<compile_context>
chip_gen: v6e
topology: v6e:2x2x1
jax: 0.10.0
libtpu: 0.0.40
codegen_flags: <defaults>
</compile_context>

<pallas_src>
import jax
import jax.numpy as jnp
from jax.experimental import pallas as pl
from jax.experimental.pallas import tpu as pltpu

# ----------------------------- config -----------------------------------
D_MODEL = 32
N_HEADS = 4
D_FF = 64
N_BLOCKS = 2
BATCH = 2
SEQ = 8
D_HEAD = D_MODEL // N_HEADS
LN_EPS = 1e-5
SCALE = 1.0 / (D_HEAD ** 0.5)
NEG_INF = -1e30  # f32 additive mask fill


# --------------------------- fused Pallas kernel --------------------------
def _fused_transformer_kernel(
    qa_ref, qc_ref,
    enc_wqkv, enc_bqkv, enc_wo, enc_bo, enc_w1, enc_b1, enc_w2, enc_b2, enc_ln,
    dec_wqkv, dec_bqkv, dec_wo_sa, dec_bo_sa,
    dec_wq_ca, dec_bq_ca, dec_wkv_ca, dec_bkv_ca, dec_wo_ca, dec_bo_ca,
    dec_w1, dec_b1, dec_w2, dec_b2, dec_ln,
    states_out, concepts_out,
):
    # causal additive mask built in-kernel: 0 = attend, NEG_INF = blocked
    # (torch.triu(ones, 1) == 0  ->  attend iff row >= col)
    row = jax.lax.broadcasted_iota(jnp.int32, (SEQ, SEQ), 0)
    col = jax.lax.broadcasted_iota(jnp.int32, (SEQ, SEQ), 1)
    neg_mask = jnp.where(row >= col, 0.0, NEG_INF).astype(jnp.float32)

    def layernorm(x, g, b):
        mu = jnp.mean(x, axis=-1, keepdims=True)
        var = jnp.mean((x - mu) ** 2, axis=-1, keepdims=True)
        return (x - mu) * jax.lax.rsqrt(var + LN_EPS) * g + b

    def mm(x, w, b):
        return jnp.dot(x, w, preferred_element_type=jnp.float32) + b

    def heads_attention(q2d, k2d, v2d):
        # q2d/k2d/v2d: (S, D); per-head static lane slices, everything in vregs.
        ctx = []
        for h in range(N_HEADS):
            sl = slice(h * D_HEAD, (h + 1) * D_HEAD)
            qh, kh, vh = q2d[:, sl], k2d[:, sl], v2d[:, sl]
            s = jnp.dot(qh, kh.T, preferred_element_type=jnp.float32) * SCALE
            s = s + neg_mask
            s = s - jnp.max(s, axis=-1, keepdims=True)
            p = jnp.exp(s)
            p = p * pl.reciprocal(jnp.sum(p, axis=-1, keepdims=True), approx=True)
            ctx.append(jnp.dot(p, vh, preferred_element_type=jnp.float32))
        return jnp.concatenate(ctx, axis=-1)  # (S, D)

    # ---------------- encoder (knowledge_encoder) ----------------
    states = qa_ref[0]  # (S, D)
    for blk in range(N_BLOCKS):
        lnp = enc_ln[blk]  # (4, D): [g1, b1, g2, b2]
        qkv = mm(states, enc_wqkv[blk], enc_bqkv[blk])  # (S, 3D)
        ctx = heads_attention(qkv[:, :D_MODEL],
                              qkv[:, D_MODEL:2 * D_MODEL],
                              qkv[:, 2 * D_MODEL:])
        attn = mm(ctx, enc_wo[blk], enc_bo[blk])
        states = layernorm(states + attn, lnp[0:1], lnp[1:2])
        hid = jnp.maximum(mm(states, enc_w1[blk], enc_b1[blk]), 0.0)
        ff = mm(hid, enc_w2[blk], enc_b2[blk])
        states = layernorm(states + ff, lnp[2:3], lnp[3:4])

    # ---------------- decoder (states_retriever) ----------------
    concepts = qc_ref[0]  # (S, D)
    for blk in range(N_BLOCKS):
        lnp = dec_ln[blk]  # (6, D): [g1, b1, g2, b2, g3, b3]
        # masked self-attention
        qkv = mm(concepts, dec_wqkv[blk], dec_bqkv[blk])
        ctx = heads_attention(qkv[:, :D_MODEL],
                              qkv[:, D_MODEL:2 * D_MODEL],
                              qkv[:, 2 * D_MODEL:])
        attn = mm(ctx, dec_wo_sa[blk], dec_bo_sa[blk])
        concepts = layernorm(concepts + attn, lnp[0:1], lnp[1:2])
        # masked cross-attention over (final) encoder states
        q_cross = mm(concepts, dec_wq_ca[blk], dec_bq_ca[blk])
        kv = mm(states, dec_wkv_ca[blk], dec_bkv_ca[blk])  # (S, 2D)
        ctx = heads_attention(q_cross, kv[:, :D_MODEL], kv[:, D_MODEL:])
        attn = mm(ctx, dec_wo_ca[blk], dec_bo_ca[blk])
        concepts = layernorm(concepts + attn, lnp[2:3], lnp[3:4])
        # FFN
        hid = jnp.maximum(mm(concepts, dec_w1[blk], dec_b1[blk]), 0.0)
        ff = mm(hid, dec_w2[blk], dec_b2[blk])
        concepts = layernorm(concepts + ff, lnp[4:5], lnp[5:6])

    states_out[0] = states
    concepts_out[0] = concepts


# ------------------------ parameter initialization -----------------------
def init_params(key, d=D_MODEL, d_ff=D_FF, nb=N_BLOCKS):
    """Weights stacked over blocks; QKV / KV projections pre-fused."""
    def key_iter(k):
        while True:
            k, sub = jax.random.split(k)
            yield sub
    ki = key_iter(key)

    def dense(din, dout):
        return 0.02 * jax.random.normal(next(ki), (din, dout), jnp.float32)

    def qkv_w():
        return jnp.concatenate([dense(d, d), dense(d, d), dense(d, d)], axis=1)

    def kv_w():
        return jnp.concatenate([dense(d, d), dense(d, d)], axis=1)

    def zeros(dout):
        return jnp.zeros((nb, 1, dout), jnp.float32)

    def ln(n_ln):
        rows = jnp.stack([jnp.ones((d,), jnp.float32),
                          jnp.zeros((d,), jnp.float32)] * n_ln)  # (2*n_ln, d)
        return jnp.tile(rows, (nb, 1, 1))

    params = {
        "enc_wqkv": jnp.stack([qkv_w() for _ in range(nb)]), "enc_bqkv": zeros(3 * d),
        "enc_wo": jnp.stack([dense(d, d) for _ in range(nb)]), "enc_bo": zeros(d),
        "enc_w1": jnp.stack([dense(d, d_ff) for _ in range(nb)]), "enc_b1": zeros(d_ff),
        "enc_w2": jnp.stack([dense(d_ff, d) for _ in range(nb)]), "enc_b2": zeros(d),
        "enc_ln": ln(2),
        "dec_wqkv": jnp.stack([qkv_w() for _ in range(nb)]), "dec_bqkv": zeros(3 * d),
        "dec_wo_sa": jnp.stack([dense(d, d) for _ in range(nb)]), "dec_bo_sa": zeros(d),
        "dec_wq_ca": jnp.stack([dense(d, d) for _ in range(nb)]), "dec_bq_ca": zeros(d),
        "dec_wkv_ca": jnp.stack([kv_w() for _ in range(nb)]), "dec_bkv_ca": zeros(2 * d),
        "dec_wo_ca": jnp.stack([dense(d, d) for _ in range(nb)]), "dec_bo_ca": zeros(d),
        "dec_w1": jnp.stack([dense(d, d_ff) for _ in range(nb)]), "dec_b1": zeros(d_ff),
        "dec_w2": jnp.stack([dense(d_ff, d) for _ in range(nb)]), "dec_b2": zeros(d),
        "dec_ln": ln(3),
    }
    return params


_WEIGHT_ORDER = [
    "enc_wqkv", "enc_bqkv", "enc_wo", "enc_bo",
    "enc_w1", "enc_b1", "enc_w2", "enc_b2", "enc_ln",
    "dec_wqkv", "dec_bqkv", "dec_wo_sa", "dec_bo_sa",
    "dec_wq_ca", "dec_bq_ca", "dec_wkv_ca", "dec_bkv_ca",
    "dec_wo_ca", "dec_bo_ca",
    "dec_w1", "dec_b1", "dec_w2", "dec_b2", "dec_ln",
]


# ----------------------------- model glue --------------------------------
def transformer_forward(params, q_embed_data, qa_embed_data):
    b, s, d = qa_embed_data.shape
    assert s == SEQ and d == D_MODEL and q_embed_data.shape == (b, s, d)

    weights = [params[k] for k in _WEIGHT_ORDER]

    act_spec = pl.BlockSpec((1, s, d), lambda i: (i, 0, 0))

    def full_spec(arr):
        zero_idx = (0,) * arr.ndim
        return pl.BlockSpec(arr.shape, lambda i, z=zero_idx: z)

    states, concepts = pl.pallas_call(
        _fused_transformer_kernel,
        out_shape=(jax.ShapeDtypeStruct((b, s, d), jnp.float32),
                   jax.ShapeDtypeStruct((b, s, d), jnp.float32)),
        grid=(b,),
        in_specs=[act_spec, act_spec] + [full_spec(w) for w in weights],
        out_specs=(act_spec, act_spec),
        compiler_params=pltpu.CompilerParams(
            dimension_semantics=("parallel",)),
    )(qa_embed_data, q_embed_data, *weights)
    return states, concepts


# ------------------------------- main -------------------------------------
if __name__ == "__main__":
    root = jax.random.PRNGKey(0)
    k_params, k_q, k_qa = jax.random.split(root, 3)

    params = init_params(k_params)
    q_embed = jax.random.normal(k_q, (BATCH, SEQ, D_MODEL), jnp.float32)
    qa_embed = jax.random.normal(k_qa, (BATCH, SEQ, D_MODEL), jnp.float32)

    states, concepts = transformer_forward(params, q_embed, qa_embed)
    jax.block_until_ready((states, concepts))

    assert states.shape == (BATCH, SEQ, D_MODEL)
    assert concepts.shape == (BATCH, SEQ, D_MODEL)
    assert bool(jnp.all(jnp.isfinite(states))) and bool(jnp.all(jnp.isfinite(concepts)))
    print("KERNEL_OK")
</pallas_src>

<mosaic_0001>
module attributes {stable_mosaic.version = 11 : i64} {
  func.func @_fused_transformer_kernel(%arg0: i32, %arg1: memref<1x8x32xf32, #tpu.memory_space<vmem>>, %arg2: memref<1x8x32xf32, #tpu.memory_space<vmem>>, %arg3: memref<2x32x96xf32, #tpu.memory_space<vmem>>, %arg4: memref<2x1x96xf32, #tpu.memory_space<vmem>>, %arg5: memref<2x32x32xf32, #tpu.memory_space<vmem>>, %arg6: memref<2x1x32xf32, #tpu.memory_space<vmem>>, %arg7: memref<2x32x64xf32, #tpu.memory_space<vmem>>, %arg8: memref<2x1x64xf32, #tpu.memory_space<vmem>>, %arg9: memref<2x64x32xf32, #tpu.memory_space<vmem>>, %arg10: memref<2x1x32xf32, #tpu.memory_space<vmem>>, %arg11: memref<2x4x32xf32, #tpu.memory_space<vmem>>, %arg12: memref<2x32x96xf32, #tpu.memory_space<vmem>>, %arg13: memref<2x1x96xf32, #tpu.memory_space<vmem>>, %arg14: memref<2x32x32xf32, #tpu.memory_space<vmem>>, %arg15: memref<2x1x32xf32, #tpu.memory_space<vmem>>, %arg16: memref<2x32x32xf32, #tpu.memory_space<vmem>>, %arg17: memref<2x1x32xf32, #tpu.memory_space<vmem>>, %arg18: memref<2x32x64xf32, #tpu.memory_space<vmem>>, %arg19: memref<2x1x64xf32, #tpu.memory_space<vmem>>, %arg20: memref<2x32x32xf32, #tpu.memory_space<vmem>>, %arg21: memref<2x1x32xf32, #tpu.memory_space<vmem>>, %arg22: memref<2x32x64xf32, #tpu.memory_space<vmem>>, %arg23: memref<2x1x64xf32, #tpu.memory_space<vmem>>, %arg24: memref<2x64x32xf32, #tpu.memory_space<vmem>>, %arg25: memref<2x1x32xf32, #tpu.memory_space<vmem>>, %arg26: memref<2x6x32xf32, #tpu.memory_space<vmem>>, %arg27: memref<1x8x32xf32, #tpu.memory_space<vmem>>, %arg28: memref<1x8x32xf32, #tpu.memory_space<vmem>>) attributes {dimension_semantics = [#tpu.dimension_semantics<parallel>], iteration_bounds = array<i64: 2>, scalar_prefetch = 0 : i64, scratch_operands = 0 : i64, tpu.core_type = #tpu.core_type<tc>, window_params = [{transform_indices = @transform_0, window_bounds = array<i64: 1, 8, 32>}, {transform_indices = @transform_1, window_bounds = array<i64: 1, 8, 32>}, {pipeline_mode = #tpu.pipeline_mode<synchronous>, transform_indices = @transform_2, window_bounds = array<i64: 2, 32, 96>}, {pipeline_mode = #tpu.pipeline_mode<synchronous>, transform_indices = @transform_3, window_bounds = array<i64: 2, 1, 96>}, {pipeline_mode = #tpu.pipeline_mode<synchronous>, transform_indices = @transform_4, window_bounds = array<i64: 2, 32, 32>}, {pipeline_mode = #tpu.pipeline_mode<synchronous>, transform_indices = @transform_5, window_bounds = array<i64: 2, 1, 32>}, {pipeline_mode = #tpu.pipeline_mode<synchronous>, transform_indices = @transform_6, window_bounds = array<i64: 2, 32, 64>}, {pipeline_mode = #tpu.pipeline_mode<synchronous>, transform_indices = @transform_7, window_bounds = array<i64: 2, 1, 64>}, {pipeline_mode = #tpu.pipeline_mode<synchronous>, transform_indices = @transform_8, window_bounds = array<i64: 2, 64, 32>}, {pipeline_mode = #tpu.pipeline_mode<synchronous>, transform_indices = @transform_9, window_bounds = array<i64: 2, 1, 32>}, {pipeline_mode = #tpu.pipeline_mode<synchronous>, transform_indices = @transform_10, window_bounds = array<i64: 2, 4, 32>}, {pipeline_mode = #tpu.pipeline_mode<synchronous>, transform_indices = @transform_11, window_bounds = array<i64: 2, 32, 96>}, {pipeline_mode = #tpu.pipeline_mode<synchronous>, transform_indices = @transform_12, window_bounds = array<i64: 2, 1, 96>}, {pipeline_mode = #tpu.pipeline_mode<synchronous>, transform_indices = @transform_13, window_bounds = array<i64: 2, 32, 32>}, {pipeline_mode = #tpu.pipeline_mode<synchronous>, transform_indices = @transform_14, window_bounds = array<i64: 2, 1, 32>}, {pipeline_mode = #tpu.pipeline_mode<synchronous>, transform_indices = @transform_15, window_bounds = array<i64: 2, 32, 32>}, {pipeline_mode = #tpu.pipeline_mode<synchronous>, transform_indices = @transform_16, window_bounds = array<i64: 2, 1, 32>}, {pipeline_mode = #tpu.pipeline_mode<synchronous>, transform_indices = @transform_17, window_bounds = array<i64: 2, 32, 64>}, {pipeline_mode = #tpu.pipeline_mode<synchronous>, transform_indices = @transform_18, window_bounds = array<i64: 2, 1, 64>}, {pipeline_mode = #tpu.pipeline_mode<synchronous>, transform_indices = @transform_19, window_bounds = array<i64: 2, 32, 32>}, {pipeline_mode = #tpu.pipeline_mode<synchronous>, transform_indices = @transform_20, window_bounds = array<i64: 2, 1, 32>}, {pipeline_mode = #tpu.pipeline_mode<synchronous>, transform_indices = @transform_21, window_bounds = array<i64: 2, 32, 64>}, {pipeline_mode = #tpu.pipeline_mode<synchronous>, transform_indices = @transform_22, window_bounds = array<i64: 2, 1, 64>}, {pipeline_mode = #tpu.pipeline_mode<synchronous>, transform_indices = @transform_23, window_bounds = array<i64: 2, 64, 32>}, {pipeline_mode = #tpu.pipeline_mode<synchronous>, transform_indices = @transform_24, window_bounds = array<i64: 2, 1, 32>}, {pipeline_mode = #tpu.pipeline_mode<synchronous>, transform_indices = @transform_25, window_bounds = array<i64: 2, 6, 32>}, {transform_indices = @transform_26, window_bounds = array<i64: 1, 8, 32>}, {transform_indices = @transform_27, window_bounds = array<i64: 1, 8, 32>}]} {
    %0 = tpu.iota {dimensions = array<i32: 0>} : vector<8x8xi32>
    %1 = tpu.iota {dimensions = array<i32: 1>} : vector<8x8xi32>
    %2 = arith.cmpi sge, %0, %1 : vector<8x8xi32>
    %cst = arith.constant 0.000000e+00 : f32
    %cst_0 = arith.constant -1.000000e+30 : f32
    %3 = vector.broadcast %cst : f32 to vector<8x8xf32>
    %4 = vector.broadcast %cst_0 : f32 to vector<8x8xf32>
    %5 = arith.select %2, %3, %4 : vector<8x8xi1>, vector<8x8xf32>
    %c0 = arith.constant 0 : index
    %c0_1 = arith.constant 0 : index
    %c0_2 = arith.constant 0 : index
    %6 = vector.load %arg1[%c0, %c0_1, %c0_2] : memref<1x8x32xf32, #tpu.memory_space<vmem>>, vector<1x8x32xf32>
    %7 = vector.shape_cast %6 : vector<1x8x32xf32> to vector<8x32xf32>
    %c0_3 = arith.constant 0 : index
    %c0_4 = arith.constant 0 : index
    %c0_5 = arith.constant 0 : index
    %8 = vector.load %arg11[%c0_3, %c0_4, %c0_5] : memref<2x4x32xf32, #tpu.memory_space<vmem>>, vector<1x4x32xf32>
    %9 = vector.shape_cast %8 : vector<1x4x32xf32> to vector<4x32xf32>
    %c0_6 = arith.constant 0 : index
    %c0_7 = arith.constant 0 : index
    %c0_8 = arith.constant 0 : index
    %10 = vector.load %arg3[%c0_6, %c0_7, %c0_8] : memref<2x32x96xf32, #tpu.memory_space<vmem>>, vector<1x32x96xf32>
    %11 = vector.shape_cast %10 : vector<1x32x96xf32> to vector<32x96xf32>
    %c0_9 = arith.constant 0 : index
    %c0_10 = arith.constant 0 : index
    %c0_11 = arith.constant 0 : index
    %12 = vector.load %arg4[%c0_9, %c0_10, %c0_11] : memref<2x1x96xf32, #tpu.memory_space<vmem>>, vector<1x1x96xf32>
    %13 = vector.shape_cast %12 : vector<1x1x96xf32> to vector<1x96xf32>
    %cst_12 = arith.constant dense<0.000000e+00> : vector<8x96xf32>
    %14 = tpu.matmul %7, %11, %cst_12 {dimension_numbers = #tpu.dot_dimension_numbers<[1], [0], [0], [1], [0, 0, 1, 1], [], []>} : vector<8x32xf32>, vector<32x96xf32>, vector<8x96xf32> -> vector<8x96xf32>
    %15 = vector.broadcast %13 : vector<1x96xf32> to vector<8x96xf32>
    %16 = arith.addf %14, %15 : vector<8x96xf32>
    %17 = vector.extract_strided_slice %16 {offsets = [0, 0], sizes = [8, 32], strides = [1, 1]} : vector<8x96xf32> to vector<8x32xf32>
    %18 = vector.extract_strided_slice %16 {offsets = [0, 32], sizes = [8, 32], strides = [1, 1]} : vector<8x96xf32> to vector<8x32xf32>
    %19 = vector.extract_strided_slice %16 {offsets = [0, 64], sizes = [8, 32], strides = [1, 1]} : vector<8x96xf32> to vector<8x32xf32>
    %20 = vector.extract_strided_slice %17 {offsets = [0, 0], sizes = [8, 8], strides = [1, 1]} : vector<8x32xf32> to vector<8x8xf32>
    %21 = vector.extract_strided_slice %18 {offsets = [0, 0], sizes = [8, 8], strides = [1, 1]} : vector<8x32xf32> to vector<8x8xf32>
    %22 = vector.extract_strided_slice %19 {offsets = [0, 0], sizes = [8, 8], strides = [1, 1]} : vector<8x32xf32> to vector<8x8xf32>
    %23 = tpu.transpose %21, [1, 0] : vector<8x8xf32> -> vector<8x8xf32>
    %cst_13 = arith.constant dense<0.000000e+00> : vector<8x8xf32>
    %24 = tpu.matmul %20, %23, %cst_13 {dimension_numbers = #tpu.dot_dimension_numbers<[1], [0], [0], [1], [0, 0, 1, 1], [], []>} : vector<8x8xf32>, vector<8x8xf32>, vector<8x8xf32> -> vector<8x8xf32>
    %cst_14 = arith.constant 0.353553385 : f32
    %25 = vector.broadcast %cst_14 : f32 to vector<8x8xf32>
    %26 = arith.mulf %24, %25 : vector<8x8xf32>
    %27 = arith.addf %26, %5 : vector<8x8xf32>
    %cst_15 = arith.constant dense<0xFF800000> : vector<8xf32>
    %28 = vector.multi_reduction <maximumf>, %27, %cst_15 [1] : vector<8x8xf32> to vector<8xf32>
    %29 = vector.shape_cast %28 : vector<8xf32> to vector<8x1xf32>
    %30 = vector.broadcast %29 : vector<8x1xf32> to vector<8x8xf32>
    %31 = arith.subf %27, %30 : vector<8x8xf32>
    %32 = math.exp %31 : vector<8x8xf32>
    %cst_16 = arith.constant dense<0.000000e+00> : vector<8xf32>
    %33 = vector.multi_reduction <add>, %32, %cst_16 [1] : vector<8x8xf32> to vector<8xf32>
    %34 = vector.shape_cast %33 : vector<8xf32> to vector<8x1xf32>
    %35 = tpu.reciprocal %34 {approx = true} : vector<8x1xf32> -> vector<8x1xf32>
    %36 = vector.broadcast %35 : vector<8x1xf32> to vector<8x8xf32>
    %37 = arith.mulf %32, %36 : vector<8x8xf32>
    %cst_17 = arith.constant dense<0.000000e+00> : vector<8x8xf32>
    %38 = tpu.matmul %37, %22, %cst_17 {dimension_numbers = #tpu.dot_dimension_numbers<[1], [0], [0], [1], [0, 0, 1, 1], [], []>} : vector<8x8xf32>, vector<8x8xf32>, vector<8x8xf32> -> vector<8x8xf32>
    %39 = vector.extract_strided_slice %17 {offsets = [0, 8], sizes = [8, 8], strides = [1, 1]} : vector<8x32xf32> to vector<8x8xf32>
    %40 = vector.extract_strided_slice %18 {offsets = [0, 8], sizes = [8, 8], strides = [1, 1]} : vector<8x32xf32> to vector<8x8xf32>
    %41 = vector.extract_strided_slice %19 {offsets = [0, 8], sizes = [8, 8], strides = [1, 1]} : vector<8x32xf32> to vector<8x8xf32>
    %42 = tpu.transpose %40, [1, 0] : vector<8x8xf32> -> vector<8x8xf32>
    %cst_18 = arith.constant dense<0.000000e+00> : vector<8x8xf32>
    %43 = tpu.matmul %39, %42, %cst_18 {dimension_numbers = #tpu.dot_dimension_numbers<[1], [0], [0], [1], [0, 0, 1, 1], [], []>} : vector<8x8xf32>, vector<8x8xf32>, vector<8x8xf32> -> vector<8x8xf32>
    %cst_19 = arith.constant 0.353553385 : f32
    %44 = vector.broadcast %cst_19 : f32 to vector<8x8xf32>
    %45 = arith.mulf %43, %44 : vector<8x8xf32>
    %46 = arith.addf %45, %5 : vector<8x8xf32>
    %cst_20 = arith.constant dense<0xFF800000> : vector<8xf32>
    %47 = vector.multi_reduction <maximumf>, %46, %cst_20 [1] : vector<8x8xf32> to vector<8xf32>
    %48 = vector.shape_cast %47 : vector<8xf32> to vector<8x1xf32>
    %49 = vector.broadcast %48 : vector<8x1xf32> to vector<8x8xf32>
    %50 = arith.subf %46, %49 : vector<8x8xf32>
    %51 = math.exp %50 : vector<8x8xf32>
    %cst_21 = arith.constant dense<0.000000e+00> : vector<8xf32>
    %52 = vector.multi_reduction <add>, %51, %cst_21 [1] : vector<8x8xf32> to vector<8xf32>
    %53 = vector.shape_cast %52 : vector<8xf32> to vector<8x1xf32>
    %54 = tpu.reciprocal %53 {approx = true} : vector<8x1xf32> -> vector<8x1xf32>
    %55 = vector.broadcast %54 : vector<8x1xf32> to vector<8x8xf32>
    %56 = arith.mulf %51, %55 : vector<8x8xf32>
    %cst_22 = arith.constant dense<0.000000e+00> : vector<8x8xf32>
    %57 = tpu.matmul %56, %41, %cst_22 {dimension_numbers = #tpu.dot_dimension_numbers<[1], [0], [0], [1], [0, 0, 1, 1], [], []>} : vector<8x8xf32>, vector<8x8xf32>, vector<8x8xf32> -> vector<8x8xf32>
    %58 = vector.extract_strided_slice %17 {offsets = [0, 16], sizes = [8, 8], strides = [1, 1]} : vector<8x32xf32> to vector<8x8xf32>
    %59 = vector.extract_strided_slice %18 {offsets = [0, 16], sizes = [8, 8], strides = [1, 1]} : vector<8x32xf32> to vector<8x8xf32>
    %60 = vector.extract_strided_slice %19 {offsets = [0, 16], sizes = [8, 8], strides = [1, 1]} : vector<8x32xf32> to vector<8x8xf32>
    %61 = tpu.transpose %59, [1, 0] : vector<8x8xf32> -> vector<8x8xf32>
    %cst_23 = arith.constant dense<0.000000e+00> : vector<8x8xf32>
    %62 = tpu.matmul %58, %61, %cst_23 {dimension_numbers = #tpu.dot_dimension_numbers<[1], [0], [0], [1], [0, 0, 1, 1], [], []>} : vector<8x8xf32>, vector<8x8xf32>, vector<8x8xf32> -> vector<8x8xf32>
    %cst_24 = arith.constant 0.353553385 : f32
    %63 = vector.broadcast %cst_24 : f32 to vector<8x8xf32>
    %64 = arith.mulf %62, %63 : vector<8x8xf32>
    %65 = arith.addf %64, %5 : vector<8x8xf32>
    %cst_25 = arith.constant dense<0xFF800000> : vector<8xf32>
    %66 = vector.multi_reduction <maximumf>, %65, %cst_25 [1] : vector<8x8xf32> to vector<8xf32>
    %67 = vector.shape_cast %66 : vector<8xf32> to vector<8x1xf32>
    %68 = vector.broadcast %67 : vector<8x1xf32> to vector<8x8xf32>
    %69 = arith.subf %65, %68 : vector<8x8xf32>
    %70 = math.exp %69 : vector<8x8xf32>
    %cst_26 = arith.constant dense<0.000000e+00> : vector<8xf32>
    %71 = vector.multi_reduction <add>, %70, %cst_26 [1] : vector<8x8xf32> to vector<8xf32>
    %72 = vector.shape_cast %71 : vector<8xf32> to vector<8x1xf32>
    %73 = tpu.reciprocal %72 {approx = true} : vector<8x1xf32> -> vector<8x1xf32>
    %74 = vector.broadcast %73 : vector<8x1xf32> to vector<8x8xf32>
    %75 = arith.mulf %70, %74 : vector<8x8xf32>
    %cst_27 = arith.constant dense<0.000000e+00> : vector<8x8xf32>
    %76 = tpu.matmul %75, %60, %cst_27 {dimension_numbers = #tpu.dot_dimension_numbers<[1], [0], [0], [1], [0, 0, 1, 1], [], []>} : vector<8x8xf32>, vector<8x8xf32>, vector<8x8xf32> -> vector<8x8xf32>
    %77 = vector.extract_strided_slice %17 {offsets = [0, 24], sizes = [8, 8], strides = [1, 1]} : vector<8x32xf32> to vector<8x8xf32>
    %78 = vector.extract_strided_slice %18 {offsets = [0, 24], sizes = [8, 8], strides = [1, 1]} : vector<8x32xf32> to vector<8x8xf32>
    %79 = vector.extract_strided_slice %19 {offsets = [0, 24], sizes = [8, 8], strides = [1, 1]} : vector<8x32xf32> to vector<8x8xf32>
    %80 = tpu.transpose %78, [1, 0] : vector<8x8xf32> -> vector<8x8xf32>
    %cst_28 = arith.constant dense<0.000000e+00> : vector<8x8xf32>
    %81 = tpu.matmul %77, %80, %cst_28 {dimension_numbers = #tpu.dot_dimension_numbers<[1], [0], [0], [1], [0, 0, 1, 1], [], []>} : vector<8x8xf32>, vector<8x8xf32>, vector<8x8xf32> -> vector<8x8xf32>
    %cst_29 = arith.constant 0.353553385 : f32
    %82 = vector.broadcast %cst_29 : f32 to vector<8x8xf32>
    %83 = arith.mulf %81, %82 : vector<8x8xf32>
    %84 = arith.addf %83, %5 : vector<8x8xf32>
    %cst_30 = arith.constant dense<0xFF800000> : vector<8xf32>
    %85 = vector.multi_reduction <maximumf>, %84, %cst_30 [1] : vector<8x8xf32> to vector<8xf32>
    %86 = vector.shape_cast %85 : vector<8xf32> to vector<8x1xf32>
    %87 = vector.broadcast %86 : vector<8x1xf32> to vector<8x8xf32>
    %88 = arith.subf %84, %87 : vector<8x8xf32>
    %89 = math.exp %88 : vector<8x8xf32>
    %cst_31 = arith.constant dense<0.000000e+00> : vector<8xf32>
    %90 = vector.multi_reduction <add>, %89, %cst_31 [1] : vector<8x8xf32> to vector<8xf32>
    %91 = vector.shape_cast %90 : vector<8xf32> to vector<8x1xf32>
    %92 = tpu.reciprocal %91 {approx = true} : vector<8x1xf32> -> vector<8x1xf32>
    %93 = vector.broadcast %92 : vector<8x1xf32> to vector<8x8xf32>
    %94 = arith.mulf %89, %93 : vector<8x8xf32>
    %cst_32 = arith.constant dense<0.000000e+00> : vector<8x8xf32>
    %95 = tpu.matmul %94, %79, %cst_32 {dimension_numbers = #tpu.dot_dimension_numbers<[1], [0], [0], [1], [0, 0, 1, 1], [], []>} : vector<8x8xf32>, vector<8x8xf32>, vector<8x8xf32> -> vector<8x8xf32>
    %96 = tpu.concatenate %38, %57, %76, %95 in 1 : vector<8x8xf32>, vector<8x8xf32>, vector<8x8xf32>, vector<8x8xf32> -> vector<8x32xf32>
    %c0_33 = arith.constant 0 : index
    %c0_34 = arith.constant 0 : index
    %c0_35 = arith.constant 0 : index
    %97 = vector.load %arg5[%c0_33, %c0_34, %c0_35] : memref<2x32x32xf32, #tpu.memory_space<vmem>>, vector<1x32x32xf32>
    %98 = vector.shape_cast %97 : vector<1x32x32xf32> to vector<32x32xf32>
    %c0_36 = arith.constant 0 : index
    %c0_37 = arith.constant 0 : index
    %c0_38 = arith.constant 0 : index
    %99 = vector.load %arg6[%c0_36, %c0_37, %c0_38] : memref<2x1x32xf32, #tpu.memory_space<vmem>>, vector<1x1x32xf32>
    %100 = vector.shape_cast %99 : vector<1x1x32xf32> to vector<1x32xf32>
    %cst_39 = arith.constant dense<0.000000e+00> : vector<8x32xf32>
    %101 = tpu.matmul %96, %98, %cst_39 {dimension_numbers = #tpu.dot_dimension_numbers<[1], [0], [0], [1], [0, 0, 1, 1], [], []>} : vector<8x32xf32>, vector<32x32xf32>, vector<8x32xf32> -> vector<8x32xf32>
    %102 = vector.broadcast %100 : vector<1x32xf32> to vector<8x32xf32>
    %103 = arith.addf %101, %102 : vector<8x32xf32>
    %104 = arith.addf %7, %103 : vector<8x32xf32>
    %105 = vector.extract_strided_slice %9 {offsets = [0, 0], sizes = [1, 32], strides = [1, 1]} : vector<4x32xf32> to vector<1x32xf32>
    %106 = vector.extract_strided_slice %9 {offsets = [1, 0], sizes = [1, 32], strides = [1, 1]} : vector<4x32xf32> to vector<1x32xf32>
    %cst_40 = arith.constant dense<0.000000e+00> : vector<8xf32>
    %107 = vector.multi_reduction <add>, %104, %cst_40 [1] : vector<8x32xf32> to vector<8xf32>
    %108 = vector.shape_cast %107 : vector<8xf32> to vector<8x1xf32>
    %cst_41 = arith.constant 3.200000e+01 : f32
    %109 = vector.broadcast %cst_41 : f32 to vector<8x1xf32>
    %110 = arith.divf %108, %109 : vector<8x1xf32>
    %111 = vector.broadcast %110 : vector<8x1xf32> to vector<8x32xf32>
    %112 = arith.subf %104, %111 : vector<8x32xf32>
    %113 = arith.mulf %112, %112 : vector<8x32xf32>
    %cst_42 = arith.constant dense<0.000000e+00> : vector<8xf32>
    %114 = vector.multi_reduction <add>, %113, %cst_42 [1] : vector<8x32xf32> to vector<8xf32>
    %115 = vector.shape_cast %114 : vector<8xf32> to vector<8x1xf32>
    %cst_43 = arith.constant 3.200000e+01 : f32
    %116 = vector.broadcast %cst_43 : f32 to vector<8x1xf32>
    %117 = arith.divf %115, %116 : vector<8x1xf32>
    %118 = vector.broadcast %110 : vector<8x1xf32> to vector<8x32xf32>
    %119 = arith.subf %104, %118 : vector<8x32xf32>
    %cst_44 = arith.constant 9.99999974E-6 : f32
    %120 = vector.broadcast %cst_44 : f32 to vector<8x1xf32>
    %121 = arith.addf %117, %120 : vector<8x1xf32>
    %122 = math.rsqrt %121 : vector<8x1xf32>
    %123 = vector.broadcast %122 : vector<8x1xf32> to vector<8x32xf32>
    %124 = arith.mulf %119, %123 : vector<8x32xf32>
    %125 = vector.broadcast %105 : vector<1x32xf32> to vector<8x32xf32>
    %126 = arith.mulf %124, %125 : vector<8x32xf32>
    %127 = vector.broadcast %106 : vector<1x32xf32> to vector<8x32xf32>
    %128 = arith.addf %126, %127 : vector<8x32xf32>
    %c0_45 = arith.constant 0 : index
    %c0_46 = arith.constant 0 : index
    %c0_47 = arith.constant 0 : index
    %129 = vector.load %arg7[%c0_45, %c0_46, %c0_47] : memref<2x32x64xf32, #tpu.memory_space<vmem>>, vector<1x32x64xf32>
    %130 = vector.shape_cast %129 : vector<1x32x64xf32> to vector<32x64xf32>
    %c0_48 = arith.constant 0 : index
    %c0_49 = arith.constant 0 : index
    %c0_50 = arith.constant 0 : index
    %131 = vector.load %arg8[%c0_48, %c0_49, %c0_50] : memref<2x1x64xf32, #tpu.memory_space<vmem>>, vector<1x1x64xf32>
    %132 = vector.shape_cast %131 : vector<1x1x64xf32> to vector<1x64xf32>
    %cst_51 = arith.constant dense<0.000000e+00> : vector<8x64xf32>
    %133 = tpu.matmul %128, %130, %cst_51 {dimension_numbers = #tpu.dot_dimension_numbers<[1], [0], [0], [1], [0, 0, 1, 1], [], []>} : vector<8x32xf32>, vector<32x64xf32>, vector<8x64xf32> -> vector<8x64xf32>
    %134 = vector.broadcast %132 : vector<1x64xf32> to vector<8x64xf32>
    %135 = arith.addf %133, %134 : vector<8x64xf32>
    %cst_52 = arith.constant 0.000000e+00 : f32
    %136 = vector.broadcast %cst_52 : f32 to vector<8x64xf32>
    %137 = arith.maximumf %135, %136 : vector<8x64xf32>
    %c0_53 = arith.constant 0 : index
    %c0_54 = arith.constant 0 : index
    %c0_55 = arith.constant 0 : index
    %138 = vector.load %arg9[%c0_53, %c0_54, %c0_55] : memref<2x64x32xf32, #tpu.memory_space<vmem>>, vector<1x64x32xf32>
    %139 = vector.shape_cast %138 : vector<1x64x32xf32> to vector<64x32xf32>
    %c0_56 = arith.constant 0 : index
    %c0_57 = arith.constant 0 : index
    %c0_58 = arith.constant 0 : index
    %140 = vector.load %arg10[%c0_56, %c0_57, %c0_58] : memref<2x1x32xf32, #tpu.memory_space<vmem>>, vector<1x1x32xf32>
    %141 = vector.shape_cast %140 : vector<1x1x32xf32> to vector<1x32xf32>
    %cst_59 = arith.constant dense<0.000000e+00> : vector<8x32xf32>
    %142 = tpu.matmul %137, %139, %cst_59 {dimension_numbers = #tpu.dot_dimension_numbers<[1], [0], [0], [1], [0, 0, 1, 1], [], []>} : vector<8x64xf32>, vector<64x32xf32>, vector<8x32xf32> -> vector<8x32xf32>
    %143 = vector.broadcast %141 : vector<1x32xf32> to vector<8x32xf32>
    %144 = arith.addf %142, %143 : vector<8x32xf32>
    %145 = arith.addf %128, %144 : vector<8x32xf32>
    %146 = vector.extract_strided_slice %9 {offsets = [2, 0], sizes = [1, 32], strides = [1, 1]} : vector<4x32xf32> to vector<1x32xf32>
    %147 = vector.extract_strided_slice %9 {offsets = [3, 0], sizes = [1, 32], strides = [1, 1]} : vector<4x32xf32> to vector<1x32xf32>
    %cst_60 = arith.constant dense<0.000000e+00> : vector<8xf32>
    %148 = vector.multi_reduction <add>, %145, %cst_60 [1] : vector<8x32xf32> to vector<8xf32>
    %149 = vector.shape_cast %148 : vector<8xf32> to vector<8x1xf32>
    %cst_61 = arith.constant 3.200000e+01 : f32
    %150 = vector.broadcast %cst_61 : f32 to vector<8x1xf32>
    %151 = arith.divf %149, %150 : vector<8x1xf32>
    %152 = vector.broadcast %151 : vector<8x1xf32> to vector<8x32xf32>
    %153 = arith.subf %145, %152 : vector<8x32xf32>
    %154 = arith.mulf %153, %153 : vector<8x32xf32>
    %cst_62 = arith.constant dense<0.000000e+00> : vector<8xf32>
    %155 = vector.multi_reduction <add>, %154, %cst_62 [1] : vector<8x32xf32> to vector<8xf32>
    %156 = vector.shape_cast %155 : vector<8xf32> to vector<8x1xf32>
    %cst_63 = arith.constant 3.200000e+01 : f32
    %157 = vector.broadcast %cst_63 : f32 to vector<8x1xf32>
    %158 = arith.divf %156, %157 : vector<8x1xf32>
    %159 = vector.broadcast %151 : vector<8x1xf32> to vector<8x32xf32>
    %160 = arith.subf %145, %159 : vector<8x32xf32>
    %cst_64 = arith.constant 9.99999974E-6 : f32
    %161 = vector.broadcast %cst_64 : f32 to vector<8x1xf32>
    %162 = arith.addf %158, %161 : vector<8x1xf32>
    %163 = math.rsqrt %162 : vector<8x1xf32>
    %164 = vector.broadcast %163 : vector<8x1xf32> to vector<8x32xf32>
    %165 = arith.mulf %160, %164 : vector<8x32xf32>
    %166 = vector.broadcast %146 : vector<1x32xf32> to vector<8x32xf32>
    %167 = arith.mulf %165, %166 : vector<8x32xf32>
    %168 = vector.broadcast %147 : vector<1x32xf32> to vector<8x32xf32>
    %169 = arith.addf %167, %168 : vector<8x32xf32>
    %c1 = arith.constant 1 : index
    %c0_65 = arith.constant 0 : index
    %c0_66 = arith.constant 0 : index
    %170 = vector.load %arg11[%c1, %c0_65, %c0_66] : memref<2x4x32xf32, #tpu.memory_space<vmem>>, vector<1x4x32xf32>
    %171 = vector.shape_cast %170 : vector<1x4x32xf32> to vector<4x32xf32>
    %c1_67 = arith.constant 1 : index
    %c0_68 = arith.constant 0 : index
    %c0_69 = arith.constant 0 : index
    %172 = vector.load %arg3[%c1_67, %c0_68, %c0_69] : memref<2x32x96xf32, #tpu.memory_space<vmem>>, vector<1x32x96xf32>
    %173 = vector.shape_cast %172 : vector<1x32x96xf32> to vector<32x96xf32>
    %c1_70 = arith.constant 1 : index
    %c0_71 = arith.constant 0 : index
    %c0_72 = arith.constant 0 : index
    %174 = vector.load %arg4[%c1_70, %c0_71, %c0_72] : memref<2x1x96xf32, #tpu.memory_space<vmem>>, vector<1x1x96xf32>
    %175 = vector.shape_cast %174 : vector<1x1x96xf32> to vector<1x96xf32>
    %cst_73 = arith.constant dense<0.000000e+00> : vector<8x96xf32>
    %176 = tpu.matmul %169, %173, %cst_73 {dimension_numbers = #tpu.dot_dimension_numbers<[1], [0], [0], [1], [0, 0, 1, 1], [], []>} : vector<8x32xf32>, vector<32x96xf32>, vector<8x96xf32> -> vector<8x96xf32>
    %177 = vector.broadcast %175 : vector<1x96xf32> to vector<8x96xf32>
    %178 = arith.addf %176, %177 : vector<8x96xf32>
    %179 = vector.extract_strided_slice %178 {offsets = [0, 0], sizes = [8, 32], strides = [1, 1]} : vector<8x96xf32> to vector<8x32xf32>
    %180 = vector.extract_strided_slice %178 {offsets = [0, 32], sizes = [8, 32], strides = [1, 1]} : vector<8x96xf32> to vector<8x32xf32>
    %181 = vector.extract_strided_slice %178 {offsets = [0, 64], sizes = [8, 32], strides = [1, 1]} : vector<8x96xf32> to vector<8x32xf32>
    %182 = vector.extract_strided_slice %179 {offsets = [0, 0], sizes = [8, 8], strides = [1, 1]} : vector<8x32xf32> to vector<8x8xf32>
    %183 = vector.extract_strided_slice %180 {offsets = [0, 0], sizes = [8, 8], strides = [1, 1]} : vector<8x32xf32> to vector<8x8xf32>
    %184 = vector.extract_strided_slice %181 {offsets = [0, 0], sizes = [8, 8], strides = [1, 1]} : vector<8x32xf32> to vector<8x8xf32>
    %185 = tpu.transpose %183, [1, 0] : vector<8x8xf32> -> vector<8x8xf32>
    %cst_74 = arith.constant dense<0.000000e+00> : vector<8x8xf32>
    %186 = tpu.matmul %182, %185, %cst_74 {dimension_numbers = #tpu.dot_dimension_numbers<[1], [0], [0], [1], [0, 0, 1, 1], [], []>} : vector<8x8xf32>, vector<8x8xf32>, vector<8x8xf32> -> vector<8x8xf32>
    %cst_75 = arith.constant 0.353553385 : f32
    %187 = vector.broadcast %cst_75 : f32 to vector<8x8xf32>
    %188 = arith.mulf %186, %187 : vector<8x8xf32>
    %189 = arith.addf %188, %5 : vector<8x8xf32>
    %cst_76 = arith.constant dense<0xFF800000> : vector<8xf32>
    %190 = vector.multi_reduction <maximumf>, %189, %cst_76 [1] : vector<8x8xf32> to vector<8xf32>
    %191 = vector.shape_cast %190 : vector<8xf32> to vector<8x1xf32>
    %192 = vector.broadcast %191 : vector<8x1xf32> to vector<8x8xf32>
    %193 = arith.subf %189, %192 : vector<8x8xf32>
    %194 = math.exp %193 : vector<8x8xf32>
    %cst_77 = arith.constant dense<0.000000e+00> : vector<8xf32>
    %195 = vector.multi_reduction <add>, %194, %cst_77 [1] : vector<8x8xf32> to vector<8xf32>
    %196 = vector.shape_cast %195 : vector<8xf32> to vector<8x1xf32>
    %197 = tpu.reciprocal %196 {approx = true} : vector<8x1xf32> -> vector<8x1xf32>
    %198 = vector.broadcast %197 : vector<8x1xf32> to vector<8x8xf32>
    %199 = arith.mulf %194, %198 : vector<8x8xf32>
    %cst_78 = arith.constant dense<0.000000e+00> : vector<8x8xf32>
    %200 = tpu.matmul %199, %184, %cst_78 {dimension_numbers = #tpu.dot_dimension_numbers<[1], [0], [0], [1], [0, 0, 1, 1], [], []>} : vector<8x8xf32>, vector<8x8xf32>, vector<8x8xf32> -> vector<8x8xf32>
    %201 = vector.extract_strided_slice %179 {offsets = [0, 8], sizes = [8, 8], strides = [1, 1]} : vector<8x32xf32> to vector<8x8xf32>
    %202 = vector.extract_strided_slice %180 {offsets = [0, 8], sizes = [8, 8], strides = [1, 1]} : vector<8x32xf32> to vector<8x8xf32>
    %203 = vector.extract_strided_slice %181 {offsets = [0, 8], sizes = [8, 8], strides = [1, 1]} : vector<8x32xf32> to vector<8x8xf32>
    %204 = tpu.transpose %202, [1, 0] : vector<8x8xf32> -> vector<8x8xf32>
    %cst_79 = arith.constant dense<0.000000e+00> : vector<8x8xf32>
    %205 = tpu.matmul %201, %204, %cst_79 {dimension_numbers = #tpu.dot_dimension_numbers<[1], [0], [0], [1], [0, 0, 1, 1], [], []>} : vector<8x8xf32>, vector<8x8xf32>, vector<8x8xf32> -> vector<8x8xf32>
    %cst_80 = arith.constant 0.353553385 : f32
    %206 = vector.broadcast %cst_80 : f32 to vector<8x8xf32>
    %207 = arith.mulf %205, %206 : vector<8x8xf32>
    %208 = arith.addf %207, %5 : vector<8x8xf32>
    %cst_81 = arith.constant dense<0xFF800000> : vector<8xf32>
    %209 = vector.multi_reduction <maximumf>, %208, %cst_81 [1] : vector<8x8xf32> to vector<8xf32>
    %210 = vector.shape_cast %209 : vector<8xf32> to vector<8x1xf32>
    %211 = vector.broadcast %210 : vector<8x1xf32> to vector<8x8xf32>
    %212 = arith.subf %208, %211 : vector<8x8xf32>
    %213 = math.exp %212 : vector<8x8xf32>
    %cst_82 = arith.constant dense<0.000000e+00> : vector<8xf32>
    %214 = vector.multi_reduction <add>, %213, %cst_82 [1] : vector<8x8xf32> to vector<8xf32>
    %215 = vector.shape_cast %214 : vector<8xf32> to vector<8x1xf32>
    %216 = tpu.reciprocal %215 {approx = true} : vector<8x1xf32> -> vector<8x1xf32>
    %217 = vector.broadcast %216 : vector<8x1xf32> to vector<8x8xf32>
    %218 = arith.mulf %213, %217 : vector<8x8xf32>
    %cst_83 = arith.constant dense<0.000000e+00> : vector<8x8xf32>
    %219 = tpu.matmul %218, %203, %cst_83 {dimension_numbers = #tpu.dot_dimension_numbers<[1], [0], [0], [1], [0, 0, 1, 1], [], []>} : vector<8x8xf32>, vector<8x8xf32>, vector<8x8xf32> -> vector<8x8xf32>
    %220 = vector.extract_strided_slice %179 {offsets = [0, 16], sizes = [8, 8], strides = [1, 1]} : vector<8x32xf32> to vector<8x8xf32>
    %221 = vector.extract_strided_slice %180 {offsets = [0, 16], sizes = [8, 8], strides = [1, 1]} : vector<8x32xf32> to vector<8x8xf32>
    %222 = vector.extract_strided_slice %181 {offsets = [0, 16], sizes = [8, 8], strides = [1, 1]} : vector<8x32xf32> to vector<8x8xf32>
    %223 = tpu.transpose %221, [1, 0] : vector<8x8xf32> -> vector<8x8xf32>
    %cst_84 = arith.constant dense<0.000000e+00> : vector<8x8xf32>
    %224 = tpu.matmul %220, %223, %cst_84 {dimension_numbers = #tpu.dot_dimension_numbers<[1], [0], [0], [1], [0, 0, 1, 1], [], []>} : vector<8x8xf32>, vector<8x8xf32>, vector<8x8xf32> -> vector<8x8xf32>
    %cst_85 = arith.constant 0.353553385 : f32
    %225 = vector.broadcast %cst_85 : f32 to vector<8x8xf32>
    %226 = arith.mulf %224, %225 : vector<8x8xf32>
    %227 = arith.addf %226, %5 : vector<8x8xf32>
    %cst_86 = arith.constant dense<0xFF800000> : vector<8xf32>
    %228 = vector.multi_reduction <maximumf>, %227, %cst_86 [1] : vector<8x8xf32> to vector<8xf32>
    %229 = vector.shape_cast %228 : vector<8xf32> to vector<8x1xf32>
    %230 = vector.broadcast %229 : vector<8x1xf32> to vector<8x8xf32>
    %231 = arith.subf %227, %230 : vector<8x8xf32>
    %232 = math.exp %231 : vector<8x8xf32>
    %cst_87 = arith.constant dense<0.000000e+00> : vector<8xf32>
    %233 = vector.multi_reduction <add>, %232, %cst_87 [1] : vector<8x8xf32> to vector<8xf32>
    %234 = vector.shape_cast %233 : vector<8xf32> to vector<8x1xf32>
    %235 = tpu.reciprocal %234 {approx = true} : vector<8x1xf32> -> vector<8x1xf32>
    %236 = vector.broadcast %235 : vector<8x1xf32> to vector<8x8xf32>
    %237 = arith.mulf %232, %236 : vector<8x8xf32>
    %cst_88 = arith.constant dense<0.000000e+00> : vector<8x8xf32>
    %238 = tpu.matmul %237, %222, %cst_88 {dimension_numbers = #tpu.dot_dimension_numbers<[1], [0], [0], [1], [0, 0, 1, 1], [], []>} : vector<8x8xf32>, vector<8x8xf32>, vector<8x8xf32> -> vector<8x8xf32>
    %239 = vector.extract_strided_slice %179 {offsets = [0, 24], sizes = [8, 8], strides = [1, 1]} : vector<8x32xf32> to vector<8x8xf32>
    %240 = vector.extract_strided_slice %180 {offsets = [0, 24], sizes = [8, 8], strides = [1, 1]} : vector<8x32xf32> to vector<8x8xf32>
    %241 = vector.extract_strided_slice %181 {offsets = [0, 24], sizes = [8, 8], strides = [1, 1]} : vector<8x32xf32> to vector<8x8xf32>
    %242 = tpu.transpose %240, [1, 0] : vector<8x8xf32> -> vector<8x8xf32>
    %cst_89 = arith.constant dense<0.000000e+00> : vector<8x8xf32>
    %243 = tpu.matmul %239, %242, %cst_89 {dimension_numbers = #tpu.dot_dimension_numbers<[1], [0], [0], [1], [0, 0, 1, 1], [], []>} : vector<8x8xf32>, vector<8x8xf32>, vector<8x8xf32> -> vector<8x8xf32>
    %cst_90 = arith.constant 0.353553385 : f32
    %244 = vector.broadcast %cst_90 : f32 to vector<8x8xf32>
    %245 = arith.mulf %243, %244 : vector<8x8xf32>
    %246 = arith.addf %245, %5 : vector<8x8xf32>
    %cst_91 = arith.constant dense<0xFF800000> : vector<8xf32>
    %247 = vector.multi_reduction <maximumf>, %246, %cst_91 [1] : vector<8x8xf32> to vector<8xf32>
    %248 = vector.shape_cast %247 : vector<8xf32> to vector<8x1xf32>
    %249 = vector.broadcast %248 : vector<8x1xf32> to vector<8x8xf32>
    %250 = arith.subf %246, %249 : vector<8x8xf32>
    %251 = math.exp %250 : vector<8x8xf32>
    %cst_92 = arith.constant dense<0.000000e+00> : vector<8xf32>
    %252 = vector.multi_reduction <add>, %251, %cst_92 [1] : vector<8x8xf32> to vector<8xf32>
    %253 = vector.shape_cast %252 : vector<8xf32> to vector<8x1xf32>
    %254 = tpu.reciprocal %253 {approx = true} : vector<8x1xf32> -> vector<8x1xf32>
    %255 = vector.broadcast %254 : vector<8x1xf32> to vector<8x8xf32>
    %256 = arith.mulf %251, %255 : vector<8x8xf32>
    %cst_93 = arith.constant dense<0.000000e+00> : vector<8x8xf32>
    %257 = tpu.matmul %256, %241, %cst_93 {dimension_numbers = #tpu.dot_dimension_numbers<[1], [0], [0], [1], [0, 0, 1, 1], [], []>} : vector<8x8xf32>, vector<8x8xf32>, vector<8x8xf32> -> vector<8x8xf32>
    %258 = tpu.concatenate %200, %219, %238, %257 in 1 : vector<8x8xf32>, vector<8x8xf32>, vector<8x8xf32>, vector<8x8xf32> -> vector<8x32xf32>
    %c1_94 = arith.constant 1 : index
    %c0_95 = arith.constant 0 : index
    %c0_96 = arith.constant 0 : index
    %259 = vector.load %arg5[%c1_94, %c0_95, %c0_96] : memref<2x32x32xf32, #tpu.memory_space<vmem>>, vector<1x32x32xf32>
    %260 = vector.shape_cast %259 : vector<1x32x32xf32> to vector<32x32xf32>
    %c1_97 = arith.constant 1 : index
    %c0_98 = arith.constant 0 : index
    %c0_99 = arith.constant 0 : index
    %261 = vector.load %arg6[%c1_97, %c0_98, %c0_99] : memref<2x1x32xf32, #tpu.memory_space<vmem>>, vector<1x1x32xf32>
    %262 = vector.shape_cast %261 : vector<1x1x32xf32> to vector<1x32xf32>
    %cst_100 = arith.constant dense<0.000000e+00> : vector<8x32xf32>
    %263 = tpu.matmul %258, %260, %cst_100 {dimension_numbers = #tpu.dot_dimension_numbers<[1], [0], [0], [1], [0, 0, 1, 1], [], []>} : vector<8x32xf32>, vector<32x32xf32>, vector<8x32xf32> -> vector<8x32xf32>
    %264 = vector.broadcast %262 : vector<1x32xf32> to vector<8x32xf32>
    %265 = arith.addf %263, %264 : vector<8x32xf32>
    %266 = arith.addf %169, %265 : vector<8x32xf32>
    %267 = vector.extract_strided_slice %171 {offsets = [0, 0], sizes = [1, 32], strides = [1, 1]} : vector<4x32xf32> to vector<1x32xf32>
    %268 = vector.extract_strided_slice %171 {offsets = [1, 0], sizes = [1, 32], strides = [1, 1]} : vector<4x32xf32> to vector<1x32xf32>
    %cst_101 = arith.constant dense<0.000000e+00> : vector<8xf32>
    %269 = vector.multi_reduction <add>, %266, %cst_101 [1] : vector<8x32xf32> to vector<8xf32>
    %270 = vector.shape_cast %269 : vector<8xf32> to vector<8x1xf32>
    %cst_102 = arith.constant 3.200000e+01 : f32
    %271 = vector.broadcast %cst_102 : f32 to vector<8x1xf32>
    %272 = arith.divf %270, %271 : vector<8x1xf32>
    %273 = vector.broadcast %272 : vector<8x1xf32> to vector<8x32xf32>
    %274 = arith.subf %266, %273 : vector<8x32xf32>
    %275 = arith.mulf %274, %274 : vector<8x32xf32>
    %cst_103 = arith.constant dense<0.000000e+00> : vector<8xf32>
    %276 = vector.multi_reduction <add>, %275, %cst_103 [1] : vector<8x32xf32> to vector<8xf32>
    %277 = vector.shape_cast %276 : vector<8xf32> to vector<8x1xf32>
    %cst_104 = arith.constant 3.200000e+01 : f32
    %278 = vector.broadcast %cst_104 : f32 to vector<8x1xf32>
    %279 = arith.divf %277, %278 : vector<8x1xf32>
    %280 = vector.broadcast %272 : vector<8x1xf32> to vector<8x32xf32>
    %281 = arith.subf %266, %280 : vector<8x32xf32>
    %cst_105 = arith.constant 9.99999974E-6 : f32
    %282 = vector.broadcast %cst_105 : f32 to vector<8x1xf32>
    %283 = arith.addf %279, %282 : vector<8x1xf32>
    %284 = math.rsqrt %283 : vector<8x1xf32>
    %285 = vector.broadcast %284 : vector<8x1xf32> to vector<8x32xf32>
    %286 = arith.mulf %281, %285 : vector<8x32xf32>
    %287 = vector.broadcast %267 : vector<1x32xf32> to vector<8x32xf32>
    %288 = arith.mulf %286, %287 : vector<8x32xf32>
    %289 = vector.broadcast %268 : vector<1x32xf32> to vector<8x32xf32>
    %290 = arith.addf %288, %289 : vector<8x32xf32>
    %c1_106 = arith.constant 1 : index
    %c0_107 = arith.constant 0 : index
    %c0_108 = arith.constant 0 : index
    %291 = vector.load %arg7[%c1_106, %c0_107, %c0_108] : memref<2x32x64xf32, #tpu.memory_space<vmem>>, vector<1x32x64xf32>
    %292 = vector.shape_cast %291 : vector<1x32x64xf32> to vector<32x64xf32>
    %c1_109 = arith.constant 1 : index
    %c0_110 = arith.constant 0 : index
    %c0_111 = arith.constant 0 : index
    %293 = vector.load %arg8[%c1_109, %c0_110, %c0_111] : memref<2x1x64xf32, #tpu.memory_space<vmem>>, vector<1x1x64xf32>
    %294 = vector.shape_cast %293 : vector<1x1x64xf32> to vector<1x64xf32>
    %cst_112 = arith.constant dense<0.000000e+00> : vector<8x64xf32>
    %295 = tpu.matmul %290, %292, %cst_112 {dimension_numbers = #tpu.dot_dimension_numbers<[1], [0], [0], [1], [0, 0, 1, 1], [], []>} : vector<8x32xf32>, vector<32x64xf32>, vector<8x64xf32> -> vector<8x64xf32>
    %296 = vector.broadcast %294 : vector<1x64xf32> to vector<8x64xf32>
    %297 = arith.addf %295, %296 : vector<8x64xf32>
    %cst_113 = arith.constant 0.000000e+00 : f32
    %298 = vector.broadcast %cst_113 : f32 to vector<8x64xf32>
    %299 = arith.maximumf %297, %298 : vector<8x64xf32>
    %c1_114 = arith.constant 1 : index
    %c0_115 = arith.constant 0 : index
    %c0_116 = arith.constant 0 : index
    %300 = vector.load %arg9[%c1_114, %c0_115, %c0_116] : memref<2x64x32xf32, #tpu.memory_space<vmem>>, vector<1x64x32xf32>
    %301 = vector.shape_cast %300 : vector<1x64x32xf32> to vector<64x32xf32>
    %c1_117 = arith.constant 1 : index
    %c0_118 = arith.constant 0 : index
    %c0_119 = arith.constant 0 : index
    %302 = vector.load %arg10[%c1_117, %c0_118, %c0_119] : memref<2x1x32xf32, #tpu.memory_space<vmem>>, vector<1x1x32xf32>
    %303 = vector.shape_cast %302 : vector<1x1x32xf32> to vector<1x32xf32>
    %cst_120 = arith.constant dense<0.000000e+00> : vector<8x32xf32>
    %304 = tpu.matmul %299, %301, %cst_120 {dimension_numbers = #tpu.dot_dimension_numbers<[1], [0], [0], [1], [0, 0, 1, 1], [], []>} : vector<8x64xf32>, vector<64x32xf32>, vector<8x32xf32> -> vector<8x32xf32>
    %305 = vector.broadcast %303 : vector<1x32xf32> to vector<8x32xf32>
    %306 = arith.addf %304, %305 : vector<8x32xf32>
    %307 = arith.addf %290, %306 : vector<8x32xf32>
    %308 = vector.extract_strided_slice %171 {offsets = [2, 0], sizes = [1, 32], strides = [1, 1]} : vector<4x32xf32> to vector<1x32xf32>
    %309 = vector.extract_strided_slice %171 {offsets = [3, 0], sizes = [1, 32], strides = [1, 1]} : vector<4x32xf32> to vector<1x32xf32>
    %cst_121 = arith.constant dense<0.000000e+00> : vector<8xf32>
    %310 = vector.multi_reduction <add>, %307, %cst_121 [1] : vector<8x32xf32> to vector<8xf32>
    %311 = vector.shape_cast %310 : vector<8xf32> to vector<8x1xf32>
    %cst_122 = arith.constant 3.200000e+01 : f32
    %312 = vector.broadcast %cst_122 : f32 to vector<8x1xf32>
    %313 = arith.divf %311, %312 : vector<8x1xf32>
    %314 = vector.broadcast %313 : vector<8x1xf32> to vector<8x32xf32>
    %315 = arith.subf %307, %314 : vector<8x32xf32>
    %316 = arith.mulf %315, %315 : vector<8x32xf32>
    %cst_123 = arith.constant dense<0.000000e+00> : vector<8xf32>
    %317 = vector.multi_reduction <add>, %316, %cst_123 [1] : vector<8x32xf32> to vector<8xf32>
    %318 = vector.shape_cast %317 : vector<8xf32> to vector<8x1xf32>
    %cst_124 = arith.constant 3.200000e+01 : f32
    %319 = vector.broadcast %cst_124 : f32 to vector<8x1xf32>
    %320 = arith.divf %318, %319 : vector<8x1xf32>
    %321 = vector.broadcast %313 : vector<8x1xf32> to vector<8x32xf32>
    %322 = arith.subf %307, %321 : vector<8x32xf32>
    %cst_125 = arith.constant 9.99999974E-6 : f32
    %323 = vector.broadcast %cst_125 : f32 to vector<8x1xf32>
    %324 = arith.addf %320, %323 : vector<8x1xf32>
    %325 = math.rsqrt %324 : vector<8x1xf32>
    %326 = vector.broadcast %325 : vector<8x1xf32> to vector<8x32xf32>
    %327 = arith.mulf %322, %326 : vector<8x32xf32>
    %328 = vector.broadcast %308 : vector<1x32xf32> to vector<8x32xf32>
    %329 = arith.mulf %327, %328 : vector<8x32xf32>
    %330 = vector.broadcast %309 : vector<1x32xf32> to vector<8x32xf32>
    %331 = arith.addf %329, %330 : vector<8x32xf32>
    %c0_126 = arith.constant 0 : index
    %c0_127 = arith.constant 0 : index
    %c0_128 = arith.constant 0 : index
    %332 = vector.load %arg2[%c0_126, %c0_127, %c0_128] : memref<1x8x32xf32, #tpu.memory_space<vmem>>, vector<1x8x32xf32>
    %333 = vector.shape_cast %332 : vector<1x8x32xf32> to vector<8x32xf32>
    %c0_129 = arith.constant 0 : index
    %c0_130 = arith.constant 0 : index
    %c0_131 = arith.constant 0 : index
    %334 = vector.load %arg26[%c0_129, %c0_130, %c0_131] : memref<2x6x32xf32, #tpu.memory_space<vmem>>, vector<1x6x32xf32>
    %335 = vector.shape_cast %334 : vector<1x6x32xf32> to vector<6x32xf32>
    %c0_132 = arith.constant 0 : index
    %c0_133 = arith.constant 0 : index
    %c0_134 = arith.constant 0 : index
    %336 = vector.load %arg12[%c0_132, %c0_133, %c0_134] : memref<2x32x96xf32, #tpu.memory_space<vmem>>, vector<1x32x96xf32>
    %337 = vector.shape_cast %336 : vector<1x32x96xf32> to vector<32x96xf32>
    %c0_135 = arith.constant 0 : index
    %c0_136 = arith.constant 0 : index
    %c0_137 = arith.constant 0 : index
    %338 = vector.load %arg13[%c0_135, %c0_136, %c0_137] : memref<2x1x96xf32, #tpu.memory_space<vmem>>, vector<1x1x96xf32>
    %339 = vector.shape_cast %338 : vector<1x1x96xf32> to vector<1x96xf32>
    %cst_138 = arith.constant dense<0.000000e+00> : vector<8x96xf32>
    %340 = tpu.matmul %333, %337, %cst_138 {dimension_numbers = #tpu.dot_dimension_numbers<[1], [0], [0], [1], [0, 0, 1, 1], [], []>} : vector<8x32xf32>, vector<32x96xf32>, vector<8x96xf32> -> vector<8x96xf32>
    %341 = vector.broadcast %339 : vector<1x96xf32> to vector<8x96xf32>
    %342 = arith.addf %340, %341 : vector<8x96xf32>
    %343 = vector.extract_strided_slice %342 {offsets = [0, 0], sizes = [8, 32], strides = [1, 1]} : vector<8x96xf32> to vector<8x32xf32>
    %344 = vector.extract_strided_slice %342 {offsets = [0, 32], sizes = [8, 32], strides = [1, 1]} : vector<8x96xf32> to vector<8x32xf32>
    %345 = vector.extract_strided_slice %342 {offsets = [0, 64], sizes = [8, 32], strides = [1, 1]} : vector<8x96xf32> to vector<8x32xf32>
    %346 = vector.extract_strided_slice %343 {offsets = [0, 0], sizes = [8, 8], strides = [1, 1]} : vector<8x32xf32> to vector<8x8xf32>
    %347 = vector.extract_strided_slice %344 {offsets = [0, 0], sizes = [8, 8], strides = [1, 1]} : vector<8x32xf32> to vector<8x8xf32>
    %348 = vector.extract_strided_slice %345 {offsets = [0, 0], sizes = [8, 8], strides = [1, 1]} : vector<8x32xf32> to vector<8x8xf32>
    %349 = tpu.transpose %347, [1, 0] : vector<8x8xf32> -> vector<8x8xf32>
    %cst_139 = arith.constant dense<0.000000e+00> : vector<8x8xf32>
    %350 = tpu.matmul %346, %349, %cst_139 {dimension_numbers = #tpu.dot_dimension_numbers<[1], [0], [0], [1], [0, 0, 1, 1], [], []>} : vector<8x8xf32>, vector<8x8xf32>, vector<8x8xf32> -> vector<8x8xf32>
    %cst_140 = arith.constant 0.353553385 : f32
    %351 = vector.broadcast %cst_140 : f32 to vector<8x8xf32>
    %352 = arith.mulf %350, %351 : vector<8x8xf32>
    %353 = arith.addf %352, %5 : vector<8x8xf32>
    %cst_141 = arith.constant dense<0xFF800000> : vector<8xf32>
    %354 = vector.multi_reduction <maximumf>, %353, %cst_141 [1] : vector<8x8xf32> to vector<8xf32>
    %355 = vector.shape_cast %354 : vector<8xf32> to vector<8x1xf32>
    %356 = vector.broadcast %355 : vector<8x1xf32> to vector<8x8xf32>
    %357 = arith.subf %353, %356 : vector<8x8xf32>
    %358 = math.exp %357 : vector<8x8xf32>
    %cst_142 = arith.constant dense<0.000000e+00> : vector<8xf32>
    %359 = vector.multi_reduction <add>, %358, %cst_142 [1] : vector<8x8xf32> to vector<8xf32>
    %360 = vector.shape_cast %359 : vector<8xf32> to vector<8x1xf32>
    %361 = tpu.reciprocal %360 {approx = true} : vector<8x1xf32> -> vector<8x1xf32>
    %362 = vector.broadcast %361 : vector<8x1xf32> to vector<8x8xf32>
    %363 = arith.mulf %358, %362 : vector<8x8xf32>
    %cst_143 = arith.constant dense<0.000000e+00> : vector<8x8xf32>
    %364 = tpu.matmul %363, %348, %cst_143 {dimension_numbers = #tpu.dot_dimension_numbers<[1], [0], [0], [1], [0, 0, 1, 1], [], []>} : vector<8x8xf32>, vector<8x8xf32>, vector<8x8xf32> -> vector<8x8xf32>
    %365 = vector.extract_strided_slice %343 {offsets = [0, 8], sizes = [8, 8], strides = [1, 1]} : vector<8x32xf32> to vector<8x8xf32>
    %366 = vector.extract_strided_slice %344 {offsets = [0, 8], sizes = [8, 8], strides = [1, 1]} : vector<8x32xf32> to vector<8x8xf32>
    %367 = vector.extract_strided_slice %345 {offsets = [0, 8], sizes = [8, 8], strides = [1, 1]} : vector<8x32xf32> to vector<8x8xf32>
    %368 = tpu.transpose %366, [1, 0] : vector<8x8xf32> -> vector<8x8xf32>
    %cst_144 = arith.constant dense<0.000000e+00> : vector<8x8xf32>
    %369 = tpu.matmul %365, %368, %cst_144 {dimension_numbers = #tpu.dot_dimension_numbers<[1], [0], [0], [1], [0, 0, 1, 1], [], []>} : vector<8x8xf32>, vector<8x8xf32>, vector<8x8xf32> -> vector<8x8xf32>
    %cst_145 = arith.constant 0.353553385 : f32
    %370 = vector.broadcast %cst_145 : f32 to vector<8x8xf32>
    %371 = arith.mulf %369, %370 : vector<8x8xf32>
    %372 = arith.addf %371, %5 : vector<8x8xf32>
    %cst_146 = arith.constant dense<0xFF800000> : vector<8xf32>
    %373 = vector.multi_reduction <maximumf>, %372, %cst_146 [1] : vector<8x8xf32> to vector<8xf32>
    %374 = vector.shape_cast %373 : vector<8xf32> to vector<8x1xf32>
    %375 = vector.broadcast %374 : vector<8x1xf32> to vector<8x8xf32>
    %376 = arith.subf %372, %375 : vector<8x8xf32>
    %377 = math.exp %376 : vector<8x8xf32>
    %cst_147 = arith.constant dense<0.000000e+00> : vector<8xf32>
    %378 = vector.multi_reduction <add>, %377, %cst_147 [1] : vector<8x8xf32> to vector<8xf32>
    %379 = vector.shape_cast %378 : vector<8xf32> to vector<8x1xf32>
    %380 = tpu.reciprocal %379 {approx = true} : vector<8x1xf32> -> vector<8x1xf32>
    %381 = vector.broadcast %380 : vector<8x1xf32> to vector<8x8xf32>
    %382 = arith.mulf %377, %381 : vector<8x8xf32>
    %cst_148 = arith.constant dense<0.000000e+00> : vector<8x8xf32>
    %383 = tpu.matmul %382, %367, %cst_148 {dimension_numbers = #tpu.dot_dimension_numbers<[1], [0], [0], [1], [0, 0, 1, 1], [], []>} : vector<8x8xf32>, vector<8x8xf32>, vector<8x8xf32> -> vector<8x8xf32>
    %384 = vector.extract_strided_slice %343 {offsets = [0, 16], sizes = [8, 8], strides = [1, 1]} : vector<8x32xf32> to vector<8x8xf32>
    %385 = vector.extract_strided_slice %344 {offsets = [0, 16], sizes = [8, 8], strides = [1, 1]} : vector<8x32xf32> to vector<8x8xf32>
    %386 = vector.extract_strided_slice %345 {offsets = [0, 16], sizes = [8, 8], strides = [1, 1]} : vector<8x32xf32> to vector<8x8xf32>
    %387 = tpu.transpose %385, [1, 0] : vector<8x8xf32> -> vector<8x8xf32>
    %cst_149 = arith.constant dense<0.000000e+00> : vector<8x8xf32>
    %388 = tpu.matmul %384, %387, %cst_149 {dimension_numbers = #tpu.dot_dimension_numbers<[1], [0], [0], [1], [0, 0, 1, 1], [], []>} : vector<8x8xf32>, vector<8x8xf32>, vector<8x8xf32> -> vector<8x8xf32>
    %cst_150 = arith.constant 0.353553385 : f32
    %389 = vector.broadcast %cst_150 : f32 to vector<8x8xf32>
    %390 = arith.mulf %388, %389 : vector<8x8xf32>
    %391 = arith.addf %390, %5 : vector<8x8xf32>
    %cst_151 = arith.constant dense<0xFF800000> : vector<8xf32>
    %392 = vector.multi_reduction <maximumf>, %391, %cst_151 [1] : vector<8x8xf32> to vector<8xf32>
    %393 = vector.shape_cast %392 : vector<8xf32> to vector<8x1xf32>
    %394 = vector.broadcast %393 : vector<8x1xf32> to vector<8x8xf32>
    %395 = arith.subf %391, %394 : vector<8x8xf32>
    %396 = math.exp %395 : vector<8x8xf32>
    %cst_152 = arith.constant dense<0.000000e+00> : vector<8xf32>
    %397 = vector.multi_reduction <add>, %396, %cst_152 [1] : vector<8x8xf32> to vector<8xf32>
    %398 = vector.shape_cast %397 : vector<8xf32> to vector<8x1xf32>
    %399 = tpu.reciprocal %398 {approx = true} : vector<8x1xf32> -> vector<8x1xf32>
    %400 = vector.broadcast %399 : vector<8x1xf32> to vector<8x8xf32>
    %401 = arith.mulf %396, %400 : vector<8x8xf32>
    %cst_153 = arith.constant dense<0.000000e+00> : vector<8x8xf32>
    %402 = tpu.matmul %401, %386, %cst_153 {dimension_numbers = #tpu.dot_dimension_numbers<[1], [0], [0], [1], [0, 0, 1, 1], [], []>} : vector<8x8xf32>, vector<8x8xf32>, vector<8x8xf32> -> vector<8x8xf32>
    %403 = vector.extract_strided_slice %343 {offsets = [0, 24], sizes = [8, 8], strides = [1, 1]} : vector<8x32xf32> to vector<8x8xf32>
    %404 = vector.extract_strided_slice %344 {offsets = [0, 24], sizes = [8, 8], strides = [1, 1]} : vector<8x32xf32> to vector<8x8xf32>
    %405 = vector.extract_strided_slice %345 {offsets = [0, 24], sizes = [8, 8], strides = [1, 1]} : vector<8x32xf32> to vector<8x8xf32>
    %406 = tpu.transpose %404, [1, 0] : vector<8x8xf32> -> vector<8x8xf32>
    %cst_154 = arith.constant dense<0.000000e+00> : vector<8x8xf32>
    %407 = tpu.matmul %403, %406, %cst_154 {dimension_numbers = #tpu.dot_dimension_numbers<[1], [0], [0], [1], [0, 0, 1, 1], [], []>} : vector<8x8xf32>, vector<8x8xf32>, vector<8x8xf32> -> vector<8x8xf32>
    %cst_155 = arith.constant 0.353553385 : f32
    %408 = vector.broadcast %cst_155 : f32 to vector<8x8xf32>
    %409 = arith.mulf %407, %408 : vector<8x8xf32>
    %410 = arith.addf %409, %5 : vector<8x8xf32>
    %cst_156 = arith.constant dense<0xFF800000> : vector<8xf32>
    %411 = vector.multi_reduction <maximumf>, %410, %cst_156 [1] : vector<8x8xf32> to vector<8xf32>
    %412 = vector.shape_cast %411 : vector<8xf32> to vector<8x1xf32>
    %413 = vector.broadcast %412 : vector<8x1xf32> to vector<8x8xf32>
    %414 = arith.subf %410, %413 : vector<8x8xf32>
    %415 = math.exp %414 : vector<8x8xf32>
    %cst_157 = arith.constant dense<0.000000e+00> : vector<8xf32>
    %416 = vector.multi_reduction <add>, %415, %cst_157 [1] : vector<8x8xf32> to vector<8xf32>
    %417 = vector.shape_cast %416 : vector<8xf32> to vector<8x1xf32>
    %418 = tpu.reciprocal %417 {approx = true} : vector<8x1xf32> -> vector<8x1xf32>
    %419 = vector.broadcast %418 : vector<8x1xf32> to vector<8x8xf32>
    %420 = arith.mulf %415, %419 : vector<8x8xf32>
    %cst_158 = arith.constant dense<0.000000e+00> : vector<8x8xf32>
    %421 = tpu.matmul %420, %405, %cst_158 {dimension_numbers = #tpu.dot_dimension_numbers<[1], [0], [0], [1], [0, 0, 1, 1], [], []>} : vector<8x8xf32>, vector<8x8xf32>, vector<8x8xf32> -> vector<8x8xf32>
    %422 = tpu.concatenate %364, %383, %402, %421 in 1 : vector<8x8xf32>, vector<8x8xf32>, vector<8x8xf32>, vector<8x8xf32> -> vector<8x32xf32>
    %c0_159 = arith.constant 0 : index
    %c0_160 = arith.constant 0 : index
    %c0_161 = arith.constant 0 : index
    %423 = vector.load %arg14[%c0_159, %c0_160, %c0_161] : memref<2x32x32xf32, #tpu.memory_space<vmem>>, vector<1x32x32xf32>
    %424 = vector.shape_cast %423 : vector<1x32x32xf32> to vector<32x32xf32>
    %c0_162 = arith.constant 0 : index
    %c0_163 = arith.constant 0 : index
    %c0_164 = arith.constant 0 : index
    %425 = vector.load %arg15[%c0_162, %c0_163, %c0_164] : memref<2x1x32xf32, #tpu.memory_space<vmem>>, vector<1x1x32xf32>
    %426 = vector.shape_cast %425 : vector<1x1x32xf32> to vector<1x32xf32>
    %cst_165 = arith.constant dense<0.000000e+00> : vector<8x32xf32>
    %427 = tpu.matmul %422, %424, %cst_165 {dimension_numbers = #tpu.dot_dimension_numbers<[1], [0], [0], [1], [0, 0, 1, 1], [], []>} : vector<8x32xf32>, vector<32x32xf32>, vector<8x32xf32> -> vector<8x32xf32>
    %428 = vector.broadcast %426 : vector<1x32xf32> to vector<8x32xf32>
    %429 = arith.addf %427, %428 : vector<8x32xf32>
    %430 = arith.addf %333, %429 : vector<8x32xf32>
    %431 = vector.extract_strided_slice %335 {offsets = [0, 0], sizes = [1, 32], strides = [1, 1]} : vector<6x32xf32> to vector<1x32xf32>
    %432 = vector.extract_strided_slice %335 {offsets = [1, 0], sizes = [1, 32], strides = [1, 1]} : vector<6x32xf32> to vector<1x32xf32>
    %cst_166 = arith.constant dense<0.000000e+00> : vector<8xf32>
    %433 = vector.multi_reduction <add>, %430, %cst_166 [1] : vector<8x32xf32> to vector<8xf32>
    %434 = vector.shape_cast %433 : vector<8xf32> to vector<8x1xf32>
    %cst_167 = arith.constant 3.200000e+01 : f32
    %435 = vector.broadcast %cst_167 : f32 to vector<8x1xf32>
    %436 = arith.divf %434, %435 : vector<8x1xf32>
    %437 = vector.broadcast %436 : vector<8x1xf32> to vector<8x32xf32>
    %438 = arith.subf %430, %437 : vector<8x32xf32>
    %439 = arith.mulf %438, %438 : vector<8x32xf32>
    %cst_168 = arith.constant dense<0.000000e+00> : vector<8xf32>
    %440 = vector.multi_reduction <add>, %439, %cst_168 [1] : vector<8x32xf32> to vector<8xf32>
    %441 = vector.shape_cast %440 : vector<8xf32> to vector<8x1xf32>
    %cst_169 = arith.constant 3.200000e+01 : f32
    %442 = vector.broadcast %cst_169 : f32 to vector<8x1xf32>
    %443 = arith.divf %441, %442 : vector<8x1xf32>
    %444 = vector.broadcast %436 : vector<8x1xf32> to vector<8x32xf32>
    %445 = arith.subf %430, %444 : vector<8x32xf32>
    %cst_170 = arith.constant 9.99999974E-6 : f32
    %446 = vector.broadcast %cst_170 : f32 to vector<8x1xf32>
    %447 = arith.addf %443, %446 : vector<8x1xf32>
    %448 = math.rsqrt %447 : vector<8x1xf32>
    %449 = vector.broadcast %448 : vector<8x1xf32> to vector<8x32xf32>
    %450 = arith.mulf %445, %449 : vector<8x32xf32>
    %451 = vector.broadcast %431 : vector<1x32xf32> to vector<8x32xf32>
    %452 = arith.mulf %450, %451 : vector<8x32xf32>
    %453 = vector.broadcast %432 : vector<1x32xf32> to vector<8x32xf32>
    %454 = arith.addf %452, %453 : vector<8x32xf32>
    %c0_171 = arith.constant 0 : index
    %c0_172 = arith.constant 0 : index
    %c0_173 = arith.constant 0 : index
    %455 = vector.load %arg16[%c0_171, %c0_172, %c0_173] : memref<2x32x32xf32, #tpu.memory_space<vmem>>, vector<1x32x32xf32>
    %456 = vector.shape_cast %455 : vector<1x32x32xf32> to vector<32x32xf32>
    %c0_174 = arith.constant 0 : index
    %c0_175 = arith.constant 0 : index
    %c0_176 = arith.constant 0 : index
    %457 = vector.load %arg17[%c0_174, %c0_175, %c0_176] : memref<2x1x32xf32, #tpu.memory_space<vmem>>, vector<1x1x32xf32>
    %458 = vector.shape_cast %457 : vector<1x1x32xf32> to vector<1x32xf32>
    %cst_177 = arith.constant dense<0.000000e+00> : vector<8x32xf32>
    %459 = tpu.matmul %454, %456, %cst_177 {dimension_numbers = #tpu.dot_dimension_numbers<[1], [0], [0], [1], [0, 0, 1, 1], [], []>} : vector<8x32xf32>, vector<32x32xf32>, vector<8x32xf32> -> vector<8x32xf32>
    %460 = vector.broadcast %458 : vector<1x32xf32> to vector<8x32xf32>
    %461 = arith.addf %459, %460 : vector<8x32xf32>
    %c0_178 = arith.constant 0 : index
    %c0_179 = arith.constant 0 : index
    %c0_180 = arith.constant 0 : index
    %462 = vector.load %arg18[%c0_178, %c0_179, %c0_180] : memref<2x32x64xf32, #tpu.memory_space<vmem>>, vector<1x32x64xf32>
    %463 = vector.shape_cast %462 : vector<1x32x64xf32> to vector<32x64xf32>
    %c0_181 = arith.constant 0 : index
    %c0_182 = arith.constant 0 : index
    %c0_183 = arith.constant 0 : index
    %464 = vector.load %arg19[%c0_181, %c0_182, %c0_183] : memref<2x1x64xf32, #tpu.memory_space<vmem>>, vector<1x1x64xf32>
    %465 = vector.shape_cast %464 : vector<1x1x64xf32> to vector<1x64xf32>
    %cst_184 = arith.constant dense<0.000000e+00> : vector<8x64xf32>
    %466 = tpu.matmul %331, %463, %cst_184 {dimension_numbers = #tpu.dot_dimension_numbers<[1], [0], [0], [1], [0, 0, 1, 1], [], []>} : vector<8x32xf32>, vector<32x64xf32>, vector<8x64xf32> -> vector<8x64xf32>
    %467 = vector.broadcast %465 : vector<1x64xf32> to vector<8x64xf32>
    %468 = arith.addf %466, %467 : vector<8x64xf32>
    %469 = vector.extract_strided_slice %468 {offsets = [0, 0], sizes = [8, 32], strides = [1, 1]} : vector<8x64xf32> to vector<8x32xf32>
    %470 = vector.extract_strided_slice %468 {offsets = [0, 32], sizes = [8, 32], strides = [1, 1]} : vector<8x64xf32> to vector<8x32xf32>
    %471 = vector.extract_strided_slice %461 {offsets = [0, 0], sizes = [8, 8], strides = [1, 1]} : vector<8x32xf32> to vector<8x8xf32>
    %472 = vector.extract_strided_slice %469 {offsets = [0, 0], sizes = [8, 8], strides = [1, 1]} : vector<8x32xf32> to vector<8x8xf32>
    %473 = vector.extract_strided_slice %470 {offsets = [0, 0], sizes = [8, 8], strides = [1, 1]} : vector<8x32xf32> to vector<8x8xf32>
    %474 = tpu.transpose %472, [1, 0] : vector<8x8xf32> -> vector<8x8xf32>
    %cst_185 = arith.constant dense<0.000000e+00> : vector<8x8xf32>
    %475 = tpu.matmul %471, %474, %cst_185 {dimension_numbers = #tpu.dot_dimension_numbers<[1], [0], [0], [1], [0, 0, 1, 1], [], []>} : vector<8x8xf32>, vector<8x8xf32>, vector<8x8xf32> -> vector<8x8xf32>
    %cst_186 = arith.constant 0.353553385 : f32
    %476 = vector.broadcast %cst_186 : f32 to vector<8x8xf32>
    %477 = arith.mulf %475, %476 : vector<8x8xf32>
    %478 = arith.addf %477, %5 : vector<8x8xf32>
    %cst_187 = arith.constant dense<0xFF800000> : vector<8xf32>
    %479 = vector.multi_reduction <maximumf>, %478, %cst_187 [1] : vector<8x8xf32> to vector<8xf32>
    %480 = vector.shape_cast %479 : vector<8xf32> to vector<8x1xf32>
    %481 = vector.broadcast %480 : vector<8x1xf32> to vector<8x8xf32>
    %482 = arith.subf %478, %481 : vector<8x8xf32>
    %483 = math.exp %482 : vector<8x8xf32>
    %cst_188 = arith.constant dense<0.000000e+00> : vector<8xf32>
    %484 = vector.multi_reduction <add>, %483, %cst_188 [1] : vector<8x8xf32> to vector<8xf32>
    %485 = vector.shape_cast %484 : vector<8xf32> to vector<8x1xf32>
    %486 = tpu.reciprocal %485 {approx = true} : vector<8x1xf32> -> vector<8x1xf32>
    %487 = vector.broadcast %486 : vector<8x1xf32> to vector<8x8xf32>
    %488 = arith.mulf %483, %487 : vector<8x8xf32>
    %cst_189 = arith.constant dense<0.000000e+00> : vector<8x8xf32>
    %489 = tpu.matmul %488, %473, %cst_189 {dimension_numbers = #tpu.dot_dimension_numbers<[1], [0], [0], [1], [0, 0, 1, 1], [], []>} : vector<8x8xf32>, vector<8x8xf32>, vector<8x8xf32> -> vector<8x8xf32>
    %490 = vector.extract_strided_slice %461 {offsets = [0, 8], sizes = [8, 8], strides = [1, 1]} : vector<8x32xf32> to vector<8x8xf32>
    %491 = vector.extract_strided_slice %469 {offsets = [0, 8], sizes = [8, 8], strides = [1, 1]} : vector<8x32xf32> to vector<8x8xf32>
    %492 = vector.extract_strided_slice %470 {offsets = [0, 8], sizes = [8, 8], strides = [1, 1]} : vector<8x32xf32> to vector<8x8xf32>
    %493 = tpu.transpose %491, [1, 0] : vector<8x8xf32> -> vector<8x8xf32>
    %cst_190 = arith.constant dense<0.000000e+00> : vector<8x8xf32>
    %494 = tpu.matmul %490, %493, %cst_190 {dimension_numbers = #tpu.dot_dimension_numbers<[1], [0], [0], [1], [0, 0, 1, 1], [], []>} : vector<8x8xf32>, vector<8x8xf32>, vector<8x8xf32> -> vector<8x8xf32>
    %cst_191 = arith.constant 0.353553385 : f32
    %495 = vector.broadcast %cst_191 : f32 to vector<8x8xf32>
    %496 = arith.mulf %494, %495 : vector<8x8xf32>
    %497 = arith.addf %496, %5 : vector<8x8xf32>
    %cst_192 = arith.constant dense<0xFF800000> : vector<8xf32>
    %498 = vector.multi_reduction <maximumf>, %497, %cst_192 [1] : vector<8x8xf32> to vector<8xf32>
    %499 = vector.shape_cast %498 : vector<8xf32> to vector<8x1xf32>
    %500 = vector.broadcast %499 : vector<8x1xf32> to vector<8x8xf32>
    %501 = arith.subf %497, %500 : vector<8x8xf32>
    %502 = math.exp %501 : vector<8x8xf32>
    %cst_193 = arith.constant dense<0.000000e+00> : vector<8xf32>
    %503 = vector.multi_reduction <add>, %502, %cst_193 [1] : vector<8x8xf32> to vector<8xf32>
    %504 = vector.shape_cast %503 : vector<8xf32> to vector<8x1xf32>
    %505 = tpu.reciprocal %504 {approx = true} : vector<8x1xf32> -> vector<8x1xf32>
    %506 = vector.broadcast %505 : vector<8x1xf32> to vector<8x8xf32>
    %507 = arith.mulf %502, %506 : vector<8x8xf32>
    %cst_194 = arith.constant dense<0.000000e+00> : vector<8x8xf32>
    %508 = tpu.matmul %507, %492, %cst_194 {dimension_numbers = #tpu.dot_dimension_numbers<[1], [0], [0], [1], [0, 0, 1, 1], [], []>} : vector<8x8xf32>, vector<8x8xf32>, vector<8x8xf32> -> vector<8x8xf32>
    %509 = vector.extract_strided_slice %461 {offsets = [0, 16], sizes = [8, 8], strides = [1, 1]} : vector<8x32xf32> to vector<8x8xf32>
    %510 = vector.extract_strided_slice %469 {offsets = [0, 16], sizes = [8, 8], strides = [1, 1]} : vector<8x32xf32> to vector<8x8xf32>
    %511 = vector.extract_strided_slice %470 {offsets = [0, 16], sizes = [8, 8], strides = [1, 1]} : vector<8x32xf32> to vector<8x8xf32>
    %512 = tpu.transpose %510, [1, 0] : vector<8x8xf32> -> vector<8x8xf32>
    %cst_195 = arith.constant dense<0.000000e+00> : vector<8x8xf32>
    %513 = tpu.matmul %509, %512, %cst_195 {dimension_numbers = #tpu.dot_dimension_numbers<[1], [0], [0], [1], [0, 0, 1, 1], [], []>} : vector<8x8xf32>, vector<8x8xf32>, vector<8x8xf32> -> vector<8x8xf32>
    %cst_196 = arith.constant 0.353553385 : f32
    %514 = vector.broadcast %cst_196 : f32 to vector<8x8xf32>
    %515 = arith.mulf %513, %514 : vector<8x8xf32>
    %516 = arith.addf %515, %5 : vector<8x8xf32>
    %cst_197 = arith.constant dense<0xFF800000> : vector<8xf32>
    %517 = vector.multi_reduction <maximumf>, %516, %cst_197 [1] : vector<8x8xf32> to vector<8xf32>
    %518 = vector.shape_cast %517 : vector<8xf32> to vector<8x1xf32>
    %519 = vector.broadcast %518 : vector<8x1xf32> to vector<8x8xf32>
    %520 = arith.subf %516, %519 : vector<8x8xf32>
    %521 = math.exp %520 : vector<8x8xf32>
    %cst_198 = arith.constant dense<0.000000e+00> : vector<8xf32>
    %522 = vector.multi_reduction <add>, %521, %cst_198 [1] : vector<8x8xf32> to vector<8xf32>
    %523 = vector.shape_cast %522 : vector<8xf32> to vector<8x1xf32>
    %524 = tpu.reciprocal %523 {approx = true} : vector<8x1xf32> -> vector<8x1xf32>
    %525 = vector.broadcast %524 : vector<8x1xf32> to vector<8x8xf32>
    %526 = arith.mulf %521, %525 : vector<8x8xf32>
    %cst_199 = arith.constant dense<0.000000e+00> : vector<8x8xf32>
    %527 = tpu.matmul %526, %511, %cst_199 {dimension_numbers = #tpu.dot_dimension_numbers<[1], [0], [0], [1], [0, 0, 1, 1], [], []>} : vector<8x8xf32>, vector<8x8xf32>, vector<8x8xf32> -> vector<8x8xf32>
    %528 = vector.extract_strided_slice %461 {offsets = [0, 24], sizes = [8, 8], strides = [1, 1]} : vector<8x32xf32> to vector<8x8xf32>
    %529 = vector.extract_strided_slice %469 {offsets = [0, 24], sizes = [8, 8], strides = [1, 1]} : vector<8x32xf32> to vector<8x8xf32>
    %530 = vector.extract_strided_slice %470 {offsets = [0, 24], sizes = [8, 8], strides = [1, 1]} : vector<8x32xf32> to vector<8x8xf32>
    %531 = tpu.transpose %529, [1, 0] : vector<8x8xf32> -> vector<8x8xf32>
    %cst_200 = arith.constant dense<0.000000e+00> : vector<8x8xf32>
    %532 = tpu.matmul %528, %531, %cst_200 {dimension_numbers = #tpu.dot_dimension_numbers<[1], [0], [0], [1], [0, 0, 1, 1], [], []>} : vector<8x8xf32>, vector<8x8xf32>, vector<8x8xf32> -> vector<8x8xf32>
    %cst_201 = arith.constant 0.353553385 : f32
    %533 = vector.broadcast %cst_201 : f32 to vector<8x8xf32>
    %534 = arith.mulf %532, %533 : vector<8x8xf32>
    %535 = arith.addf %534, %5 : vector<8x8xf32>
    %cst_202 = arith.constant dense<0xFF800000> : vector<8xf32>
    %536 = vector.multi_reduction <maximumf>, %535, %cst_202 [1] : vector<8x8xf32> to vector<8xf32>
    %537 = vector.shape_cast %536 : vector<8xf32> to vector<8x1xf32>
    %538 = vector.broadcast %537 : vector<8x1xf32> to vector<8x8xf32>
    %539 = arith.subf %535, %538 : vector<8x8xf32>
    %540 = math.exp %539 : vector<8x8xf32>
    %cst_203 = arith.constant dense<0.000000e+00> : vector<8xf32>
    %541 = vector.multi_reduction <add>, %540, %cst_203 [1] : vector<8x8xf32> to vector<8xf32>
    %542 = vector.shape_cast %541 : vector<8xf32> to vector<8x1xf32>
    %543 = tpu.reciprocal %542 {approx = true} : vector<8x1xf32> -> vector<8x1xf32>
    %544 = vector.broadcast %543 : vector<8x1xf32> to vector<8x8xf32>
    %545 = arith.mulf %540, %544 : vector<8x8xf32>
    %cst_204 = arith.constant dense<0.000000e+00> : vector<8x8xf32>
    %546 = tpu.matmul %545, %530, %cst_204 {dimension_numbers = #tpu.dot_dimension_numbers<[1], [0], [0], [1], [0, 0, 1, 1], [], []>} : vector<8x8xf32>, vector<8x8xf32>, vector<8x8xf32> -> vector<8x8xf32>
    %547 = tpu.concatenate %489, %508, %527, %546 in 1 : vector<8x8xf32>, vector<8x8xf32>, vector<8x8xf32>, vector<8x8xf32> -> vector<8x32xf32>
    %c0_205 = arith.constant 0 : index
    %c0_206 = arith.constant 0 : index
    %c0_207 = arith.constant 0 : index
    %548 = vector.load %arg20[%c0_205, %c0_206, %c0_207] : memref<2x32x32xf32, #tpu.memory_space<vmem>>, vector<1x32x32xf32>
    %549 = vector.shape_cast %548 : vector<1x32x32xf32> to vector<32x32xf32>
    %c0_208 = arith.constant 0 : index
    %c0_209 = arith.constant 0 : index
    %c0_210 = arith.constant 0 : index
    %550 = vector.load %arg21[%c0_208, %c0_209, %c0_210] : memref<2x1x32xf32, #tpu.memory_space<vmem>>, vector<1x1x32xf32>
    %551 = vector.shape_cast %550 : vector<1x1x32xf32> to vector<1x32xf32>
    %cst_211 = arith.constant dense<0.000000e+00> : vector<8x32xf32>
    %552 = tpu.matmul %547, %549, %cst_211 {dimension_numbers = #tpu.dot_dimension_numbers<[1], [0], [0], [1], [0, 0, 1, 1], [], []>} : vector<8x32xf32>, vector<32x32xf32>, vector<8x32xf32> -> vector<8x32xf32>
    %553 = vector.broadcast %551 : vector<1x32xf32> to vector<8x32xf32>
    %554 = arith.addf %552, %553 : vector<8x32xf32>
    %555 = arith.addf %454, %554 : vector<8x32xf32>
    %556 = vector.extract_strided_slice %335 {offsets = [2, 0], sizes = [1, 32], strides = [1, 1]} : vector<6x32xf32> to vector<1x32xf32>
    %557 = vector.extract_strided_slice %335 {offsets = [3, 0], sizes = [1, 32], strides = [1, 1]} : vector<6x32xf32> to vector<1x32xf32>
    %cst_212 = arith.constant dense<0.000000e+00> : vector<8xf32>
    %558 = vector.multi_reduction <add>, %555, %cst_212 [1] : vector<8x32xf32> to vector<8xf32>
    %559 = vector.shape_cast %558 : vector<8xf32> to vector<8x1xf32>
    %cst_213 = arith.constant 3.200000e+01 : f32
    %560 = vector.broadcast %cst_213 : f32 to vector<8x1xf32>
    %561 = arith.divf %559, %560 : vector<8x1xf32>
    %562 = vector.broadcast %561 : vector<8x1xf32> to vector<8x32xf32>
    %563 = arith.subf %555, %562 : vector<8x32xf32>
    %564 = arith.mulf %563, %563 : vector<8x32xf32>
    %cst_214 = arith.constant dense<0.000000e+00> : vector<8xf32>
    %565 = vector.multi_reduction <add>, %564, %cst_214 [1] : vector<8x32xf32> to vector<8xf32>
    %566 = vector.shape_cast %565 : vector<8xf32> to vector<8x1xf32>
    %cst_215 = arith.constant 3.200000e+01 : f32
    %567 = vector.broadcast %cst_215 : f32 to vector<8x1xf32>
    %568 = arith.divf %566, %567 : vector<8x1xf32>
    %569 = vector.broadcast %561 : vector<8x1xf32> to vector<8x32xf32>
    %570 = arith.subf %555, %569 : vector<8x32xf32>
    %cst_216 = arith.constant 9.99999974E-6 : f32
    %571 = vector.broadcast %cst_216 : f32 to vector<8x1xf32>
    %572 = arith.addf %568, %571 : vector<8x1xf32>
    %573 = math.rsqrt %572 : vector<8x1xf32>
    %574 = vector.broadcast %573 : vector<8x1xf32> to vector<8x32xf32>
    %575 = arith.mulf %570, %574 : vector<8x32xf32>
    %576 = vector.broadcast %556 : vector<1x32xf32> to vector<8x32xf32>
    %577 = arith.mulf %575, %576 : vector<8x32xf32>
    %578 = vector.broadcast %557 : vector<1x32xf32> to vector<8x32xf32>
    %579 = arith.addf %577, %578 : vector<8x32xf32>
    %c0_217 = arith.constant 0 : index
    %c0_218 = arith.constant 0 : index
    %c0_219 = arith.constant 0 : index
    %580 = vector.load %arg22[%c0_217, %c0_218, %c0_219] : memref<2x32x64xf32, #tpu.memory_space<vmem>>, vector<1x32x64xf32>
    %581 = vector.shape_cast %580 : vector<1x32x64xf32> to vector<32x64xf32>
    %c0_220 = arith.constant 0 : index
    %c0_221 = arith.constant 0 : index
    %c0_222 = arith.constant 0 : index
    %582 = vector.load %arg23[%c0_220, %c0_221, %c0_222] : memref<2x1x64xf32, #tpu.memory_space<vmem>>, vector<1x1x64xf32>
    %583 = vector.shape_cast %582 : vector<1x1x64xf32> to vector<1x64xf32>
    %cst_223 = arith.constant dense<0.000000e+00> : vector<8x64xf32>
    %584 = tpu.matmul %579, %581, %cst_223 {dimension_numbers = #tpu.dot_dimension_numbers<[1], [0], [0], [1], [0, 0, 1, 1], [], []>} : vector<8x32xf32>, vector<32x64xf32>, vector<8x64xf32> -> vector<8x64xf32>
    %585 = vector.broadcast %583 : vector<1x64xf32> to vector<8x64xf32>
    %586 = arith.addf %584, %585 : vector<8x64xf32>
    %cst_224 = arith.constant 0.000000e+00 : f32
    %587 = vector.broadcast %cst_224 : f32 to vector<8x64xf32>
    %588 = arith.maximumf %586, %587 : vector<8x64xf32>
    %c0_225 = arith.constant 0 : index
    %c0_226 = arith.constant 0 : index
    %c0_227 = arith.constant 0 : index
    %589 = vector.load %arg24[%c0_225, %c0_226, %c0_227] : memref<2x64x32xf32, #tpu.memory_space<vmem>>, vector<1x64x32xf32>
    %590 = vector.shape_cast %589 : vector<1x64x32xf32> to vector<64x32xf32>
    %c0_228 = arith.constant 0 : index
    %c0_229 = arith.constant 0 : index
    %c0_230 = arith.constant 0 : index
    %591 = vector.load %arg25[%c0_228, %c0_229, %c0_230] : memref<2x1x32xf32, #tpu.memory_space<vmem>>, vector<1x1x32xf32>
    %592 = vector.shape_cast %591 : vector<1x1x32xf32> to vector<1x32xf32>
    %cst_231 = arith.constant dense<0.000000e+00> : vector<8x32xf32>
    %593 = tpu.matmul %588, %590, %cst_231 {dimension_numbers = #tpu.dot_dimension_numbers<[1], [0], [0], [1], [0, 0, 1, 1], [], []>} : vector<8x64xf32>, vector<64x32xf32>, vector<8x32xf32> -> vector<8x32xf32>
    %594 = vector.broadcast %592 : vector<1x32xf32> to vector<8x32xf32>
    %595 = arith.addf %593, %594 : vector<8x32xf32>
    %596 = arith.addf %579, %595 : vector<8x32xf32>
    %597 = vector.extract_strided_slice %335 {offsets = [4, 0], sizes = [1, 32], strides = [1, 1]} : vector<6x32xf32> to vector<1x32xf32>
    %598 = vector.extract_strided_slice %335 {offsets = [5, 0], sizes = [1, 32], strides = [1, 1]} : vector<6x32xf32> to vector<1x32xf32>
    %cst_232 = arith.constant dense<0.000000e+00> : vector<8xf32>
    %599 = vector.multi_reduction <add>, %596, %cst_232 [1] : vector<8x32xf32> to vector<8xf32>
    %600 = vector.shape_cast %599 : vector<8xf32> to vector<8x1xf32>
    %cst_233 = arith.constant 3.200000e+01 : f32
    %601 = vector.broadcast %cst_233 : f32 to vector<8x1xf32>
    %602 = arith.divf %600, %601 : vector<8x1xf32>
    %603 = vector.broadcast %602 : vector<8x1xf32> to vector<8x32xf32>
    %604 = arith.subf %596, %603 : vector<8x32xf32>
    %605 = arith.mulf %604, %604 : vector<8x32xf32>
    %cst_234 = arith.constant dense<0.000000e+00> : vector<8xf32>
    %606 = vector.multi_reduction <add>, %605, %cst_234 [1] : vector<8x32xf32> to vector<8xf32>
    %607 = vector.shape_cast %606 : vector<8xf32> to vector<8x1xf32>
    %cst_235 = arith.constant 3.200000e+01 : f32
    %608 = vector.broadcast %cst_235 : f32 to vector<8x1xf32>
    %609 = arith.divf %607, %608 : vector<8x1xf32>
    %610 = vector.broadcast %602 : vector<8x1xf32> to vector<8x32xf32>
    %611 = arith.subf %596, %610 : vector<8x32xf32>
    %cst_236 = arith.constant 9.99999974E-6 : f32
    %612 = vector.broadcast %cst_236 : f32 to vector<8x1xf32>
    %613 = arith.addf %609, %612 : vector<8x1xf32>
    %614 = math.rsqrt %613 : vector<8x1xf32>
    %615 = vector.broadcast %614 : vector<8x1xf32> to vector<8x32xf32>
    %616 = arith.mulf %611, %615 : vector<8x32xf32>
    %617 = vector.broadcast %597 : vector<1x32xf32> to vector<8x32xf32>
    %618 = arith.mulf %616, %617 : vector<8x32xf32>
    %619 = vector.broadcast %598 : vector<1x32xf32> to vector<8x32xf32>
    %620 = arith.addf %618, %619 : vector<8x32xf32>
    %c1_237 = arith.constant 1 : index
    %c0_238 = arith.constant 0 : index
    %c0_239 = arith.constant 0 : index
    %621 = vector.load %arg26[%c1_237, %c0_238, %c0_239] : memref<2x6x32xf32, #tpu.memory_space<vmem>>, vector<1x6x32xf32>
    %622 = vector.shape_cast %621 : vector<1x6x32xf32> to vector<6x32xf32>
    %c1_240 = arith.constant 1 : index
    %c0_241 = arith.constant 0 : index
    %c0_242 = arith.constant 0 : index
    %623 = vector.load %arg12[%c1_240, %c0_241, %c0_242] : memref<2x32x96xf32, #tpu.memory_space<vmem>>, vector<1x32x96xf32>
    %624 = vector.shape_cast %623 : vector<1x32x96xf32> to vector<32x96xf32>
    %c1_243 = arith.constant 1 : index
    %c0_244 = arith.constant 0 : index
    %c0_245 = arith.constant 0 : index
    %625 = vector.load %arg13[%c1_243, %c0_244, %c0_245] : memref<2x1x96xf32, #tpu.memory_space<vmem>>, vector<1x1x96xf32>
    %626 = vector.shape_cast %625 : vector<1x1x96xf32> to vector<1x96xf32>
    %cst_246 = arith.constant dense<0.000000e+00> : vector<8x96xf32>
    %627 = tpu.matmul %620, %624, %cst_246 {dimension_numbers = #tpu.dot_dimension_numbers<[1], [0], [0], [1], [0, 0, 1, 1], [], []>} : vector<8x32xf32>, vector<32x96xf32>, vector<8x96xf32> -> vector<8x96xf32>
    %628 = vector.broadcast %626 : vector<1x96xf32> to vector<8x96xf32>
    %629 = arith.addf %627, %628 : vector<8x96xf32>
    %630 = vector.extract_strided_slice %629 {offsets = [0, 0], sizes = [8, 32], strides = [1, 1]} : vector<8x96xf32> to vector<8x32xf32>
    %631 = vector.extract_strided_slice %629 {offsets = [0, 32], sizes = [8, 32], strides = [1, 1]} : vector<8x96xf32> to vector<8x32xf32>
    %632 = vector.extract_strided_slice %629 {offsets = [0, 64], sizes = [8, 32], strides = [1, 1]} : vector<8x96xf32> to vector<8x32xf32>
    %633 = vector.extract_strided_slice %630 {offsets = [0, 0], sizes = [8, 8], strides = [1, 1]} : vector<8x32xf32> to vector<8x8xf32>
    %634 = vector.extract_strided_slice %631 {offsets = [0, 0], sizes = [8, 8], strides = [1, 1]} : vector<8x32xf32> to vector<8x8xf32>
    %635 = vector.extract_strided_slice %632 {offsets = [0, 0], sizes = [8, 8], strides = [1, 1]} : vector<8x32xf32> to vector<8x8xf32>
    %636 = tpu.transpose %634, [1, 0] : vector<8x8xf32> -> vector<8x8xf32>
    %cst_247 = arith.constant dense<0.000000e+00> : vector<8x8xf32>
    %637 = tpu.matmul %633, %636, %cst_247 {dimension_numbers = #tpu.dot_dimension_numbers<[1], [0], [0], [1], [0, 0, 1, 1], [], []>} : vector<8x8xf32>, vector<8x8xf32>, vector<8x8xf32> -> vector<8x8xf32>
    %cst_248 = arith.constant 0.353553385 : f32
    %638 = vector.broadcast %cst_248 : f32 to vector<8x8xf32>
    %639 = arith.mulf %637, %638 : vector<8x8xf32>
    %640 = arith.addf %639, %5 : vector<8x8xf32>
    %cst_249 = arith.constant dense<0xFF800000> : vector<8xf32>
    %641 = vector.multi_reduction <maximumf>, %640, %cst_249 [1] : vector<8x8xf32> to vector<8xf32>
    %642 = vector.shape_cast %641 : vector<8xf32> to vector<8x1xf32>
    %643 = vector.broadcast %642 : vector<8x1xf32> to vector<8x8xf32>
    %644 = arith.subf %640, %643 : vector<8x8xf32>
    %645 = math.exp %644 : vector<8x8xf32>
    %cst_250 = arith.constant dense<0.000000e+00> : vector<8xf32>
    %646 = vector.multi_reduction <add>, %645, %cst_250 [1] : vector<8x8xf32> to vector<8xf32>
    %647 = vector.shape_cast %646 : vector<8xf32> to vector<8x1xf32>
    %648 = tpu.reciprocal %647 {approx = true} : vector<8x1xf32> -> vector<8x1xf32>
    %649 = vector.broadcast %648 : vector<8x1xf32> to vector<8x8xf32>
    %650 = arith.mulf %645, %649 : vector<8x8xf32>
    %cst_251 = arith.constant dense<0.000000e+00> : vector<8x8xf32>
    %651 = tpu.matmul %650, %635, %cst_251 {dimension_numbers = #tpu.dot_dimension_numbers<[1], [0], [0], [1], [0, 0, 1, 1], [], []>} : vector<8x8xf32>, vector<8x8xf32>, vector<8x8xf32> -> vector<8x8xf32>
    %652 = vector.extract_strided_slice %630 {offsets = [0, 8], sizes = [8, 8], strides = [1, 1]} : vector<8x32xf32> to vector<8x8xf32>
    %653 = vector.extract_strided_slice %631 {offsets = [0, 8], sizes = [8, 8], strides = [1, 1]} : vector<8x32xf32> to vector<8x8xf32>
    %654 = vector.extract_strided_slice %632 {offsets = [0, 8], sizes = [8, 8], strides = [1, 1]} : vector<8x32xf32> to vector<8x8xf32>
    %655 = tpu.transpose %653, [1, 0] : vector<8x8xf32> -> vector<8x8xf32>
    %cst_252 = arith.constant dense<0.000000e+00> : vector<8x8xf32>
    %656 = tpu.matmul %652, %655, %cst_252 {dimension_numbers = #tpu.dot_dimension_numbers<[1], [0], [0], [1], [0, 0, 1, 1], [], []>} : vector<8x8xf32>, vector<8x8xf32>, vector<8x8xf32> -> vector<8x8xf32>
    %cst_253 = arith.constant 0.353553385 : f32
    %657 = vector.broadcast %cst_253 : f32 to vector<8x8xf32>
    %658 = arith.mulf %656, %657 : vector<8x8xf32>
    %659 = arith.addf %658, %5 : vector<8x8xf32>
    %cst_254 = arith.constant dense<0xFF800000> : vector<8xf32>
    %660 = vector.multi_reduction <maximumf>, %659, %cst_254 [1] : vector<8x8xf32> to vector<8xf32>
    %661 = vector.shape_cast %660 : vector<8xf32> to vector<8x1xf32>
    %662 = vector.broadcast %661 : vector<8x1xf32> to vector<8x8xf32>
    %663 = arith.subf %659, %662 : vector<8x8xf32>
    %664 = math.exp %663 : vector<8x8xf32>
    %cst_255 = arith.constant dense<0.000000e+00> : vector<8xf32>
    %665 = vector.multi_reduction <add>, %664, %cst_255 [1] : vector<8x8xf32> to vector<8xf32>
    %666 = vector.shape_cast %665 : vector<8xf32> to vector<8x1xf32>
    %667 = tpu.reciprocal %666 {approx = true} : vector<8x1xf32> -> vector<8x1xf32>
    %668 = vector.broadcast %667 : vector<8x1xf32> to vector<8x8xf32>
    %669 = arith.mulf %664, %668 : vector<8x8xf32>
    %cst_256 = arith.constant dense<0.000000e+00> : vector<8x8xf32>
    %670 = tpu.matmul %669, %654, %cst_256 {dimension_numbers = #tpu.dot_dimension_numbers<[1], [0], [0], [1], [0, 0, 1, 1], [], []>} : vector<8x8xf32>, vector<8x8xf32>, vector<8x8xf32> -> vector<8x8xf32>
    %671 = vector.extract_strided_slice %630 {offsets = [0, 16], sizes = [8, 8], strides = [1, 1]} : vector<8x32xf32> to vector<8x8xf32>
    %672 = vector.extract_strided_slice %631 {offsets = [0, 16], sizes = [8, 8], strides = [1, 1]} : vector<8x32xf32> to vector<8x8xf32>
    %673 = vector.extract_strided_slice %632 {offsets = [0, 16], sizes = [8, 8], strides = [1, 1]} : vector<8x32xf32> to vector<8x8xf32>
    %674 = tpu.transpose %672, [1, 0] : vector<8x8xf32> -> vector<8x8xf32>
    %cst_257 = arith.constant dense<0.000000e+00> : vector<8x8xf32>
    %675 = tpu.matmul %671, %674, %cst_257 {dimension_numbers = #tpu.dot_dimension_numbers<[1], [0], [0], [1], [0, 0, 1, 1], [], []>} : vector<8x8xf32>, vector<8x8xf32>, vector<8x8xf32> -> vector<8x8xf32>
    %cst_258 = arith.constant 0.353553385 : f32
    %676 = vector.broadcast %cst_258 : f32 to vector<8x8xf32>
    %677 = arith.mulf %675, %676 : vector<8x8xf32>
    %678 = arith.addf %677, %5 : vector<8x8xf32>
    %cst_259 = arith.constant dense<0xFF800000> : vector<8xf32>
    %679 = vector.multi_reduction <maximumf>, %678, %cst_259 [1] : vector<8x8xf32> to vector<8xf32>
    %680 = vector.shape_cast %679 : vector<8xf32> to vector<8x1xf32>
    %681 = vector.broadcast %680 : vector<8x1xf32> to vector<8x8xf32>
    %682 = arith.subf %678, %681 : vector<8x8xf32>
    %683 = math.exp %682 : vector<8x8xf32>
    %cst_260 = arith.constant dense<0.000000e+00> : vector<8xf32>
    %684 = vector.multi_reduction <add>, %683, %cst_260 [1] : vector<8x8xf32> to vector<8xf32>
    %685 = vector.shape_cast %684 : vector<8xf32> to vector<8x1xf32>
    %686 = tpu.reciprocal %685 {approx = true} : vector<8x1xf32> -> vector<8x1xf32>
    %687 = vector.broadcast %686 : vector<8x1xf32> to vector<8x8xf32>
    %688 = arith.mulf %683, %687 : vector<8x8xf32>
    %cst_261 = arith.constant dense<0.000000e+00> : vector<8x8xf32>
    %689 = tpu.matmul %688, %673, %cst_261 {dimension_numbers = #tpu.dot_dimension_numbers<[1], [0], [0], [1], [0, 0, 1, 1], [], []>} : vector<8x8xf32>, vector<8x8xf32>, vector<8x8xf32> -> vector<8x8xf32>
    %690 = vector.extract_strided_slice %630 {offsets = [0, 24], sizes = [8, 8], strides = [1, 1]} : vector<8x32xf32> to vector<8x8xf32>
    %691 = vector.extract_strided_slice %631 {offsets = [0, 24], sizes = [8, 8], strides = [1, 1]} : vector<8x32xf32> to vector<8x8xf32>
    %692 = vector.extract_strided_slice %632 {offsets = [0, 24], sizes = [8, 8], strides = [1, 1]} : vector<8x32xf32> to vector<8x8xf32>
    %693 = tpu.transpose %691, [1, 0] : vector<8x8xf32> -> vector<8x8xf32>
    %cst_262 = arith.constant dense<0.000000e+00> : vector<8x8xf32>
    %694 = tpu.matmul %690, %693, %cst_262 {dimension_numbers = #tpu.dot_dimension_numbers<[1], [0], [0], [1], [0, 0, 1, 1], [], []>} : vector<8x8xf32>, vector<8x8xf32>, vector<8x8xf32> -> vector<8x8xf32>
    %cst_263 = arith.constant 0.353553385 : f32
    %695 = vector.broadcast %cst_263 : f32 to vector<8x8xf32>
    %696 = arith.mulf %694, %695 : vector<8x8xf32>
    %697 = arith.addf %696, %5 : vector<8x8xf32>
    %cst_264 = arith.constant dense<0xFF800000> : vector<8xf32>
    %698 = vector.multi_reduction <maximumf>, %697, %cst_264 [1] : vector<8x8xf32> to vector<8xf32>
    %699 = vector.shape_cast %698 : vector<8xf32> to vector<8x1xf32>
    %700 = vector.broadcast %699 : vector<8x1xf32> to vector<8x8xf32>
    %701 = arith.subf %697, %700 : vector<8x8xf32>
    %702 = math.exp %701 : vector<8x8xf32>
    %cst_265 = arith.constant dense<0.000000e+00> : vector<8xf32>
    %703 = vector.multi_reduction <add>, %702, %cst_265 [1] : vector<8x8xf32> to vector<8xf32>
    %704 = vector.shape_cast %703 : vector<8xf32> to vector<8x1xf32>
    %705 = tpu.reciprocal %704 {approx = true} : vector<8x1xf32> -> vector<8x1xf32>
    %706 = vector.broadcast %705 : vector<8x1xf32> to vector<8x8xf32>
    %707 = arith.mulf %702, %706 : vector<8x8xf32>
    %cst_266 = arith.constant dense<0.000000e+00> : vector<8x8xf32>
    %708 = tpu.matmul %707, %692, %cst_266 {dimension_numbers = #tpu.dot_dimension_numbers<[1], [0], [0], [1], [0, 0, 1, 1], [], []>} : vector<8x8xf32>, vector<8x8xf32>, vector<8x8xf32> -> vector<8x8xf32>
    %709 = tpu.concatenate %651, %670, %689, %708 in 1 : vector<8x8xf32>, vector<8x8xf32>, vector<8x8xf32>, vector<8x8xf32> -> vector<8x32xf32>
    %c1_267 = arith.constant 1 : index
    %c0_268 = arith.constant 0 : index
    %c0_269 = arith.constant 0 : index
    %710 = vector.load %arg14[%c1_267, %c0_268, %c0_269] : memref<2x32x32xf32, #tpu.memory_space<vmem>>, vector<1x32x32xf32>
    %711 = vector.shape_cast %710 : vector<1x32x32xf32> to vector<32x32xf32>
    %c1_270 = arith.constant 1 : index
    %c0_271 = arith.constant 0 : index
    %c0_272 = arith.constant 0 : index
    %712 = vector.load %arg15[%c1_270, %c0_271, %c0_272] : memref<2x1x32xf32, #tpu.memory_space<vmem>>, vector<1x1x32xf32>
    %713 = vector.shape_cast %712 : vector<1x1x32xf32> to vector<1x32xf32>
    %cst_273 = arith.constant dense<0.000000e+00> : vector<8x32xf32>
    %714 = tpu.matmul %709, %711, %cst_273 {dimension_numbers = #tpu.dot_dimension_numbers<[1], [0], [0], [1], [0, 0, 1, 1], [], []>} : vector<8x32xf32>, vector<32x32xf32>, vector<8x32xf32> -> vector<8x32xf32>
    %715 = vector.broadcast %713 : vector<1x32xf32> to vector<8x32xf32>
    %716 = arith.addf %714, %715 : vector<8x32xf32>
    %717 = arith.addf %620, %716 : vector<8x32xf32>
    %718 = vector.extract_strided_slice %622 {offsets = [0, 0], sizes = [1, 32], strides = [1, 1]} : vector<6x32xf32> to vector<1x32xf32>
    %719 = vector.extract_strided_slice %622 {offsets = [1, 0], sizes = [1, 32], strides = [1, 1]} : vector<6x32xf32> to vector<1x32xf32>
    %cst_274 = arith.constant dense<0.000000e+00> : vector<8xf32>
    %720 = vector.multi_reduction <add>, %717, %cst_274 [1] : vector<8x32xf32> to vector<8xf32>
    %721 = vector.shape_cast %720 : vector<8xf32> to vector<8x1xf32>
    %cst_275 = arith.constant 3.200000e+01 : f32
    %722 = vector.broadcast %cst_275 : f32 to vector<8x1xf32>
    %723 = arith.divf %721, %722 : vector<8x1xf32>
    %724 = vector.broadcast %723 : vector<8x1xf32> to vector<8x32xf32>
    %725 = arith.subf %717, %724 : vector<8x32xf32>
    %726 = arith.mulf %725, %725 : vector<8x32xf32>
    %cst_276 = arith.constant dense<0.000000e+00> : vector<8xf32>
    %727 = vector.multi_reduction <add>, %726, %cst_276 [1] : vector<8x32xf32> to vector<8xf32>
    %728 = vector.shape_cast %727 : vector<8xf32> to vector<8x1xf32>
    %cst_277 = arith.constant 3.200000e+01 : f32
    %729 = vector.broadcast %cst_277 : f32 to vector<8x1xf32>
    %730 = arith.divf %728, %729 : vector<8x1xf32>
    %731 = vector.broadcast %723 : vector<8x1xf32> to vector<8x32xf32>
    %732 = arith.subf %717, %731 : vector<8x32xf32>
    %cst_278 = arith.constant 9.99999974E-6 : f32
    %733 = vector.broadcast %cst_278 : f32 to vector<8x1xf32>
    %734 = arith.addf %730, %733 : vector<8x1xf32>
    %735 = math.rsqrt %734 : vector<8x1xf32>
    %736 = vector.broadcast %735 : vector<8x1xf32> to vector<8x32xf32>
    %737 = arith.mulf %732, %736 : vector<8x32xf32>
    %738 = vector.broadcast %718 : vector<1x32xf32> to vector<8x32xf32>
    %739 = arith.mulf %737, %738 : vector<8x32xf32>
    %740 = vector.broadcast %719 : vector<1x32xf32> to vector<8x32xf32>
    %741 = arith.addf %739, %740 : vector<8x32xf32>
    %c1_279 = arith.constant 1 : index
    %c0_280 = arith.constant 0 : index
    %c0_281 = arith.constant 0 : index
    %742 = vector.load %arg16[%c1_279, %c0_280, %c0_281] : memref<2x32x32xf32, #tpu.memory_space<vmem>>, vector<1x32x32xf32>
    %743 = vector.shape_cast %742 : vector<1x32x32xf32> to vector<32x32xf32>
    %c1_282 = arith.constant 1 : index
    %c0_283 = arith.constant 0 : index
    %c0_284 = arith.constant 0 : index
    %744 = vector.load %arg17[%c1_282, %c0_283, %c0_284] : memref<2x1x32xf32, #tpu.memory_space<vmem>>, vector<1x1x32xf32>
    %745 = vector.shape_cast %744 : vector<1x1x32xf32> to vector<1x32xf32>
    %cst_285 = arith.constant dense<0.000000e+00> : vector<8x32xf32>
    %746 = tpu.matmul %741, %743, %cst_285 {dimension_numbers = #tpu.dot_dimension_numbers<[1], [0], [0], [1], [0, 0, 1, 1], [], []>} : vector<8x32xf32>, vector<32x32xf32>, vector<8x32xf32> -> vector<8x32xf32>
    %747 = vector.broadcast %745 : vector<1x32xf32> to vector<8x32xf32>
    %748 = arith.addf %746, %747 : vector<8x32xf32>
    %c1_286 = arith.constant 1 : index
    %c0_287 = arith.constant 0 : index
    %c0_288 = arith.constant 0 : index
    %749 = vector.load %arg18[%c1_286, %c0_287, %c0_288] : memref<2x32x64xf32, #tpu.memory_space<vmem>>, vector<1x32x64xf32>
    %750 = vector.shape_cast %749 : vector<1x32x64xf32> to vector<32x64xf32>
    %c1_289 = arith.constant 1 : index
    %c0_290 = arith.constant 0 : index
    %c0_291 = arith.constant 0 : index
    %751 = vector.load %arg19[%c1_289, %c0_290, %c0_291] : memref<2x1x64xf32, #tpu.memory_space<vmem>>, vector<1x1x64xf32>
    %752 = vector.shape_cast %751 : vector<1x1x64xf32> to vector<1x64xf32>
    %cst_292 = arith.constant dense<0.000000e+00> : vector<8x64xf32>
    %753 = tpu.matmul %331, %750, %cst_292 {dimension_numbers = #tpu.dot_dimension_numbers<[1], [0], [0], [1], [0, 0, 1, 1], [], []>} : vector<8x32xf32>, vector<32x64xf32>, vector<8x64xf32> -> vector<8x64xf32>
    %754 = vector.broadcast %752 : vector<1x64xf32> to vector<8x64xf32>
    %755 = arith.addf %753, %754 : vector<8x64xf32>
    %756 = vector.extract_strided_slice %755 {offsets = [0, 0], sizes = [8, 32], strides = [1, 1]} : vector<8x64xf32> to vector<8x32xf32>
    %757 = vector.extract_strided_slice %755 {offsets = [0, 32], sizes = [8, 32], strides = [1, 1]} : vector<8x64xf32> to vector<8x32xf32>
    %758 = vector.extract_strided_slice %748 {offsets = [0, 0], sizes = [8, 8], strides = [1, 1]} : vector<8x32xf32> to vector<8x8xf32>
    %759 = vector.extract_strided_slice %756 {offsets = [0, 0], sizes = [8, 8], strides = [1, 1]} : vector<8x32xf32> to vector<8x8xf32>
    %760 = vector.extract_strided_slice %757 {offsets = [0, 0], sizes = [8, 8], strides = [1, 1]} : vector<8x32xf32> to vector<8x8xf32>
    %761 = tpu.transpose %759, [1, 0] : vector<8x8xf32> -> vector<8x8xf32>
    %cst_293 = arith.constant dense<0.000000e+00> : vector<8x8xf32>
    %762 = tpu.matmul %758, %761, %cst_293 {dimension_numbers = #tpu.dot_dimension_numbers<[1], [0], [0], [1], [0, 0, 1, 1], [], []>} : vector<8x8xf32>, vector<8x8xf32>, vector<8x8xf32> -> vector<8x8xf32>
    %cst_294 = arith.constant 0.353553385 : f32
    %763 = vector.broadcast %cst_294 : f32 to vector<8x8xf32>
    %764 = arith.mulf %762, %763 : vector<8x8xf32>
    %765 = arith.addf %764, %5 : vector<8x8xf32>
    %cst_295 = arith.constant dense<0xFF800000> : vector<8xf32>
    %766 = vector.multi_reduction <maximumf>, %765, %cst_295 [1] : vector<8x8xf32> to vector<8xf32>
    %767 = vector.shape_cast %766 : vector<8xf32> to vector<8x1xf32>
    %768 = vector.broadcast %767 : vector<8x1xf32> to vector<8x8xf32>
    %769 = arith.subf %765, %768 : vector<8x8xf32>
    %770 = math.exp %769 : vector<8x8xf32>
    %cst_296 = arith.constant dense<0.000000e+00> : vector<8xf32>
    %771 = vector.multi_reduction <add>, %770, %cst_296 [1] : vector<8x8xf32> to vector<8xf32>
    %772 = vector.shape_cast %771 : vector<8xf32> to vector<8x1xf32>
    %773 = tpu.reciprocal %772 {approx = true} : vector<8x1xf32> -> vector<8x1xf32>
    %774 = vector.broadcast %773 : vector<8x1xf32> to vector<8x8xf32>
    %775 = arith.mulf %770, %774 : vector<8x8xf32>
    %cst_297 = arith.constant dense<0.000000e+00> : vector<8x8xf32>
    %776 = tpu.matmul %775, %760, %cst_297 {dimension_numbers = #tpu.dot_dimension_numbers<[1], [0], [0], [1], [0, 0, 1, 1], [], []>} : vector<8x8xf32>, vector<8x8xf32>, vector<8x8xf32> -> vector<8x8xf32>
    %777 = vector.extract_strided_slice %748 {offsets = [0, 8], sizes = [8, 8], strides = [1, 1]} : vector<8x32xf32> to vector<8x8xf32>
    %778 = vector.extract_strided_slice %756 {offsets = [0, 8], sizes = [8, 8], strides = [1, 1]} : vector<8x32xf32> to vector<8x8xf32>
    %779 = vector.extract_strided_slice %757 {offsets = [0, 8], sizes = [8, 8], strides = [1, 1]} : vector<8x32xf32> to vector<8x8xf32>
    %780 = tpu.transpose %778, [1, 0] : vector<8x8xf32> -> vector<8x8xf32>
    %cst_298 = arith.constant dense<0.000000e+00> : vector<8x8xf32>
    %781 = tpu.matmul %777, %780, %cst_298 {dimension_numbers = #tpu.dot_dimension_numbers<[1], [0], [0], [1], [0, 0, 1, 1], [], []>} : vector<8x8xf32>, vector<8x8xf32>, vector<8x8xf32> -> vector<8x8xf32>
    %cst_299 = arith.constant 0.353553385 : f32
    %782 = vector.broadcast %cst_299 : f32 to vector<8x8xf32>
    %783 = arith.mulf %781, %782 : vector<8x8xf32>
    %784 = arith.addf %783, %5 : vector<8x8xf32>
    %cst_300 = arith.constant dense<0xFF800000> : vector<8xf32>
    %785 = vector.multi_reduction <maximumf>, %784, %cst_300 [1] : vector<8x8xf32> to vector<8xf32>
    %786 = vector.shape_cast %785 : vector<8xf32> to vector<8x1xf32>
    %787 = vector.broadcast %786 : vector<8x1xf32> to vector<8x8xf32>
    %788 = arith.subf %784, %787 : vector<8x8xf32>
    %789 = math.exp %788 : vector<8x8xf32>
    %cst_301 = arith.constant dense<0.000000e+00> : vector<8xf32>
    %790 = vector.multi_reduction <add>, %789, %cst_301 [1] : vector<8x8xf32> to vector<8xf32>
    %791 = vector.shape_cast %790 : vector<8xf32> to vector<8x1xf32>
    %792 = tpu.reciprocal %791 {approx = true} : vector<8x1xf32> -> vector<8x1xf32>
    %793 = vector.broadcast %792 : vector<8x1xf32> to vector<8x8xf32>
    %794 = arith.mulf %789, %793 : vector<8x8xf32>
    %cst_302 = arith.constant dense<0.000000e+00> : vector<8x8xf32>
    %795 = tpu.matmul %794, %779, %cst_302 {dimension_numbers = #tpu.dot_dimension_numbers<[1], [0], [0], [1], [0, 0, 1, 1], [], []>} : vector<8x8xf32>, vector<8x8xf32>, vector<8x8xf32> -> vector<8x8xf32>
    %796 = vector.extract_strided_slice %748 {offsets = [0, 16], sizes = [8, 8], strides = [1, 1]} : vector<8x32xf32> to vector<8x8xf32>
    %797 = vector.extract_strided_slice %756 {offsets = [0, 16], sizes = [8, 8], strides = [1, 1]} : vector<8x32xf32> to vector<8x8xf32>
    %798 = vector.extract_strided_slice %757 {offsets = [0, 16], sizes = [8, 8], strides = [1, 1]} : vector<8x32xf32> to vector<8x8xf32>
    %799 = tpu.transpose %797, [1, 0] : vector<8x8xf32> -> vector<8x8xf32>
    %cst_303 = arith.constant dense<0.000000e+00> : vector<8x8xf32>
    %800 = tpu.matmul %796, %799, %cst_303 {dimension_numbers = #tpu.dot_dimension_numbers<[1], [0], [0], [1], [0, 0, 1, 1], [], []>} : vector<8x8xf32>, vector<8x8xf32>, vector<8x8xf32> -> vector<8x8xf32>
    %cst_304 = arith.constant 0.353553385 : f32
    %801 = vector.broadcast %cst_304 : f32 to vector<8x8xf32>
    %802 = arith.mulf %800, %801 : vector<8x8xf32>
    %803 = arith.addf %802, %5 : vector<8x8xf32>
    %cst_305 = arith.constant dense<0xFF800000> : vector<8xf32>
    %804 = vector.multi_reduction <maximumf>, %803, %cst_305 [1] : vector<8x8xf32> to vector<8xf32>
    %805 = vector.shape_cast %804 : vector<8xf32> to vector<8x1xf32>
    %806 = vector.broadcast %805 : vector<8x1xf32> to vector<8x8xf32>
    %807 = arith.subf %803, %806 : vector<8x8xf32>
    %808 = math.exp %807 : vector<8x8xf32>
    %cst_306 = arith.constant dense<0.000000e+00> : vector<8xf32>
    %809 = vector.multi_reduction <add>, %808, %cst_306 [1] : vector<8x8xf32> to vector<8xf32>
    %810 = vector.shape_cast %809 : vector<8xf32> to vector<8x1xf32>
    %811 = tpu.reciprocal %810 {approx = true} : vector<8x1xf32> -> vector<8x1xf32>
    %812 = vector.broadcast %811 : vector<8x1xf32> to vector<8x8xf32>
    %813 = arith.mulf %808, %812 : vector<8x8xf32>
    %cst_307 = arith.constant dense<0.000000e+00> : vector<8x8xf32>
    %814 = tpu.matmul %813, %798, %cst_307 {dimension_numbers = #tpu.dot_dimension_numbers<[1], [0], [0], [1], [0, 0, 1, 1], [], []>} : vector<8x8xf32>, vector<8x8xf32>, vector<8x8xf32> -> vector<8x8xf32>
    %815 = vector.extract_strided_slice %748 {offsets = [0, 24], sizes = [8, 8], strides = [1, 1]} : vector<8x32xf32> to vector<8x8xf32>
    %816 = vector.extract_strided_slice %756 {offsets = [0, 24], sizes = [8, 8], strides = [1, 1]} : vector<8x32xf32> to vector<8x8xf32>
    %817 = vector.extract_strided_slice %757 {offsets = [0, 24], sizes = [8, 8], strides = [1, 1]} : vector<8x32xf32> to vector<8x8xf32>
    %818 = tpu.transpose %816, [1, 0] : vector<8x8xf32> -> vector<8x8xf32>
    %cst_308 = arith.constant dense<0.000000e+00> : vector<8x8xf32>
    %819 = tpu.matmul %815, %818, %cst_308 {dimension_numbers = #tpu.dot_dimension_numbers<[1], [0], [0], [1], [0, 0, 1, 1], [], []>} : vector<8x8xf32>, vector<8x8xf32>, vector<8x8xf32> -> vector<8x8xf32>
    %cst_309 = arith.constant 0.353553385 : f32
    %820 = vector.broadcast %cst_309 : f32 to vector<8x8xf32>
    %821 = arith.mulf %819, %820 : vector<8x8xf32>
    %822 = arith.addf %821, %5 : vector<8x8xf32>
    %cst_310 = arith.constant dense<0xFF800000> : vector<8xf32>
    %823 = vector.multi_reduction <maximumf>, %822, %cst_310 [1] : vector<8x8xf32> to vector<8xf32>
    %824 = vector.shape_cast %823 : vector<8xf32> to vector<8x1xf32>
    %825 = vector.broadcast %824 : vector<8x1xf32> to vector<8x8xf32>
    %826 = arith.subf %822, %825 : vector<8x8xf32>
    %827 = math.exp %826 : vector<8x8xf32>
    %cst_311 = arith.constant dense<0.000000e+00> : vector<8xf32>
    %828 = vector.multi_reduction <add>, %827, %cst_311 [1] : vector<8x8xf32> to vector<8xf32>
    %829 = vector.shape_cast %828 : vector<8xf32> to vector<8x1xf32>
    %830 = tpu.reciprocal %829 {approx = true} : vector<8x1xf32> -> vector<8x1xf32>
    %831 = vector.broadcast %830 : vector<8x1xf32> to vector<8x8xf32>
    %832 = arith.mulf %827, %831 : vector<8x8xf32>
    %cst_312 = arith.constant dense<0.000000e+00> : vector<8x8xf32>
    %833 = tpu.matmul %832, %817, %cst_312 {dimension_numbers = #tpu.dot_dimension_numbers<[1], [0], [0], [1], [0, 0, 1, 1], [], []>} : vector<8x8xf32>, vector<8x8xf32>, vector<8x8xf32> -> vector<8x8xf32>
    %834 = tpu.concatenate %776, %795, %814, %833 in 1 : vector<8x8xf32>, vector<8x8xf32>, vector<8x8xf32>, vector<8x8xf32> -> vector<8x32xf32>
    %c1_313 = arith.constant 1 : index
    %c0_314 = arith.constant 0 : index
    %c0_315 = arith.constant 0 : index
    %835 = vector.load %arg20[%c1_313, %c0_314, %c0_315] : memref<2x32x32xf32, #tpu.memory_space<vmem>>, vector<1x32x32xf32>
    %836 = vector.shape_cast %835 : vector<1x32x32xf32> to vector<32x32xf32>
    %c1_316 = arith.constant 1 : index
    %c0_317 = arith.constant 0 : index
    %c0_318 = arith.constant 0 : index
    %837 = vector.load %arg21[%c1_316, %c0_317, %c0_318] : memref<2x1x32xf32, #tpu.memory_space<vmem>>, vector<1x1x32xf32>
    %838 = vector.shape_cast %837 : vector<1x1x32xf32> to vector<1x32xf32>
    %cst_319 = arith.constant dense<0.000000e+00> : vector<8x32xf32>
    %839 = tpu.matmul %834, %836, %cst_319 {dimension_numbers = #tpu.dot_dimension_numbers<[1], [0], [0], [1], [0, 0, 1, 1], [], []>} : vector<8x32xf32>, vector<32x32xf32>, vector<8x32xf32> -> vector<8x32xf32>
    %840 = vector.broadcast %838 : vector<1x32xf32> to vector<8x32xf32>
    %841 = arith.addf %839, %840 : vector<8x32xf32>
    %842 = arith.addf %741, %841 : vector<8x32xf32>
    %843 = vector.extract_strided_slice %622 {offsets = [2, 0], sizes = [1, 32], strides = [1, 1]} : vector<6x32xf32> to vector<1x32xf32>
    %844 = vector.extract_strided_slice %622 {offsets = [3, 0], sizes = [1, 32], strides = [1, 1]} : vector<6x32xf32> to vector<1x32xf32>
    %cst_320 = arith.constant dense<0.000000e+00> : vector<8xf32>
    %845 = vector.multi_reduction <add>, %842, %cst_320 [1] : vector<8x32xf32> to vector<8xf32>
    %846 = vector.shape_cast %845 : vector<8xf32> to vector<8x1xf32>
    %cst_321 = arith.constant 3.200000e+01 : f32
    %847 = vector.broadcast %cst_321 : f32 to vector<8x1xf32>
    %848 = arith.divf %846, %847 : vector<8x1xf32>
    %849 = vector.broadcast %848 : vector<8x1xf32> to vector<8x32xf32>
    %850 = arith.subf %842, %849 : vector<8x32xf32>
    %851 = arith.mulf %850, %850 : vector<8x32xf32>
    %cst_322 = arith.constant dense<0.000000e+00> : vector<8xf32>
    %852 = vector.multi_reduction <add>, %851, %cst_322 [1] : vector<8x32xf32> to vector<8xf32>
    %853 = vector.shape_cast %852 : vector<8xf32> to vector<8x1xf32>
    %cst_323 = arith.constant 3.200000e+01 : f32
    %854 = vector.broadcast %cst_323 : f32 to vector<8x1xf32>
    %855 = arith.divf %853, %854 : vector<8x1xf32>
    %856 = vector.broadcast %848 : vector<8x1xf32> to vector<8x32xf32>
    %857 = arith.subf %842, %856 : vector<8x32xf32>
    %cst_324 = arith.constant 9.99999974E-6 : f32
    %858 = vector.broadcast %cst_324 : f32 to vector<8x1xf32>
    %859 = arith.addf %855, %858 : vector<8x1xf32>
    %860 = math.rsqrt %859 : vector<8x1xf32>
    %861 = vector.broadcast %860 : vector<8x1xf32> to vector<8x32xf32>
    %862 = arith.mulf %857, %861 : vector<8x32xf32>
    %863 = vector.broadcast %843 : vector<1x32xf32> to vector<8x32xf32>
    %864 = arith.mulf %862, %863 : vector<8x32xf32>
    %865 = vector.broadcast %844 : vector<1x32xf32> to vector<8x32xf32>
    %866 = arith.addf %864, %865 : vector<8x32xf32>
    %c1_325 = arith.constant 1 : index
    %c0_326 = arith.constant 0 : index
    %c0_327 = arith.constant 0 : index
    %867 = vector.load %arg22[%c1_325, %c0_326, %c0_327] : memref<2x32x64xf32, #tpu.memory_space<vmem>>, vector<1x32x64xf32>
    %868 = vector.shape_cast %867 : vector<1x32x64xf32> to vector<32x64xf32>
    %c1_328 = arith.constant 1 : index
    %c0_329 = arith.constant 0 : index
    %c0_330 = arith.constant 0 : index
    %869 = vector.load %arg23[%c1_328, %c0_329, %c0_330] : memref<2x1x64xf32, #tpu.memory_space<vmem>>, vector<1x1x64xf32>
    %870 = vector.shape_cast %869 : vector<1x1x64xf32> to vector<1x64xf32>
    %cst_331 = arith.constant dense<0.000000e+00> : vector<8x64xf32>
    %871 = tpu.matmul %866, %868, %cst_331 {dimension_numbers = #tpu.dot_dimension_numbers<[1], [0], [0], [1], [0, 0, 1, 1], [], []>} : vector<8x32xf32>, vector<32x64xf32>, vector<8x64xf32> -> vector<8x64xf32>
    %872 = vector.broadcast %870 : vector<1x64xf32> to vector<8x64xf32>
    %873 = arith.addf %871, %872 : vector<8x64xf32>
    %cst_332 = arith.constant 0.000000e+00 : f32
    %874 = vector.broadcast %cst_332 : f32 to vector<8x64xf32>
    %875 = arith.maximumf %873, %874 : vector<8x64xf32>
    %c1_333 = arith.constant 1 : index
    %c0_334 = arith.constant 0 : index
    %c0_335 = arith.constant 0 : index
    %876 = vector.load %arg24[%c1_333, %c0_334, %c0_335] : memref<2x64x32xf32, #tpu.memory_space<vmem>>, vector<1x64x32xf32>
    %877 = vector.shape_cast %876 : vector<1x64x32xf32> to vector<64x32xf32>
    %c1_336 = arith.constant 1 : index
    %c0_337 = arith.constant 0 : index
    %c0_338 = arith.constant 0 : index
    %878 = vector.load %arg25[%c1_336, %c0_337, %c0_338] : memref<2x1x32xf32, #tpu.memory_space<vmem>>, vector<1x1x32xf32>
    %879 = vector.shape_cast %878 : vector<1x1x32xf32> to vector<1x32xf32>
    %cst_339 = arith.constant dense<0.000000e+00> : vector<8x32xf32>
    %880 = tpu.matmul %875, %877, %cst_339 {dimension_numbers = #tpu.dot_dimension_numbers<[1], [0], [0], [1], [0, 0, 1, 1], [], []>} : vector<8x64xf32>, vector<64x32xf32>, vector<8x32xf32> -> vector<8x32xf32>
    %881 = vector.broadcast %879 : vector<1x32xf32> to vector<8x32xf32>
    %882 = arith.addf %880, %881 : vector<8x32xf32>
    %883 = arith.addf %866, %882 : vector<8x32xf32>
    %884 = vector.extract_strided_slice %622 {offsets = [4, 0], sizes = [1, 32], strides = [1, 1]} : vector<6x32xf32> to vector<1x32xf32>
    %885 = vector.extract_strided_slice %622 {offsets = [5, 0], sizes = [1, 32], strides = [1, 1]} : vector<6x32xf32> to vector<1x32xf32>
    %cst_340 = arith.constant dense<0.000000e+00> : vector<8xf32>
    %886 = vector.multi_reduction <add>, %883, %cst_340 [1] : vector<8x32xf32> to vector<8xf32>
    %887 = vector.shape_cast %886 : vector<8xf32> to vector<8x1xf32>
    %cst_341 = arith.constant 3.200000e+01 : f32
    %888 = vector.broadcast %cst_341 : f32 to vector<8x1xf32>
    %889 = arith.divf %887, %888 : vector<8x1xf32>
    %890 = vector.broadcast %889 : vector<8x1xf32> to vector<8x32xf32>
    %891 = arith.subf %883, %890 : vector<8x32xf32>
    %892 = arith.mulf %891, %891 : vector<8x32xf32>
    %cst_342 = arith.constant dense<0.000000e+00> : vector<8xf32>
    %893 = vector.multi_reduction <add>, %892, %cst_342 [1] : vector<8x32xf32> to vector<8xf32>
    %894 = vector.shape_cast %893 : vector<8xf32> to vector<8x1xf32>
    %cst_343 = arith.constant 3.200000e+01 : f32
    %895 = vector.broadcast %cst_343 : f32 to vector<8x1xf32>
    %896 = arith.divf %894, %895 : vector<8x1xf32>
    %897 = vector.broadcast %889 : vector<8x1xf32> to vector<8x32xf32>
    %898 = arith.subf %883, %897 : vector<8x32xf32>
    %cst_344 = arith.constant 9.99999974E-6 : f32
    %899 = vector.broadcast %cst_344 : f32 to vector<8x1xf32>
    %900 = arith.addf %896, %899 : vector<8x1xf32>
    %901 = math.rsqrt %900 : vector<8x1xf32>
    %902 = vector.broadcast %901 : vector<8x1xf32> to vector<8x32xf32>
    %903 = arith.mulf %898, %902 : vector<8x32xf32>
    %904 = vector.broadcast %884 : vector<1x32xf32> to vector<8x32xf32>
    %905 = arith.mulf %903, %904 : vector<8x32xf32>
    %906 = vector.broadcast %885 : vector<1x32xf32> to vector<8x32xf32>
    %907 = arith.addf %905, %906 : vector<8x32xf32>
    %c0_345 = arith.constant 0 : index
    %c0_346 = arith.constant 0 : index
    %c0_347 = arith.constant 0 : index
    %908 = vector.load %arg27[%c0_345, %c0_346, %c0_347] : memref<1x8x32xf32, #tpu.memory_space<vmem>>, vector<1x8x32xf32>
    %909 = vector.shape_cast %908 : vector<1x8x32xf32> to vector<8x32xf32>
    %910 = vector.shape_cast %331 : vector<8x32xf32> to vector<1x8x32xf32>
    tpu.vector_store %arg27[%c0_345, %c0_346, %c0_347], %910 {strides = array<i32>} : memref<1x8x32xf32, #tpu.memory_space<vmem>>, vector<1x8x32xf32>,
    %c0_348 = arith.constant 0 : index
    %c0_349 = arith.constant 0 : index
    %c0_350 = arith.constant 0 : index
    %911 = vector.load %arg28[%c0_348, %c0_349, %c0_350] : memref<1x8x32xf32, #tpu.memory_space<vmem>>, vector<1x8x32xf32>
    %912 = vector.shape_cast %911 : vector<1x8x32xf32> to vector<8x32xf32>
    %913 = vector.shape_cast %907 : vector<8x32xf32> to vector<1x8x32xf32>
    tpu.vector_store %arg28[%c0_348, %c0_349, %c0_350], %913 {strides = array<i32>} : memref<1x8x32xf32, #tpu.memory_space<vmem>>, vector<1x8x32xf32>,
    return
  }
  func.func @transform_0(%arg0: i32) -> (i32, i32, i32) {
    %c0_i32 = arith.constant 0 : i32
    %c0_i32_0 = arith.constant 0 : i32
    %c0_i32_1 = arith.constant 0 : i32
    return %arg0, %c0_i32, %c0_i32_0 : i32, i32, i32
  }
  func.func @transform_1(%arg0: i32) -> (i32, i32, i32) {
    %c0_i32 = arith.constant 0 : i32
    %c0_i32_0 = arith.constant 0 : i32
    %c0_i32_1 = arith.constant 0 : i32
    return %arg0, %c0_i32, %c0_i32_0 : i32, i32, i32
  }
  func.func @transform_2(%arg0: i32) -> (i32, i32, i32) {
    %c0_i32 = arith.constant 0 : i32
    %c0_i32_0 = arith.constant 0 : i32
    %c0_i32_1 = arith.constant 0 : i32
    %c0_i32_2 = arith.constant 0 : i32
    return %c0_i32, %c0_i32_0, %c0_i32_1 : i32, i32, i32
  }
  func.func @transform_3(%arg0: i32) -> (i32, i32, i32) {
    %c0_i32 = arith.constant 0 : i32
    %c0_i32_0 = arith.constant 0 : i32
    %c0_i32_1 = arith.constant 0 : i32
    %c0_i32_2 = arith.constant 0 : i32
    return %c0_i32, %c0_i32_0, %c0_i32_1 : i32, i32, i32
  }
  func.func @transform_4(%arg0: i32) -> (i32, i32, i32) {
    %c0_i32 = arith.constant 0 : i32
    %c0_i32_0 = arith.constant 0 : i32
    %c0_i32_1 = arith.constant 0 : i32
    %c0_i32_2 = arith.constant 0 : i32
    return %c0_i32, %c0_i32_0, %c0_i32_1 : i32, i32, i32
  }
  func.func @transform_5(%arg0: i32) -> (i32, i32, i32) {
    %c0_i32 = arith.constant 0 : i32
    %c0_i32_0 = arith.constant 0 : i32
    %c0_i32_1 = arith.constant 0 : i32
    %c0_i32_2 = arith.constant 0 : i32
    return %c0_i32, %c0_i32_0, %c0_i32_1 : i32, i32, i32
  }
  func.func @transform_6(%arg0: i32) -> (i32, i32, i32) {
    %c0_i32 = arith.constant 0 : i32
    %c0_i32_0 = arith.constant 0 : i32
    %c0_i32_1 = arith.constant 0 : i32
    %c0_i32_2 = arith.constant 0 : i32
    return %c0_i32, %c0_i32_0, %c0_i32_1 : i32, i32, i32
  }
  func.func @transform_7(%arg0: i32) -> (i32, i32, i32) {
    %c0_i32 = arith.constant 0 : i32
    %c0_i32_0 = arith.constant 0 : i32
    %c0_i32_1 = arith.constant 0 : i32
    %c0_i32_2 = arith.constant 0 : i32
    return %c0_i32, %c0_i32_0, %c0_i32_1 : i32, i32, i32
  }
  func.func @transform_8(%arg0: i32) -> (i32, i32, i32) {
    %c0_i32 = arith.constant 0 : i32
    %c0_i32_0 = arith.constant 0 : i32
    %c0_i32_1 = arith.constant 0 : i32
    %c0_i32_2 = arith.constant 0 : i32
    return %c0_i32, %c0_i32_0, %c0_i32_1 : i32, i32, i32
  }
  func.func @transform_9(%arg0: i32) -> (i32, i32, i32) {
    %c0_i32 = arith.constant 0 : i32
    %c0_i32_0 = arith.constant 0 : i32
    %c0_i32_1 = arith.constant 0 : i32
    %c0_i32_2 = arith.constant 0 : i32
    return %c0_i32, %c0_i32_0, %c0_i32_1 : i32, i32, i32
  }
  func.func @transform_10(%arg0: i32) -> (i32, i32, i32) {
    %c0_i32 = arith.constant 0 : i32
    %c0_i32_0 = arith.constant 0 : i32
    %c0_i32_1 = arith.constant 0 : i32
    %c0_i32_2 = arith.constant 0 : i32
    return %c0_i32, %c0_i32_0, %c0_i32_1 : i32, i32, i32
  }
  func.func @transform_11(%arg0: i32) -> (i32, i32, i32) {
    %c0_i32 = arith.constant 0 : i32
    %c0_i32_0 = arith.constant 0 : i32
    %c0_i32_1 = arith.constant 0 : i32
    %c0_i32_2 = arith.constant 0 : i32
    return %c0_i32, %c0_i32_0, %c0_i32_1 : i32, i32, i32
  }
  func.func @transform_12(%arg0: i32) -> (i32, i32, i32) {
    %c0_i32 = arith.constant 0 : i32
    %c0_i32_0 = arith.constant 0 : i32
    %c0_i32_1 = arith.constant 0 : i32
    %c0_i32_2 = arith.constant 0 : i32
    return %c0_i32, %c0_i32_0, %c0_i32_1 : i32, i32, i32
  }
  func.func @transform_13(%arg0: i32) -> (i32, i32, i32) {
    %c0_i32 = arith.constant 0 : i32
    %c0_i32_0 = arith.constant 0 : i32
    %c0_i32_1 = arith.constant 0 : i32
    %c0_i32_2 = arith.constant 0 : i32
    return %c0_i32, %c0_i32_0, %c0_i32_1 : i32, i32, i32
  }
  func.func @transform_14(%arg0: i32) -> (i32, i32, i32) {
    %c0_i32 = arith.constant 0 : i32
    %c0_i32_0 = arith.constant 0 : i32
    %c0_i32_1 = arith.constant 0 : i32
    %c0_i32_2 = arith.constant 0 : i32
    return %c0_i32, %c0_i32_0, %c0_i32_1 : i32, i32, i32
  }
  func.func @transform_15(%arg0: i32) -> (i32, i32, i32) {
    %c0_i32 = arith.constant 0 : i32
    %c0_i32_0 = arith.constant 0 : i32
    %c0_i32_1 = arith.constant 0 : i32
    %c0_i32_2 = arith.constant 0 : i32
    return %c0_i32, %c0_i32_0, %c0_i32_1 : i32, i32, i32
  }
  func.func @transform_16(%arg0: i32) -> (i32, i32, i32) {
    %c0_i32 = arith.constant 0 : i32
    %c0_i32_0 = arith.constant 0 : i32
    %c0_i32_1 = arith.constant 0 : i32
    %c0_i32_2 = arith.constant 0 : i32
    return %c0_i32, %c0_i32_0, %c0_i32_1 : i32, i32, i32
  }
  func.func @transform_17(%arg0: i32) -> (i32, i32, i32) {
    %c0_i32 = arith.constant 0 : i32
    %c0_i32_0 = arith.constant 0 : i32
    %c0_i32_1 = arith.constant 0 : i32
    %c0_i32_2 = arith.constant 0 : i32
    return %c0_i32, %c0_i32_0, %c0_i32_1 : i32, i32, i32
  }
  func.func @transform_18(%arg0: i32) -> (i32, i32, i32) {
    %c0_i32 = arith.constant 0 : i32
    %c0_i32_0 = arith.constant 0 : i32
    %c0_i32_1 = arith.constant 0 : i32
    %c0_i32_2 = arith.constant 0 : i32
    return %c0_i32, %c0_i32_0, %c0_i32_1 : i32, i32, i32
  }
  func.func @transform_19(%arg0: i32) -> (i32, i32, i32) {
    %c0_i32 = arith.constant 0 : i32
    %c0_i32_0 = arith.constant 0 : i32
    %c0_i32_1 = arith.constant 0 : i32
    %c0_i32_2 = arith.constant 0 : i32
    return %c0_i32, %c0_i32_0, %c0_i32_1 : i32, i32, i32
  }
  func.func @transform_20(%arg0: i32) -> (i32, i32, i32) {
    %c0_i32 = arith.constant 0 : i32
    %c0_i32_0 = arith.constant 0 : i32
    %c0_i32_1 = arith.constant 0 : i32
    %c0_i32_2 = arith.constant 0 : i32
    return %c0_i32, %c0_i32_0, %c0_i32_1 : i32, i32, i32
  }
  func.func @transform_21(%arg0: i32) -> (i32, i32, i32) {
    %c0_i32 = arith.constant 0 : i32
    %c0_i32_0 = arith.constant 0 : i32
    %c0_i32_1 = arith.constant 0 : i32
    %c0_i32_2 = arith.constant 0 : i32
    return %c0_i32, %c0_i32_0, %c0_i32_1 : i32, i32, i32
  }
  func.func @transform_22(%arg0: i32) -> (i32, i32, i32) {
    %c0_i32 = arith.constant 0 : i32
    %c0_i32_0 = arith.constant 0 : i32
    %c0_i32_1 = arith.constant 0 : i32
    %c0_i32_2 = arith.constant 0 : i32
    return %c0_i32, %c0_i32_0, %c0_i32_1 : i32, i32, i32
  }
  func.func @transform_23(%arg0: i32) -> (i32, i32, i32) {
    %c0_i32 = arith.constant 0 : i32
    %c0_i32_0 = arith.constant 0 : i32
    %c0_i32_1 = arith.constant 0 : i32
    %c0_i32_2 = arith.constant 0 : i32
    return %c0_i32, %c0_i32_0, %c0_i32_1 : i32, i32, i32
  }
  func.func @transform_24(%arg0: i32) -> (i32, i32, i32) {
    %c0_i32 = arith.constant 0 : i32
    %c0_i32_0 = arith.constant 0 : i32
    %c0_i32_1 = arith.constant 0 : i32
    %c0_i32_2 = arith.constant 0 : i32
    return %c0_i32, %c0_i32_0, %c0_i32_1 : i32, i32, i32
  }
  func.func @transform_25(%arg0: i32) -> (i32, i32, i32) {
    %c0_i32 = arith.constant 0 : i32
    %c0_i32_0 = arith.constant 0 : i32
    %c0_i32_1 = arith.constant 0 : i32
    %c0_i32_2 = arith.constant 0 : i32
    return %c0_i32, %c0_i32_0, %c0_i32_1 : i32, i32, i32
  }
  func.func @transform_26(%arg0: i32) -> (i32, i32, i32) {
    %c0_i32 = arith.constant 0 : i32
    %c0_i32_0 = arith.constant 0 : i32
    %c0_i32_1 = arith.constant 0 : i32
    return %arg0, %c0_i32, %c0_i32_0 : i32, i32, i32
  }
  func.func @transform_27(%arg0: i32) -> (i32, i32, i32) {
    %c0_i32 = arith.constant 0 : i32
    %c0_i32_0 = arith.constant 0 : i32
    %c0_i32_1 = arith.constant 0 : i32
    return %arg0, %c0_i32, %c0_i32_0 : i32, i32, i32
  }
}

</mosaic_0001>

<llo_original>
// kernel: tpu_custom_call.1
$region0: #{tpu_custom_call.1}
  #allocation0 [shape = 'u32[]', space=smem, size = 0x4, offset = 0x4, fixed_abs, tag = 'smem constant byte address 0x4 - core index']
  #allocation1 [shape = 'u32[144,128]{1,0:T(1,128)}', space=vmem, size = 0x12000, scoped, tag = 'internal scratch']
  %s0 = inlined_call_operand.hbm [shape: f32[2,8,32], index: 0, kind: input, shape index: {}]
  %s1 = inlined_call_operand.hbm [shape: f32[2,8,32], index: 1, kind: input, shape index: {}]
  %s2 = inlined_call_operand.vmem [shape: f32[2,32,96], index: 2, kind: input, shape index: {}]
  %s3 = inlined_call_operand.vmem [shape: f32[2,1,96], index: 3, kind: input, shape index: {}]
  %s4 = inlined_call_operand.vmem [shape: f32[2,32,32], index: 4, kind: input, shape index: {}]
  %s5 = inlined_call_operand.hbm [shape: f32[2,1,32], index: 5, kind: input, shape index: {}]
  %s6 = inlined_call_operand.vmem [shape: f32[2,32,64], index: 6, kind: input, shape index: {}]
  %s7 = inlined_call_operand.hbm [shape: f32[2,1,64], index: 7, kind: input, shape index: {}]
  %s8 = inlined_call_operand.vmem [shape: f32[2,64,32], index: 8, kind: input, shape index: {}]
  %s9 = inlined_call_operand.hbm [shape: f32[2,1,32], index: 9, kind: input, shape index: {}]
  %s10 = inlined_call_operand.hbm [shape: f32[2,4,32], index: 10, kind: input, shape index: {}]
  %s11 = inlined_call_operand.vmem [shape: f32[2,32,96], index: 11, kind: input, shape index: {}]
  %s12 = inlined_call_operand.hbm [shape: f32[2,1,96], index: 12, kind: input, shape index: {}]
  %s13 = inlined_call_operand.vmem [shape: f32[2,32,32], index: 13, kind: input, shape index: {}]
  %s14 = inlined_call_operand.hbm [shape: f32[2,1,32], index: 14, kind: input, shape index: {}]
  %s15 = inlined_call_operand.hbm [shape: f32[2,32,32], index: 15, kind: input, shape index: {}]
  %s16 = inlined_call_operand.hbm [shape: f32[2,1,32], index: 16, kind: input, shape index: {}]
  %s17 = inlined_call_operand.hbm [shape: f32[2,32,64], index: 17, kind: input, shape index: {}]
  %s18 = inlined_call_operand.hbm [shape: f32[2,1,64], index: 18, kind: input, shape index: {}]
  %s19 = inlined_call_operand.hbm [shape: f32[2,32,32], index: 19, kind: input, shape index: {}]
  %s20 = inlined_call_operand.hbm [shape: f32[2,1,32], index: 20, kind: input, shape index: {}]
  %s21 = inlined_call_operand.vmem [shape: f32[2,32,64], index: 21, kind: input, shape index: {}]
  %s22 = inlined_call_operand.hbm [shape: f32[2,1,64], index: 22, kind: input, shape index: {}]
  %s23 = inlined_call_operand.vmem [shape: f32[2,64,32], index: 23, kind: input, shape index: {}]
  %s24 = inlined_call_operand.vmem [shape: f32[2,1,32], index: 24, kind: input, shape index: {}]
  %s25 = inlined_call_operand.vmem [shape: f32[2,6,32], index: 25, kind: input, shape index: {}]
  %s26 = inlined_call_operand.hbm [shape: f32[2,8,32], index: 26, kind: output, shape index: {0}]
  %s27 = inlined_call_operand.hbm [shape: f32[2,8,32], index: 27, kind: output, shape index: {1}]
  %28 = xla_tuple %s26, %s27
  %s29 = sld [smem:[#allocation0]]
  $region205: #{tpu_custom_call.1} parent=0
    _
  %s31 = ssub.s32 1, %s29
  %s32 = scalar_select 0, %s31, %s29
  $region1: #{tpu_custom_call.1} parent=0
    #allocation2 [shape = 'u8[8192]{0}', space=vmem, size = 0x2000, scoped, tag = 'input window, operand 0']
    #allocation3 [shape = 's32[2]{0}', space=sflag, size = 0x8, scoped, tag = 'scoped memory for tpu_custom_call.1']
    #allocation4 [shape = 's32[2]{0}', space=sflag, size = 0x8, scoped, tag = 'scoped memory for tpu_custom_call.1']
    #allocation5 [shape = 'u8[8192]{0}', space=vmem, size = 0x2000, scoped, tag = 'input window, operand 1']
    #allocation6 [shape = 's32[2]{0}', space=sflag, size = 0x8, scoped, tag = 'scoped memory for tpu_custom_call.1']
    #allocation7 [shape = 'u8[1024]{0}', space=vmem, size = 0x400, scoped, tag = 'input window, operand 5, single buffered']
    #allocation8 [shape = 'u8[1024]{0}', space=vmem, size = 0x400, scoped, tag = 'input window, operand 7, single buffered']
    #allocation9 [shape = 's32[1]{0}', space=sflag, size = 0x4, scoped, tag = 'scoped memory for tpu_custom_call.1']
    #allocation10 [shape = 'u8[1024]{0}', space=vmem, size = 0x400, scoped, tag = 'input window, operand 9, single buffered']
    #allocation11 [shape = 'u8[4096]{0}', space=vmem, size = 0x1000, scoped, tag = 'input window, operand 10, single buffered']
    #allocation12 [shape = 's32[1]{0}', space=sflag, size = 0x4, scoped, tag = 'scoped memory for tpu_custom_call.1']
    #allocation13 [shape = 'u8[1024]{0}', space=vmem, size = 0x400, scoped, tag = 'input window, operand 12, single buffered']
    #allocation14 [shape = 'u8[1024]{0}', space=vmem, size = 0x400, scoped, tag = 'input window, operand 14, single buffered']
    #allocation15 [shape = 's32[1]{0}', space=sflag, size = 0x4, scoped, tag = 'scoped memory for tpu_custom_call.1']
    #allocation16 [shape = 'u8[32768]{0}', space=vmem, size = 0x8000, scoped, tag = 'input window, operand 15, single buffered']
    #allocation17 [shape = 'u8[1024]{0}', space=vmem, size = 0x400, scoped, tag = 'input window, operand 16, single buffered']
    #allocation18 [shape = 's32[1]{0}', space=sflag, size = 0x4, scoped, tag = 'scoped memory for tpu_custom_call.1']
    #allocation19 [shape = 'u8[32768]{0}', space=vmem, size = 0x8000, scoped, tag = 'input window, operand 17, single buffered']
    #allocation20 [shape = 'u8[1024]{0}', space=vmem, size = 0x400, scoped, tag = 'input window, operand 18, single buffered']
    #allocation21 [shape = 's32[1]{0}', space=sflag, size = 0x4, scoped, tag = 'scoped memory for tpu_custom_call.1']
    #allocation22 [shape = 'u8[32768]{0}', space=vmem, size = 0x8000, scoped, tag = 'input window, operand 19, single buffered']
    #allocation23 [shape = 'u8[1024]{0}', space=vmem, size = 0x400, scoped, tag = 'input window, operand 20, single buffered']
    #allocation24 [shape = 's32[1]{0}', space=sflag, size = 0x4, scoped, tag = 'scoped memory for tpu_custom_call.1']
    #allocation25 [shape = 'u8[1024]{0}', space=vmem, size = 0x400, scoped, tag = 'input window, operand 22, single buffered']
    #allocation26 [shape = 'u8[8192]{0}', space=vmem, size = 0x2000, scoped, tag = 'output window, operand 0']
    #allocation27 [shape = 'u8[8192]{0}', space=vmem, size = 0x2000, scoped, tag = 'output window, operand 1']
    #allocation28 [shape = 's32[2]{0}', space=sflag, size = 0x8, scoped, tag = 'scoped memory for tpu_custom_call.1']
    %33 = vsyncpa [#allocation3], 0
    %s34 = scalar_lea.sflag [#allocation3], 1
    %35 = vsyncpa %s34, 0
    %36 = vsyncpa [#allocation6], 0
    %s37 = scalar_lea.sflag [#allocation6], 1
    %38 = vsyncpa %s37, 0
    %39 = vsyncpa [#allocation9], 0
    %40 = vsyncpa [#allocation12], 0
    %41 = vsyncpa [#allocation15], 0
    %42 = vsyncpa [#allocation18], 0
    %43 = vsyncpa [#allocation21], 0
    %44 = vsyncpa [#allocation24], 0
    %45 = vsyncpa [#allocation4], 0
    %s46 = scalar_lea.sflag [#allocation4], 1
    %47 = vsyncpa %s46, 0
    %48 = vsyncpa [#allocation28], 0
    %s49 = scalar_lea.sflag [#allocation28], 1
    %50 = vsyncpa %s49, 0
    loop: start=0, step=1, limit=4
    $region2: #{tpu_custom_call.1} parent=1 // loop_pre_header
      _
    $region3: #{tpu_custom_call.1} parent=1 // loop_header
      %s52 = sphi 0, %s56
      %p53 = scmp.ge.s32.totalorder %s52, 4
      %s62 = sphi 0, %s64
      %s65 = sphi 0, %s62
      %s66 = sphi 0, %s65
      %s82 = sphi 0, %s66
      %s88 = sphi 0, %s90
      %s91 = sphi 0, %s88
      %s92 = sphi 0, %s91
      %s108 = sphi 0, %s92
      %s112 = sphi 0, %s112
      %s114 = sphi 0, %s112
      %s115 = sphi 0, %s114
      %s129 = sphi 0, %s115
      %s133 = sphi 0, %s133
      %s135 = sphi 0, %s133
      %s136 = sphi 0, %s135
      %s150 = sphi 0, %s136
      %s154 = sphi 0, %s154
      %s156 = sphi 0, %s154
      %s157 = sphi 0, %s156
      %s171 = sphi 0, %s157
      %s175 = sphi 0, %s175
      %s177 = sphi 0, %s175
      %s178 = sphi 0, %s177
      %s192 = sphi 0, %s178
      %s196 = sphi 0, %s196
      %s198 = sphi 0, %s196
      %s199 = sphi 0, %s198
      %s213 = sphi 0, %s199
      %s217 = sphi 0, %s217
      %s219 = sphi 0, %s217
      %s220 = sphi 0, %s219
      %s234 = sphi 0, %s220
      %s238 = sphi 0, %s238
      %s240 = sphi 0, %s238
      %s241 = sphi 0, %s240
      %s255 = sphi 0, %s241
      %s259 = sphi 0, %s259
      %s261 = sphi 0, %s259
      %s262 = sphi 0, %s261
      %s276 = sphi 0, %s262
      %s280 = sphi 0, %s280
      %s282 = sphi 0, %s280
      %s283 = sphi 0, %s282
      %s297 = sphi 0, %s283
      %s301 = sphi 0, %s301
      %s303 = sphi 0, %s301
      %s304 = sphi 0, %s303
      %s318 = sphi 0, %s304
      %s322 = sphi 0, %s322
      %s324 = sphi 0, %s322
      %s325 = sphi 0, %s324
      %s339 = sphi 0, %s325
      %s343 = sphi 0, %s343
      %s345 = sphi 0, %s343
      %s346 = sphi 0, %s345
      %s360 = sphi 0, %s346
      %s364 = sphi 0, %s364
      %s366 = sphi 0, %s364
      %s367 = sphi 0, %s366
      %s381 = sphi 0, %s367
      %s385 = sphi 0, %s385
      %s387 = sphi 0, %s385
      %s388 = sphi 0, %s387
      %s402 = sphi 0, %s388
      %s406 = sphi 0, %s406
      %s408 = sphi 0, %s406
      %s409 = sphi 0, %s408
      %s423 = sphi 0, %s409
      %s427 = sphi 0, %s427
      %s429 = sphi 0, %s427
      %s430 = sphi 0, %s429
      %s444 = sphi 0, %s430
      %s448 = sphi 0, %s448
      %s450 = sphi 0, %s448
      %s451 = sphi 0, %s450
      %s465 = sphi 0, %s451
      %s469 = sphi 0, %s469
      %s471 = sphi 0, %s469
      %s472 = sphi 0, %s471
      %s486 = sphi 0, %s472
      %s490 = sphi 0, %s490
      %s492 = sphi 0, %s490
      %s493 = sphi 0, %s492
      %s507 = sphi 0, %s493
      %s511 = sphi 0, %s511
      %s513 = sphi 0, %s511
      %s514 = sphi 0, %s513
      %s528 = sphi 0, %s514
      %s532 = sphi 0, %s532
      %s534 = sphi 0, %s532
      %s535 = sphi 0, %s534
      %s549 = sphi 0, %s535
      %s553 = sphi 0, %s553
      %s555 = sphi 0, %s553
      %s556 = sphi 0, %s555
      %s570 = sphi 0, %s556
      %s574 = sphi 0, %s574
      %s576 = sphi 0, %s574
      %s577 = sphi 0, %s576
      %s591 = sphi 0, %s577
      %s595 = sphi 0, %s595
      %s597 = sphi 0, %s595
      %s598 = sphi 0, %s597
      %s612 = sphi 0, %s598
      %s618 = sphi 0, %s620
      %s621 = sphi 0, %s618
      %s622 = sphi 0, %s621
      %s638 = sphi 0, %s622
      %s644 = sphi 0, %s646
      %s647 = sphi 0, %s644
      %s648 = sphi 0, %s647
      %s664 = sphi 0, %s648
    $region4: #{tpu_custom_call.1} parent=1 // loop_header_branch
      %55 = sbr.rel (%p53) target = $region8
    $region5: #{tpu_custom_call.1} parent=1 // loop_body
      %s57 = ssub.s32 %s52, 1
      %s58 = ssub.s32 %s52, 2
      %s59 = sadd.s32 %s52, 1
      %s60 = ssub.s32 %s52, %s59
      %p61 = scmp.eq.s32.totalorder %s60, 0
      %s63 = sadd.s32 %s62, 1
      %s64 = scalar_select %p61, %s62, %s63
      %p67 = pneg %p61
      %p68 = scmp.eq.s32.totalorder %s52, 1
      %p69 = por %p67, %p68
      %p70 = scmp.ne.s32.totalorder %s62, %s65
      %p71 = scmp.eq.s32.totalorder %s52, 0
      %p72 = por %p70, %p71
      %p73 = scmp.ne.s32.totalorder %s62, %s65
      %p74 = scmp.eq.s32.totalorder %s57, 1
      %p75 = por %p73, %p74
      %p76 = scmp.ne.s32.totalorder %s65, %s66
      %p77 = scmp.eq.s32.totalorder %s57, 0
      %p78 = por %p76, %p77
      %p79 = scmp.ne.s32.totalorder %s65, %s66
      %p80 = scmp.eq.s32.totalorder %s58, 1
      %p81 = por %p79, %p80
      %p83 = scmp.ne.s32.totalorder %s66, %s82
      %p84 = scmp.eq.s32.totalorder %s58, 0
      %p85 = por %p83, %p84
      %s86 = ssub.s32 %s52, %s59
      %p87 = scmp.eq.s32.totalorder %s86, 0
      %s89 = sadd.s32 %s88, 1
      %s90 = scalar_select %p87, %s88, %s89
      %p93 = pneg %p87
      %p94 = scmp.eq.s32.totalorder %s52, 1
      %p95 = por %p93, %p94
      %p96 = scmp.ne.s32.totalorder %s88, %s91
      %p97 = scmp.eq.s32.totalorder %s52, 0
      %p98 = por %p96, %p97
      %p99 = scmp.ne.s32.totalorder %s88, %s91
      %p100 = scmp.eq.s32.totalorder %s57, 1
      %p101 = por %p99, %p100
      %p102 = scmp.ne.s32.totalorder %s91, %s92
      %p103 = scmp.eq.s32.totalorder %s57, 0
      %p104 = por %p102, %p103
      %p105 = scmp.ne.s32.totalorder %s91, %s92
      %p106 = scmp.eq.s32.totalorder %s58, 1
      %p107 = por %p105, %p106
      %p109 = scmp.ne.s32.totalorder %s92, %s108
      %p110 = scmp.eq.s32.totalorder %s58, 0
      %p111 = por %p109, %p110
      %s113 = sadd.s32 %s112, 1
      %p116 = scmp.eq.s32.totalorder %s52, 1
      %p117 = scmp.ne.s32.totalorder %s112, %s114
      %p118 = scmp.eq.s32.totalorder %s52, 0
      %p119 = por %p117, %p118
      %p120 = scmp.ne.s32.totalorder %s112, %s114
      %p121 = scmp.eq.s32.totalorder %s57, 1
      %p122 = por %p120, %p121
      %p123 = scmp.ne.s32.totalorder %s114, %s115
      %p124 = scmp.eq.s32.totalorder %s57, 0
      %p125 = por %p123, %p124
      %p126 = scmp.ne.s32.totalorder %s114, %s115
      %p127 = scmp.eq.s32.totalorder %s58, 1
      %p128 = por %p126, %p127
      %p130 = scmp.ne.s32.totalorder %s115, %s129
      %p131 = scmp.eq.s32.totalorder %s58, 0
      %p132 = por %p130, %p131
      %s134 = sadd.s32 %s133, 1
      %p137 = scmp.eq.s32.totalorder %s52, 1
      %p138 = scmp.ne.s32.totalorder %s133, %s135
      %p139 = scmp.eq.s32.totalorder %s52, 0
      %p140 = por %p138, %p139
      %p141 = scmp.ne.s32.totalorder %s133, %s135
      %p142 = scmp.eq.s32.totalorder %s57, 1
      %p143 = por %p141, %p142
      %p144 = scmp.ne.s32.totalorder %s135, %s136
      %p145 = scmp.eq.s32.totalorder %s57, 0
      %p146 = por %p144, %p145
      %p147 = scmp.ne.s32.totalorder %s135, %s136
      %p148 = scmp.eq.s32.totalorder %s58, 1
      %p149 = por %p147, %p148
      %p151 = scmp.ne.s32.totalorder %s136, %s150
      %p152 = scmp.eq.s32.totalorder %s58, 0
      %p153 = por %p151, %p152
      %s155 = sadd.s32 %s154, 1
      %p158 = scmp.eq.s32.totalorder %s52, 1
      %p159 = scmp.ne.s32.totalorder %s154, %s156
      %p160 = scmp.eq.s32.totalorder %s52, 0
      %p161 = por %p159, %p160
      %p162 = scmp.ne.s32.totalorder %s154, %s156
      %p163 = scmp.eq.s32.totalorder %s57, 1
      %p164 = por %p162, %p163
      %p165 = scmp.ne.s32.totalorder %s156, %s157
      %p166 = scmp.eq.s32.totalorder %s57, 0
      %p167 = por %p165, %p166
      %p168 = scmp.ne.s32.totalorder %s156, %s157
      %p169 = scmp.eq.s32.totalorder %s58, 1
      %p170 = por %p168, %p169
      %p172 = scmp.ne.s32.totalorder %s157, %s171
      %p173 = scmp.eq.s32.totalorder %s58, 0
      %p174 = por %p172, %p173
      %s176 = sadd.s32 %s175, 1
      %p179 = scmp.eq.s32.totalorder %s52, 1
      %p180 = scmp.ne.s32.totalorder %s175, %s177
      %p181 = scmp.eq.s32.totalorder %s52, 0
      %p182 = por %p180, %p181
      %p183 = scmp.ne.s32.totalorder %s175, %s177
      %p184 = scmp.eq.s32.totalorder %s57, 1
      %p185 = por %p183, %p184
      %p186 = scmp.ne.s32.totalorder %s177, %s178
      %p187 = scmp.eq.s32.totalorder %s57, 0
      %p188 = por %p186, %p187
      %p189 = scmp.ne.s32.totalorder %s177, %s178
      %p190 = scmp.eq.s32.totalorder %s58, 1
      %p191 = por %p189, %p190
      %p193 = scmp.ne.s32.totalorder %s178, %s192
      %p194 = scmp.eq.s32.totalorder %s58, 0
      %p195 = por %p193, %p194
      %s197 = sadd.s32 %s196, 1
      %p200 = scmp.eq.s32.totalorder %s52, 1
      %p201 = scmp.ne.s32.totalorder %s196, %s198
      %p202 = scmp.eq.s32.totalorder %s52, 0
      %p203 = por %p201, %p202
      %p204 = scmp.ne.s32.totalorder %s196, %s198
      %p205 = scmp.eq.s32.totalorder %s57, 1
      %p206 = por %p204, %p205
      %p207 = scmp.ne.s32.totalorder %s198, %s199
      %p208 = scmp.eq.s32.totalorder %s57, 0
      %p209 = por %p207, %p208
      %p210 = scmp.ne.s32.totalorder %s198, %s199
      %p211 = scmp.eq.s32.totalorder %s58, 1
      %p212 = por %p210, %p211
      %p214 = scmp.ne.s32.totalorder %s199, %s213
      %p215 = scmp.eq.s32.totalorder %s58, 0
      %p216 = por %p214, %p215
      %s218 = sadd.s32 %s217, 1
      %p221 = scmp.eq.s32.totalorder %s52, 1
      %p222 = scmp.ne.s32.totalorder %s217, %s219
      %p223 = scmp.eq.s32.totalorder %s52, 0
      %p224 = por %p222, %p223
      %p225 = scmp.ne.s32.totalorder %s217, %s219
      %p226 = scmp.eq.s32.totalorder %s57, 1
      %p227 = por %p225, %p226
      %p228 = scmp.ne.s32.totalorder %s219, %s220
      %p229 = scmp.eq.s32.totalorder %s57, 0
      %p230 = por %p228, %p229
      %p231 = scmp.ne.s32.totalorder %s219, %s220
      %p232 = scmp.eq.s32.totalorder %s58, 1
      %p233 = por %p231, %p232
      %p235 = scmp.ne.s32.totalorder %s220, %s234
      %p236 = scmp.eq.s32.totalorder %s58, 0
      %p237 = por %p235, %p236
      %s239 = sadd.s32 %s238, 1
      %p242 = scmp.eq.s32.totalorder %s52, 1
      %p243 = scmp.ne.s32.totalorder %s238, %s240
      %p244 = scmp.eq.s32.totalorder %s52, 0
      %p245 = por %p243, %p244
      %p246 = scmp.ne.s32.totalorder %s238, %s240
      %p247 = scmp.eq.s32.totalorder %s57, 1
      %p248 = por %p246, %p247
      %p249 = scmp.ne.s32.totalorder %s240, %s241
      %p250 = scmp.eq.s32.totalorder %s57, 0
      %p251 = por %p249, %p250
      %p252 = scmp.ne.s32.totalorder %s240, %s241
      %p253 = scmp.eq.s32.totalorder %s58, 1
      %p254 = por %p252, %p253
      %p256 = scmp.ne.s32.totalorder %s241, %s255
      %p257 = scmp.eq.s32.totalorder %s58, 0
      %p258 = por %p256, %p257
      %s260 = sadd.s32 %s259, 1
      %p263 = scmp.eq.s32.totalorder %s52, 1
      %p264 = scmp.ne.s32.totalorder %s259, %s261
      %p265 = scmp.eq.s32.totalorder %s52, 0
      %p266 = por %p264, %p265
      %p267 = scmp.ne.s32.totalorder %s259, %s261
      %p268 = scmp.eq.s32.totalorder %s57, 1
      %p269 = por %p267, %p268
      %p270 = scmp.ne.s32.totalorder %s261, %s262
      %p271 = scmp.eq.s32.totalorder %s57, 0
      %p272 = por %p270, %p271
      %p273 = scmp.ne.s32.totalorder %s261, %s262
      %p274 = scmp.eq.s32.totalorder %s58, 1
      %p275 = por %p273, %p274
      %p277 = scmp.ne.s32.totalorder %s262, %s276
      %p278 = scmp.eq.s32.totalorder %s58, 0
      %p279 = por %p277, %p278
      %s281 = sadd.s32 %s280, 1
      %p284 = scmp.eq.s32.totalorder %s52, 1
      %p285 = scmp.ne.s32.totalorder %s280, %s282
      %p286 = scmp.eq.s32.totalorder %s52, 0
      %p287 = por %p285, %p286
      %p288 = scmp.ne.s32.totalorder %s280, %s282
      %p289 = scmp.eq.s32.totalorder %s57, 1
      %p290 = por %p288, %p289
      %p291 = scmp.ne.s32.totalorder %s282, %s283
      %p292 = scmp.eq.s32.totalorder %s57, 0
      %p293 = por %p291, %p292
      %p294 = scmp.ne.s32.totalorder %s282, %s283
      %p295 = scmp.eq.s32.totalorder %s58, 1
      %p296 = por %p294, %p295
      %p298 = scmp.ne.s32.totalorder %s283, %s297
      %p299 = scmp.eq.s32.totalorder %s58, 0
      %p300 = por %p298, %p299
      %s302 = sadd.s32 %s301, 1
      %p305 = scmp.eq.s32.totalorder %s52, 1
      %p306 = scmp.ne.s32.totalorder %s301, %s303
      %p307 = scmp.eq.s32.totalorder %s52, 0
      %p308 = por %p306, %p307
      %p309 = scmp.ne.s32.totalorder %s301, %s303
      %p310 = scmp.eq.s32.totalorder %s57, 1
      %p311 = por %p309, %p310
      %p312 = scmp.ne.s32.totalorder %s303, %s304
      %p313 = scmp.eq.s32.totalorder %s57, 0
      %p314 = por %p312, %p313
      %p315 = scmp.ne.s32.totalorder %s303, %s304
      %p316 = scmp.eq.s32.totalorder %s58, 1
      %p317 = por %p315, %p316
      %p319 = scmp.ne.s32.totalorder %s304, %s318
      %p320 = scmp.eq.s32.totalorder %s58, 0
      %p321 = por %p319, %p320
      %s323 = sadd.s32 %s322, 1
      %p326 = scmp.eq.s32.totalorder %s52, 1
      %p327 = scmp.ne.s32.totalorder %s322, %s324
      %p328 = scmp.eq.s32.totalorder %s52, 0
      %p329 = por %p327, %p328
      %p330 = scmp.ne.s32.totalorder %s322, %s324
      %p331 = scmp.eq.s32.totalorder %s57, 1
      %p332 = por %p330, %p331
      %p333 = scmp.ne.s32.totalorder %s324, %s325
      %p334 = scmp.eq.s32.totalorder %s57, 0
      %p335 = por %p333, %p334
      %p336 = scmp.ne.s32.totalorder %s324, %s325
      %p337 = scmp.eq.s32.totalorder %s58, 1
      %p338 = por %p336, %p337
      %p340 = scmp.ne.s32.totalorder %s325, %s339
      %p341 = scmp.eq.s32.totalorder %s58, 0
      %p342 = por %p340, %p341
      %s344 = sadd.s32 %s343, 1
      %p347 = scmp.eq.s32.totalorder %s52, 1
      %p348 = scmp.ne.s32.totalorder %s343, %s345
      %p349 = scmp.eq.s32.totalorder %s52, 0
      %p350 = por %p348, %p349
      %p351 = scmp.ne.s32.totalorder %s343, %s345
      %p352 = scmp.eq.s32.totalorder %s57, 1
      %p353 = por %p351, %p352
      %p354 = scmp.ne.s32.totalorder %s345, %s346
      %p355 = scmp.eq.s32.totalorder %s57, 0
      %p356 = por %p354, %p355
      %p357 = scmp.ne.s32.totalorder %s345, %s346
      %p358 = scmp.eq.s32.totalorder %s58, 1
      %p359 = por %p357, %p358
      %p361 = scmp.ne.s32.totalorder %s346, %s360
      %p362 = scmp.eq.s32.totalorder %s58, 0
      %p363 = por %p361, %p362
      %s365 = sadd.s32 %s364, 1
      %p368 = scmp.eq.s32.totalorder %s52, 1
      %p369 = scmp.ne.s32.totalorder %s364, %s366
      %p370 = scmp.eq.s32.totalorder %s52, 0
      %p371 = por %p369, %p370
      %p372 = scmp.ne.s32.totalorder %s364, %s366
      %p373 = scmp.eq.s32.totalorder %s57, 1
      %p374 = por %p372, %p373
      %p375 = scmp.ne.s32.totalorder %s366, %s367
      %p376 = scmp.eq.s32.totalorder %s57, 0
      %p377 = por %p375, %p376
      %p378 = scmp.ne.s32.totalorder %s366, %s367
      %p379 = scmp.eq.s32.totalorder %s58, 1
      %p380 = por %p378, %p379
      %p382 = scmp.ne.s32.totalorder %s367, %s381
      %p383 = scmp.eq.s32.totalorder %s58, 0
      %p384 = por %p382, %p383
      %s386 = sadd.s32 %s385, 1
      %p389 = scmp.eq.s32.totalorder %s52, 1
      %p390 = scmp.ne.s32.totalorder %s385, %s387
      %p391 = scmp.eq.s32.totalorder %s52, 0
      %p392 = por %p390, %p391
      %p393 = scmp.ne.s32.totalorder %s385, %s387
      %p394 = scmp.eq.s32.totalorder %s57, 1
      %p395 = por %p393, %p394
      %p396 = scmp.ne.s32.totalorder %s387, %s388
      %p397 = scmp.eq.s32.totalorder %s57, 0
      %p398 = por %p396, %p397
      %p399 = scmp.ne.s32.totalorder %s387, %s388
      %p400 = scmp.eq.s32.totalorder %s58, 1
      %p401 = por %p399, %p400
      %p403 = scmp.ne.s32.totalorder %s388, %s402
      %p404 = scmp.eq.s32.totalorder %s58, 0
      %p405 = por %p403, %p404
      %s407 = sadd.s32 %s406, 1
      %p410 = scmp.eq.s32.totalorder %s52, 1
      %p411 = scmp.ne.s32.totalorder %s406, %s408
      %p412 = scmp.eq.s32.totalorder %s52, 0
      %p413 = por %p411, %p412
      %p414 = scmp.ne.s32.totalorder %s406, %s408
      %p415 = scmp.eq.s32.totalorder %s57, 1
      %p416 = por %p414, %p415
      %p417 = scmp.ne.s32.totalorder %s408, %s409
      %p418 = scmp.eq.s32.totalorder %s57, 0
      %p419 = por %p417, %p418
      %p420 = scmp.ne.s32.totalorder %s408, %s409
      %p421 = scmp.eq.s32.totalorder %s58, 1
      %p422 = por %p420, %p421
      %p424 = scmp.ne.s32.totalorder %s409, %s423
      %p425 = scmp.eq.s32.totalorder %s58, 0
      %p426 = por %p424, %p425
      %s428 = sadd.s32 %s427, 1
      %p431 = scmp.eq.s32.totalorder %s52, 1
      %p432 = scmp.ne.s32.totalorder %s427, %s429
      %p433 = scmp.eq.s32.totalorder %s52, 0
      %p434 = por %p432, %p433
      %p435 = scmp.ne.s32.totalorder %s427, %s429
      %p436 = scmp.eq.s32.totalorder %s57, 1
      %p437 = por %p435, %p436
      %p438 = scmp.ne.s32.totalorder %s429, %s430
      %p439 = scmp.eq.s32.totalorder %s57, 0
      %p440 = por %p438, %p439
      %p441 = scmp.ne.s32.totalorder %s429, %s430
      %p442 = scmp.eq.s32.totalorder %s58, 1
      %p443 = por %p441, %p442
      %p445 = scmp.ne.s32.totalorder %s430, %s444
      %p446 = scmp.eq.s32.totalorder %s58, 0
      %p447 = por %p445, %p446
      %s449 = sadd.s32 %s448, 1
      %p452 = scmp.eq.s32.totalorder %s52, 1
      %p453 = scmp.ne.s32.totalorder %s448, %s450
      %p454 = scmp.eq.s32.totalorder %s52, 0
      %p455 = por %p453, %p454
      %p456 = scmp.ne.s32.totalorder %s448, %s450
      %p457 = scmp.eq.s32.totalorder %s57, 1
      %p458 = por %p456, %p457
      %p459 = scmp.ne.s32.totalorder %s450, %s451
      %p460 = scmp.eq.s32.totalorder %s57, 0
      %p461 = por %p459, %p460
      %p462 = scmp.ne.s32.totalorder %s450, %s451
      %p463 = scmp.eq.s32.totalorder %s58, 1
      %p464 = por %p462, %p463
      %p466 = scmp.ne.s32.totalorder %s451, %s465
      %p467 = scmp.eq.s32.totalorder %s58, 0
      %p468 = por %p466, %p467
      %s470 = sadd.s32 %s469, 1
      %p473 = scmp.eq.s32.totalorder %s52, 1
      %p474 = scmp.ne.s32.totalorder %s469, %s471
      %p475 = scmp.eq.s32.totalorder %s52, 0
      %p476 = por %p474, %p475
      %p477 = scmp.ne.s32.totalorder %s469, %s471
      %p478 = scmp.eq.s32.totalorder %s57, 1
      %p479 = por %p477, %p478
      %p480 = scmp.ne.s32.totalorder %s471, %s472
      %p481 = scmp.eq.s32.totalorder %s57, 0
      %p482 = por %p480, %p481
      %p483 = scmp.ne.s32.totalorder %s471, %s472
      %p484 = scmp.eq.s32.totalorder %s58, 1
      %p485 = por %p483, %p484
      %p487 = scmp.ne.s32.totalorder %s472, %s486
      %p488 = scmp.eq.s32.totalorder %s58, 0
      %p489 = por %p487, %p488
      %s491 = sadd.s32 %s490, 1
      %p494 = scmp.eq.s32.totalorder %s52, 1
      %p495 = scmp.ne.s32.totalorder %s490, %s492
      %p496 = scmp.eq.s32.totalorder %s52, 0
      %p497 = por %p495, %p496
      %p498 = scmp.ne.s32.totalorder %s490, %s492
      %p499 = scmp.eq.s32.totalorder %s57, 1
      %p500 = por %p498, %p499
      %p501 = scmp.ne.s32.totalorder %s492, %s493
      %p502 = scmp.eq.s32.totalorder %s57, 0
      %p503 = por %p501, %p502
      %p504 = scmp.ne.s32.totalorder %s492, %s493
      %p505 = scmp.eq.s32.totalorder %s58, 1
      %p506 = por %p504, %p505
      %p508 = scmp.ne.s32.totalorder %s493, %s507
      %p509 = scmp.eq.s32.totalorder %s58, 0
      %p510 = por %p508, %p509
      %s512 = sadd.s32 %s511, 1
      %p515 = scmp.eq.s32.totalorder %s52, 1
      %p516 = scmp.ne.s32.totalorder %s511, %s513
      %p517 = scmp.eq.s32.totalorder %s52, 0
      %p518 = por %p516, %p517
      %p519 = scmp.ne.s32.totalorder %s511, %s513
      %p520 = scmp.eq.s32.totalorder %s57, 1
      %p521 = por %p519, %p520
      %p522 = scmp.ne.s32.totalorder %s513, %s514
      %p523 = scmp.eq.s32.totalorder %s57, 0
      %p524 = por %p522, %p523
      %p525 = scmp.ne.s32.totalorder %s513, %s514
      %p526 = scmp.eq.s32.totalorder %s58, 1
      %p527 = por %p525, %p526
      %p529 = scmp.ne.s32.totalorder %s514, %s528
      %p530 = scmp.eq.s32.totalorder %s58, 0
      %p531 = por %p529, %p530
      %s533 = sadd.s32 %s532, 1
      %p536 = scmp.eq.s32.totalorder %s52, 1
      %p537 = scmp.ne.s32.totalorder %s532, %s534
      %p538 = scmp.eq.s32.totalorder %s52, 0
      %p539 = por %p537, %p538
      %p540 = scmp.ne.s32.totalorder %s532, %s534
      %p541 = scmp.eq.s32.totalorder %s57, 1
      %p542 = por %p540, %p541
      %p543 = scmp.ne.s32.totalorder %s534, %s535
      %p544 = scmp.eq.s32.totalorder %s57, 0
      %p545 = por %p543, %p544
      %p546 = scmp.ne.s32.totalorder %s534, %s535
      %p547 = scmp.eq.s32.totalorder %s58, 1
      %p548 = por %p546, %p547
      %p550 = scmp.ne.s32.totalorder %s535, %s549
      %p551 = scmp.eq.s32.totalorder %s58, 0
      %p552 = por %p550, %p551
      %s554 = sadd.s32 %s553, 1
      %p557 = scmp.eq.s32.totalorder %s52, 1
      %p558 = scmp.ne.s32.totalorder %s553, %s555
      %p559 = scmp.eq.s32.totalorder %s52, 0
      %p560 = por %p558, %p559
      %p561 = scmp.ne.s32.totalorder %s553, %s555
      %p562 = scmp.eq.s32.totalorder %s57, 1
      %p563 = por %p561, %p562
      %p564 = scmp.ne.s32.totalorder %s555, %s556
      %p565 = scmp.eq.s32.totalorder %s57, 0
      %p566 = por %p564, %p565
      %p567 = scmp.ne.s32.totalorder %s555, %s556
      %p568 = scmp.eq.s32.totalorder %s58, 1
      %p569 = por %p567, %p568
      %p571 = scmp.ne.s32.totalorder %s556, %s570
      %p572 = scmp.eq.s32.totalorder %s58, 0
      %p573 = por %p571, %p572
      %s575 = sadd.s32 %s574, 1
      %p578 = scmp.eq.s32.totalorder %s52, 1
      %p579 = scmp.ne.s32.totalorder %s574, %s576
      %p580 = scmp.eq.s32.totalorder %s52, 0
      %p581 = por %p579, %p580
      %p582 = scmp.ne.s32.totalorder %s574, %s576
      %p583 = scmp.eq.s32.totalorder %s57, 1
      %p584 = por %p582, %p583
      %p585 = scmp.ne.s32.totalorder %s576, %s577
      %p586 = scmp.eq.s32.totalorder %s57, 0
      %p587 = por %p585, %p586
      %p588 = scmp.ne.s32.totalorder %s576, %s577
      %p589 = scmp.eq.s32.totalorder %s58, 1
      %p590 = por %p588, %p589
      %p592 = scmp.ne.s32.totalorder %s577, %s591
      %p593 = scmp.eq.s32.totalorder %s58, 0
      %p594 = por %p592, %p593
      %s596 = sadd.s32 %s595, 1
      %p599 = scmp.eq.s32.totalorder %s52, 1
      %p600 = scmp.ne.s32.totalorder %s595, %s597
      %p601 = scmp.eq.s32.totalorder %s52, 0
      %p602 = por %p600, %p601
      %p603 = scmp.ne.s32.totalorder %s595, %s597
      %p604 = scmp.eq.s32.totalorder %s57, 1
      %p605 = por %p603, %p604
      %p606 = scmp.ne.s32.totalorder %s597, %s598
      %p607 = scmp.eq.s32.totalorder %s57, 0
      %p608 = por %p606, %p607
      %p609 = scmp.ne.s32.totalorder %s597, %s598
      %p610 = scmp.eq.s32.totalorder %s58, 1
      %p611 = por %p609, %p610
      %p613 = scmp.ne.s32.totalorder %s598, %s612
      %p614 = scmp.eq.s32.totalorder %s58, 0
      %p615 = por %p613, %p614
      %s616 = ssub.s32 %s52, %s59
      %p617 = scmp.eq.s32.totalorder %s616, 0
      %s619 = sadd.s32 %s618, 1
      %s620 = scalar_select %p617, %s618, %s619
      %p623 = pneg %p617
      %p624 = scmp.eq.s32.totalorder %s52, 1
      %p625 = por %p623, %p624
      %p626 = scmp.ne.s32.totalorder %s618, %s621
      %p627 = scmp.eq.s32.totalorder %s52, 0
      %p628 = por %p626, %p627
      %p629 = scmp.ne.s32.totalorder %s618, %s621
      %p630 = scmp.eq.s32.totalorder %s57, 1
      %p631 = por %p629, %p630
      %p632 = scmp.ne.s32.totalorder %s621, %s622
      %p633 = scmp.eq.s32.totalorder %s57, 0
      %p634 = por %p632, %p633
      %p635 = scmp.ne.s32.totalorder %s621, %s622
      %p636 = scmp.eq.s32.totalorder %s58, 1
      %p637 = por %p635, %p636
      %p639 = scmp.ne.s32.totalorder %s622, %s638
      %p640 = scmp.eq.s32.totalorder %s58, 0
      %p641 = por %p639, %p640
      %s642 = ssub.s32 %s52, %s59
      %p643 = scmp.eq.s32.totalorder %s642, 0
      %s645 = sadd.s32 %s644, 1
      %s646 = scalar_select %p643, %s644, %s645
      %p649 = pneg %p643
      %p650 = scmp.eq.s32.totalorder %s52, 1
      %p651 = por %p649, %p650
      %p652 = scmp.ne.s32.totalorder %s644, %s647
      %p653 = scmp.eq.s32.totalorder %s52, 0
      %p654 = por %p652, %p653
      %p655 = scmp.ne.s32.totalorder %s644, %s647
      %p656 = scmp.eq.s32.totalorder %s57, 1
      %p657 = por %p655, %p656
      %p658 = scmp.ne.s32.totalorder %s647, %s648
      %p659 = scmp.eq.s32.totalorder %s57, 0
      %p660 = por %p658, %p659
      %p661 = scmp.ne.s32.totalorder %s647, %s648
      %p662 = scmp.eq.s32.totalorder %s58, 1
      %p663 = por %p661, %p662
      %p665 = scmp.ne.s32.totalorder %s648, %s664
      %p666 = scmp.eq.s32.totalorder %s58, 0
      %p667 = por %p665, %p666
      %p668 = scmp.le.s32.totalorder 1, %s52
      %p669 = scmp.lt.s32.totalorder %s52, 3
      %p670 = pnand %p668, %p669
      %p671 = pneg %p670
      // Predicated region
      $region9: #{tpu_custom_call.1} parent=5 // pred_check
        _
      $region10: #{tpu_custom_call.1} parent=5 // pred_check_branch
        %673 = sbr.rel (%p670) target = $region12
      $region11: #{tpu_custom_call.1} parent=5 // pred_region
        %s674 = ssub.s32 %s52, 1
        // Predicated region
        $region13: #{tpu_custom_call.1} parent=11 // pred_check
          %p675 = pneg %p125
        $region14: #{tpu_custom_call.1} parent=11 // pred_check_branch
          %677 = sbr.rel (%p675) target = $region16
        $region15: #{tpu_custom_call.1} parent=11 // pred_region
          _
        $region16: #{tpu_custom_call.1} parent=11 // pred_fallthru
          _
        // Predicated region
        $region17: #{tpu_custom_call.1} parent=11 // pred_check
          %p678 = pneg %p146
        $region18: #{tpu_custom_call.1} parent=11 // pred_check_branch
          %680 = sbr.rel (%p678) target = $region20
        $region19: #{tpu_custom_call.1} parent=11 // pred_region
          _
        $region20: #{tpu_custom_call.1} parent=11 // pred_fallthru
          _
        // Predicated region
        $region21: #{tpu_custom_call.1} parent=11 // pred_check
          %p681 = pneg %p167
        $region22: #{tpu_custom_call.1} parent=11 // pred_check_branch
          %683 = sbr.rel (%p681) target = $region24
        $region23: #{tpu_custom_call.1} parent=11 // pred_region
          _
        $region24: #{tpu_custom_call.1} parent=11 // pred_fallthru
          _
        // Predicated region
        $region25: #{tpu_custom_call.1} parent=11 // pred_check
          %p684 = pneg %p188
        $region26: #{tpu_custom_call.1} parent=11 // pred_check_branch
          %686 = sbr.rel (%p684) target = $region28
        $region27: #{tpu_custom_call.1} parent=11 // pred_region
          %s688 = ssub.s32 32, 32
          %689 = vsyncadd [#allocation6], %s688
          %s690 = sshll.u32 [#allocation7], 4
          %s691 = int_to_ptr.vmem [resolvable:$true] %s690
          %696 = dma.hbm_to_vmem [thread:$0]  %s5, 32, %s691, [#allocation6], 16, 16, 1
        $region28: #{tpu_custom_call.1} parent=11 // pred_fallthru
          _
        // Predicated region
        $region29: #{tpu_custom_call.1} parent=11 // pred_check
          %p697 = pneg %p209
        $region30: #{tpu_custom_call.1} parent=11 // pred_check_branch
          %699 = sbr.rel (%p697) target = $region32
        $region31: #{tpu_custom_call.1} parent=11 // pred_region
          _
        $region32: #{tpu_custom_call.1} parent=11 // pred_fallthru
          _
        // Predicated region
        $region33: #{tpu_custom_call.1} parent=11 // pred_check
          %p700 = pneg %p230
        $region34: #{tpu_custom_call.1} parent=11 // pred_check_branch
          %702 = sbr.rel (%p700) target = $region36
        $region35: #{tpu_custom_call.1} parent=11 // pred_region
          %s704 = ssub.s32 32, 32
          %705 = vsyncadd [#allocation9], %s704
          %s706 = sshll.u32 [#allocation8], 4
          %s707 = int_to_ptr.vmem [resolvable:$true] %s706
          %712 = dma.hbm_to_vmem [thread:$0]  %s7, 32, %s707, [#allocation9], 16, 16, 1
        $region36: #{tpu_custom_call.1} parent=11 // pred_fallthru
          _
        // Predicated region
        $region37: #{tpu_custom_call.1} parent=11 // pred_check
          %p713 = pneg %p251
        $region38: #{tpu_custom_call.1} parent=11 // pred_check_branch
          %715 = sbr.rel (%p713) target = $region40
        $region39: #{tpu_custom_call.1} parent=11 // pred_region
          _
        $region40: #{tpu_custom_call.1} parent=11 // pred_fallthru
          _
        // Predicated region
        $region41: #{tpu_custom_call.1} parent=11 // pred_check
          %p716 = pneg %p272
        $region42: #{tpu_custom_call.1} parent=11 // pred_check_branch
          %718 = sbr.rel (%p716) target = $region44
        $region43: #{tpu_custom_call.1} parent=11 // pred_region
          %s720 = ssub.s32 32, 32
          %721 = vsyncadd [#allocation9], %s720
          %s722 = sshll.u32 [#allocation10], 4
          %s723 = int_to_ptr.vmem [resolvable:$true] %s722
          %728 = dma.hbm_to_vmem [thread:$0]  %s9, 32, %s723, [#allocation9], 16, 16, 1
        $region44: #{tpu_custom_call.1} parent=11 // pred_fallthru
          _
        // Predicated region
        $region45: #{tpu_custom_call.1} parent=11 // pred_check
          %p729 = pneg %p293
        $region46: #{tpu_custom_call.1} parent=11 // pred_check_branch
          %731 = sbr.rel (%p729) target = $region48
        $region47: #{tpu_custom_call.1} parent=11 // pred_region
          %s733 = ssub.s32 128, 128
          %734 = vsyncadd [#allocation12], %s733
          %s735 = sshll.u32 [#allocation11], 4
          %s736 = int_to_ptr.vmem [resolvable:$true] %s735
          %741 = dma.hbm_to_vmem [thread:$0]  %s10, 128, %s736, [#allocation12], 64, 64, 4
        $region48: #{tpu_custom_call.1} parent=11 // pred_fallthru
          _
        // Predicated region
        $region49: #{tpu_custom_call.1} parent=11 // pred_check
          %p742 = pneg %p314
        $region50: #{tpu_custom_call.1} parent=11 // pred_check_branch
          %744 = sbr.rel (%p742) target = $region52
        $region51: #{tpu_custom_call.1} parent=11 // pred_region
          _
        $region52: #{tpu_custom_call.1} parent=11 // pred_fallthru
          _
        // Predicated region
        $region53: #{tpu_custom_call.1} parent=11 // pred_check
          %p745 = pneg %p335
        $region54: #{tpu_custom_call.1} parent=11 // pred_check_branch
          %747 = sbr.rel (%p745) target = $region56
        $region55: #{tpu_custom_call.1} parent=11 // pred_region
          %s749 = ssub.s32 32, 32
          %750 = vsyncadd [#allocation12], %s749
          %s751 = sshll.u32 [#allocation13], 4
          %s752 = int_to_ptr.vmem [resolvable:$true] %s751
          %757 = dma.hbm_to_vmem [thread:$0]  %s12, 32, %s752, [#allocation12], 16, 16, 1
        $region56: #{tpu_custom_call.1} parent=11 // pred_fallthru
          _
        // Predicated region
        $region57: #{tpu_custom_call.1} parent=11 // pred_check
          %p758 = pneg %p356
        $region58: #{tpu_custom_call.1} parent=11 // pred_check_branch
          %760 = sbr.rel (%p758) target = $region60
        $region59: #{tpu_custom_call.1} parent=11 // pred_region
          _
        $region60: #{tpu_custom_call.1} parent=11 // pred_fallthru
          _
        // Predicated region
        $region61: #{tpu_custom_call.1} parent=11 // pred_check
          %p761 = pneg %p377
        $region62: #{tpu_custom_call.1} parent=11 // pred_check_branch
          %763 = sbr.rel (%p761) target = $region64
        $region63: #{tpu_custom_call.1} parent=11 // pred_region
          %s765 = ssub.s32 32, 32
          %766 = vsyncadd [#allocation15], %s765
          %s767 = sshll.u32 [#allocation14], 4
          %s768 = int_to_ptr.vmem [resolvable:$true] %s767
          %773 = dma.hbm_to_vmem [thread:$0]  %s14, 32, %s768, [#allocation15], 16, 16, 1
        $region64: #{tpu_custom_call.1} parent=11 // pred_fallthru
          _
        // Predicated region
        $region65: #{tpu_custom_call.1} parent=11 // pred_check
          %p774 = pneg %p398
        $region66: #{tpu_custom_call.1} parent=11 // pred_check_branch
          %776 = sbr.rel (%p774) target = $region68
        $region67: #{tpu_custom_call.1} parent=11 // pred_region
          %s778 = ssub.s32 1024, 1024
          %779 = vsyncadd [#allocation15], %s778
          %s780 = sshll.u32 [#allocation16], 4
          %s781 = int_to_ptr.vmem [resolvable:$true] %s780
          %786 = dma.hbm_to_vmem [thread:$0]  %s15, 1024, %s781, [#allocation15], 128, 128, 8
        $region68: #{tpu_custom_call.1} parent=11 // pred_fallthru
          _
        // Predicated region
        $region69: #{tpu_custom_call.1} parent=11 // pred_check
          %p787 = pneg %p419
        $region70: #{tpu_custom_call.1} parent=11 // pred_check_branch
          %789 = sbr.rel (%p787) target = $region72
        $region71: #{tpu_custom_call.1} parent=11 // pred_region
          %s791 = ssub.s32 32, 32
          %792 = vsyncadd [#allocation18], %s791
          %s793 = sshll.u32 [#allocation17], 4
          %s794 = int_to_ptr.vmem [resolvable:$true] %s793
          %799 = dma.hbm_to_vmem [thread:$0]  %s16, 32, %s794, [#allocation18], 16, 16, 1
        $region72: #{tpu_custom_call.1} parent=11 // pred_fallthru
          _
        // Predicated region
        $region73: #{tpu_custom_call.1} parent=11 // pred_check
          %p800 = pneg %p440
        $region74: #{tpu_custom_call.1} parent=11 // pred_check_branch
          %802 = sbr.rel (%p800) target = $region76
        $region75: #{tpu_custom_call.1} parent=11 // pred_region
          %s804 = ssub.s32 1024, 1024
          %805 = vsyncadd [#allocation18], %s804
          %s806 = sshll.u32 [#allocation19], 4
          %s807 = int_to_ptr.vmem [resolvable:$true] %s806
          %812 = dma.hbm_to_vmem [thread:$0]  %s17, 1024, %s807, [#allocation18], 128, 128, 8
        $region76: #{tpu_custom_call.1} parent=11 // pred_fallthru
          _
        // Predicated region
        $region77: #{tpu_custom_call.1} parent=11 // pred_check
          %p813 = pneg %p461
        $region78: #{tpu_custom_call.1} parent=11 // pred_check_branch
          %815 = sbr.rel (%p813) target = $region80
        $region79: #{tpu_custom_call.1} parent=11 // pred_region
          %s817 = ssub.s32 32, 32
          %818 = vsyncadd [#allocation21], %s817
          %s819 = sshll.u32 [#allocation20], 4
          %s820 = int_to_ptr.vmem [resolvable:$true] %s819
          %825 = dma.hbm_to_vmem [thread:$0]  %s18, 32, %s820, [#allocation21], 16, 16, 1
        $region80: #{tpu_custom_call.1} parent=11 // pred_fallthru
          _
        // Predicated region
        $region81: #{tpu_custom_call.1} parent=11 // pred_check
          %p826 = pneg %p482
        $region82: #{tpu_custom_call.1} parent=11 // pred_check_branch
          %828 = sbr.rel (%p826) target = $region84
        $region83: #{tpu_custom_call.1} parent=11 // pred_region
          %s830 = ssub.s32 1024, 1024
          %831 = vsyncadd [#allocation21], %s830
          %s832 = sshll.u32 [#allocation22], 4
          %s833 = int_to_ptr.vmem [resolvable:$true] %s832
          %838 = dma.hbm_to_vmem [thread:$0]  %s19, 1024, %s833, [#allocation21], 128, 128, 8
        $region84: #{tpu_custom_call.1} parent=11 // pred_fallthru
          _
        // Predicated region
        $region85: #{tpu_custom_call.1} parent=11 // pred_check
          %p839 = pneg %p503
        $region86: #{tpu_custom_call.1} parent=11 // pred_check_branch
          %841 = sbr.rel (%p839) target = $region88
        $region87: #{tpu_custom_call.1} parent=11 // pred_region
          %s843 = ssub.s32 32, 32
          %844 = vsyncadd [#allocation24], %s843
          %s845 = sshll.u32 [#allocation23], 4
          %s846 = int_to_ptr.vmem [resolvable:$true] %s845
          %851 = dma.hbm_to_vmem [thread:$0]  %s20, 32, %s846, [#allocation24], 16, 16, 1
        $region88: #{tpu_custom_call.1} parent=11 // pred_fallthru
          _
        // Predicated region
        $region89: #{tpu_custom_call.1} parent=11 // pred_check
          %p852 = pneg %p524
        $region90: #{tpu_custom_call.1} parent=11 // pred_check_branch
          %854 = sbr.rel (%p852) target = $region92
        $region91: #{tpu_custom_call.1} parent=11 // pred_region
          _
        $region92: #{tpu_custom_call.1} parent=11 // pred_fallthru
          _
        // Predicated region
        $region93: #{tpu_custom_call.1} parent=11 // pred_check
          %p855 = pneg %p545
        $region94: #{tpu_custom_call.1} parent=11 // pred_check_branch
          %857 = sbr.rel (%p855) target = $region96
        $region95: #{tpu_custom_call.1} parent=11 // pred_region
          %s859 = ssub.s32 32, 32
          %860 = vsyncadd [#allocation24], %s859
          %s861 = sshll.u32 [#allocation25], 4
          %s862 = int_to_ptr.vmem [resolvable:$true] %s861
          %867 = dma.hbm_to_vmem [thread:$0]  %s22, 32, %s862, [#allocation24], 16, 16, 1
        $region96: #{tpu_custom_call.1} parent=11 // pred_fallthru
          _
        // Predicated region
        $region97: #{tpu_custom_call.1} parent=11 // pred_check
          %p868 = pneg %p566
        $region98: #{tpu_custom_call.1} parent=11 // pred_check_branch
          %870 = sbr.rel (%p868) target = $region100
        $region99: #{tpu_custom_call.1} parent=11 // pred_region
          _
        $region100: #{tpu_custom_call.1} parent=11 // pred_fallthru
          _
        // Predicated region
        $region101: #{tpu_custom_call.1} parent=11 // pred_check
          %p871 = pneg %p587
        $region102: #{tpu_custom_call.1} parent=11 // pred_check_branch
          %873 = sbr.rel (%p871) target = $region104
        $region103: #{tpu_custom_call.1} parent=11 // pred_region
          _
        $region104: #{tpu_custom_call.1} parent=11 // pred_fallthru
          _
        // Predicated region
        $region105: #{tpu_custom_call.1} parent=11 // pred_check
          %p874 = pneg %p608
        $region106: #{tpu_custom_call.1} parent=11 // pred_check_branch
          %876 = sbr.rel (%p874) target = $region108
        $region107: #{tpu_custom_call.1} parent=11 // pred_region
          _
        $region108: #{tpu_custom_call.1} parent=11 // pred_fallthru
          _
      $region12: #{tpu_custom_call.1} parent=5 // pred_fallthru
        _
      %p877 = scmp.lt.s32.totalorder %s52, 2
      // Predicated region
      $region109: #{tpu_custom_call.1} parent=5 // pred_check
        %p878 = pneg %p877
      $region110: #{tpu_custom_call.1} parent=5 // pred_check_branch
        %880 = sbr.rel (%p878) target = $region112
      $region111: #{tpu_custom_call.1} parent=5 // pred_region
        // Predicated region
        $region113: #{tpu_custom_call.1} parent=111 // pred_check
          %p881 = pneg %p72
        $region114: #{tpu_custom_call.1} parent=111 // pred_check_branch
          %883 = sbr.rel (%p881) target = $region116
        $region115: #{tpu_custom_call.1} parent=111 // pred_region
          %s884 = sand.u32 %s62, 1
          %s885 = scalar_lea.sflag [#allocation3], %s884
          %s886 = sand.u32 %s62, 1
          %s887 = smul.addr %s886, 8
          %s888 = scalar_lea.vmem [#allocation2], %s887
          %s890 = ssub.s32 128, 128
          %891 = vsyncadd %s885, %s890
          %s892 = smul.addr %s52, 128
          %s893 = scalar_lea.hbm %s0, %s892
          %s895 = sshll.u32 %s888, 4
          %s896 = int_to_ptr.vmem [resolvable:$true] %s895
          %898 = dma.hbm_to_vmem [thread:$0]  %s893, 128, %s896, %s885
        $region116: #{tpu_custom_call.1} parent=111 // pred_fallthru
          _
        // Predicated region
        $region117: #{tpu_custom_call.1} parent=111 // pred_check
          %p899 = pneg %p98
        $region118: #{tpu_custom_call.1} parent=111 // pred_check_branch
          %901 = sbr.rel (%p899) target = $region120
        $region119: #{tpu_custom_call.1} parent=111 // pred_region
          %s902 = sand.u32 %s52, 1
          %s903 = scalar_lea.sflag [#allocation6], %s902
          %s904 = sand.u32 %s88, 1
          %s905 = smul.addr %s904, 8
          %s906 = scalar_lea.vmem [#allocation5], %s905
          %s908 = ssub.s32 128, 128
          %909 = vsyncadd %s903, %s908
          %s910 = smul.addr %s52, 128
          %s911 = scalar_lea.hbm %s1, %s910
          %s913 = sshll.u32 %s906, 4
          %s914 = int_to_ptr.vmem [resolvable:$true] %s913
          %916 = dma.hbm_to_vmem [thread:$0]  %s911, 128, %s914, %s903
        $region120: #{tpu_custom_call.1} parent=111 // pred_fallthru
          _
      $region112: #{tpu_custom_call.1} parent=5 // pred_fallthru
        _
      %p917 = scmp.le.s32.totalorder 1, %s52
      %p918 = scmp.lt.s32.totalorder %s52, 3
      %p919 = pnand %p917, %p918
      %p920 = pneg %p919
      // Predicated region
      $region121: #{tpu_custom_call.1} parent=5 // pred_check
        _
      $region122: #{tpu_custom_call.1} parent=5 // pred_check_branch
        %922 = sbr.rel (%p919) target = $region124
      $region123: #{tpu_custom_call.1} parent=5 // pred_region
        %s923 = ssub.s32 %s52, 1
        %s924 = sand.u32 %s65, 1
        %s925 = scalar_lea.sflag [#allocation3], %s924
        %s926 = sand.u32 %s65, 1
        %s927 = smul.addr %s926, 8
        %s928 = scalar_lea.vmem [#allocation2], %s927
        // Predicated region
        $region125: #{tpu_custom_call.1} parent=123 // pred_check
          %p929 = pneg %p78
        $region126: #{tpu_custom_call.1} parent=123 // pred_check_branch
          %931 = sbr.rel (%p929) target = $region128
        $region127: #{tpu_custom_call.1} parent=123 // pred_region
          %932 = dma.done %s925, 128
        $region128: #{tpu_custom_call.1} parent=123 // pred_fallthru
          _
        %s933 = sand.u32 %s57, 1
        %s934 = scalar_lea.sflag [#allocation6], %s933
        %s935 = sand.u32 %s91, 1
        %s936 = smul.addr %s935, 8
        %s937 = scalar_lea.vmem [#allocation5], %s936
        // Predicated region
        $region129: #{tpu_custom_call.1} parent=123 // pred_check
          %p938 = pneg %p104
        $region130: #{tpu_custom_call.1} parent=123 // pred_check_branch
          %940 = sbr.rel (%p938) target = $region132
        $region131: #{tpu_custom_call.1} parent=123 // pred_region
          %941 = dma.done %s934, 128
        $region132: #{tpu_custom_call.1} parent=123 // pred_fallthru
          _
        // Predicated region
        $region133: #{tpu_custom_call.1} parent=123 // pred_check
          %p942 = pneg %p188
        $region134: #{tpu_custom_call.1} parent=123 // pred_check_branch
          %944 = sbr.rel (%p942) target = $region136
        $region135: #{tpu_custom_call.1} parent=123 // pred_region
          %945 = dma.done [#allocation6], 32
        $region136: #{tpu_custom_call.1} parent=123 // pred_fallthru
          _
        // Predicated region
        $region137: #{tpu_custom_call.1} parent=123 // pred_check
          %p946 = pneg %p230
        $region138: #{tpu_custom_call.1} parent=123 // pred_check_branch
          %948 = sbr.rel (%p946) target = $region140
        $region139: #{tpu_custom_call.1} parent=123 // pred_region
          %949 = dma.done [#allocation9], 32
        $region140: #{tpu_custom_call.1} parent=123 // pred_fallthru
          _
        // Predicated region
        $region141: #{tpu_custom_call.1} parent=123 // pred_check
          %p950 = pneg %p272
        $region142: #{tpu_custom_call.1} parent=123 // pred_check_branch
          %952 = sbr.rel (%p950) target = $region144
        $region143: #{tpu_custom_call.1} parent=123 // pred_region
          %953 = dma.done [#allocation9], 32
        $region144: #{tpu_custom_call.1} parent=123 // pred_fallthru
          _
        // Predicated region
        $region145: #{tpu_custom_call.1} parent=123 // pred_check
          %p954 = pneg %p293
        $region146: #{tpu_custom_call.1} parent=123 // pred_check_branch
          %956 = sbr.rel (%p954) target = $region148
        $region147: #{tpu_custom_call.1} parent=123 // pred_region
          %957 = dma.done [#allocation12], 128
        $region148: #{tpu_custom_call.1} parent=123 // pred_fallthru
          _
        // Predicated region
        $region149: #{tpu_custom_call.1} parent=123 // pred_check
          %p958 = pneg %p335
        $region150: #{tpu_custom_call.1} parent=123 // pred_check_branch
          %960 = sbr.rel (%p958) target = $region152
        $region151: #{tpu_custom_call.1} parent=123 // pred_region
          %961 = dma.done [#allocation12], 32
        $region152: #{tpu_custom_call.1} parent=123 // pred_fallthru
          _
        // Predicated region
        $region153: #{tpu_custom_call.1} parent=123 // pred_check
          %p962 = pneg %p377
        $region154: #{tpu_custom_call.1} parent=123 // pred_check_branch
          %964 = sbr.rel (%p962) target = $region156
        $region155: #{tpu_custom_call.1} parent=123 // pred_region
          %965 = dma.done [#allocation15], 32
        $region156: #{tpu_custom_call.1} parent=123 // pred_fallthru
          _
        // Predicated region
        $region157: #{tpu_custom_call.1} parent=123 // pred_check
          %p966 = pneg %p398
        $region158: #{tpu_custom_call.1} parent=123 // pred_check_branch
          %968 = sbr.rel (%p966) target = $region160
        $region159: #{tpu_custom_call.1} parent=123 // pred_region
          %969 = dma.done [#allocation15], 1024
        $region160: #{tpu_custom_call.1} parent=123 // pred_fallthru
          _
        // Predicated region
        $region161: #{tpu_custom_call.1} parent=123 // pred_check
          %p970 = pneg %p419
        $region162: #{tpu_custom_call.1} parent=123 // pred_check_branch
          %972 = sbr.rel (%p970) target = $region164
        $region163: #{tpu_custom_call.1} parent=123 // pred_region
          %973 = dma.done [#allocation18], 32
        $region164: #{tpu_custom_call.1} parent=123 // pred_fallthru
          _
        // Predicated region
        $region165: #{tpu_custom_call.1} parent=123 // pred_check
          %p974 = pneg %p440
        $region166: #{tpu_custom_call.1} parent=123 // pred_check_branch
          %976 = sbr.rel (%p974) target = $region168
        $region167: #{tpu_custom_call.1} parent=123 // pred_region
          %977 = dma.done [#allocation18], 1024
        $region168: #{tpu_custom_call.1} parent=123 // pred_fallthru
          _
        // Predicated region
        $region169: #{tpu_custom_call.1} parent=123 // pred_check
          %p978 = pneg %p461
        $region170: #{tpu_custom_call.1} parent=123 // pred_check_branch
          %980 = sbr.rel (%p978) target = $region172
        $region171: #{tpu_custom_call.1} parent=123 // pred_region
          %981 = dma.done [#allocation21], 32
        $region172: #{tpu_custom_call.1} parent=123 // pred_fallthru
          _
        // Predicated region
        $region173: #{tpu_custom_call.1} parent=123 // pred_check
          %p982 = pneg %p482
        $region174: #{tpu_custom_call.1} parent=123 // pred_check_branch
          %984 = sbr.rel (%p982) target = $region176
        $region175: #{tpu_custom_call.1} parent=123 // pred_region
          %985 = dma.done [#allocation21], 1024
        $region176: #{tpu_custom_call.1} parent=123 // pred_fallthru
          _
        // Predicated region
        $region177: #{tpu_custom_call.1} parent=123 // pred_check
          %p986 = pneg %p503
        $region178: #{tpu_custom_call.1} parent=123 // pred_check_branch
          %988 = sbr.rel (%p986) target = $region180
        $region179: #{tpu_custom_call.1} parent=123 // pred_region
          %989 = dma.done [#allocation24], 32
        $region180: #{tpu_custom_call.1} parent=123 // pred_fallthru
          _
        // Predicated region
        $region181: #{tpu_custom_call.1} parent=123 // pred_check
          %p990 = pneg %p545
        $region182: #{tpu_custom_call.1} parent=123 // pred_check_branch
          %992 = sbr.rel (%p990) target = $region184
        $region183: #{tpu_custom_call.1} parent=123 // pred_region
          %993 = dma.done [#allocation24], 32
        $region184: #{tpu_custom_call.1} parent=123 // pred_fallthru
          _
        %s994 = sand.u32 %s65, 1
        %s995 = scalar_lea.sflag [#allocation3], %s994
        %s996 = sand.u32 %s65, 1
        %s997 = smul.addr %s996, 8
        %s998 = scalar_lea.vmem [#allocation2], %s997
        %p999 = pneg %p78
        %p1000 = pneg %p75
        %s1001 = sand.u32 %s57, 1
        %s1002 = scalar_lea.sflag [#allocation6], %s1001
        %s1003 = sand.u32 %s91, 1
        %s1004 = smul.addr %s1003, 8
        %s1005 = scalar_lea.vmem [#allocation5], %s1004
        %p1006 = pneg %p104
        %p1007 = pneg %p101
        %p1008 = pneg %p125
        %p1009 = pneg %p122
        %p1010 = pneg %p146
        %p1011 = pneg %p143
        %p1012 = pneg %p167
        %p1013 = pneg %p164
        %p1014 = pneg %p188
        %p1015 = pneg %p185
        %p1016 = pneg %p209
        %p1017 = pneg %p206
        %p1018 = pneg %p230
        %p1019 = pneg %p227
        %p1020 = pneg %p251
        %p1021 = pneg %p248
        %p1022 = pneg %p272
        %p1023 = pneg %p269
        %p1024 = pneg %p293
        %p1025 = pneg %p290
        %p1026 = pneg %p314
        %p1027 = pneg %p311
        %p1028 = pneg %p335
        %p1029 = pneg %p332
        %p1030 = pneg %p356
        %p1031 = pneg %p353
        %p1032 = pneg %p377
        %p1033 = pneg %p374
        %p1034 = pneg %p398
        %p1035 = pneg %p395
        %p1036 = pneg %p419
        %p1037 = pneg %p416
        %p1038 = pneg %p440
        %p1039 = pneg %p437
        %p1040 = pneg %p461
        %p1041 = pneg %p458
        %p1042 = pneg %p482
        %p1043 = pneg %p479
        %p1044 = pneg %p503
        %p1045 = pneg %p500
        %p1046 = pneg %p524
        %p1047 = pneg %p521
        %p1048 = pneg %p545
        %p1049 = pneg %p542
        %p1050 = pneg %p566
        %p1051 = pneg %p563
        %p1052 = pneg %p587
        %p1053 = pneg %p584
        %p1054 = pneg %p608
        %p1055 = pneg %p605
        %p1056 = pneg %p634
        %p1057 = pneg %p631
        %s1058 = sand.u32 %s621, 1
        %s1059 = scalar_lea.sflag [#allocation4], %s1058
        %s1060 = sand.u32 %s621, 1
        %s1061 = smul.addr %s1060, 8
        %s1062 = scalar_lea.vmem [#allocation26], %s1061
        %p1063 = pneg %p660
        %p1064 = pneg %p657
        %s1065 = sand.u32 %s647, 1
        %s1066 = scalar_lea.sflag [#allocation28], %s1065
        %s1067 = sand.u32 %s647, 1
        %s1068 = smul.addr %s1067, 8
        %s1069 = scalar_lea.vmem [#allocation27], %s1068
        %v1070 = vlaneseq
        %v1071 = vshrl.u32 %v1070, 7
        %v1072 = vlaneseq
        %v1073 = vand.u32 %v1072, 127
        %vm1074 = vcmp.ge.s32.totalorder %v1071, %v1073
        %v1075 = vsel %vm1074, 0.0, -1e+30
        %v1076 = vld [vmem:[%s928] sm:$0xff]
        %v1077 = vld [vmem:[#allocation11] sm:$0xf]
        %v1078 = vld [vmem:[%s2] sm:$0xff]
        %v1079 = vld [vmem:[%s2 + $0x8] sm:$0xff]
        %v1080 = vld [vmem:[%s2 + $0x10] sm:$0xff]
        %v1081 = vld [vmem:[%s2 + $0x18] sm:$0xff]
        %v1082 = vld [vmem:[%s3] sm:$0x1]
        %v1084 = vlaneseq
        %v1085 = vshrl.u32 %v1084, 7
        %v1086 = vsub.s32 0, %v1085
        %v1087 = vrot.slane %v1082, %v1086
        %vm1089 = vcmask 261120
        %v1091 = vsel %vm1089, %v1076, 0
        %1093 = vmatprep.subr.mxu0 0.0
        %1094 = vmatpush1.msra.mxu0 0.0
        %1095 = vmatprep.subr.mxu0 0.0
        %1096 = vmatpush1.msra.mxu0 0.0
        %1097 = vmatprep.subr.mxu0 0.0
        %1098 = vmatpush1.msra.mxu0 0.0
        %1099 = vmatprep.subr.mxu0 0.0
        %1100 = vmatpush1.msra.mxu0 0.0
        %1101 = vmatprep.subr.mxu0 0.0
        %1102 = vmatpush1.msra.mxu0 0.0
        %1103 = vmatprep.subr.mxu0 0.0
        %1104 = vmatpush1.msra.mxu0 0.0
        %1105 = vmatprep.subr.mxu0 0.0
        %1106 = vmatpush1.msra.mxu0 0.0
        %1107 = vmatprep.subr.mxu0 0.0
        %1108 = vmatpush1.msra.mxu0 0.0
        %1109 = vmatprep.subr.mxu0 0.0
        %1110 = vmatpush1.msra.mxu0 0.0
        %1111 = vmatprep.subr.mxu0 0.0
        %1112 = vmatpush1.msra.mxu0 0.0
        %1113 = vmatprep.subr.mxu0 0.0
        %1114 = vmatpush1.msra.mxu0 0.0
        %1115 = vmatprep.subr.mxu0 0.0
        %1116 = vmatpush1.msra.mxu0 0.0
        %1117 = vmatprep.subr.mxu0 0.0
        %1118 = vmatpush1.msra.mxu0 %v1081
        %1119 = vmatprep.subr.mxu0 0.0
        %1120 = vmatpush1.msra.mxu0 %v1080
        %1121 = vmatprep.subr.mxu0 0.0
        %1122 = vmatpush1.msra.mxu0 %v1079
        %1123 = vmatprep.subr.mxu0 0.0
        %1124 = vmatpush1.msra.mxu0 %v1078
        %1125 = vmatprep.subr.mxu0 0.0
        %1126 = vmatpush2.msra.mxu0 0.0
        %1127 = vmatprep.subr.mxu0 0.0
        %1128 = vmatpush2.msra.mxu0 0.0
        %1129 = vmatprep.subr.mxu0 0.0
        %1130 = vmatpush2.msra.mxu0 0.0
        %1131 = vmatprep.subr.mxu0 0.0
        %1132 = vmatpush2.msra.mxu0 0.0
        %1133 = vmatprep.subr.mxu0 0.0
        %1134 = vmatpush2.msra.mxu0 0.0
        %1135 = vmatprep.subr.mxu0 0.0
        %1136 = vmatpush2.msra.mxu0 0.0
        %1137 = vmatprep.subr.mxu0 0.0
        %1138 = vmatpush2.msra.mxu0 0.0
        %1139 = vmatprep.subr.mxu0 0.0
        %1140 = vmatpush2.msra.mxu0 0.0
        %1141 = vmatprep.subr.mxu0 0.0
        %1142 = vmatpush2.msra.mxu0 0.0
        %1143 = vmatprep.subr.mxu0 0.0
        %1144 = vmatpush2.msra.mxu0 0.0
        %1145 = vmatprep.subr.mxu0 0.0
        %1146 = vmatpush2.msra.mxu0 0.0
        %1147 = vmatprep.subr.mxu0 0.0
        %1148 = vmatpush2.msra.mxu0 0.0
        %1149 = vmatprep.subr.mxu0 0.0
        %1150 = vmatpush2.msra.mxu0 0.0
        %1151 = vmatprep.subr.mxu0 0.0
        %1152 = vmatpush2.msra.mxu0 0.0
        %1153 = vmatprep.subr.mxu0 0.0
        %1154 = vmatpush2.msra.mxu0 0.0
        %1155 = vmatprep.subr.mxu0 0.0
        %1156 = vmatpush2.msra.mxu0 0.0
        %1157 = vmatprep.mubr.f32.mxu0 0.0
        %1158 = vmatmul.mubr.f32.gmra.mxu0 %v1091
        %v1159 = vpop.f32.mrf.mxu0
        %v1160 = vadd.f32 %v1087, %v1159
        %v1161 = vpop.f32.mrf.mxu0
        %1162 = vdwg.mxu0
        %1164 = vrot.lane.b32.xlu0 %v1160, 96
        %v1165 = vpop.permute.xlu0 %1164
        %vm1166 = vcmask 64512
        %v1167 = vsel %vm1166, %v1160, 0
        %v1169 = vsel %vm1166, %v1165, 0
        %1171 = vmatprep.subr.mxu0 0.0
        %1172 = vmatpush1.xpose.msra.mxu0 0.0
        %1173 = vmatprep.subr.mxu0 0.0
        %1174 = vmatpush1.xpose.msra.mxu0 0.0
        %1175 = vmatprep.subr.mxu0 0.0
        %1176 = vmatpush1.xpose.msra.mxu0 0.0
        %1177 = vmatprep.subr.mxu0 0.0
        %1178 = vmatpush1.xpose.msra.mxu0 0.0
        %1179 = vmatprep.subr.mxu0 0.0
        %1180 = vmatpush1.xpose.msra.mxu0 0.0
        %1181 = vmatprep.subr.mxu0 0.0
        %1182 = vmatpush1.xpose.msra.mxu0 0.0
        %1183 = vmatprep.subr.mxu0 0.0
        %1184 = vmatpush1.xpose.msra.mxu0 0.0
        %1185 = vmatprep.subr.mxu0 0.0
        %1186 = vmatpush1.xpose.msra.mxu0 0.0
        %1187 = vmatprep.subr.mxu0 0.0
        %1188 = vmatpush1.xpose.msra.mxu0 0.0
        %1189 = vmatprep.subr.mxu0 0.0
        %1190 = vmatpush1.xpose.msra.mxu0 0.0
        %1191 = vmatprep.subr.mxu0 0.0
        %1192 = vmatpush1.xpose.msra.mxu0 0.0
        %1193 = vmatprep.subr.mxu0 0.0
        %1194 = vmatpush1.xpose.msra.mxu0 0.0
        %1195 = vmatprep.subr.mxu0 0.0
        %1196 = vmatpush1.xpose.msra.mxu0 0.0
        %1197 = vmatprep.subr.mxu0 0.0
        %1198 = vmatpush1.xpose.msra.mxu0 0.0
        %1199 = vmatprep.subr.mxu0 0.0
        %1200 = vmatpush1.xpose.msra.mxu0 0.0
        %1201 = vmatprep.subr.mxu0 0.0
        %1202 = vmatpush1.xpose.msra.mxu0 %v1169
        %1203 = vmatprep.subr.mxu0 0.0
        %1204 = vmatpush2.xpose.msra.mxu0 0.0
        %1205 = vmatprep.subr.mxu0 0.0
        %1206 = vmatpush2.xpose.msra.mxu0 0.0
        %1207 = vmatprep.subr.mxu0 0.0
        %1208 = vmatpush2.xpose.msra.mxu0 0.0
        %1209 = vmatprep.subr.mxu0 0.0
        %1210 = vmatpush2.xpose.msra.mxu0 0.0
        %1211 = vmatprep.subr.mxu0 0.0
        %1212 = vmatpush2.xpose.msra.mxu0 0.0
        %1213 = vmatprep.subr.mxu0 0.0
        %1214 = vmatpush2.xpose.msra.mxu0 0.0
        %1215 = vmatprep.subr.mxu0 0.0
        %1216 = vmatpush2.xpose.msra.mxu0 0.0
        %1217 = vmatprep.subr.mxu0 0.0
        %1218 = vmatpush2.xpose.msra.mxu0 0.0
        %1219 = vmatprep.subr.mxu0 0.0
        %1220 = vmatpush2.xpose.msra.mxu0 0.0
        %1221 = vmatprep.subr.mxu0 0.0
        %1222 = vmatpush2.xpose.msra.mxu0 0.0
        %1223 = vmatprep.subr.mxu0 0.0
        %1224 = vmatpush2.xpose.msra.mxu0 0.0
        %1225 = vmatprep.subr.mxu0 0.0
        %1226 = vmatpush2.xpose.msra.mxu0 0.0
        %1227 = vmatprep.subr.mxu0 0.0
        %1228 = vmatpush2.xpose.msra.mxu0 0.0
        %1229 = vmatprep.subr.mxu0 0.0
        %1230 = vmatpush2.xpose.msra.mxu0 0.0
        %1231 = vmatprep.subr.mxu0 0.0
        %1232 = vmatpush2.xpose.msra.mxu0 0.0
        %1233 = vmatprep.subr.mxu0 0.0
        %1234 = vmatpush2.xpose.msra.mxu0 0.0
        %1235 = vmatprep.mubr.f32.mxu0 0.0
        %1236 = vmatmul.mubr.f32.gmra.mxu0 %v1167
        %v1237 = vpop.f32.mrf.mxu0
        %v1238 = vadd.f32 0.0, %v1237
        %v1239 = vpop.f32.mrf.mxu0
        %1240 = vdwg.mxu0
        %v1241 = vmul.f32 %v1238, 0.35355338
        %v1242 = vadd.f32 %v1241, %v1075
        %v1243 = vsel %vm1166, %v1242, -inf
        %1244 = vmax.xlane.f32.xlu0 %v1243
        %v1245 = vpop.xlane.xlu0 %1244
        %v1246 = vsub.f32 %v1242, %v1245
        %v1247 = vmul.f32 %v1246, 1.442695
        %v1248 = vpow.pop %v1247
        %v1249 = vsel %vm1166, %v1248, 0.0
        %1250 = vadd.xlane.f32.xlu0 %v1249
        %v1251 = vpop.xlane.xlu0 %1250
        %v1252 = vrcp.pop %v1251
        %v1253 = vmul.f32 %v1248, %v1252
        %1254 = vrot.lane.b32.xlu0 %v1160, 64
        %v1255 = vpop.permute.xlu0 %1254
        %v1258 = vsel %vm1166, %v1253, 0
        %1260 = vmatprep.subr.mxu0 0.0
        %1261 = vmatpush1.msra.mxu0 0.0
        %1262 = vmatprep.subr.mxu0 0.0
        %1263 = vmatpush1.msra.mxu0 0.0
        %1264 = vmatprep.subr.mxu0 0.0
        %1265 = vmatpush1.msra.mxu0 0.0
        %1266 = vmatprep.subr.mxu0 0.0
        %1267 = vmatpush1.msra.mxu0 0.0
        %1268 = vmatprep.subr.mxu0 0.0
        %1269 = vmatpush1.msra.mxu0 0.0
        %1270 = vmatprep.subr.mxu0 0.0
        %1271 = vmatpush1.msra.mxu0 0.0
        %1272 = vmatprep.subr.mxu0 0.0
        %1273 = vmatpush1.msra.mxu0 0.0
        %1274 = vmatprep.subr.mxu0 0.0
        %1275 = vmatpush1.msra.mxu0 0.0
        %1276 = vmatprep.subr.mxu0 0.0
        %1277 = vmatpush1.msra.mxu0 0.0
        %1278 = vmatprep.subr.mxu0 0.0
        %1279 = vmatpush1.msra.mxu0 0.0
        %1280 = vmatprep.subr.mxu0 0.0
        %1281 = vmatpush1.msra.mxu0 0.0
        %1282 = vmatprep.subr.mxu0 0.0
        %1283 = vmatpush1.msra.mxu0 0.0
        %1284 = vmatprep.subr.mxu0 0.0
        %1285 = vmatpush1.msra.mxu0 0.0
        %1286 = vmatprep.subr.mxu0 0.0
        %1287 = vmatpush1.msra.mxu0 0.0
        %1288 = vmatprep.subr.mxu0 0.0
        %1289 = vmatpush1.msra.mxu0 0.0
        %1290 = vmatprep.subr.mxu0 0.0
        %1291 = vmatpush1.msra.mxu0 %v1255
        %1292 = vmatprep.subr.mxu0 0.0
        %1293 = vmatpush2.msra.mxu0 0.0
        %1294 = vmatprep.subr.mxu0 0.0
        %1295 = vmatpush2.msra.mxu0 0.0
        %1296 = vmatprep.subr.mxu0 0.0
        %1297 = vmatpush2.msra.mxu0 0.0
        %1298 = vmatprep.subr.mxu0 0.0
        %1299 = vmatpush2.msra.mxu0 0.0
        %1300 = vmatprep.subr.mxu0 0.0
        %1301 = vmatpush2.msra.mxu0 0.0
        %1302 = vmatprep.subr.mxu0 0.0
        %1303 = vmatpush2.msra.mxu0 0.0
        %1304 = vmatprep.subr.mxu0 0.0
        %1305 = vmatpush2.msra.mxu0 0.0
        %1306 = vmatprep.subr.mxu0 0.0
        %1307 = vmatpush2.msra.mxu0 0.0
        %1308 = vmatprep.subr.mxu0 0.0
        %1309 = vmatpush2.msra.mxu0 0.0
        %1310 = vmatprep.subr.mxu0 0.0
        %1311 = vmatpush2.msra.mxu0 0.0
        %1312 = vmatprep.subr.mxu0 0.0
        %1313 = vmatpush2.msra.mxu0 0.0
        %1314 = vmatprep.subr.mxu0 0.0
        %1315 = vmatpush2.msra.mxu0 0.0
        %1316 = vmatprep.subr.mxu0 0.0
        %1317 = vmatpush2.msra.mxu0 0.0
        %1318 = vmatprep.subr.mxu0 0.0
        %1319 = vmatpush2.msra.mxu0 0.0
        %1320 = vmatprep.subr.mxu0 0.0
        %1321 = vmatpush2.msra.mxu0 0.0
        %1322 = vmatprep.subr.mxu0 0.0
        %1323 = vmatpush2.msra.mxu0 0.0
        %1324 = vmatprep.mubr.f32.mxu0 0.0
        %1325 = vmatmul.mubr.f32.gmra.mxu0 %v1258
        %v1326 = vpop.f32.mrf.mxu0
        %v1327 = vadd.f32 0.0, %v1326
        %v1328 = vpop.f32.mrf.mxu0
        %1329 = vdwg.mxu0
        %1330 = vrot.lane.b32.xlu0 %v1160, 120
        %v1331 = vpop.permute.xlu0 %1330
        %1332 = vrot.lane.b32.xlu0 %v1160, 88
        %v1333 = vpop.permute.xlu0 %1332
        %v1334 = vsel %vm1166, %v1331, 0
        %v1336 = vsel %vm1166, %v1333, 0
        %1338 = vmatprep.subr.mxu0 0.0
        %1339 = vmatpush1.xpose.msra.mxu0 0.0
        %1340 = vmatprep.subr.mxu0 0.0
        %1341 = vmatpush1.xpose.msra.mxu0 0.0
        %1342 = vmatprep.subr.mxu0 0.0
        %1343 = vmatpush1.xpose.msra.mxu0 0.0
        %1344 = vmatprep.subr.mxu0 0.0
        %1345 = vmatpush1.xpose.msra.mxu0 0.0
        %1346 = vmatprep.subr.mxu0 0.0
        %1347 = vmatpush1.xpose.msra.mxu0 0.0
        %1348 = vmatprep.subr.mxu0 0.0
        %1349 = vmatpush1.xpose.msra.mxu0 0.0
        %1350 = vmatprep.subr.mxu0 0.0
        %1351 = vmatpush1.xpose.msra.mxu0 0.0
        %1352 = vmatprep.subr.mxu0 0.0
        %1353 = vmatpush1.xpose.msra.mxu0 0.0
        %1354 = vmatprep.subr.mxu0 0.0
        %1355 = vmatpush1.xpose.msra.mxu0 0.0
        %1356 = vmatprep.subr.mxu0 0.0
        %1357 = vmatpush1.xpose.msra.mxu0 0.0
        %1358 = vmatprep.subr.mxu0 0.0
        %1359 = vmatpush1.xpose.msra.mxu0 0.0
        %1360 = vmatprep.subr.mxu0 0.0
        %1361 = vmatpush1.xpose.msra.mxu0 0.0
        %1362 = vmatprep.subr.mxu0 0.0
        %1363 = vmatpush1.xpose.msra.mxu0 0.0
        %1364 = vmatprep.subr.mxu0 0.0
        %1365 = vmatpush1.xpose.msra.mxu0 0.0
        %1366 = vmatprep.subr.mxu0 0.0
        %1367 = vmatpush1.xpose.msra.mxu0 0.0
        %1368 = vmatprep.subr.mxu0 0.0
        %1369 = vmatpush1.xpose.msra.mxu0 %v1336
        %1370 = vmatprep.subr.mxu0 0.0
        %1371 = vmatpush2.xpose.msra.mxu0 0.0
        %1372 = vmatprep.subr.mxu0 0.0
        %1373 = vmatpush2.xpose.msra.mxu0 0.0
        %1374 = vmatprep.subr.mxu0 0.0
        %1375 = vmatpush2.xpose.msra.mxu0 0.0
        %1376 = vmatprep.subr.mxu0 0.0
        %1377 = vmatpush2.xpose.msra.mxu0 0.0
        %1378 = vmatprep.subr.mxu0 0.0
        %1379 = vmatpush2.xpose.msra.mxu0 0.0
        %1380 = vmatprep.subr.mxu0 0.0
        %1381 = vmatpush2.xpose.msra.mxu0 0.0
        %1382 = vmatprep.subr.mxu0 0.0
        %1383 = vmatpush2.xpose.msra.mxu0 0.0
        %1384 = vmatprep.subr.mxu0 0.0
        %1385 = vmatpush2.xpose.msra.mxu0 0.0
        %1386 = vmatprep.subr.mxu0 0.0
        %1387 = vmatpush2.xpose.msra.mxu0 0.0
        %1388 = vmatprep.subr.mxu0 0.0
        %1389 = vmatpush2.xpose.msra.mxu0 0.0
        %1390 = vmatprep.subr.mxu0 0.0
        %1391 = vmatpush2.xpose.msra.mxu0 0.0
        %1392 = vmatprep.subr.mxu0 0.0
        %1393 = vmatpush2.xpose.msra.mxu0 0.0
        %1394 = vmatprep.subr.mxu0 0.0
        %1395 = vmatpush2.xpose.msra.mxu0 0.0
        %1396 = vmatprep.subr.mxu0 0.0
        %1397 = vmatpush2.xpose.msra.mxu0 0.0
        %1398 = vmatprep.subr.mxu0 0.0
        %1399 = vmatpush2.xpose.msra.mxu0 0.0
        %1400 = vmatprep.subr.mxu0 0.0
        %1401 = vmatpush2.xpose.msra.mxu0 0.0
        %1402 = vmatprep.mubr.f32.mxu0 0.0
        %1403 = vmatmul.mubr.f32.gmra.mxu0 %v1334
        %v1404 = vpop.f32.mrf.mxu0
        %v1405 = vadd.f32 0.0, %v1404
        %v1406 = vpop.f32.mrf.mxu0
        %1407 = vdwg.mxu0
        %v1408 = vmul.f32 %v1405, 0.35355338
        %v1409 = vadd.f32 %v1408, %v1075
        %v1410 = vsel %vm1166, %v1409, -inf
        %1411 = vmax.xlane.f32.xlu0 %v1410
        %v1412 = vpop.xlane.xlu0 %1411
        %v1413 = vsub.f32 %v1409, %v1412
        %v1414 = vmul.f32 %v1413, 1.442695
        %v1415 = vpow.pop %v1414
        %v1416 = vsel %vm1166, %v1415, 0.0
        %1417 = vadd.xlane.f32.xlu0 %v1416
        %v1418 = vpop.xlane.xlu0 %1417
        %v1419 = vrcp.pop %v1418
        %v1420 = vmul.f32 %v1415, %v1419
        %1421 = vrot.lane.b32.xlu0 %v1160, 56
        %v1422 = vpop.permute.xlu0 %1421
        %v1425 = vsel %vm1166, %v1420, 0
        %1427 = vmatprep.subr.mxu0 0.0
        %1428 = vmatpush1.msra.mxu0 0.0
        %1429 = vmatprep.subr.mxu0 0.0
        %1430 = vmatpush1.msra.mxu0 0.0
        %1431 = vmatprep.subr.mxu0 0.0
        %1432 = vmatpush1.msra.mxu0 0.0
        %1433 = vmatprep.subr.mxu0 0.0
        %1434 = vmatpush1.msra.mxu0 0.0
        %1435 = vmatprep.subr.mxu0 0.0
        %1436 = vmatpush1.msra.mxu0 0.0
        %1437 = vmatprep.subr.mxu0 0.0
        %1438 = vmatpush1.msra.mxu0 0.0
        %1439 = vmatprep.subr.mxu0 0.0
        %1440 = vmatpush1.msra.mxu0 0.0
        %1441 = vmatprep.subr.mxu0 0.0
        %1442 = vmatpush1.msra.mxu0 0.0
        %1443 = vmatprep.subr.mxu0 0.0
        %1444 = vmatpush1.msra.mxu0 0.0
        %1445 = vmatprep.subr.mxu0 0.0
        %1446 = vmatpush1.msra.mxu0 0.0
        %1447 = vmatprep.subr.mxu0 0.0
        %1448 = vmatpush1.msra.mxu0 0.0
        %1449 = vmatprep.subr.mxu0 0.0
        %1450 = vmatpush1.msra.mxu0 0.0
        %1451 = vmatprep.subr.mxu0 0.0
        %1452 = vmatpush1.msra.mxu0 0.0
        %1453 = vmatprep.subr.mxu0 0.0
        %1454 = vmatpush1.msra.mxu0 0.0
        %1455 = vmatprep.subr.mxu0 0.0
        %1456 = vmatpush1.msra.mxu0 0.0
        %1457 = vmatprep.subr.mxu0 0.0
        %1458 = vmatpush1.msra.mxu0 %v1422
        %1459 = vmatprep.subr.mxu0 0.0
        %1460 = vmatpush2.msra.mxu0 0.0
        %1461 = vmatprep.subr.mxu0 0.0
        %1462 = vmatpush2.msra.mxu0 0.0
        %1463 = vmatprep.subr.mxu0 0.0
        %1464 = vmatpush2.msra.mxu0 0.0
        %1465 = vmatprep.subr.mxu0 0.0
        %1466 = vmatpush2.msra.mxu0 0.0
        %1467 = vmatprep.subr.mxu0 0.0
        %1468 = vmatpush2.msra.mxu0 0.0
        %1469 = vmatprep.subr.mxu0 0.0
        %1470 = vmatpush2.msra.mxu0 0.0
        %1471 = vmatprep.subr.mxu0 0.0
        %1472 = vmatpush2.msra.mxu0 0.0
        %1473 = vmatprep.subr.mxu0 0.0
        %1474 = vmatpush2.msra.mxu0 0.0
        %1475 = vmatprep.subr.mxu0 0.0
        %1476 = vmatpush2.msra.mxu0 0.0
        %1477 = vmatprep.subr.mxu0 0.0
        %1478 = vmatpush2.msra.mxu0 0.0
        %1479 = vmatprep.subr.mxu0 0.0
        %1480 = vmatpush2.msra.mxu0 0.0
        %1481 = vmatprep.subr.mxu0 0.0
        %1482 = vmatpush2.msra.mxu0 0.0
        %1483 = vmatprep.subr.mxu0 0.0
        %1484 = vmatpush2.msra.mxu0 0.0
        %1485 = vmatprep.subr.mxu0 0.0
        %1486 = vmatpush2.msra.mxu0 0.0
        %1487 = vmatprep.subr.mxu0 0.0
        %1488 = vmatpush2.msra.mxu0 0.0
        %1489 = vmatprep.subr.mxu0 0.0
        %1490 = vmatpush2.msra.mxu0 0.0
        %1491 = vmatprep.mubr.f32.mxu0 0.0
        %1492 = vmatmul.mubr.f32.gmra.mxu0 %v1425
        %v1493 = vpop.f32.mrf.mxu0
        %v1494 = vadd.f32 0.0, %v1493
        %v1495 = vpop.f32.mrf.mxu0
        %1496 = vdwg.mxu0
        %1497 = vrot.lane.b32.xlu0 %v1160, 112
        %v1498 = vpop.permute.xlu0 %1497
        %1499 = vrot.lane.b32.xlu0 %v1160, 80
        %v1500 = vpop.permute.xlu0 %1499
        %v1501 = vsel %vm1166, %v1498, 0
        %v1503 = vsel %vm1166, %v1500, 0
        %1505 = vmatprep.subr.mxu0 0.0
        %1506 = vmatpush1.xpose.msra.mxu0 0.0
        %1507 = vmatprep.subr.mxu0 0.0
        %1508 = vmatpush1.xpose.msra.mxu0 0.0
        %1509 = vmatprep.subr.mxu0 0.0
        %1510 = vmatpush1.xpose.msra.mxu0 0.0
        %1511 = vmatprep.subr.mxu0 0.0
        %1512 = vmatpush1.xpose.msra.mxu0 0.0
        %1513 = vmatprep.subr.mxu0 0.0
        %1514 = vmatpush1.xpose.msra.mxu0 0.0
        %1515 = vmatprep.subr.mxu0 0.0
        %1516 = vmatpush1.xpose.msra.mxu0 0.0
        %1517 = vmatprep.subr.mxu0 0.0
        %1518 = vmatpush1.xpose.msra.mxu0 0.0
        %1519 = vmatprep.subr.mxu0 0.0
        %1520 = vmatpush1.xpose.msra.mxu0 0.0
        %1521 = vmatprep.subr.mxu0 0.0
        %1522 = vmatpush1.xpose.msra.mxu0 0.0
        %1523 = vmatprep.subr.mxu0 0.0
        %1524 = vmatpush1.xpose.msra.mxu0 0.0
        %1525 = vmatprep.subr.mxu0 0.0
        %1526 = vmatpush1.xpose.msra.mxu0 0.0
        %1527 = vmatprep.subr.mxu0 0.0
        %1528 = vmatpush1.xpose.msra.mxu0 0.0
        %1529 = vmatprep.subr.mxu0 0.0
        %1530 = vmatpush1.xpose.msra.mxu0 0.0
        %1531 = vmatprep.subr.mxu0 0.0
        %1532 = vmatpush1.xpose.msra.mxu0 0.0
        %1533 = vmatprep.subr.mxu0 0.0
        %1534 = vmatpush1.xpose.msra.mxu0 0.0
        %1535 = vmatprep.subr.mxu0 0.0
        %1536 = vmatpush1.xpose.msra.mxu0 %v1503
        %1537 = vmatprep.subr.mxu0 0.0
        %1538 = vmatpush2.xpose.msra.mxu0 0.0
        %1539 = vmatprep.subr.mxu0 0.0
        %1540 = vmatpush2.xpose.msra.mxu0 0.0
        %1541 = vmatprep.subr.mxu0 0.0
        %1542 = vmatpush2.xpose.msra.mxu0 0.0
        %1543 = vmatprep.subr.mxu0 0.0
        %1544 = vmatpush2.xpose.msra.mxu0 0.0
        %1545 = vmatprep.subr.mxu0 0.0
        %1546 = vmatpush2.xpose.msra.mxu0 0.0
        %1547 = vmatprep.subr.mxu0 0.0
        %1548 = vmatpush2.xpose.msra.mxu0 0.0
        %1549 = vmatprep.subr.mxu0 0.0
        %1550 = vmatpush2.xpose.msra.mxu0 0.0
        %1551 = vmatprep.subr.mxu0 0.0
        %1552 = vmatpush2.xpose.msra.mxu0 0.0
        %1553 = vmatprep.subr.mxu0 0.0
        %1554 = vmatpush2.xpose.msra.mxu0 0.0
        %1555 = vmatprep.subr.mxu0 0.0
        %1556 = vmatpush2.xpose.msra.mxu0 0.0
        %1557 = vmatprep.subr.mxu0 0.0
        %1558 = vmatpush2.xpose.msra.mxu0 0.0
        %1559 = vmatprep.subr.mxu0 0.0
        %1560 = vmatpush2.xpose.msra.mxu0 0.0
        %1561 = vmatprep.subr.mxu0 0.0
        %1562 = vmatpush2.xpose.msra.mxu0 0.0
        %1563 = vmatprep.subr.mxu0 0.0
        %1564 = vmatpush2.xpose.msra.mxu0 0.0
        %1565 = vmatprep.subr.mxu0 0.0
        %1566 = vmatpush2.xpose.msra.mxu0 0.0
        %1567 = vmatprep.subr.mxu0 0.0
        %1568 = vmatpush2.xpose.msra.mxu0 0.0
        %1569 = vmatprep.mubr.f32.mxu0 0.0
        %1570 = vmatmul.mubr.f32.gmra.mxu0 %v1501
        %v1571 = vpop.f32.mrf.mxu0
        %v1572 = vadd.f32 0.0, %v1571
        %v1573 = vpop.f32.mrf.mxu0
        %1574 = vdwg.mxu0
        %v1575 = vmul.f32 %v1572, 0.35355338
        %v1576 = vadd.f32 %v1575, %v1075
        %v1577 = vsel %vm1166, %v1576, -inf
        %1578 = vmax.xlane.f32.xlu0 %v1577
        %v1579 = vpop.xlane.xlu0 %1578
        %v1580 = vsub.f32 %v1576, %v1579
        %v1581 = vmul.f32 %v1580, 1.442695
        %v1582 = vpow.pop %v1581
        %v1583 = vsel %vm1166, %v1582, 0.0
        %1584 = vadd.xlane.f32.xlu0 %v1583
        %v1585 = vpop.xlane.xlu0 %1584
        %v1586 = vrcp.pop %v1585
        %v1587 = vmul.f32 %v1582, %v1586
        %1588 = vrot.lane.b32.xlu0 %v1160, 48
        %v1589 = vpop.permute.xlu0 %1588
        %v1592 = vsel %vm1166, %v1587, 0
        %1594 = vmatprep.subr.mxu0 0.0
        %1595 = vmatpush1.msra.mxu0 0.0
        %1596 = vmatprep.subr.mxu0 0.0
        %1597 = vmatpush1.msra.mxu0 0.0
        %1598 = vmatprep.subr.mxu0 0.0
        %1599 = vmatpush1.msra.mxu0 0.0
        %1600 = vmatprep.subr.mxu0 0.0
        %1601 = vmatpush1.msra.mxu0 0.0
        %1602 = vmatprep.subr.mxu0 0.0
        %1603 = vmatpush1.msra.mxu0 0.0
        %1604 = vmatprep.subr.mxu0 0.0
        %1605 = vmatpush1.msra.mxu0 0.0
        %1606 = vmatprep.subr.mxu0 0.0
        %1607 = vmatpush1.msra.mxu0 0.0
        %1608 = vmatprep.subr.mxu0 0.0
        %1609 = vmatpush1.msra.mxu0 0.0
        %1610 = vmatprep.subr.mxu0 0.0
        %1611 = vmatpush1.msra.mxu0 0.0
        %1612 = vmatprep.subr.mxu0 0.0
        %1613 = vmatpush1.msra.mxu0 0.0
        %1614 = vmatprep.subr.mxu0 0.0
        %1615 = vmatpush1.msra.mxu0 0.0
        %1616 = vmatprep.subr.mxu0 0.0
        %1617 = vmatpush1.msra.mxu0 0.0
        %1618 = vmatprep.subr.mxu0 0.0
        %1619 = vmatpush1.msra.mxu0 0.0
        %1620 = vmatprep.subr.mxu0 0.0
        %1621 = vmatpush1.msra.mxu0 0.0
        %1622 = vmatprep.subr.mxu0 0.0
        %1623 = vmatpush1.msra.mxu0 0.0
        %1624 = vmatprep.subr.mxu0 0.0
        %1625 = vmatpush1.msra.mxu0 %v1589
        %1626 = vmatprep.subr.mxu0 0.0
        %1627 = vmatpush2.msra.mxu0 0.0
        %1628 = vmatprep.subr.mxu0 0.0
        %1629 = vmatpush2.msra.mxu0 0.0
        %1630 = vmatprep.subr.mxu0 0.0
        %1631 = vmatpush2.msra.mxu0 0.0
        %1632 = vmatprep.subr.mxu0 0.0
        %1633 = vmatpush2.msra.mxu0 0.0
        %1634 = vmatprep.subr.mxu0 0.0
        %1635 = vmatpush2.msra.mxu0 0.0
        %1636 = vmatprep.subr.mxu0 0.0
        %1637 = vmatpush2.msra.mxu0 0.0
        %1638 = vmatprep.subr.mxu0 0.0
        %1639 = vmatpush2.msra.mxu0 0.0
        %1640 = vmatprep.subr.mxu0 0.0
        %1641 = vmatpush2.msra.mxu0 0.0
        %1642 = vmatprep.subr.mxu0 0.0
        %1643 = vmatpush2.msra.mxu0 0.0
        %1644 = vmatprep.subr.mxu0 0.0
        %1645 = vmatpush2.msra.mxu0 0.0
        %1646 = vmatprep.subr.mxu0 0.0
        %1647 = vmatpush2.msra.mxu0 0.0
        %1648 = vmatprep.subr.mxu0 0.0
        %1649 = vmatpush2.msra.mxu0 0.0
        %1650 = vmatprep.subr.mxu0 0.0
        %1651 = vmatpush2.msra.mxu0 0.0
        %1652 = vmatprep.subr.mxu0 0.0
        %1653 = vmatpush2.msra.mxu0 0.0
        %1654 = vmatprep.subr.mxu0 0.0
        %1655 = vmatpush2.msra.mxu0 0.0
        %1656 = vmatprep.subr.mxu0 0.0
        %1657 = vmatpush2.msra.mxu0 0.0
        %1658 = vmatprep.mubr.f32.mxu0 0.0
        %1659 = vmatmul.mubr.f32.gmra.mxu0 %v1592
        %v1660 = vpop.f32.mrf.mxu0
        %v1661 = vadd.f32 0.0, %v1660
        %v1662 = vpop.f32.mrf.mxu0
        %1663 = vdwg.mxu0
        %1664 = vrot.lane.b32.xlu0 %v1160, 104
        %v1665 = vpop.permute.xlu0 %1664
        %1666 = vrot.lane.b32.xlu0 %v1160, 72
        %v1667 = vpop.permute.xlu0 %1666
        %v1668 = vsel %vm1166, %v1665, 0
        %v1670 = vsel %vm1166, %v1667, 0
        %1672 = vmatprep.subr.mxu0 0.0
        %1673 = vmatpush1.xpose.msra.mxu0 0.0
        %1674 = vmatprep.subr.mxu0 0.0
        %1675 = vmatpush1.xpose.msra.mxu0 0.0
        %1676 = vmatprep.subr.mxu0 0.0
        %1677 = vmatpush1.xpose.msra.mxu0 0.0
        %1678 = vmatprep.subr.mxu0 0.0
        %1679 = vmatpush1.xpose.msra.mxu0 0.0
        %1680 = vmatprep.subr.mxu0 0.0
        %1681 = vmatpush1.xpose.msra.mxu0 0.0
        %1682 = vmatprep.subr.mxu0 0.0
        %1683 = vmatpush1.xpose.msra.mxu0 0.0
        %1684 = vmatprep.subr.mxu0 0.0
        %1685 = vmatpush1.xpose.msra.mxu0 0.0
        %1686 = vmatprep.subr.mxu0 0.0
        %1687 = vmatpush1.xpose.msra.mxu0 0.0
        %1688 = vmatprep.subr.mxu0 0.0
        %1689 = vmatpush1.xpose.msra.mxu0 0.0
        %1690 = vmatprep.subr.mxu0 0.0
        %1691 = vmatpush1.xpose.msra.mxu0 0.0
        %1692 = vmatprep.subr.mxu0 0.0
        %1693 = vmatpush1.xpose.msra.mxu0 0.0
        %1694 = vmatprep.subr.mxu0 0.0
        %1695 = vmatpush1.xpose.msra.mxu0 0.0
        %1696 = vmatprep.subr.mxu0 0.0
        %1697 = vmatpush1.xpose.msra.mxu0 0.0
        %1698 = vmatprep.subr.mxu0 0.0
        %1699 = vmatpush1.xpose.msra.mxu0 0.0
        %1700 = vmatprep.subr.mxu0 0.0
        %1701 = vmatpush1.xpose.msra.mxu0 0.0
        %1702 = vmatprep.subr.mxu0 0.0
        %1703 = vmatpush1.xpose.msra.mxu0 %v1670
        %1704 = vmatprep.subr.mxu0 0.0
        %1705 = vmatpush2.xpose.msra.mxu0 0.0
        %1706 = vmatprep.subr.mxu0 0.0
        %1707 = vmatpush2.xpose.msra.mxu0 0.0
        %1708 = vmatprep.subr.mxu0 0.0
        %1709 = vmatpush2.xpose.msra.mxu0 0.0
        %1710 = vmatprep.subr.mxu0 0.0
        %1711 = vmatpush2.xpose.msra.mxu0 0.0
        %1712 = vmatprep.subr.mxu0 0.0
        %1713 = vmatpush2.xpose.msra.mxu0 0.0
        %1714 = vmatprep.subr.mxu0 0.0
        %1715 = vmatpush2.xpose.msra.mxu0 0.0
        %1716 = vmatprep.subr.mxu0 0.0
        %1717 = vmatpush2.xpose.msra.mxu0 0.0
        %1718 = vmatprep.subr.mxu0 0.0
        %1719 = vmatpush2.xpose.msra.mxu0 0.0
        %1720 = vmatprep.subr.mxu0 0.0
        %1721 = vmatpush2.xpose.msra.mxu0 0.0
        %1722 = vmatprep.subr.mxu0 0.0
        %1723 = vmatpush2.xpose.msra.mxu0 0.0
        %1724 = vmatprep.subr.mxu0 0.0
        %1725 = vmatpush2.xpose.msra.mxu0 0.0
        %1726 = vmatprep.subr.mxu0 0.0
        %1727 = vmatpush2.xpose.msra.mxu0 0.0
        %1728 = vmatprep.subr.mxu0 0.0
        %1729 = vmatpush2.xpose.msra.mxu0 0.0
        %1730 = vmatprep.subr.mxu0 0.0
        %1731 = vmatpush2.xpose.msra.mxu0 0.0
        %1732 = vmatprep.subr.mxu0 0.0
        %1733 = vmatpush2.xpose.msra.mxu0 0.0
        %1734 = vmatprep.subr.mxu0 0.0
        %1735 = vmatpush2.xpose.msra.mxu0 0.0
        %1736 = vmatprep.mubr.f32.mxu0 0.0
        %1737 = vmatmul.mubr.f32.gmra.mxu0 %v1668
        %v1738 = vpop.f32.mrf.mxu0
        %v1739 = vadd.f32 0.0, %v1738
        %v1740 = vpop.f32.mrf.mxu0
        %1741 = vdwg.mxu0
        %v1742 = vmul.f32 %v1739, 0.35355338
        %v1743 = vadd.f32 %v1742, %v1075
        %v1744 = vsel %vm1166, %v1743, -inf
        %1745 = vmax.xlane.f32.xlu0 %v1744
        %v1746 = vpop.xlane.xlu0 %1745
        %v1747 = vsub.f32 %v1743, %v1746
        %v1748 = vmul.f32 %v1747, 1.442695
        %v1749 = vpow.pop %v1748
        %v1750 = vsel %vm1166, %v1749, 0.0
        %1751 = vadd.xlane.f32.xlu0 %v1750
        %v1752 = vpop.xlane.xlu0 %1751
        %v1753 = vrcp.pop %v1752
        %v1754 = vmul.f32 %v1749, %v1753
        %1755 = vrot.lane.b32.xlu0 %v1160, 40
        %v1756 = vpop.permute.xlu0 %1755
        %v1759 = vsel %vm1166, %v1754, 0
        %1761 = vmatprep.subr.mxu0 0.0
        %1762 = vmatpush1.msra.mxu0 0.0
        %1763 = vmatprep.subr.mxu0 0.0
        %1764 = vmatpush1.msra.mxu0 0.0
        %1765 = vmatprep.subr.mxu0 0.0
        %1766 = vmatpush1.msra.mxu0 0.0
        %1767 = vmatprep.subr.mxu0 0.0
        %1768 = vmatpush1.msra.mxu0 0.0
        %1769 = vmatprep.subr.mxu0 0.0
        %1770 = vmatpush1.msra.mxu0 0.0
        %1771 = vmatprep.subr.mxu0 0.0
        %1772 = vmatpush1.msra.mxu0 0.0
        %1773 = vmatprep.subr.mxu0 0.0
        %1774 = vmatpush1.msra.mxu0 0.0
        %1775 = vmatprep.subr.mxu0 0.0
        %1776 = vmatpush1.msra.mxu0 0.0
        %1777 = vmatprep.subr.mxu0 0.0
        %1778 = vmatpush1.msra.mxu0 0.0
        %1779 = vmatprep.subr.mxu0 0.0
        %1780 = vmatpush1.msra.mxu0 0.0
        %1781 = vmatprep.subr.mxu0 0.0
        %1782 = vmatpush1.msra.mxu0 0.0
        %1783 = vmatprep.subr.mxu0 0.0
        %1784 = vmatpush1.msra.mxu0 0.0
        %1785 = vmatprep.subr.mxu0 0.0
        %1786 = vmatpush1.msra.mxu0 0.0
        %1787 = vmatprep.subr.mxu0 0.0
        %1788 = vmatpush1.msra.mxu0 0.0
        %1789 = vmatprep.subr.mxu0 0.0
        %1790 = vmatpush1.msra.mxu0 0.0
        %1791 = vmatprep.subr.mxu0 0.0
        %1792 = vmatpush1.msra.mxu0 %v1756
        %1793 = vmatprep.subr.mxu0 0.0
        %1794 = vmatpush2.msra.mxu0 0.0
        %1795 = vmatprep.subr.mxu0 0.0
        %1796 = vmatpush2.msra.mxu0 0.0
        %1797 = vmatprep.subr.mxu0 0.0
        %1798 = vmatpush2.msra.mxu0 0.0
        %1799 = vmatprep.subr.mxu0 0.0
        %1800 = vmatpush2.msra.mxu0 0.0
        %1801 = vmatprep.subr.mxu0 0.0
        %1802 = vmatpush2.msra.mxu0 0.0
        %1803 = vmatprep.subr.mxu0 0.0
        %1804 = vmatpush2.msra.mxu0 0.0
        %1805 = vmatprep.subr.mxu0 0.0
        %1806 = vmatpush2.msra.mxu0 0.0
        %1807 = vmatprep.subr.mxu0 0.0
        %1808 = vmatpush2.msra.mxu0 0.0
        %1809 = vmatprep.subr.mxu0 0.0
        %1810 = vmatpush2.msra.mxu0 0.0
        %1811 = vmatprep.subr.mxu0 0.0
        %1812 = vmatpush2.msra.mxu0 0.0
        %1813 = vmatprep.subr.mxu0 0.0
        %1814 = vmatpush2.msra.mxu0 0.0
        %1815 = vmatprep.subr.mxu0 0.0
        %1816 = vmatpush2.msra.mxu0 0.0
        %1817 = vmatprep.subr.mxu0 0.0
        %1818 = vmatpush2.msra.mxu0 0.0
        %1819 = vmatprep.subr.mxu0 0.0
        %1820 = vmatpush2.msra.mxu0 0.0
        %1821 = vmatprep.subr.mxu0 0.0
        %1822 = vmatpush2.msra.mxu0 0.0
        %1823 = vmatprep.subr.mxu0 0.0
        %1824 = vmatpush2.msra.mxu0 0.0
        %1825 = vmatprep.mubr.f32.mxu0 0.0
        %1826 = vmatmul.mubr.f32.gmra.mxu0 %v1759
        %v1827 = vpop.f32.mrf.mxu0
        %v1828 = vadd.f32 0.0, %v1827
        %v1829 = vpop.f32.mrf.mxu0
        %1830 = vdwg.mxu0
        %1832 = vrot.lane.b32.xlu0 %v1494, 8
        %v1833 = vpop.permute.xlu0 %1832
        %1836 = vrot.lane.b32.xlu0 %v1661, 16
        %v1837 = vpop.permute.xlu0 %1836
        %1840 = vrot.lane.b32.xlu0 %v1828, 24
        %v1841 = vpop.permute.xlu0 %1840
        %v1843 = vsel %vm1166, %v1327, %v1833
        %vm1844 = vcmask 130048
        %v1845 = vsel %vm1844, %v1843, %v1837
        %vm1846 = vcmask 195584
        %v1847 = vsel %vm1846, %v1845, %v1841
        %v1848 = vld [vmem:[%s4] sm:$0xff]
        %v1849 = vld [vmem:[%s4 + $0x8] sm:$0xff]
        %v1850 = vld [vmem:[%s4 + $0x10] sm:$0xff]
        %v1851 = vld [vmem:[%s4 + $0x18] sm:$0xff]
        %v1852 = vld [vmem:[#allocation7] sm:$0x1]
        %v1854 = vlaneseq
        %v1855 = vshrl.u32 %v1854, 7
        %v1856 = vsub.s32 0, %v1855
        %v1857 = vrot.slane %v1852, %v1856
        %v1860 = vsel %vm1089, %v1847, 0
        %1862 = vmatprep.subr.mxu0 0.0
        %1863 = vmatpush1.msra.mxu0 0.0
        %1864 = vmatprep.subr.mxu0 0.0
        %1865 = vmatpush1.msra.mxu0 0.0
        %1866 = vmatprep.subr.mxu0 0.0
        %1867 = vmatpush1.msra.mxu0 0.0
        %1868 = vmatprep.subr.mxu0 0.0
        %1869 = vmatpush1.msra.mxu0 0.0
        %1870 = vmatprep.subr.mxu0 0.0
        %1871 = vmatpush1.msra.mxu0 0.0
        %1872 = vmatprep.subr.mxu0 0.0
        %1873 = vmatpush1.msra.mxu0 0.0
        %1874 = vmatprep.subr.mxu0 0.0
        %1875 = vmatpush1.msra.mxu0 0.0
        %1876 = vmatprep.subr.mxu0 0.0
        %1877 = vmatpush1.msra.mxu0 0.0
        %1878 = vmatprep.subr.mxu0 0.0
        %1879 = vmatpush1.msra.mxu0 0.0
        %1880 = vmatprep.subr.mxu0 0.0
        %1881 = vmatpush1.msra.mxu0 0.0
        %1882 = vmatprep.subr.mxu0 0.0
        %1883 = vmatpush1.msra.mxu0 0.0
        %1884 = vmatprep.subr.mxu0 0.0
        %1885 = vmatpush1.msra.mxu0 0.0
        %1886 = vmatprep.subr.mxu0 0.0
        %1887 = vmatpush1.msra.mxu0 %v1851
        %1888 = vmatprep.subr.mxu0 0.0
        %1889 = vmatpush1.msra.mxu0 %v1850
        %1890 = vmatprep.subr.mxu0 0.0
        %1891 = vmatpush1.msra.mxu0 %v1849
        %1892 = vmatprep.subr.mxu0 0.0
        %1893 = vmatpush1.msra.mxu0 %v1848
        %1894 = vmatprep.subr.mxu0 0.0
        %1895 = vmatpush2.msra.mxu0 0.0
        %1896 = vmatprep.subr.mxu0 0.0
        %1897 = vmatpush2.msra.mxu0 0.0
        %1898 = vmatprep.subr.mxu0 0.0
        %1899 = vmatpush2.msra.mxu0 0.0
        %1900 = vmatprep.subr.mxu0 0.0
        %1901 = vmatpush2.msra.mxu0 0.0
        %1902 = vmatprep.subr.mxu0 0.0
        %1903 = vmatpush2.msra.mxu0 0.0
        %1904 = vmatprep.subr.mxu0 0.0
        %1905 = vmatpush2.msra.mxu0 0.0
        %1906 = vmatprep.subr.mxu0 0.0
        %1907 = vmatpush2.msra.mxu0 0.0
        %1908 = vmatprep.subr.mxu0 0.0
        %1909 = vmatpush2.msra.mxu0 0.0
        %1910 = vmatprep.subr.mxu0 0.0
        %1911 = vmatpush2.msra.mxu0 0.0
        %1912 = vmatprep.subr.mxu0 0.0
        %1913 = vmatpush2.msra.mxu0 0.0
        %1914 = vmatprep.subr.mxu0 0.0
        %1915 = vmatpush2.msra.mxu0 0.0
        %1916 = vmatprep.subr.mxu0 0.0
        %1917 = vmatpush2.msra.mxu0 0.0
        %1918 = vmatprep.subr.mxu0 0.0
        %1919 = vmatpush2.msra.mxu0 0.0
        %1920 = vmatprep.subr.mxu0 0.0
        %1921 = vmatpush2.msra.mxu0 0.0
        %1922 = vmatprep.subr.mxu0 0.0
        %1923 = vmatpush2.msra.mxu0 0.0
        %1924 = vmatprep.subr.mxu0 0.0
        %1925 = vmatpush2.msra.mxu0 0.0
        %1926 = vmatprep.mubr.f32.mxu0 0.0
        %1927 = vmatmul.mubr.f32.gmra.mxu0 %v1860
        %v1928 = vpop.f32.mrf.mxu0
        %v1929 = vadd.f32 %v1857, %v1928
        %v1930 = vpop.f32.mrf.mxu0
        %1931 = vdwg.mxu0
        %v1932 = vadd.f32 %v1076, %v1929
        %v1933 = vsel %vm1089, %v1932, 0.0
        %1934 = vadd.xlane.f32.xlu0 %v1933
        %v1935 = vpop.xlane.xlu0 %1934
        %v1936 = vrcp.pop 32.0
        %v1937 = vmul.f32 %v1935, %v1936
        %v1938 = vsub.f32 %v1932, %v1937
        %v1939 = vmul.f32 %v1938, %v1938
        %v1940 = vsel %vm1089, %v1939, 0.0
        %1941 = vadd.xlane.f32.xlu0 %v1940
        %v1942 = vpop.xlane.xlu0 %1941
        %v1943 = vmul.f32 %v1942, %v1936
        %v1944 = vadd.f32 %v1943, 1e-05
        %v1945 = vrsqrt.pop %v1944
        %v1946 = vmul.f32 %v1938, %v1945
        %v1947 = vlaneseq
        %v1948 = vshrl.u32 %v1947, 7
        %v1949 = vsub.s32 0, %v1948
        %v1950 = vrot.slane %v1077, %v1949
        %v1951 = vmul.f32 %v1946, %v1950
        %v1952 = vlaneseq
        %v1953 = vshrl.u32 %v1952, 7
        %v1954 = vsub.s32 1, %v1953
        %v1955 = vrot.slane %v1077, %v1954
        %v1956 = vadd.f32 %v1951, %v1955
        %v1957 = vld [vmem:[%s6] sm:$0xff]
        %v1958 = vld [vmem:[%s6 + $0x8] sm:$0xff]
        %v1959 = vld [vmem:[%s6 + $0x10] sm:$0xff]
        %v1960 = vld [vmem:[%s6 + $0x18] sm:$0xff]
        %v1961 = vld [vmem:[#allocation8] sm:$0x1]
        %v1963 = vlaneseq
        %v1964 = vshrl.u32 %v1963, 7
        %v1965 = vsub.s32 0, %v1964
        %v1966 = vrot.slane %v1961, %v1965
        %v1969 = vsel %vm1089, %v1956, 0
        %1971 = vmatprep.subr.mxu0 0.0
        %1972 = vmatpush1.msra.mxu0 0.0
        %1973 = vmatprep.subr.mxu0 0.0
        %1974 = vmatpush1.msra.mxu0 0.0
        %1975 = vmatprep.subr.mxu0 0.0
        %1976 = vmatpush1.msra.mxu0 0.0
        %1977 = vmatprep.subr.mxu0 0.0
        %1978 = vmatpush1.msra.mxu0 0.0
        %1979 = vmatprep.subr.mxu0 0.0
        %1980 = vmatpush1.msra.mxu0 0.0
        %1981 = vmatprep.subr.mxu0 0.0
        %1982 = vmatpush1.msra.mxu0 0.0
        %1983 = vmatprep.subr.mxu0 0.0
        %1984 = vmatpush1.msra.mxu0 0.0
        %1985 = vmatprep.subr.mxu0 0.0
        %1986 = vmatpush1.msra.mxu0 0.0
        %1987 = vmatprep.subr.mxu0 0.0
        %1988 = vmatpush1.msra.mxu0 0.0
        %1989 = vmatprep.subr.mxu0 0.0
        %1990 = vmatpush1.msra.mxu0 0.0
        %1991 = vmatprep.subr.mxu0 0.0
        %1992 = vmatpush1.msra.mxu0 0.0
        %1993 = vmatprep.subr.mxu0 0.0
        %1994 = vmatpush1.msra.mxu0 0.0
        %1995 = vmatprep.subr.mxu0 0.0
        %1996 = vmatpush1.msra.mxu0 %v1960
        %1997 = vmatprep.subr.mxu0 0.0
        %1998 = vmatpush1.msra.mxu0 %v1959
        %1999 = vmatprep.subr.mxu0 0.0
        %2000 = vmatpush1.msra.mxu0 %v1958
        %2001 = vmatprep.subr.mxu0 0.0
        %2002 = vmatpush1.msra.mxu0 %v1957
        %2003 = vmatprep.subr.mxu0 0.0
        %2004 = vmatpush2.msra.mxu0 0.0
        %2005 = vmatprep.subr.mxu0 0.0
        %2006 = vmatpush2.msra.mxu0 0.0
        %2007 = vmatprep.subr.mxu0 0.0
        %2008 = vmatpush2.msra.mxu0 0.0
        %2009 = vmatprep.subr.mxu0 0.0
        %2010 = vmatpush2.msra.mxu0 0.0
        %2011 = vmatprep.subr.mxu0 0.0
        %2012 = vmatpush2.msra.mxu0 0.0
        %2013 = vmatprep.subr.mxu0 0.0
        %2014 = vmatpush2.msra.mxu0 0.0
        %2015 = vmatprep.subr.mxu0 0.0
        %2016 = vmatpush2.msra.mxu0 0.0
        %2017 = vmatprep.subr.mxu0 0.0
        %2018 = vmatpush2.msra.mxu0 0.0
        %2019 = vmatprep.subr.mxu0 0.0
        %2020 = vmatpush2.msra.mxu0 0.0
        %2021 = vmatprep.subr.mxu0 0.0
        %2022 = vmatpush2.msra.mxu0 0.0
        %2023 = vmatprep.subr.mxu0 0.0
        %2024 = vmatpush2.msra.mxu0 0.0
        %2025 = vmatprep.subr.mxu0 0.0
        %2026 = vmatpush2.msra.mxu0 0.0
        %2027 = vmatprep.subr.mxu0 0.0
        %2028 = vmatpush2.msra.mxu0 0.0
        %2029 = vmatprep.subr.mxu0 0.0
        %2030 = vmatpush2.msra.mxu0 0.0
        %2031 = vmatprep.subr.mxu0 0.0
        %2032 = vmatpush2.msra.mxu0 0.0
        %2033 = vmatprep.subr.mxu0 0.0
        %2034 = vmatpush2.msra.mxu0 0.0
        %2035 = vmatprep.mubr.f32.mxu0 0.0
        %2036 = vmatmul.mubr.f32.gmra.mxu0 %v1969
        %v2037 = vpop.f32.mrf.mxu0
        %v2038 = vadd.f32 %v1966, %v2037
        %v2039 = vpop.f32.mrf.mxu0
        %2040 = vdwg.mxu0
        %v2041 = vmax.f32 %v2038, 0.0
        %v2042 = vld [vmem:[%s8] sm:$0xff]
        %v2043 = vld [vmem:[%s8 + $0x8] sm:$0xff]
        %v2044 = vld [vmem:[%s8 + $0x10] sm:$0xff]
        %v2045 = vld [vmem:[%s8 + $0x18] sm:$0xff]
        %v2046 = vld [vmem:[%s8 + $0x20] sm:$0xff]
        %v2047 = vld [vmem:[%s8 + $0x28] sm:$0xff]
        %v2048 = vld [vmem:[%s8 + $0x30] sm:$0xff]
        %v2049 = vld [vmem:[%s8 + $0x38] sm:$0xff]
        %v2050 = vld [vmem:[#allocation10] sm:$0x1]
        %v2052 = vlaneseq
        %v2053 = vshrl.u32 %v2052, 7
        %v2054 = vsub.s32 0, %v2053
        %v2055 = vrot.slane %v2050, %v2054
        %vm2057 = vcmask 523264
        %v2059 = vsel %vm2057, %v2041, 0
        %2061 = vmatprep.subr.mxu0 0.0
        %2062 = vmatpush1.msra.mxu0 0.0
        %2063 = vmatprep.subr.mxu0 0.0
        %2064 = vmatpush1.msra.mxu0 0.0
        %2065 = vmatprep.subr.mxu0 0.0
        %2066 = vmatpush1.msra.mxu0 0.0
        %2067 = vmatprep.subr.mxu0 0.0
        %2068 = vmatpush1.msra.mxu0 0.0
        %2069 = vmatprep.subr.mxu0 0.0
        %2070 = vmatpush1.msra.mxu0 0.0
        %2071 = vmatprep.subr.mxu0 0.0
        %2072 = vmatpush1.msra.mxu0 0.0
        %2073 = vmatprep.subr.mxu0 0.0
        %2074 = vmatpush1.msra.mxu0 0.0
        %2075 = vmatprep.subr.mxu0 0.0
        %2076 = vmatpush1.msra.mxu0 0.0
        %2077 = vmatprep.subr.mxu0 0.0
        %2078 = vmatpush1.msra.mxu0 %v2049
        %2079 = vmatprep.subr.mxu0 0.0
        %2080 = vmatpush1.msra.mxu0 %v2048
        %2081 = vmatprep.subr.mxu0 0.0
        %2082 = vmatpush1.msra.mxu0 %v2047
        %2083 = vmatprep.subr.mxu0 0.0
        %2084 = vmatpush1.msra.mxu0 %v2046
        %2085 = vmatprep.subr.mxu0 0.0
        %2086 = vmatpush1.msra.mxu0 %v2045
        %2087 = vmatprep.subr.mxu0 0.0
        %2088 = vmatpush1.msra.mxu0 %v2044
        %2089 = vmatprep.subr.mxu0 0.0
        %2090 = vmatpush1.msra.mxu0 %v2043
        %2091 = vmatprep.subr.mxu0 0.0
        %2092 = vmatpush1.msra.mxu0 %v2042
        %2093 = vmatprep.subr.mxu0 0.0
        %2094 = vmatpush2.msra.mxu0 0.0
        %2095 = vmatprep.subr.mxu0 0.0
        %2096 = vmatpush2.msra.mxu0 0.0
        %2097 = vmatprep.subr.mxu0 0.0
        %2098 = vmatpush2.msra.mxu0 0.0
        %2099 = vmatprep.subr.mxu0 0.0
        %2100 = vmatpush2.msra.mxu0 0.0
        %2101 = vmatprep.subr.mxu0 0.0
        %2102 = vmatpush2.msra.mxu0 0.0
        %2103 = vmatprep.subr.mxu0 0.0
        %2104 = vmatpush2.msra.mxu0 0.0
        %2105 = vmatprep.subr.mxu0 0.0
        %2106 = vmatpush2.msra.mxu0 0.0
        %2107 = vmatprep.subr.mxu0 0.0
        %2108 = vmatpush2.msra.mxu0 0.0
        %2109 = vmatprep.subr.mxu0 0.0
        %2110 = vmatpush2.msra.mxu0 0.0
        %2111 = vmatprep.subr.mxu0 0.0
        %2112 = vmatpush2.msra.mxu0 0.0
        %2113 = vmatprep.subr.mxu0 0.0
        %2114 = vmatpush2.msra.mxu0 0.0
        %2115 = vmatprep.subr.mxu0 0.0
        %2116 = vmatpush2.msra.mxu0 0.0
        %2117 = vmatprep.subr.mxu0 0.0
        %2118 = vmatpush2.msra.mxu0 0.0
        %2119 = vmatprep.subr.mxu0 0.0
        %2120 = vmatpush2.msra.mxu0 0.0
        %2121 = vmatprep.subr.mxu0 0.0
        %2122 = vmatpush2.msra.mxu0 0.0
        %2123 = vmatprep.subr.mxu0 0.0
        %2124 = vmatpush2.msra.mxu0 0.0
        %2125 = vmatprep.mubr.f32.mxu0 0.0
        %2126 = vmatmul.mubr.f32.gmra.mxu0 %v2059
        %v2127 = vpop.f32.mrf.mxu0
        %v2128 = vadd.f32 %v2055, %v2127
        %v2129 = vpop.f32.mrf.mxu0
        %2130 = vdwg.mxu0
        %v2131 = vadd.f32 %v1956, %v2128
        %v2132 = vsel %vm1089, %v2131, 0.0
        %2133 = vadd.xlane.f32.xlu0 %v2132
        %v2134 = vpop.xlane.xlu0 %2133
        %v2135 = vmul.f32 %v2134, %v1936
        %v2136 = vsub.f32 %v2131, %v2135
        %v2137 = vmul.f32 %v2136, %v2136
        %v2138 = vsel %vm1089, %v2137, 0.0
        %2139 = vadd.xlane.f32.xlu0 %v2138
        %v2140 = vpop.xlane.xlu0 %2139
        %v2141 = vmul.f32 %v2140, %v1936
        %v2142 = vadd.f32 %v2141, 1e-05
        %v2143 = vrsqrt.pop %v2142
        %v2144 = vmul.f32 %v2136, %v2143
        %v2145 = vlaneseq
        %v2146 = vshrl.u32 %v2145, 7
        %v2147 = vsub.s32 2, %v2146
        %v2148 = vrot.slane %v1077, %v2147
        %v2149 = vmul.f32 %v2144, %v2148
        %v2150 = vlaneseq
        %v2151 = vshrl.u32 %v2150, 7
        %v2152 = vsub.s32 3, %v2151
        %v2153 = vrot.slane %v1077, %v2152
        %v2154 = vadd.f32 %v2149, %v2153
        %s2155 = scalar_lea.vmem [#allocation11], 4
        %v2156 = vld [vmem:[%s2155] sm:$0xf]
        %s2157 = scalar_lea.vmem %s2, 32
        %v2158 = vld [vmem:[%s2157] sm:$0xff]
        %v2159 = vld [vmem:[%s2157 + $0x8] sm:$0xff]
        %v2160 = vld [vmem:[%s2157 + $0x10] sm:$0xff]
        %v2161 = vld [vmem:[%s2157 + $0x18] sm:$0xff]
        %s2162 = scalar_lea.vmem %s3, 1
        %v2163 = vld [vmem:[%s2162] sm:$0x1]
        %v2165 = vlaneseq
        %v2166 = vshrl.u32 %v2165, 7
        %v2167 = vsub.s32 0, %v2166
        %v2168 = vrot.slane %v2163, %v2167
        %v2171 = vsel %vm1089, %v2154, 0
        %2173 = vmatprep.subr.mxu0 0.0
        %2174 = vmatpush1.msra.mxu0 0.0
        %2175 = vmatprep.subr.mxu0 0.0
        %2176 = vmatpush1.msra.mxu0 0.0
        %2177 = vmatprep.subr.mxu0 0.0
        %2178 = vmatpush1.msra.mxu0 0.0
        %2179 = vmatprep.subr.mxu0 0.0
        %2180 = vmatpush1.msra.mxu0 0.0
        %2181 = vmatprep.subr.mxu0 0.0
        %2182 = vmatpush1.msra.mxu0 0.0
        %2183 = vmatprep.subr.mxu0 0.0
        %2184 = vmatpush1.msra.mxu0 0.0
        %2185 = vmatprep.subr.mxu0 0.0
        %2186 = vmatpush1.msra.mxu0 0.0
        %2187 = vmatprep.subr.mxu0 0.0
        %2188 = vmatpush1.msra.mxu0 0.0
        %2189 = vmatprep.subr.mxu0 0.0
        %2190 = vmatpush1.msra.mxu0 0.0
        %2191 = vmatprep.subr.mxu0 0.0
        %2192 = vmatpush1.msra.mxu0 0.0
        %2193 = vmatprep.subr.mxu0 0.0
        %2194 = vmatpush1.msra.mxu0 0.0
        %2195 = vmatprep.subr.mxu0 0.0
        %2196 = vmatpush1.msra.mxu0 0.0
        %2197 = vmatprep.subr.mxu0 0.0
        %2198 = vmatpush1.msra.mxu0 %v2161
        %2199 = vmatprep.subr.mxu0 0.0
        %2200 = vmatpush1.msra.mxu0 %v2160
        %2201 = vmatprep.subr.mxu0 0.0
        %2202 = vmatpush1.msra.mxu0 %v2159
        %2203 = vmatprep.subr.mxu0 0.0
        %2204 = vmatpush1.msra.mxu0 %v2158
        %2205 = vmatprep.subr.mxu0 0.0
        %2206 = vmatpush2.msra.mxu0 0.0
        %2207 = vmatprep.subr.mxu0 0.0
        %2208 = vmatpush2.msra.mxu0 0.0
        %2209 = vmatprep.subr.mxu0 0.0
        %2210 = vmatpush2.msra.mxu0 0.0
        %2211 = vmatprep.subr.mxu0 0.0
        %2212 = vmatpush2.msra.mxu0 0.0
        %2213 = vmatprep.subr.mxu0 0.0
        %2214 = vmatpush2.msra.mxu0 0.0
        %2215 = vmatprep.subr.mxu0 0.0
        %2216 = vmatpush2.msra.mxu0 0.0
        %2217 = vmatprep.subr.mxu0 0.0
        %2218 = vmatpush2.msra.mxu0 0.0
        %2219 = vmatprep.subr.mxu0 0.0
        %2220 = vmatpush2.msra.mxu0 0.0
        %2221 = vmatprep.subr.mxu0 0.0
        %2222 = vmatpush2.msra.mxu0 0.0
        %2223 = vmatprep.subr.mxu0 0.0
        %2224 = vmatpush2.msra.mxu0 0.0
        %2225 = vmatprep.subr.mxu0 0.0
        %2226 = vmatpush2.msra.mxu0 0.0
        %2227 = vmatprep.subr.mxu0 0.0
        %2228 = vmatpush2.msra.mxu0 0.0
        %2229 = vmatprep.subr.mxu0 0.0
        %2230 = vmatpush2.msra.mxu0 0.0
        %2231 = vmatprep.subr.mxu0 0.0
        %2232 = vmatpush2.msra.mxu0 0.0
        %2233 = vmatprep.subr.mxu0 0.0
        %2234 = vmatpush2.msra.mxu0 0.0
        %2235 = vmatprep.subr.mxu0 0.0
        %2236 = vmatpush2.msra.mxu0 0.0
        %2237 = vmatprep.mubr.f32.mxu0 0.0
        %2238 = vmatmul.mubr.f32.gmra.mxu0 %v2171
        %v2239 = vpop.f32.mrf.mxu0
        %v2240 = vadd.f32 %v2168, %v2239
        %v2241 = vpop.f32.mrf.mxu0
        %2242 = vdwg.mxu0
        %2244 = vrot.lane.b32.xlu0 %v2240, 96
        %v2245 = vpop.permute.xlu0 %2244
        %v2246 = vsel %vm1166, %v2240, 0
        %v2248 = vsel %vm1166, %v2245, 0
        %2250 = vmatprep.subr.mxu0 0.0
        %2251 = vmatpush1.xpose.msra.mxu0 0.0
        %2252 = vmatprep.subr.mxu0 0.0
        %2253 = vmatpush1.xpose.msra.mxu0 0.0
        %2254 = vmatprep.subr.mxu0 0.0
        %2255 = vmatpush1.xpose.msra.mxu0 0.0
        %2256 = vmatprep.subr.mxu0 0.0
        %2257 = vmatpush1.xpose.msra.mxu0 0.0
        %2258 = vmatprep.subr.mxu0 0.0
        %2259 = vmatpush1.xpose.msra.mxu0 0.0
        %2260 = vmatprep.subr.mxu0 0.0
        %2261 = vmatpush1.xpose.msra.mxu0 0.0
        %2262 = vmatprep.subr.mxu0 0.0
        %2263 = vmatpush1.xpose.msra.mxu0 0.0
        %2264 = vmatprep.subr.mxu0 0.0
        %2265 = vmatpush1.xpose.msra.mxu0 0.0
        %2266 = vmatprep.subr.mxu0 0.0
        %2267 = vmatpush1.xpose.msra.mxu0 0.0
        %2268 = vmatprep.subr.mxu0 0.0
        %2269 = vmatpush1.xpose.msra.mxu0 0.0
        %2270 = vmatprep.subr.mxu0 0.0
        %2271 = vmatpush1.xpose.msra.mxu0 0.0
        %2272 = vmatprep.subr.mxu0 0.0
        %2273 = vmatpush1.xpose.msra.mxu0 0.0
        %2274 = vmatprep.subr.mxu0 0.0
        %2275 = vmatpush1.xpose.msra.mxu0 0.0
        %2276 = vmatprep.subr.mxu0 0.0
        %2277 = vmatpush1.xpose.msra.mxu0 0.0
        %2278 = vmatprep.subr.mxu0 0.0
        %2279 = vmatpush1.xpose.msra.mxu0 0.0
        %2280 = vmatprep.subr.mxu0 0.0
        %2281 = vmatpush1.xpose.msra.mxu0 %v2248
        %2282 = vmatprep.subr.mxu0 0.0
        %2283 = vmatpush2.xpose.msra.mxu0 0.0
        %2284 = vmatprep.subr.mxu0 0.0
        %2285 = vmatpush2.xpose.msra.mxu0 0.0
        %2286 = vmatprep.subr.mxu0 0.0
        %2287 = vmatpush2.xpose.msra.mxu0 0.0
        %2288 = vmatprep.subr.mxu0 0.0
        %2289 = vmatpush2.xpose.msra.mxu0 0.0
        %2290 = vmatprep.subr.mxu0 0.0
        %2291 = vmatpush2.xpose.msra.mxu0 0.0
        %2292 = vmatprep.subr.mxu0 0.0
        %2293 = vmatpush2.xpose.msra.mxu0 0.0
        %2294 = vmatprep.subr.mxu0 0.0
        %2295 = vmatpush2.xpose.msra.mxu0 0.0
        %2296 = vmatprep.subr.mxu0 0.0
        %2297 = vmatpush2.xpose.msra.mxu0 0.0
        %2298 = vmatprep.subr.mxu0 0.0
        %2299 = vmatpush2.xpose.msra.mxu0 0.0
        %2300 = vmatprep.subr.mxu0 0.0
        %2301 = vmatpush2.xpose.msra.mxu0 0.0
        %2302 = vmatprep.subr.mxu0 0.0
        %2303 = vmatpush2.xpose.msra.mxu0 0.0
        %2304 = vmatprep.subr.mxu0 0.0
        %2305 = vmatpush2.xpose.msra.mxu0 0.0
        %2306 = vmatprep.subr.mxu0 0.0
        %2307 = vmatpush2.xpose.msra.mxu0 0.0
        %2308 = vmatprep.subr.mxu0 0.0
        %2309 = vmatpush2.xpose.msra.mxu0 0.0
        %2310 = vmatprep.subr.mxu0 0.0
        %2311 = vmatpush2.xpose.msra.mxu0 0.0
        %2312 = vmatprep.subr.mxu0 0.0
        %2313 = vmatpush2.xpose.msra.mxu0 0.0
        %2314 = vmatprep.mubr.f32.mxu0 0.0
        %2315 = vmatmul.mubr.f32.gmra.mxu0 %v2246
        %v2316 = vpop.f32.mrf.mxu0
        %v2317 = vadd.f32 0.0, %v2316
        %v2318 = vpop.f32.mrf.mxu0
        %2319 = vdwg.mxu0
        %v2320 = vmul.f32 %v2317, 0.35355338
        %v2321 = vadd.f32 %v2320, %v1075
        %v2322 = vsel %vm1166, %v2321, -inf
        %2323 = vmax.xlane.f32.xlu0 %v2322
        %v2324 = vpop.xlane.xlu0 %2323
        %v2325 = vsub.f32 %v2321, %v2324
        %v2326 = vmul.f32 %v2325, 1.442695
        %v2327 = vpow.pop %v2326
        %v2328 = vsel %vm1166, %v2327, 0.0
        %2329 = vadd.xlane.f32.xlu0 %v2328
        %v2330 = vpop.xlane.xlu0 %2329
        %v2331 = vrcp.pop %v2330
        %v2332 = vmul.f32 %v2327, %v2331
        %2333 = vrot.lane.b32.xlu0 %v2240, 64
        %v2334 = vpop.permute.xlu0 %2333
        %v2337 = vsel %vm1166, %v2332, 0
        %2339 = vmatprep.subr.mxu0 0.0
        %2340 = vmatpush1.msra.mxu0 0.0
        %2341 = vmatprep.subr.mxu0 0.0
        %2342 = vmatpush1.msra.mxu0 0.0
        %2343 = vmatprep.subr.mxu0 0.0
        %2344 = vmatpush1.msra.mxu0 0.0
        %2345 = vmatprep.subr.mxu0 0.0
        %2346 = vmatpush1.msra.mxu0 0.0
        %2347 = vmatprep.subr.mxu0 0.0
        %2348 = vmatpush1.msra.mxu0 0.0
        %2349 = vmatprep.subr.mxu0 0.0
        %2350 = vmatpush1.msra.mxu0 0.0
        %2351 = vmatprep.subr.mxu0 0.0
        %2352 = vmatpush1.msra.mxu0 0.0
        %2353 = vmatprep.subr.mxu0 0.0
        %2354 = vmatpush1.msra.mxu0 0.0
        %2355 = vmatprep.subr.mxu0 0.0
        %2356 = vmatpush1.msra.mxu0 0.0
        %2357 = vmatprep.subr.mxu0 0.0
        %2358 = vmatpush1.msra.mxu0 0.0
        %2359 = vmatprep.subr.mxu0 0.0
        %2360 = vmatpush1.msra.mxu0 0.0
        %2361 = vmatprep.subr.mxu0 0.0
        %2362 = vmatpush1.msra.mxu0 0.0
        %2363 = vmatprep.subr.mxu0 0.0
        %2364 = vmatpush1.msra.mxu0 0.0
        %2365 = vmatprep.subr.mxu0 0.0
        %2366 = vmatpush1.msra.mxu0 0.0
        %2367 = vmatprep.subr.mxu0 0.0
        %2368 = vmatpush1.msra.mxu0 0.0
        %2369 = vmatprep.subr.mxu0 0.0
        %2370 = vmatpush1.msra.mxu0 %v2334
        %2371 = vmatprep.subr.mxu0 0.0
        %2372 = vmatpush2.msra.mxu0 0.0
        %2373 = vmatprep.subr.mxu0 0.0
        %2374 = vmatpush2.msra.mxu0 0.0
        %2375 = vmatprep.subr.mxu0 0.0
        %2376 = vmatpush2.msra.mxu0 0.0
        %2377 = vmatprep.subr.mxu0 0.0
        %2378 = vmatpush2.msra.mxu0 0.0
        %2379 = vmatprep.subr.mxu0 0.0
        %2380 = vmatpush2.msra.mxu0 0.0
        %2381 = vmatprep.subr.mxu0 0.0
        %2382 = vmatpush2.msra.mxu0 0.0
        %2383 = vmatprep.subr.mxu0 0.0
        %2384 = vmatpush2.msra.mxu0 0.0
        %2385 = vmatprep.subr.mxu0 0.0
        %2386 = vmatpush2.msra.mxu0 0.0
        %2387 = vmatprep.subr.mxu0 0.0
        %2388 = vmatpush2.msra.mxu0 0.0
        %2389 = vmatprep.subr.mxu0 0.0
        %2390 = vmatpush2.msra.mxu0 0.0
        %2391 = vmatprep.subr.mxu0 0.0
        %2392 = vmatpush2.msra.mxu0 0.0
        %2393 = vmatprep.subr.mxu0 0.0
        %2394 = vmatpush2.msra.mxu0 0.0
        %2395 = vmatprep.subr.mxu0 0.0
        %2396 = vmatpush2.msra.mxu0 0.0
        %2397 = vmatprep.subr.mxu0 0.0
        %2398 = vmatpush2.msra.mxu0 0.0
        %2399 = vmatprep.subr.mxu0 0.0
        %2400 = vmatpush2.msra.mxu0 0.0
        %2401 = vmatprep.subr.mxu0 0.0
        %2402 = vmatpush2.msra.mxu0 0.0
        %2403 = vmatprep.mubr.f32.mxu0 0.0
        %2404 = vmatmul.mubr.f32.gmra.mxu0 %v2337
        %v2405 = vpop.f32.mrf.mxu0
        %v2406 = vadd.f32 0.0, %v2405
        %v2407 = vpop.f32.mrf.mxu0
        %2408 = vdwg.mxu0
        %2409 = vrot.lane.b32.xlu0 %v2240, 120
        %v2410 = vpop.permute.xlu0 %2409
        %2411 = vrot.lane.b32.xlu0 %v2240, 88
        %v2412 = vpop.permute.xlu0 %2411
        %v2413 = vsel %vm1166, %v2410, 0
        %v2415 = vsel %vm1166, %v2412, 0
        %2417 = vmatprep.subr.mxu0 0.0
        %2418 = vmatpush1.xpose.msra.mxu0 0.0
        %2419 = vmatprep.subr.mxu0 0.0
        %2420 = vmatpush1.xpose.msra.mxu0 0.0
        %2421 = vmatprep.subr.mxu0 0.0
        %2422 = vmatpush1.xpose.msra.mxu0 0.0
        %2423 = vmatprep.subr.mxu0 0.0
        %2424 = vmatpush1.xpose.msra.mxu0 0.0
        %2425 = vmatprep.subr.mxu0 0.0
        %2426 = vmatpush1.xpose.msra.mxu0 0.0
        %2427 = vmatprep.subr.mxu0 0.0
        %2428 = vmatpush1.xpose.msra.mxu0 0.0
        %2429 = vmatprep.subr.mxu0 0.0
        %2430 = vmatpush1.xpose.msra.mxu0 0.0
        %2431 = vmatprep.subr.mxu0 0.0
        %2432 = vmatpush1.xpose.msra.mxu0 0.0
        %2433 = vmatprep.subr.mxu0 0.0
        %2434 = vmatpush1.xpose.msra.mxu0 0.0
        %2435 = vmatprep.subr.mxu0 0.0
        %2436 = vmatpush1.xpose.msra.mxu0 0.0
        %2437 = vmatprep.subr.mxu0 0.0
        %2438 = vmatpush1.xpose.msra.mxu0 0.0
        %2439 = vmatprep.subr.mxu0 0.0
        %2440 = vmatpush1.xpose.msra.mxu0 0.0
        %2441 = vmatprep.subr.mxu0 0.0
        %2442 = vmatpush1.xpose.msra.mxu0 0.0
        %2443 = vmatprep.subr.mxu0 0.0
        %2444 = vmatpush1.xpose.msra.mxu0 0.0
        %2445 = vmatprep.subr.mxu0 0.0
        %2446 = vmatpush1.xpose.msra.mxu0 0.0
        %2447 = vmatprep.subr.mxu0 0.0
        %2448 = vmatpush1.xpose.msra.mxu0 %v2415
        %2449 = vmatprep.subr.mxu0 0.0
        %2450 = vmatpush2.xpose.msra.mxu0 0.0
        %2451 = vmatprep.subr.mxu0 0.0
        %2452 = vmatpush2.xpose.msra.mxu0 0.0
        %2453 = vmatprep.subr.mxu0 0.0
        %2454 = vmatpush2.xpose.msra.mxu0 0.0
        %2455 = vmatprep.subr.mxu0 0.0
        %2456 = vmatpush2.xpose.msra.mxu0 0.0
        %2457 = vmatprep.subr.mxu0 0.0
        %2458 = vmatpush2.xpose.msra.mxu0 0.0
        %2459 = vmatprep.subr.mxu0 0.0
        %2460 = vmatpush2.xpose.msra.mxu0 0.0
        %2461 = vmatprep.subr.mxu0 0.0
        %2462 = vmatpush2.xpose.msra.mxu0 0.0
        %2463 = vmatprep.subr.mxu0 0.0
        %2464 = vmatpush2.xpose.msra.mxu0 0.0
        %2465 = vmatprep.subr.mxu0 0.0
        %2466 = vmatpush2.xpose.msra.mxu0 0.0
        %2467 = vmatprep.subr.mxu0 0.0
        %2468 = vmatpush2.xpose.msra.mxu0 0.0
        %2469 = vmatprep.subr.mxu0 0.0
        %2470 = vmatpush2.xpose.msra.mxu0 0.0
        %2471 = vmatprep.subr.mxu0 0.0
        %2472 = vmatpush2.xpose.msra.mxu0 0.0
        %2473 = vmatprep.subr.mxu0 0.0
        %2474 = vmatpush2.xpose.msra.mxu0 0.0
        %2475 = vmatprep.subr.mxu0 0.0
        %2476 = vmatpush2.xpose.msra.mxu0 0.0
        %2477 = vmatprep.subr.mxu0 0.0
        %2478 = vmatpush2.xpose.msra.mxu0 0.0
        %2479 = vmatprep.subr.mxu0 0.0
        %2480 = vmatpush2.xpose.msra.mxu0 0.0
        %2481 = vmatprep.mubr.f32.mxu0 0.0
        %2482 = vmatmul.mubr.f32.gmra.mxu0 %v2413
        %v2483 = vpop.f32.mrf.mxu0
        %v2484 = vadd.f32 0.0, %v2483
        %v2485 = vpop.f32.mrf.mxu0
        %2486 = vdwg.mxu0
        %v2487 = vmul.f32 %v2484, 0.35355338
        %v2488 = vadd.f32 %v2487, %v1075
        %v2489 = vsel %vm1166, %v2488, -inf
        %2490 = vmax.xlane.f32.xlu0 %v2489
        %v2491 = vpop.xlane.xlu0 %2490
        %v2492 = vsub.f32 %v2488, %v2491
        %v2493 = vmul.f32 %v2492, 1.442695
        %v2494 = vpow.pop %v2493
        %v2495 = vsel %vm1166, %v2494, 0.0
        %2496 = vadd.xlane.f32.xlu0 %v2495
        %v2497 = vpop.xlane.xlu0 %2496
        %v2498 = vrcp.pop %v2497
        %v2499 = vmul.f32 %v2494, %v2498
        %2500 = vrot.lane.b32.xlu0 %v2240, 56
        %v2501 = vpop.permute.xlu0 %2500
        %v2504 = vsel %vm1166, %v2499, 0
        %2506 = vmatprep.subr.mxu0 0.0
        %2507 = vmatpush1.msra.mxu0 0.0
        %2508 = vmatprep.subr.mxu0 0.0
        %2509 = vmatpush1.msra.mxu0 0.0
        %2510 = vmatprep.subr.mxu0 0.0
        %2511 = vmatpush1.msra.mxu0 0.0
        %2512 = vmatprep.subr.mxu0 0.0
        %2513 = vmatpush1.msra.mxu0 0.0
        %2514 = vmatprep.subr.mxu0 0.0
        %2515 = vmatpush1.msra.mxu0 0.0
        %2516 = vmatprep.subr.mxu0 0.0
        %2517 = vmatpush1.msra.mxu0 0.0
        %2518 = vmatprep.subr.mxu0 0.0
        %2519 = vmatpush1.msra.mxu0 0.0
        %2520 = vmatprep.subr.mxu0 0.0
        %2521 = vmatpush1.msra.mxu0 0.0
        %2522 = vmatprep.subr.mxu0 0.0
        %2523 = vmatpush1.msra.mxu0 0.0
        %2524 = vmatprep.subr.mxu0 0.0
        %2525 = vmatpush1.msra.mxu0 0.0
        %2526 = vmatprep.subr.mxu0 0.0
        %2527 = vmatpush1.msra.mxu0 0.0
        %2528 = vmatprep.subr.mxu0 0.0
        %2529 = vmatpush1.msra.mxu0 0.0
        %2530 = vmatprep.subr.mxu0 0.0
        %2531 = vmatpush1.msra.mxu0 0.0
        %2532 = vmatprep.subr.mxu0 0.0
        %2533 = vmatpush1.msra.mxu0 0.0
        %2534 = vmatprep.subr.mxu0 0.0
        %2535 = vmatpush1.msra.mxu0 0.0
        %2536 = vmatprep.subr.mxu0 0.0
        %2537 = vmatpush1.msra.mxu0 %v2501
        %2538 = vmatprep.subr.mxu0 0.0
        %2539 = vmatpush2.msra.mxu0 0.0
        %2540 = vmatprep.subr.mxu0 0.0
        %2541 = vmatpush2.msra.mxu0 0.0
        %2542 = vmatprep.subr.mxu0 0.0
        %2543 = vmatpush2.msra.mxu0 0.0
        %2544 = vmatprep.subr.mxu0 0.0
        %2545 = vmatpush2.msra.mxu0 0.0
        %2546 = vmatprep.subr.mxu0 0.0
        %2547 = vmatpush2.msra.mxu0 0.0
        %2548 = vmatprep.subr.mxu0 0.0
        %2549 = vmatpush2.msra.mxu0 0.0
        %2550 = vmatprep.subr.mxu0 0.0
        %2551 = vmatpush2.msra.mxu0 0.0
        %2552 = vmatprep.subr.mxu0 0.0
        %2553 = vmatpush2.msra.mxu0 0.0
        %2554 = vmatprep.subr.mxu0 0.0
        %2555 = vmatpush2.msra.mxu0 0.0
        %2556 = vmatprep.subr.mxu0 0.0
        %2557 = vmatpush2.msra.mxu0 0.0
        %2558 = vmatprep.subr.mxu0 0.0
        %2559 = vmatpush2.msra.mxu0 0.0
        %2560 = vmatprep.subr.mxu0 0.0
        %2561 = vmatpush2.msra.mxu0 0.0
        %2562 = vmatprep.subr.mxu0 0.0
        %2563 = vmatpush2.msra.mxu0 0.0
        %2564 = vmatprep.subr.mxu0 0.0
        %2565 = vmatpush2.msra.mxu0 0.0
        %2566 = vmatprep.subr.mxu0 0.0
        %2567 = vmatpush2.msra.mxu0 0.0
        %2568 = vmatprep.subr.mxu0 0.0
        %2569 = vmatpush2.msra.mxu0 0.0
        %2570 = vmatprep.mubr.f32.mxu0 0.0
        %2571 = vmatmul.mubr.f32.gmra.mxu0 %v2504
        %v2572 = vpop.f32.mrf.mxu0
        %v2573 = vadd.f32 0.0, %v2572
        %v2574 = vpop.f32.mrf.mxu0
        %2575 = vdwg.mxu0
        %2576 = vrot.lane.b32.xlu0 %v2240, 112
        %v2577 = vpop.permute.xlu0 %2576
        %2578 = vrot.lane.b32.xlu0 %v2240, 80
        %v2579 = vpop.permute.xlu0 %2578
        %v2580 = vsel %vm1166, %v2577, 0
        %v2582 = vsel %vm1166, %v2579, 0
        %2584 = vmatprep.subr.mxu0 0.0
        %2585 = vmatpush1.xpose.msra.mxu0 0.0
        %2586 = vmatprep.subr.mxu0 0.0
        %2587 = vmatpush1.xpose.msra.mxu0 0.0
        %2588 = vmatprep.subr.mxu0 0.0
        %2589 = vmatpush1.xpose.msra.mxu0 0.0
        %2590 = vmatprep.subr.mxu0 0.0
        %2591 = vmatpush1.xpose.msra.mxu0 0.0
        %2592 = vmatprep.subr.mxu0 0.0
        %2593 = vmatpush1.xpose.msra.mxu0 0.0
        %2594 = vmatprep.subr.mxu0 0.0
        %2595 = vmatpush1.xpose.msra.mxu0 0.0
        %2596 = vmatprep.subr.mxu0 0.0
        %2597 = vmatpush1.xpose.msra.mxu0 0.0
        %2598 = vmatprep.subr.mxu0 0.0
        %2599 = vmatpush1.xpose.msra.mxu0 0.0
        %2600 = vmatprep.subr.mxu0 0.0
        %2601 = vmatpush1.xpose.msra.mxu0 0.0
        %2602 = vmatprep.subr.mxu0 0.0
        %2603 = vmatpush1.xpose.msra.mxu0 0.0
        %2604 = vmatprep.subr.mxu0 0.0
        %2605 = vmatpush1.xpose.msra.mxu0 0.0
        %2606 = vmatprep.subr.mxu0 0.0
        %2607 = vmatpush1.xpose.msra.mxu0 0.0
        %2608 = vmatprep.subr.mxu0 0.0
        %2609 = vmatpush1.xpose.msra.mxu0 0.0
        %2610 = vmatprep.subr.mxu0 0.0
        %2611 = vmatpush1.xpose.msra.mxu0 0.0
        %2612 = vmatprep.subr.mxu0 0.0
        %2613 = vmatpush1.xpose.msra.mxu0 0.0
        %2614 = vmatprep.subr.mxu0 0.0
        %2615 = vmatpush1.xpose.msra.mxu0 %v2582
        %2616 = vmatprep.subr.mxu0 0.0
        %2617 = vmatpush2.xpose.msra.mxu0 0.0
        %2618 = vmatprep.subr.mxu0 0.0
        %2619 = vmatpush2.xpose.msra.mxu0 0.0
        %2620 = vmatprep.subr.mxu0 0.0
        %2621 = vmatpush2.xpose.msra.mxu0 0.0
        %2622 = vmatprep.subr.mxu0 0.0
        %2623 = vmatpush2.xpose.msra.mxu0 0.0
        %2624 = vmatprep.subr.mxu0 0.0
        %2625 = vmatpush2.xpose.msra.mxu0 0.0
        %2626 = vmatprep.subr.mxu0 0.0
        %2627 = vmatpush2.xpose.msra.mxu0 0.0
        %2628 = vmatprep.subr.mxu0 0.0
        %2629 = vmatpush2.xpose.msra.mxu0 0.0
        %2630 = vmatprep.subr.mxu0 0.0
        %2631 = vmatpush2.xpose.msra.mxu0 0.0
        %2632 = vmatprep.subr.mxu0 0.0
        %2633 = vmatpush2.xpose.msra.mxu0 0.0
        %2634 = vmatprep.subr.mxu0 0.0
        %2635 = vmatpush2.xpose.msra.mxu0 0.0
        %2636 = vmatprep.subr.mxu0 0.0
        %2637 = vmatpush2.xpose.msra.mxu0 0.0
        %2638 = vmatprep.subr.mxu0 0.0
        %2639 = vmatpush2.xpose.msra.mxu0 0.0
        %2640 = vmatprep.subr.mxu0 0.0
        %2641 = vmatpush2.xpose.msra.mxu0 0.0
        %2642 = vmatprep.subr.mxu0 0.0
        %2643 = vmatpush2.xpose.msra.mxu0 0.0
        %2644 = vmatprep.subr.mxu0 0.0
        %2645 = vmatpush2.xpose.msra.mxu0 0.0
        %2646 = vmatprep.subr.mxu0 0.0
        %2647 = vmatpush2.xpose.msra.mxu0 0.0
        %2648 = vmatprep.mubr.f32.mxu0 0.0
        %2649 = vmatmul.mubr.f32.gmra.mxu0 %v2580
        %v2650 = vpop.f32.mrf.mxu0
        %v2651 = vadd.f32 0.0, %v2650
        %v2652 = vpop.f32.mrf.mxu0
        %2653 = vdwg.mxu0
        %v2654 = vmul.f32 %v2651, 0.35355338
        %v2655 = vadd.f32 %v2654, %v1075
        %v2656 = vsel %vm1166, %v2655, -inf
        %2657 = vmax.xlane.f32.xlu0 %v2656
        %v2658 = vpop.xlane.xlu0 %2657
        %v2659 = vsub.f32 %v2655, %v2658
        %v2660 = vmul.f32 %v2659, 1.442695
        %v2661 = vpow.pop %v2660
        %v2662 = vsel %vm1166, %v2661, 0.0
        %2663 = vadd.xlane.f32.xlu0 %v2662
        %v2664 = vpop.xlane.xlu0 %2663
        %v2665 = vrcp.pop %v2664
        %v2666 = vmul.f32 %v2661, %v2665
        %2667 = vrot.lane.b32.xlu0 %v2240, 48
        %v2668 = vpop.permute.xlu0 %2667
        %v2671 = vsel %vm1166, %v2666, 0
        %2673 = vmatprep.subr.mxu0 0.0
        %2674 = vmatpush1.msra.mxu0 0.0
        %2675 = vmatprep.subr.mxu0 0.0
        %2676 = vmatpush1.msra.mxu0 0.0
        %2677 = vmatprep.subr.mxu0 0.0
        %2678 = vmatpush1.msra.mxu0 0.0
        %2679 = vmatprep.subr.mxu0 0.0
        %2680 = vmatpush1.msra.mxu0 0.0
        %2681 = vmatprep.subr.mxu0 0.0
        %2682 = vmatpush1.msra.mxu0 0.0
        %2683 = vmatprep.subr.mxu0 0.0
        %2684 = vmatpush1.msra.mxu0 0.0
        %2685 = vmatprep.subr.mxu0 0.0
        %2686 = vmatpush1.msra.mxu0 0.0
        %2687 = vmatprep.subr.mxu0 0.0
        %2688 = vmatpush1.msra.mxu0 0.0
        %2689 = vmatprep.subr.mxu0 0.0
        %2690 = vmatpush1.msra.mxu0 0.0
        %2691 = vmatprep.subr.mxu0 0.0
        %2692 = vmatpush1.msra.mxu0 0.0
        %2693 = vmatprep.subr.mxu0 0.0
        %2694 = vmatpush1.msra.mxu0 0.0
        %2695 = vmatprep.subr.mxu0 0.0
        %2696 = vmatpush1.msra.mxu0 0.0
        %2697 = vmatprep.subr.mxu0 0.0
        %2698 = vmatpush1.msra.mxu0 0.0
        %2699 = vmatprep.subr.mxu0 0.0
        %2700 = vmatpush1.msra.mxu0 0.0
        %2701 = vmatprep.subr.mxu0 0.0
        %2702 = vmatpush1.msra.mxu0 0.0
        %2703 = vmatprep.subr.mxu0 0.0
        %2704 = vmatpush1.msra.mxu0 %v2668
        %2705 = vmatprep.subr.mxu0 0.0
        %2706 = vmatpush2.msra.mxu0 0.0
        %2707 = vmatprep.subr.mxu0 0.0
        %2708 = vmatpush2.msra.mxu0 0.0
        %2709 = vmatprep.subr.mxu0 0.0
        %2710 = vmatpush2.msra.mxu0 0.0
        %2711 = vmatprep.subr.mxu0 0.0
        %2712 = vmatpush2.msra.mxu0 0.0
        %2713 = vmatprep.subr.mxu0 0.0
        %2714 = vmatpush2.msra.mxu0 0.0
        %2715 = vmatprep.subr.mxu0 0.0
        %2716 = vmatpush2.msra.mxu0 0.0
        %2717 = vmatprep.subr.mxu0 0.0
        %2718 = vmatpush2.msra.mxu0 0.0
        %2719 = vmatprep.subr.mxu0 0.0
        %2720 = vmatpush2.msra.mxu0 0.0
        %2721 = vmatprep.subr.mxu0 0.0
        %2722 = vmatpush2.msra.mxu0 0.0
        %2723 = vmatprep.subr.mxu0 0.0
        %2724 = vmatpush2.msra.mxu0 0.0
        %2725 = vmatprep.subr.mxu0 0.0
        %2726 = vmatpush2.msra.mxu0 0.0
        %2727 = vmatprep.subr.mxu0 0.0
        %2728 = vmatpush2.msra.mxu0 0.0
        %2729 = vmatprep.subr.mxu0 0.0
        %2730 = vmatpush2.msra.mxu0 0.0
        %2731 = vmatprep.subr.mxu0 0.0
        %2732 = vmatpush2.msra.mxu0 0.0
        %2733 = vmatprep.subr.mxu0 0.0
        %2734 = vmatpush2.msra.mxu0 0.0
        %2735 = vmatprep.subr.mxu0 0.0
        %2736 = vmatpush2.msra.mxu0 0.0
        %2737 = vmatprep.mubr.f32.mxu0 0.0
        %2738 = vmatmul.mubr.f32.gmra.mxu0 %v2671
        %v2739 = vpop.f32.mrf.mxu0
        %v2740 = vadd.f32 0.0, %v2739
        %v2741 = vpop.f32.mrf.mxu0
        %2742 = vdwg.mxu0
        %2743 = vrot.lane.b32.xlu0 %v2240, 104
        %v2744 = vpop.permute.xlu0 %2743
        %2745 = vrot.lane.b32.xlu0 %v2240, 72
        %v2746 = vpop.permute.xlu0 %2745
        %v2747 = vsel %vm1166, %v2744, 0
        %v2749 = vsel %vm1166, %v2746, 0
        %2751 = vmatprep.subr.mxu0 0.0
        %2752 = vmatpush1.xpose.msra.mxu0 0.0
        %2753 = vmatprep.subr.mxu0 0.0
        %2754 = vmatpush1.xpose.msra.mxu0 0.0
        %2755 = vmatprep.subr.mxu0 0.0
        %2756 = vmatpush1.xpose.msra.mxu0 0.0
        %2757 = vmatprep.subr.mxu0 0.0
        %2758 = vmatpush1.xpose.msra.mxu0 0.0
        %2759 = vmatprep.subr.mxu0 0.0
        %2760 = vmatpush1.xpose.msra.mxu0 0.0
        %2761 = vmatprep.subr.mxu0 0.0
        %2762 = vmatpush1.xpose.msra.mxu0 0.0
        %2763 = vmatprep.subr.mxu0 0.0
        %2764 = vmatpush1.xpose.msra.mxu0 0.0
        %2765 = vmatprep.subr.mxu0 0.0
        %2766 = vmatpush1.xpose.msra.mxu0 0.0
        %2767 = vmatprep.subr.mxu0 0.0
        %2768 = vmatpush1.xpose.msra.mxu0 0.0
        %2769 = vmatprep.subr.mxu0 0.0
        %2770 = vmatpush1.xpose.msra.mxu0 0.0
        %2771 = vmatprep.subr.mxu0 0.0
        %2772 = vmatpush1.xpose.msra.mxu0 0.0
        %2773 = vmatprep.subr.mxu0 0.0
        %2774 = vmatpush1.xpose.msra.mxu0 0.0
        %2775 = vmatprep.subr.mxu0 0.0
        %2776 = vmatpush1.xpose.msra.mxu0 0.0
        %2777 = vmatprep.subr.mxu0 0.0
        %2778 = vmatpush1.xpose.msra.mxu0 0.0
        %2779 = vmatprep.subr.mxu0 0.0
        %2780 = vmatpush1.xpose.msra.mxu0 0.0
        %2781 = vmatprep.subr.mxu0 0.0
        %2782 = vmatpush1.xpose.msra.mxu0 %v2749
        %2783 = vmatprep.subr.mxu0 0.0
        %2784 = vmatpush2.xpose.msra.mxu0 0.0
        %2785 = vmatprep.subr.mxu0 0.0
        %2786 = vmatpush2.xpose.msra.mxu0 0.0
        %2787 = vmatprep.subr.mxu0 0.0
        %2788 = vmatpush2.xpose.msra.mxu0 0.0
        %2789 = vmatprep.subr.mxu0 0.0
        %2790 = vmatpush2.xpose.msra.mxu0 0.0
        %2791 = vmatprep.subr.mxu0 0.0
        %2792 = vmatpush2.xpose.msra.mxu0 0.0
        %2793 = vmatprep.subr.mxu0 0.0
        %2794 = vmatpush2.xpose.msra.mxu0 0.0
        %2795 = vmatprep.subr.mxu0 0.0
        %2796 = vmatpush2.xpose.msra.mxu0 0.0
        %2797 = vmatprep.subr.mxu0 0.0
        %2798 = vmatpush2.xpose.msra.mxu0 0.0
        %2799 = vmatprep.subr.mxu0 0.0
        %2800 = vmatpush2.xpose.msra.mxu0 0.0
        %2801 = vmatprep.subr.mxu0 0.0
        %2802 = vmatpush2.xpose.msra.mxu0 0.0
        %2803 = vmatprep.subr.mxu0 0.0
        %2804 = vmatpush2.xpose.msra.mxu0 0.0
        %2805 = vmatprep.subr.mxu0 0.0
        %2806 = vmatpush2.xpose.msra.mxu0 0.0
        %2807 = vmatprep.subr.mxu0 0.0
        %2808 = vmatpush2.xpose.msra.mxu0 0.0
        %2809 = vmatprep.subr.mxu0 0.0
        %2810 = vmatpush2.xpose.msra.mxu0 0.0
        %2811 = vmatprep.subr.mxu0 0.0
        %2812 = vmatpush2.xpose.msra.mxu0 0.0
        %2813 = vmatprep.subr.mxu0 0.0
        %2814 = vmatpush2.xpose.msra.mxu0 0.0
        %2815 = vmatprep.mubr.f32.mxu0 0.0
        %2816 = vmatmul.mubr.f32.gmra.mxu0 %v2747
        %v2817 = vpop.f32.mrf.mxu0
        %v2818 = vadd.f32 0.0, %v2817
        %v2819 = vpop.f32.mrf.mxu0
        %2820 = vdwg.mxu0
        %v2821 = vmul.f32 %v2818, 0.35355338
        %v2822 = vadd.f32 %v2821, %v1075
        %v2823 = vsel %vm1166, %v2822, -inf
        %2824 = vmax.xlane.f32.xlu0 %v2823
        %v2825 = vpop.xlane.xlu0 %2824
        %v2826 = vsub.f32 %v2822, %v2825
        %v2827 = vmul.f32 %v2826, 1.442695
        %v2828 = vpow.pop %v2827
        %v2829 = vsel %vm1166, %v2828, 0.0
        %2830 = vadd.xlane.f32.xlu0 %v2829
        %v2831 = vpop.xlane.xlu0 %2830
        %v2832 = vrcp.pop %v2831
        %v2833 = vmul.f32 %v2828, %v2832
        %2834 = vrot.lane.b32.xlu0 %v2240, 40
        %v2835 = vpop.permute.xlu0 %2834
        %v2838 = vsel %vm1166, %v2833, 0
        %2840 = vmatprep.subr.mxu0 0.0
        %2841 = vmatpush1.msra.mxu0 0.0
        %2842 = vmatprep.subr.mxu0 0.0
        %2843 = vmatpush1.msra.mxu0 0.0
        %2844 = vmatprep.subr.mxu0 0.0
        %2845 = vmatpush1.msra.mxu0 0.0
        %2846 = vmatprep.subr.mxu0 0.0
        %2847 = vmatpush1.msra.mxu0 0.0
        %2848 = vmatprep.subr.mxu0 0.0
        %2849 = vmatpush1.msra.mxu0 0.0
        %2850 = vmatprep.subr.mxu0 0.0
        %2851 = vmatpush1.msra.mxu0 0.0
        %2852 = vmatprep.subr.mxu0 0.0
        %2853 = vmatpush1.msra.mxu0 0.0
        %2854 = vmatprep.subr.mxu0 0.0
        %2855 = vmatpush1.msra.mxu0 0.0
        %2856 = vmatprep.subr.mxu0 0.0
        %2857 = vmatpush1.msra.mxu0 0.0
        %2858 = vmatprep.subr.mxu0 0.0
        %2859 = vmatpush1.msra.mxu0 0.0
        %2860 = vmatprep.subr.mxu0 0.0
        %2861 = vmatpush1.msra.mxu0 0.0
        %2862 = vmatprep.subr.mxu0 0.0
        %2863 = vmatpush1.msra.mxu0 0.0
        %2864 = vmatprep.subr.mxu0 0.0
        %2865 = vmatpush1.msra.mxu0 0.0
        %2866 = vmatprep.subr.mxu0 0.0
        %2867 = vmatpush1.msra.mxu0 0.0
        %2868 = vmatprep.subr.mxu0 0.0
        %2869 = vmatpush1.msra.mxu0 0.0
        %2870 = vmatprep.subr.mxu0 0.0
        %2871 = vmatpush1.msra.mxu0 %v2835
        %2872 = vmatprep.subr.mxu0 0.0
        %2873 = vmatpush2.msra.mxu0 0.0
        %2874 = vmatprep.subr.mxu0 0.0
        %2875 = vmatpush2.msra.mxu0 0.0
        %2876 = vmatprep.subr.mxu0 0.0
        %2877 = vmatpush2.msra.mxu0 0.0
        %2878 = vmatprep.subr.mxu0 0.0
        %2879 = vmatpush2.msra.mxu0 0.0
        %2880 = vmatprep.subr.mxu0 0.0
        %2881 = vmatpush2.msra.mxu0 0.0
        %2882 = vmatprep.subr.mxu0 0.0
        %2883 = vmatpush2.msra.mxu0 0.0
        %2884 = vmatprep.subr.mxu0 0.0
        %2885 = vmatpush2.msra.mxu0 0.0
        %2886 = vmatprep.subr.mxu0 0.0
        %2887 = vmatpush2.msra.mxu0 0.0
        %2888 = vmatprep.subr.mxu0 0.0
        %2889 = vmatpush2.msra.mxu0 0.0
        %2890 = vmatprep.subr.mxu0 0.0
        %2891 = vmatpush2.msra.mxu0 0.0
        %2892 = vmatprep.subr.mxu0 0.0
        %2893 = vmatpush2.msra.mxu0 0.0
        %2894 = vmatprep.subr.mxu0 0.0
        %2895 = vmatpush2.msra.mxu0 0.0
        %2896 = vmatprep.subr.mxu0 0.0
        %2897 = vmatpush2.msra.mxu0 0.0
        %2898 = vmatprep.subr.mxu0 0.0
        %2899 = vmatpush2.msra.mxu0 0.0
        %2900 = vmatprep.subr.mxu0 0.0
        %2901 = vmatpush2.msra.mxu0 0.0
        %2902 = vmatprep.subr.mxu0 0.0
        %2903 = vmatpush2.msra.mxu0 0.0
        %2904 = vmatprep.mubr.f32.mxu0 0.0
        %2905 = vmatmul.mubr.f32.gmra.mxu0 %v2838
        %v2906 = vpop.f32.mrf.mxu0
        %v2907 = vadd.f32 0.0, %v2906
        %v2908 = vpop.f32.mrf.mxu0
        %2909 = vdwg.mxu0
        %2911 = vrot.lane.b32.xlu0 %v2573, 8
        %v2912 = vpop.permute.xlu0 %2911
        %2915 = vrot.lane.b32.xlu0 %v2740, 16
        %v2916 = vpop.permute.xlu0 %2915
        %2919 = vrot.lane.b32.xlu0 %v2907, 24
        %v2920 = vpop.permute.xlu0 %2919
        %v2922 = vsel %vm1166, %v2406, %v2912
        %v2923 = vsel %vm1844, %v2922, %v2916
        %v2924 = vsel %vm1846, %v2923, %v2920
        %s2925 = scalar_lea.vmem %s4, 32
        %v2926 = vld [vmem:[%s2925] sm:$0xff]
        %v2927 = vld [vmem:[%s2925 + $0x8] sm:$0xff]
        %v2928 = vld [vmem:[%s2925 + $0x10] sm:$0xff]
        %v2929 = vld [vmem:[%s2925 + $0x18] sm:$0xff]
        %s2930 = scalar_lea.vmem [#allocation7], 1
        %v2931 = vld [vmem:[%s2930] sm:$0x1]
        %v2933 = vlaneseq
        %v2934 = vshrl.u32 %v2933, 7
        %v2935 = vsub.s32 0, %v2934
        %v2936 = vrot.slane %v2931, %v2935
        %v2939 = vsel %vm1089, %v2924, 0
        %2941 = vmatprep.subr.mxu0 0.0
        %2942 = vmatpush1.msra.mxu0 0.0
        %2943 = vmatprep.subr.mxu0 0.0
        %2944 = vmatpush1.msra.mxu0 0.0
        %2945 = vmatprep.subr.mxu0 0.0
        %2946 = vmatpush1.msra.mxu0 0.0
        %2947 = vmatprep.subr.mxu0 0.0
        %2948 = vmatpush1.msra.mxu0 0.0
        %2949 = vmatprep.subr.mxu0 0.0
        %2950 = vmatpush1.msra.mxu0 0.0
        %2951 = vmatprep.subr.mxu0 0.0
        %2952 = vmatpush1.msra.mxu0 0.0
        %2953 = vmatprep.subr.mxu0 0.0
        %2954 = vmatpush1.msra.mxu0 0.0
        %2955 = vmatprep.subr.mxu0 0.0
        %2956 = vmatpush1.msra.mxu0 0.0
        %2957 = vmatprep.subr.mxu0 0.0
        %2958 = vmatpush1.msra.mxu0 0.0
        %2959 = vmatprep.subr.mxu0 0.0
        %2960 = vmatpush1.msra.mxu0 0.0
        %2961 = vmatprep.subr.mxu0 0.0
        %2962 = vmatpush1.msra.mxu0 0.0
        %2963 = vmatprep.subr.mxu0 0.0
        %2964 = vmatpush1.msra.mxu0 0.0
        %2965 = vmatprep.subr.mxu0 0.0
        %2966 = vmatpush1.msra.mxu0 %v2929
        %2967 = vmatprep.subr.mxu0 0.0
        %2968 = vmatpush1.msra.mxu0 %v2928
        %2969 = vmatprep.subr.mxu0 0.0
        %2970 = vmatpush1.msra.mxu0 %v2927
        %2971 = vmatprep.subr.mxu0 0.0
        %2972 = vmatpush1.msra.mxu0 %v2926
        %2973 = vmatprep.subr.mxu0 0.0
        %2974 = vmatpush2.msra.mxu0 0.0
        %2975 = vmatprep.subr.mxu0 0.0
        %2976 = vmatpush2.msra.mxu0 0.0
        %2977 = vmatprep.subr.mxu0 0.0
        %2978 = vmatpush2.msra.mxu0 0.0
        %2979 = vmatprep.subr.mxu0 0.0
        %2980 = vmatpush2.msra.mxu0 0.0
        %2981 = vmatprep.subr.mxu0 0.0
        %2982 = vmatpush2.msra.mxu0 0.0
        %2983 = vmatprep.subr.mxu0 0.0
        %2984 = vmatpush2.msra.mxu0 0.0
        %2985 = vmatprep.subr.mxu0 0.0
        %2986 = vmatpush2.msra.mxu0 0.0
        %2987 = vmatprep.subr.mxu0 0.0
        %2988 = vmatpush2.msra.mxu0 0.0
        %2989 = vmatprep.subr.mxu0 0.0
        %2990 = vmatpush2.msra.mxu0 0.0
        %2991 = vmatprep.subr.mxu0 0.0
        %2992 = vmatpush2.msra.mxu0 0.0
        %2993 = vmatprep.subr.mxu0 0.0
        %2994 = vmatpush2.msra.mxu0 0.0
        %2995 = vmatprep.subr.mxu0 0.0
        %2996 = vmatpush2.msra.mxu0 0.0
        %2997 = vmatprep.subr.mxu0 0.0
        %2998 = vmatpush2.msra.mxu0 0.0
        %2999 = vmatprep.subr.mxu0 0.0
        %3000 = vmatpush2.msra.mxu0 0.0
        %3001 = vmatprep.subr.mxu0 0.0
        %3002 = vmatpush2.msra.mxu0 0.0
        %3003 = vmatprep.subr.mxu0 0.0
        %3004 = vmatpush2.msra.mxu0 0.0
        %3005 = vmatprep.mubr.f32.mxu0 0.0
        %3006 = vmatmul.mubr.f32.gmra.mxu0 %v2939
        %v3007 = vpop.f32.mrf.mxu0
        %v3008 = vadd.f32 %v2936, %v3007
        %v3009 = vpop.f32.mrf.mxu0
        %3010 = vdwg.mxu0
        %v3011 = vadd.f32 %v2154, %v3008
        %v3012 = vsel %vm1089, %v3011, 0.0
        %3013 = vadd.xlane.f32.xlu0 %v3012
        %v3014 = vpop.xlane.xlu0 %3013
        %v3015 = vmul.f32 %v3014, %v1936
        %v3016 = vsub.f32 %v3011, %v3015
        %v3017 = vmul.f32 %v3016, %v3016
        %v3018 = vsel %vm1089, %v3017, 0.0
        %3019 = vadd.xlane.f32.xlu0 %v3018
        %v3020 = vpop.xlane.xlu0 %3019
        %v3021 = vmul.f32 %v3020, %v1936
        %v3022 = vadd.f32 %v3021, 1e-05
        %v3023 = vrsqrt.pop %v3022
        %v3024 = vmul.f32 %v3016, %v3023
        %v3025 = vlaneseq
        %v3026 = vshrl.u32 %v3025, 7
        %v3027 = vsub.s32 0, %v3026
        %v3028 = vrot.slane %v2156, %v3027
        %v3029 = vmul.f32 %v3024, %v3028
        %v3030 = vlaneseq
        %v3031 = vshrl.u32 %v3030, 7
        %v3032 = vsub.s32 1, %v3031
        %v3033 = vrot.slane %v2156, %v3032
        %v3034 = vadd.f32 %v3029, %v3033
        %s3035 = scalar_lea.vmem %s6, 32
        %v3036 = vld [vmem:[%s3035] sm:$0xff]
        %v3037 = vld [vmem:[%s3035 + $0x8] sm:$0xff]
        %v3038 = vld [vmem:[%s3035 + $0x10] sm:$0xff]
        %v3039 = vld [vmem:[%s3035 + $0x18] sm:$0xff]
        %s3040 = scalar_lea.vmem [#allocation8], 1
        %v3041 = vld [vmem:[%s3040] sm:$0x1]
        %v3043 = vlaneseq
        %v3044 = vshrl.u32 %v3043, 7
        %v3045 = vsub.s32 0, %v3044
        %v3046 = vrot.slane %v3041, %v3045
        %v3049 = vsel %vm1089, %v3034, 0
        %3051 = vmatprep.subr.mxu0 0.0
        %3052 = vmatpush1.msra.mxu0 0.0
        %3053 = vmatprep.subr.mxu0 0.0
        %3054 = vmatpush1.msra.mxu0 0.0
        %3055 = vmatprep.subr.mxu0 0.0
        %3056 = vmatpush1.msra.mxu0 0.0
        %3057 = vmatprep.subr.mxu0 0.0
        %3058 = vmatpush1.msra.mxu0 0.0
        %3059 = vmatprep.subr.mxu0 0.0
        %3060 = vmatpush1.msra.mxu0 0.0
        %3061 = vmatprep.subr.mxu0 0.0
        %3062 = vmatpush1.msra.mxu0 0.0
        %3063 = vmatprep.subr.mxu0 0.0
        %3064 = vmatpush1.msra.mxu0 0.0
        %3065 = vmatprep.subr.mxu0 0.0
        %3066 = vmatpush1.msra.mxu0 0.0
        %3067 = vmatprep.subr.mxu0 0.0
        %3068 = vmatpush1.msra.mxu0 0.0
        %3069 = vmatprep.subr.mxu0 0.0
        %3070 = vmatpush1.msra.mxu0 0.0
        %3071 = vmatprep.subr.mxu0 0.0
        %3072 = vmatpush1.msra.mxu0 0.0
        %3073 = vmatprep.subr.mxu0 0.0
        %3074 = vmatpush1.msra.mxu0 0.0
        %3075 = vmatprep.subr.mxu0 0.0
        %3076 = vmatpush1.msra.mxu0 %v3039
        %3077 = vmatprep.subr.mxu0 0.0
        %3078 = vmatpush1.msra.mxu0 %v3038
        %3079 = vmatprep.subr.mxu0 0.0
        %3080 = vmatpush1.msra.mxu0 %v3037
        %3081 = vmatprep.subr.mxu0 0.0
        %3082 = vmatpush1.msra.mxu0 %v3036
        %3083 = vmatprep.subr.mxu0 0.0
        %3084 = vmatpush2.msra.mxu0 0.0
        %3085 = vmatprep.subr.mxu0 0.0
        %3086 = vmatpush2.msra.mxu0 0.0
        %3087 = vmatprep.subr.mxu0 0.0
        %3088 = vmatpush2.msra.mxu0 0.0
        %3089 = vmatprep.subr.mxu0 0.0
        %3090 = vmatpush2.msra.mxu0 0.0
        %3091 = vmatprep.subr.mxu0 0.0
        %3092 = vmatpush2.msra.mxu0 0.0
        %3093 = vmatprep.subr.mxu0 0.0
        %3094 = vmatpush2.msra.mxu0 0.0
        %3095 = vmatprep.subr.mxu0 0.0
        %3096 = vmatpush2.msra.mxu0 0.0
        %3097 = vmatprep.subr.mxu0 0.0
        %3098 = vmatpush2.msra.mxu0 0.0
        %3099 = vmatprep.subr.mxu0 0.0
        %3100 = vmatpush2.msra.mxu0 0.0
        %3101 = vmatprep.subr.mxu0 0.0
        %3102 = vmatpush2.msra.mxu0 0.0
        %3103 = vmatprep.subr.mxu0 0.0
        %3104 = vmatpush2.msra.mxu0 0.0
        %3105 = vmatprep.subr.mxu0 0.0
        %3106 = vmatpush2.msra.mxu0 0.0
        %3107 = vmatprep.subr.mxu0 0.0
        %3108 = vmatpush2.msra.mxu0 0.0
        %3109 = vmatprep.subr.mxu0 0.0
        %3110 = vmatpush2.msra.mxu0 0.0
        %3111 = vmatprep.subr.mxu0 0.0
        %3112 = vmatpush2.msra.mxu0 0.0
        %3113 = vmatprep.subr.mxu0 0.0
        %3114 = vmatpush2.msra.mxu0 0.0
        %3115 = vmatprep.mubr.f32.mxu0 0.0
        %3116 = vmatmul.mubr.f32.gmra.mxu0 %v3049
        %v3117 = vpop.f32.mrf.mxu0
        %v3118 = vadd.f32 %v3046, %v3117
        %v3119 = vpop.f32.mrf.mxu0
        %3120 = vdwg.mxu0
        %v3121 = vmax.f32 %v3118, 0.0
        %s3122 = scalar_lea.vmem %s8, 64
        %v3123 = vld [vmem:[%s3122] sm:$0xff]
        %v3124 = vld [vmem:[%s3122 + $0x8] sm:$0xff]
        %v3125 = vld [vmem:[%s3122 + $0x10] sm:$0xff]
        %v3126 = vld [vmem:[%s3122 + $0x18] sm:$0xff]
        %v3127 = vld [vmem:[%s3122 + $0x20] sm:$0xff]
        %v3128 = vld [vmem:[%s3122 + $0x28] sm:$0xff]
        %v3129 = vld [vmem:[%s3122 + $0x30] sm:$0xff]
        %v3130 = vld [vmem:[%s3122 + $0x38] sm:$0xff]
        %s3131 = scalar_lea.vmem [#allocation10], 1
        %v3132 = vld [vmem:[%s3131] sm:$0x1]
        %v3134 = vlaneseq
        %v3135 = vshrl.u32 %v3134, 7
        %v3136 = vsub.s32 0, %v3135
        %v3137 = vrot.slane %v3132, %v3136
        %v3140 = vsel %vm2057, %v3121, 0
        %3142 = vmatprep.subr.mxu0 0.0
        %3143 = vmatpush1.msra.mxu0 0.0
        %3144 = vmatprep.subr.mxu0 0.0
        %3145 = vmatpush1.msra.mxu0 0.0
        %3146 = vmatprep.subr.mxu0 0.0
        %3147 = vmatpush1.msra.mxu0 0.0
        %3148 = vmatprep.subr.mxu0 0.0
        %3149 = vmatpush1.msra.mxu0 0.0
        %3150 = vmatprep.subr.mxu0 0.0
        %3151 = vmatpush1.msra.mxu0 0.0
        %3152 = vmatprep.subr.mxu0 0.0
        %3153 = vmatpush1.msra.mxu0 0.0
        %3154 = vmatprep.subr.mxu0 0.0
        %3155 = vmatpush1.msra.mxu0 0.0
        %3156 = vmatprep.subr.mxu0 0.0
        %3157 = vmatpush1.msra.mxu0 0.0
        %3158 = vmatprep.subr.mxu0 0.0
        %3159 = vmatpush1.msra.mxu0 %v3130
        %3160 = vmatprep.subr.mxu0 0.0
        %3161 = vmatpush1.msra.mxu0 %v3129
        %3162 = vmatprep.subr.mxu0 0.0
        %3163 = vmatpush1.msra.mxu0 %v3128
        %3164 = vmatprep.subr.mxu0 0.0
        %3165 = vmatpush1.msra.mxu0 %v3127
        %3166 = vmatprep.subr.mxu0 0.0
        %3167 = vmatpush1.msra.mxu0 %v3126
        %3168 = vmatprep.subr.mxu0 0.0
        %3169 = vmatpush1.msra.mxu0 %v3125
        %3170 = vmatprep.subr.mxu0 0.0
        %3171 = vmatpush1.msra.mxu0 %v3124
        %3172 = vmatprep.subr.mxu0 0.0
        %3173 = vmatpush1.msra.mxu0 %v3123
        %3174 = vmatprep.subr.mxu0 0.0
        %3175 = vmatpush2.msra.mxu0 0.0
        %3176 = vmatprep.subr.mxu0 0.0
        %3177 = vmatpush2.msra.mxu0 0.0
        %3178 = vmatprep.subr.mxu0 0.0
        %3179 = vmatpush2.msra.mxu0 0.0
        %3180 = vmatprep.subr.mxu0 0.0
        %3181 = vmatpush2.msra.mxu0 0.0
        %3182 = vmatprep.subr.mxu0 0.0
        %3183 = vmatpush2.msra.mxu0 0.0
        %3184 = vmatprep.subr.mxu0 0.0
        %3185 = vmatpush2.msra.mxu0 0.0
        %3186 = vmatprep.subr.mxu0 0.0
        %3187 = vmatpush2.msra.mxu0 0.0
        %3188 = vmatprep.subr.mxu0 0.0
        %3189 = vmatpush2.msra.mxu0 0.0
        %3190 = vmatprep.subr.mxu0 0.0
        %3191 = vmatpush2.msra.mxu0 0.0
        %3192 = vmatprep.subr.mxu0 0.0
        %3193 = vmatpush2.msra.mxu0 0.0
        %3194 = vmatprep.subr.mxu0 0.0
        %3195 = vmatpush2.msra.mxu0 0.0
        %3196 = vmatprep.subr.mxu0 0.0
        %3197 = vmatpush2.msra.mxu0 0.0
        %3198 = vmatprep.subr.mxu0 0.0
        %3199 = vmatpush2.msra.mxu0 0.0
        %3200 = vmatprep.subr.mxu0 0.0
        %3201 = vmatpush2.msra.mxu0 0.0
        %3202 = vmatprep.subr.mxu0 0.0
        %3203 = vmatpush2.msra.mxu0 0.0
        %3204 = vmatprep.subr.mxu0 0.0
        %3205 = vmatpush2.msra.mxu0 0.0
        %3206 = vmatprep.mubr.f32.mxu0 0.0
        %3207 = vmatmul.mubr.f32.gmra.mxu0 %v3140
        %v3208 = vpop.f32.mrf.mxu0
        %v3209 = vadd.f32 %v3137, %v3208
        %v3210 = vpop.f32.mrf.mxu0
        %3211 = vdwg.mxu0
        %v3212 = vadd.f32 %v3034, %v3209
        %v3213 = vsel %vm1089, %v3212, 0.0
        %3214 = vadd.xlane.f32.xlu0 %v3213
        %v3215 = vpop.xlane.xlu0 %3214
        %v3216 = vmul.f32 %v3215, %v1936
        %v3217 = vsub.f32 %v3212, %v3216
        %v3218 = vmul.f32 %v3217, %v3217
        %v3219 = vsel %vm1089, %v3218, 0.0
        %3220 = vadd.xlane.f32.xlu0 %v3219
        %v3221 = vpop.xlane.xlu0 %3220
        %v3222 = vmul.f32 %v3221, %v1936
        %v3223 = vadd.f32 %v3222, 1e-05
        %v3224 = vrsqrt.pop %v3223
        %v3225 = vmul.f32 %v3217, %v3224
        %v3226 = vlaneseq
        %v3227 = vshrl.u32 %v3226, 7
        %v3228 = vsub.s32 2, %v3227
        %v3229 = vrot.slane %v2156, %v3228
        %v3230 = vmul.f32 %v3225, %v3229
        %v3231 = vlaneseq
        %v3232 = vshrl.u32 %v3231, 7
        %v3233 = vsub.s32 3, %v3232
        %v3234 = vrot.slane %v2156, %v3233
        %v3235 = vadd.f32 %v3230, %v3234
        %v3236 = vld [vmem:[%s937] sm:$0xff]
        %v3237 = vld [vmem:[%s25] sm:$0x3f]
        %v3238 = vld [vmem:[%s11] sm:$0xff]
        %v3239 = vld [vmem:[%s11 + $0x8] sm:$0xff]
        %v3240 = vld [vmem:[%s11 + $0x10] sm:$0xff]
        %v3241 = vld [vmem:[%s11 + $0x18] sm:$0xff]
        %v3242 = vld [vmem:[#allocation13] sm:$0x1]
        %v3244 = vlaneseq
        %v3245 = vshrl.u32 %v3244, 7
        %v3246 = vsub.s32 0, %v3245
        %v3247 = vrot.slane %v3242, %v3246
        %v3250 = vsel %vm1089, %v3236, 0
        %3252 = vmatprep.subr.mxu0 0.0
        %3253 = vmatpush1.msra.mxu0 0.0
        %3254 = vmatprep.subr.mxu0 0.0
        %3255 = vmatpush1.msra.mxu0 0.0
        %3256 = vmatprep.subr.mxu0 0.0
        %3257 = vmatpush1.msra.mxu0 0.0
        %3258 = vmatprep.subr.mxu0 0.0
        %3259 = vmatpush1.msra.mxu0 0.0
        %3260 = vmatprep.subr.mxu0 0.0
        %3261 = vmatpush1.msra.mxu0 0.0
        %3262 = vmatprep.subr.mxu0 0.0
        %3263 = vmatpush1.msra.mxu0 0.0
        %3264 = vmatprep.subr.mxu0 0.0
        %3265 = vmatpush1.msra.mxu0 0.0
        %3266 = vmatprep.subr.mxu0 0.0
        %3267 = vmatpush1.msra.mxu0 0.0
        %3268 = vmatprep.subr.mxu0 0.0
        %3269 = vmatpush1.msra.mxu0 0.0
        %3270 = vmatprep.subr.mxu0 0.0
        %3271 = vmatpush1.msra.mxu0 0.0
        %3272 = vmatprep.subr.mxu0 0.0
        %3273 = vmatpush1.msra.mxu0 0.0
        %3274 = vmatprep.subr.mxu0 0.0
        %3275 = vmatpush1.msra.mxu0 0.0
        %3276 = vmatprep.subr.mxu0 0.0
        %3277 = vmatpush1.msra.mxu0 %v3241
        %3278 = vmatprep.subr.mxu0 0.0
        %3279 = vmatpush1.msra.mxu0 %v3240
        %3280 = vmatprep.subr.mxu0 0.0
        %3281 = vmatpush1.msra.mxu0 %v3239
        %3282 = vmatprep.subr.mxu0 0.0
        %3283 = vmatpush1.msra.mxu0 %v3238
        %3284 = vmatprep.subr.mxu0 0.0
        %3285 = vmatpush2.msra.mxu0 0.0
        %3286 = vmatprep.subr.mxu0 0.0
        %3287 = vmatpush2.msra.mxu0 0.0
        %3288 = vmatprep.subr.mxu0 0.0
        %3289 = vmatpush2.msra.mxu0 0.0
        %3290 = vmatprep.subr.mxu0 0.0
        %3291 = vmatpush2.msra.mxu0 0.0
        %3292 = vmatprep.subr.mxu0 0.0
        %3293 = vmatpush2.msra.mxu0 0.0
        %3294 = vmatprep.subr.mxu0 0.0
        %3295 = vmatpush2.msra.mxu0 0.0
        %3296 = vmatprep.subr.mxu0 0.0
        %3297 = vmatpush2.msra.mxu0 0.0
        %3298 = vmatprep.subr.mxu0 0.0
        %3299 = vmatpush2.msra.mxu0 0.0
        %3300 = vmatprep.subr.mxu0 0.0
        %3301 = vmatpush2.msra.mxu0 0.0
        %3302 = vmatprep.subr.mxu0 0.0
        %3303 = vmatpush2.msra.mxu0 0.0
        %3304 = vmatprep.subr.mxu0 0.0
        %3305 = vmatpush2.msra.mxu0 0.0
        %3306 = vmatprep.subr.mxu0 0.0
        %3307 = vmatpush2.msra.mxu0 0.0
        %3308 = vmatprep.subr.mxu0 0.0
        %3309 = vmatpush2.msra.mxu0 0.0
        %3310 = vmatprep.subr.mxu0 0.0
        %3311 = vmatpush2.msra.mxu0 0.0
        %3312 = vmatprep.subr.mxu0 0.0
        %3313 = vmatpush2.msra.mxu0 0.0
        %3314 = vmatprep.subr.mxu0 0.0
        %3315 = vmatpush2.msra.mxu0 0.0
        %3316 = vmatprep.mubr.f32.mxu0 0.0
        %3317 = vmatmul.mubr.f32.gmra.mxu0 %v3250
        %v3318 = vpop.f32.mrf.mxu0
        %v3319 = vadd.f32 %v3247, %v3318
        %v3320 = vpop.f32.mrf.mxu0
        %3321 = vdwg.mxu0
        %3323 = vrot.lane.b32.xlu0 %v3319, 96
        %v3324 = vpop.permute.xlu0 %3323
        %v3325 = vsel %vm1166, %v3319, 0
        %v3327 = vsel %vm1166, %v3324, 0
        %3329 = vmatprep.subr.mxu0 0.0
        %3330 = vmatpush1.xpose.msra.mxu0 0.0
        %3331 = vmatprep.subr.mxu0 0.0
        %3332 = vmatpush1.xpose.msra.mxu0 0.0
        %3333 = vmatprep.subr.mxu0 0.0
        %3334 = vmatpush1.xpose.msra.mxu0 0.0
        %3335 = vmatprep.subr.mxu0 0.0
        %3336 = vmatpush1.xpose.msra.mxu0 0.0
        %3337 = vmatprep.subr.mxu0 0.0
        %3338 = vmatpush1.xpose.msra.mxu0 0.0
        %3339 = vmatprep.subr.mxu0 0.0
        %3340 = vmatpush1.xpose.msra.mxu0 0.0
        %3341 = vmatprep.subr.mxu0 0.0
        %3342 = vmatpush1.xpose.msra.mxu0 0.0
        %3343 = vmatprep.subr.mxu0 0.0
        %3344 = vmatpush1.xpose.msra.mxu0 0.0
        %3345 = vmatprep.subr.mxu0 0.0
        %3346 = vmatpush1.xpose.msra.mxu0 0.0
        %3347 = vmatprep.subr.mxu0 0.0
        %3348 = vmatpush1.xpose.msra.mxu0 0.0
        %3349 = vmatprep.subr.mxu0 0.0
        %3350 = vmatpush1.xpose.msra.mxu0 0.0
        %3351 = vmatprep.subr.mxu0 0.0
        %3352 = vmatpush1.xpose.msra.mxu0 0.0
        %3353 = vmatprep.subr.mxu0 0.0
        %3354 = vmatpush1.xpose.msra.mxu0 0.0
        %3355 = vmatprep.subr.mxu0 0.0
        %3356 = vmatpush1.xpose.msra.mxu0 0.0
        %3357 = vmatprep.subr.mxu0 0.0
        %3358 = vmatpush1.xpose.msra.mxu0 0.0
        %3359 = vmatprep.subr.mxu0 0.0
        %3360 = vmatpush1.xpose.msra.mxu0 %v3327
        %3361 = vmatprep.subr.mxu0 0.0
        %3362 = vmatpush2.xpose.msra.mxu0 0.0
        %3363 = vmatprep.subr.mxu0 0.0
        %3364 = vmatpush2.xpose.msra.mxu0 0.0
        %3365 = vmatprep.subr.mxu0 0.0
        %3366 = vmatpush2.xpose.msra.mxu0 0.0
        %3367 = vmatprep.subr.mxu0 0.0
        %3368 = vmatpush2.xpose.msra.mxu0 0.0
        %3369 = vmatprep.subr.mxu0 0.0
        %3370 = vmatpush2.xpose.msra.mxu0 0.0
        %3371 = vmatprep.subr.mxu0 0.0
        %3372 = vmatpush2.xpose.msra.mxu0 0.0
        %3373 = vmatprep.subr.mxu0 0.0
        %3374 = vmatpush2.xpose.msra.mxu0 0.0
        %3375 = vmatprep.subr.mxu0 0.0
        %3376 = vmatpush2.xpose.msra.mxu0 0.0
        %3377 = vmatprep.subr.mxu0 0.0
        %3378 = vmatpush2.xpose.msra.mxu0 0.0
        %3379 = vmatprep.subr.mxu0 0.0
        %3380 = vmatpush2.xpose.msra.mxu0 0.0
        %3381 = vmatprep.subr.mxu0 0.0
        %3382 = vmatpush2.xpose.msra.mxu0 0.0
        %3383 = vmatprep.subr.mxu0 0.0
        %3384 = vmatpush2.xpose.msra.mxu0 0.0
        %3385 = vmatprep.subr.mxu0 0.0
        %3386 = vmatpush2.xpose.msra.mxu0 0.0
        %3387 = vmatprep.subr.mxu0 0.0
        %3388 = vmatpush2.xpose.msra.mxu0 0.0
        %3389 = vmatprep.subr.mxu0 0.0
        %3390 = vmatpush2.xpose.msra.mxu0 0.0
        %3391 = vmatprep.subr.mxu0 0.0
        %3392 = vmatpush2.xpose.msra.mxu0 0.0
        %3393 = vmatprep.mubr.f32.mxu0 0.0
        %3394 = vmatmul.mubr.f32.gmra.mxu0 %v3325
        %v3395 = vpop.f32.mrf.mxu0
        %v3396 = vadd.f32 0.0, %v3395
        %v3397 = vpop.f32.mrf.mxu0
        %3398 = vdwg.mxu0
        %v3399 = vmul.f32 %v3396, 0.35355338
        %v3400 = vadd.f32 %v3399, %v1075
        %v3401 = vsel %vm1166, %v3400, -inf
        %3402 = vmax.xlane.f32.xlu0 %v3401
        %v3403 = vpop.xlane.xlu0 %3402
        %v3404 = vsub.f32 %v3400, %v3403
        %v3405 = vmul.f32 %v3404, 1.442695
        %v3406 = vpow.pop %v3405
        %v3407 = vsel %vm1166, %v3406, 0.0
        %3408 = vadd.xlane.f32.xlu0 %v3407
        %v3409 = vpop.xlane.xlu0 %3408
        %v3410 = vrcp.pop %v3409
        %v3411 = vmul.f32 %v3406, %v3410
        %3412 = vrot.lane.b32.xlu0 %v3319, 64
        %v3413 = vpop.permute.xlu0 %3412
        %v3416 = vsel %vm1166, %v3411, 0
        %3418 = vmatprep.subr.mxu0 0.0
        %3419 = vmatpush1.msra.mxu0 0.0
        %3420 = vmatprep.subr.mxu0 0.0
        %3421 = vmatpush1.msra.mxu0 0.0
        %3422 = vmatprep.subr.mxu0 0.0
        %3423 = vmatpush1.msra.mxu0 0.0
        %3424 = vmatprep.subr.mxu0 0.0
        %3425 = vmatpush1.msra.mxu0 0.0
        %3426 = vmatprep.subr.mxu0 0.0
        %3427 = vmatpush1.msra.mxu0 0.0
        %3428 = vmatprep.subr.mxu0 0.0
        %3429 = vmatpush1.msra.mxu0 0.0
        %3430 = vmatprep.subr.mxu0 0.0
        %3431 = vmatpush1.msra.mxu0 0.0
        %3432 = vmatprep.subr.mxu0 0.0
        %3433 = vmatpush1.msra.mxu0 0.0
        %3434 = vmatprep.subr.mxu0 0.0
        %3435 = vmatpush1.msra.mxu0 0.0
        %3436 = vmatprep.subr.mxu0 0.0
        %3437 = vmatpush1.msra.mxu0 0.0
        %3438 = vmatprep.subr.mxu0 0.0
        %3439 = vmatpush1.msra.mxu0 0.0
        %3440 = vmatprep.subr.mxu0 0.0
        %3441 = vmatpush1.msra.mxu0 0.0
        %3442 = vmatprep.subr.mxu0 0.0
        %3443 = vmatpush1.msra.mxu0 0.0
        %3444 = vmatprep.subr.mxu0 0.0
        %3445 = vmatpush1.msra.mxu0 0.0
        %3446 = vmatprep.subr.mxu0 0.0
        %3447 = vmatpush1.msra.mxu0 0.0
        %3448 = vmatprep.subr.mxu0 0.0
        %3449 = vmatpush1.msra.mxu0 %v3413
        %3450 = vmatprep.subr.mxu0 0.0
        %3451 = vmatpush2.msra.mxu0 0.0
        %3452 = vmatprep.subr.mxu0 0.0
        %3453 = vmatpush2.msra.mxu0 0.0
        %3454 = vmatprep.subr.mxu0 0.0
        %3455 = vmatpush2.msra.mxu0 0.0
        %3456 = vmatprep.subr.mxu0 0.0
        %3457 = vmatpush2.msra.mxu0 0.0
        %3458 = vmatprep.subr.mxu0 0.0
        %3459 = vmatpush2.msra.mxu0 0.0
        %3460 = vmatprep.subr.mxu0 0.0
        %3461 = vmatpush2.msra.mxu0 0.0
        %3462 = vmatprep.subr.mxu0 0.0
        %3463 = vmatpush2.msra.mxu0 0.0
        %3464 = vmatprep.subr.mxu0 0.0
        %3465 = vmatpush2.msra.mxu0 0.0
        %3466 = vmatprep.subr.mxu0 0.0
        %3467 = vmatpush2.msra.mxu0 0.0
        %3468 = vmatprep.subr.mxu0 0.0
        %3469 = vmatpush2.msra.mxu0 0.0
        %3470 = vmatprep.subr.mxu0 0.0
        %3471 = vmatpush2.msra.mxu0 0.0
        %3472 = vmatprep.subr.mxu0 0.0
        %3473 = vmatpush2.msra.mxu0 0.0
        %3474 = vmatprep.subr.mxu0 0.0
        %3475 = vmatpush2.msra.mxu0 0.0
        %3476 = vmatprep.subr.mxu0 0.0
        %3477 = vmatpush2.msra.mxu0 0.0
        %3478 = vmatprep.subr.mxu0 0.0
        %3479 = vmatpush2.msra.mxu0 0.0
        %3480 = vmatprep.subr.mxu0 0.0
        %3481 = vmatpush2.msra.mxu0 0.0
        %3482 = vmatprep.mubr.f32.mxu0 0.0
        %3483 = vmatmul.mubr.f32.gmra.mxu0 %v3416
        %v3484 = vpop.f32.mrf.mxu0
        %v3485 = vadd.f32 0.0, %v3484
        %v3486 = vpop.f32.mrf.mxu0
        %3487 = vdwg.mxu0
        %3488 = vrot.lane.b32.xlu0 %v3319, 120
        %v3489 = vpop.permute.xlu0 %3488
        %3490 = vrot.lane.b32.xlu0 %v3319, 88
        %v3491 = vpop.permute.xlu0 %3490
        %v3492 = vsel %vm1166, %v3489, 0
        %v3494 = vsel %vm1166, %v3491, 0
        %3496 = vmatprep.subr.mxu0 0.0
        %3497 = vmatpush1.xpose.msra.mxu0 0.0
        %3498 = vmatprep.subr.mxu0 0.0
        %3499 = vmatpush1.xpose.msra.mxu0 0.0
        %3500 = vmatprep.subr.mxu0 0.0
        %3501 = vmatpush1.xpose.msra.mxu0 0.0
        %3502 = vmatprep.subr.mxu0 0.0
        %3503 = vmatpush1.xpose.msra.mxu0 0.0
        %3504 = vmatprep.subr.mxu0 0.0
        %3505 = vmatpush1.xpose.msra.mxu0 0.0
        %3506 = vmatprep.subr.mxu0 0.0
        %3507 = vmatpush1.xpose.msra.mxu0 0.0
        %3508 = vmatprep.subr.mxu0 0.0
        %3509 = vmatpush1.xpose.msra.mxu0 0.0
        %3510 = vmatprep.subr.mxu0 0.0
        %3511 = vmatpush1.xpose.msra.mxu0 0.0
        %3512 = vmatprep.subr.mxu0 0.0
        %3513 = vmatpush1.xpose.msra.mxu0 0.0
        %3514 = vmatprep.subr.mxu0 0.0
        %3515 = vmatpush1.xpose.msra.mxu0 0.0
        %3516 = vmatprep.subr.mxu0 0.0
        %3517 = vmatpush1.xpose.msra.mxu0 0.0
        %3518 = vmatprep.subr.mxu0 0.0
        %3519 = vmatpush1.xpose.msra.mxu0 0.0
        %3520 = vmatprep.subr.mxu0 0.0
        %3521 = vmatpush1.xpose.msra.mxu0 0.0
        %3522 = vmatprep.subr.mxu0 0.0
        %3523 = vmatpush1.xpose.msra.mxu0 0.0
        %3524 = vmatprep.subr.mxu0 0.0
        %3525 = vmatpush1.xpose.msra.mxu0 0.0
        %3526 = vmatprep.subr.mxu0 0.0
        %3527 = vmatpush1.xpose.msra.mxu0 %v3494
        %3528 = vmatprep.subr.mxu0 0.0
        %3529 = vmatpush2.xpose.msra.mxu0 0.0
        %3530 = vmatprep.subr.mxu0 0.0
        %3531 = vmatpush2.xpose.msra.mxu0 0.0
        %3532 = vmatprep.subr.mxu0 0.0
        %3533 = vmatpush2.xpose.msra.mxu0 0.0
        %3534 = vmatprep.subr.mxu0 0.0
        %3535 = vmatpush2.xpose.msra.mxu0 0.0
        %3536 = vmatprep.subr.mxu0 0.0
        %3537 = vmatpush2.xpose.msra.mxu0 0.0
        %3538 = vmatprep.subr.mxu0 0.0
        %3539 = vmatpush2.xpose.msra.mxu0 0.0
        %3540 = vmatprep.subr.mxu0 0.0
        %3541 = vmatpush2.xpose.msra.mxu0 0.0
        %3542 = vmatprep.subr.mxu0 0.0
        %3543 = vmatpush2.xpose.msra.mxu0 0.0
        %3544 = vmatprep.subr.mxu0 0.0
        %3545 = vmatpush2.xpose.msra.mxu0 0.0
        %3546 = vmatprep.subr.mxu0 0.0
        %3547 = vmatpush2.xpose.msra.mxu0 0.0
        %3548 = vmatprep.subr.mxu0 0.0
        %3549 = vmatpush2.xpose.msra.mxu0 0.0
        %3550 = vmatprep.subr.mxu0 0.0
        %3551 = vmatpush2.xpose.msra.mxu0 0.0
        %3552 = vmatprep.subr.mxu0 0.0
        %3553 = vmatpush2.xpose.msra.mxu0 0.0
        %3554 = vmatprep.subr.mxu0 0.0
        %3555 = vmatpush2.xpose.msra.mxu0 0.0
        %3556 = vmatprep.subr.mxu0 0.0
        %3557 = vmatpush2.xpose.msra.mxu0 0.0
        %3558 = vmatprep.subr.mxu0 0.0
        %3559 = vmatpush2.xpose.msra.mxu0 0.0
        %3560 = vmatprep.mubr.f32.mxu0 0.0
        %3561 = vmatmul.mubr.f32.gmra.mxu0 %v3492
        %v3562 = vpop.f32.mrf.mxu0
        %v3563 = vadd.f32 0.0, %v3562
        %v3564 = vpop.f32.mrf.mxu0
        %3565 = vdwg.mxu0
        %v3566 = vmul.f32 %v3563, 0.35355338
        %v3567 = vadd.f32 %v3566, %v1075
        %v3568 = vsel %vm1166, %v3567, -inf
        %3569 = vmax.xlane.f32.xlu0 %v3568
        %v3570 = vpop.xlane.xlu0 %3569
        %v3571 = vsub.f32 %v3567, %v3570
        %v3572 = vmul.f32 %v3571, 1.442695
        %v3573 = vpow.pop %v3572
        %v3574 = vsel %vm1166, %v3573, 0.0
        %3575 = vadd.xlane.f32.xlu0 %v3574
        %v3576 = vpop.xlane.xlu0 %3575
        %v3577 = vrcp.pop %v3576
        %v3578 = vmul.f32 %v3573, %v3577
        %3579 = vrot.lane.b32.xlu0 %v3319, 56
        %v3580 = vpop.permute.xlu0 %3579
        %v3583 = vsel %vm1166, %v3578, 0
        %3585 = vmatprep.subr.mxu0 0.0
        %3586 = vmatpush1.msra.mxu0 0.0
        %3587 = vmatprep.subr.mxu0 0.0
        %3588 = vmatpush1.msra.mxu0 0.0
        %3589 = vmatprep.subr.mxu0 0.0
        %3590 = vmatpush1.msra.mxu0 0.0
        %3591 = vmatprep.subr.mxu0 0.0
        %3592 = vmatpush1.msra.mxu0 0.0
        %3593 = vmatprep.subr.mxu0 0.0
        %3594 = vmatpush1.msra.mxu0 0.0
        %3595 = vmatprep.subr.mxu0 0.0
        %3596 = vmatpush1.msra.mxu0 0.0
        %3597 = vmatprep.subr.mxu0 0.0
        %3598 = vmatpush1.msra.mxu0 0.0
        %3599 = vmatprep.subr.mxu0 0.0
        %3600 = vmatpush1.msra.mxu0 0.0
        %3601 = vmatprep.subr.mxu0 0.0
        %3602 = vmatpush1.msra.mxu0 0.0
        %3603 = vmatprep.subr.mxu0 0.0
        %3604 = vmatpush1.msra.mxu0 0.0
        %3605 = vmatprep.subr.mxu0 0.0
        %3606 = vmatpush1.msra.mxu0 0.0
        %3607 = vmatprep.subr.mxu0 0.0
        %3608 = vmatpush1.msra.mxu0 0.0
        %3609 = vmatprep.subr.mxu0 0.0
        %3610 = vmatpush1.msra.mxu0 0.0
        %3611 = vmatprep.subr.mxu0 0.0
        %3612 = vmatpush1.msra.mxu0 0.0
        %3613 = vmatprep.subr.mxu0 0.0
        %3614 = vmatpush1.msra.mxu0 0.0
        %3615 = vmatprep.subr.mxu0 0.0
        %3616 = vmatpush1.msra.mxu0 %v3580
        %3617 = vmatprep.subr.mxu0 0.0
        %3618 = vmatpush2.msra.mxu0 0.0
        %3619 = vmatprep.subr.mxu0 0.0
        %3620 = vmatpush2.msra.mxu0 0.0
        %3621 = vmatprep.subr.mxu0 0.0
        %3622 = vmatpush2.msra.mxu0 0.0
        %3623 = vmatprep.subr.mxu0 0.0
        %3624 = vmatpush2.msra.mxu0 0.0
        %3625 = vmatprep.subr.mxu0 0.0
        %3626 = vmatpush2.msra.mxu0 0.0
        %3627 = vmatprep.subr.mxu0 0.0
        %3628 = vmatpush2.msra.mxu0 0.0
        %3629 = vmatprep.subr.mxu0 0.0
        %3630 = vmatpush2.msra.mxu0 0.0
        %3631 = vmatprep.subr.mxu0 0.0
        %3632 = vmatpush2.msra.mxu0 0.0
        %3633 = vmatprep.subr.mxu0 0.0
        %3634 = vmatpush2.msra.mxu0 0.0
        %3635 = vmatprep.subr.mxu0 0.0
        %3636 = vmatpush2.msra.mxu0 0.0
        %3637 = vmatprep.subr.mxu0 0.0
        %3638 = vmatpush2.msra.mxu0 0.0
        %3639 = vmatprep.subr.mxu0 0.0
        %3640 = vmatpush2.msra.mxu0 0.0
        %3641 = vmatprep.subr.mxu0 0.0
        %3642 = vmatpush2.msra.mxu0 0.0
        %3643 = vmatprep.subr.mxu0 0.0
        %3644 = vmatpush2.msra.mxu0 0.0
        %3645 = vmatprep.subr.mxu0 0.0
        %3646 = vmatpush2.msra.mxu0 0.0
        %3647 = vmatprep.subr.mxu0 0.0
        %3648 = vmatpush2.msra.mxu0 0.0
        %3649 = vmatprep.mubr.f32.mxu0 0.0
        %3650 = vmatmul.mubr.f32.gmra.mxu0 %v3583
        %v3651 = vpop.f32.mrf.mxu0
        %v3652 = vadd.f32 0.0, %v3651
        %v3653 = vpop.f32.mrf.mxu0
        %3654 = vdwg.mxu0
        %3655 = vrot.lane.b32.xlu0 %v3319, 112
        %v3656 = vpop.permute.xlu0 %3655
        %3657 = vrot.lane.b32.xlu0 %v3319, 80
        %v3658 = vpop.permute.xlu0 %3657
        %v3659 = vsel %vm1166, %v3656, 0
        %v3661 = vsel %vm1166, %v3658, 0
        %3663 = vmatprep.subr.mxu0 0.0
        %3664 = vmatpush1.xpose.msra.mxu0 0.0
        %3665 = vmatprep.subr.mxu0 0.0
        %3666 = vmatpush1.xpose.msra.mxu0 0.0
        %3667 = vmatprep.subr.mxu0 0.0
        %3668 = vmatpush1.xpose.msra.mxu0 0.0
        %3669 = vmatprep.subr.mxu0 0.0
        %3670 = vmatpush1.xpose.msra.mxu0 0.0
        %3671 = vmatprep.subr.mxu0 0.0
        %3672 = vmatpush1.xpose.msra.mxu0 0.0
        %3673 = vmatprep.subr.mxu0 0.0
        %3674 = vmatpush1.xpose.msra.mxu0 0.0
        %3675 = vmatprep.subr.mxu0 0.0
        %3676 = vmatpush1.xpose.msra.mxu0 0.0
        %3677 = vmatprep.subr.mxu0 0.0
        %3678 = vmatpush1.xpose.msra.mxu0 0.0
        %3679 = vmatprep.subr.mxu0 0.0
        %3680 = vmatpush1.xpose.msra.mxu0 0.0
        %3681 = vmatprep.subr.mxu0 0.0
        %3682 = vmatpush1.xpose.msra.mxu0 0.0
        %3683 = vmatprep.subr.mxu0 0.0
        %3684 = vmatpush1.xpose.msra.mxu0 0.0
        %3685 = vmatprep.subr.mxu0 0.0
        %3686 = vmatpush1.xpose.msra.mxu0 0.0
        %3687 = vmatprep.subr.mxu0 0.0
        %3688 = vmatpush1.xpose.msra.mxu0 0.0
        %3689 = vmatprep.subr.mxu0 0.0
        %3690 = vmatpush1.xpose.msra.mxu0 0.0
        %3691 = vmatprep.subr.mxu0 0.0
        %3692 = vmatpush1.xpose.msra.mxu0 0.0
        %3693 = vmatprep.subr.mxu0 0.0
        %3694 = vmatpush1.xpose.msra.mxu0 %v3661
        %3695 = vmatprep.subr.mxu0 0.0
        %3696 = vmatpush2.xpose.msra.mxu0 0.0
        %3697 = vmatprep.subr.mxu0 0.0
        %3698 = vmatpush2.xpose.msra.mxu0 0.0
        %3699 = vmatprep.subr.mxu0 0.0
        %3700 = vmatpush2.xpose.msra.mxu0 0.0
        %3701 = vmatprep.subr.mxu0 0.0
        %3702 = vmatpush2.xpose.msra.mxu0 0.0
        %3703 = vmatprep.subr.mxu0 0.0
        %3704 = vmatpush2.xpose.msra.mxu0 0.0
        %3705 = vmatprep.subr.mxu0 0.0
        %3706 = vmatpush2.xpose.msra.mxu0 0.0
        %3707 = vmatprep.subr.mxu0 0.0
        %3708 = vmatpush2.xpose.msra.mxu0 0.0
        %3709 = vmatprep.subr.mxu0 0.0
        %3710 = vmatpush2.xpose.msra.mxu0 0.0
        %3711 = vmatprep.subr.mxu0 0.0
        %3712 = vmatpush2.xpose.msra.mxu0 0.0
        %3713 = vmatprep.subr.mxu0 0.0
        %3714 = vmatpush2.xpose.msra.mxu0 0.0
        %3715 = vmatprep.subr.mxu0 0.0
        %3716 = vmatpush2.xpose.msra.mxu0 0.0
        %3717 = vmatprep.subr.mxu0 0.0
        %3718 = vmatpush2.xpose.msra.mxu0 0.0
        %3719 = vmatprep.subr.mxu0 0.0
        %3720 = vmatpush2.xpose.msra.mxu0 0.0
        %3721 = vmatprep.subr.mxu0 0.0
        %3722 = vmatpush2.xpose.msra.mxu0 0.0
        %3723 = vmatprep.subr.mxu0 0.0
        %3724 = vmatpush2.xpose.msra.mxu0 0.0
        %3725 = vmatprep.subr.mxu0 0.0
        %3726 = vmatpush2.xpose.msra.mxu0 0.0
        %3727 = vmatprep.mubr.f32.mxu0 0.0
        %3728 = vmatmul.mubr.f32.gmra.mxu0 %v3659
        %v3729 = vpop.f32.mrf.mxu0
        %v3730 = vadd.f32 0.0, %v3729
        %v3731 = vpop.f32.mrf.mxu0
        %3732 = vdwg.mxu0
        %v3733 = vmul.f32 %v3730, 0.35355338
        %v3734 = vadd.f32 %v3733, %v1075
        %v3735 = vsel %vm1166, %v3734, -inf
        %3736 = vmax.xlane.f32.xlu0 %v3735
        %v3737 = vpop.xlane.xlu0 %3736
        %v3738 = vsub.f32 %v3734, %v3737
        %v3739 = vmul.f32 %v3738, 1.442695
        %v3740 = vpow.pop %v3739
        %v3741 = vsel %vm1166, %v3740, 0.0
        %3742 = vadd.xlane.f32.xlu0 %v3741
        %v3743 = vpop.xlane.xlu0 %3742
        %v3744 = vrcp.pop %v3743
        %v3745 = vmul.f32 %v3740, %v3744
        %3746 = vrot.lane.b32.xlu0 %v3319, 48
        %v3747 = vpop.permute.xlu0 %3746
        %v3750 = vsel %vm1166, %v3745, 0
        %3752 = vmatprep.subr.mxu0 0.0
        %3753 = vmatpush1.msra.mxu0 0.0
        %3754 = vmatprep.subr.mxu0 0.0
        %3755 = vmatpush1.msra.mxu0 0.0
        %3756 = vmatprep.subr.mxu0 0.0
        %3757 = vmatpush1.msra.mxu0 0.0
        %3758 = vmatprep.subr.mxu0 0.0
        %3759 = vmatpush1.msra.mxu0 0.0
        %3760 = vmatprep.subr.mxu0 0.0
        %3761 = vmatpush1.msra.mxu0 0.0
        %3762 = vmatprep.subr.mxu0 0.0
        %3763 = vmatpush1.msra.mxu0 0.0
        %3764 = vmatprep.subr.mxu0 0.0
        %3765 = vmatpush1.msra.mxu0 0.0
        %3766 = vmatprep.subr.mxu0 0.0
        %3767 = vmatpush1.msra.mxu0 0.0
        %3768 = vmatprep.subr.mxu0 0.0
        %3769 = vmatpush1.msra.mxu0 0.0
        %3770 = vmatprep.subr.mxu0 0.0
        %3771 = vmatpush1.msra.mxu0 0.0
        %3772 = vmatprep.subr.mxu0 0.0
        %3773 = vmatpush1.msra.mxu0 0.0
        %3774 = vmatprep.subr.mxu0 0.0
        %3775 = vmatpush1.msra.mxu0 0.0
        %3776 = vmatprep.subr.mxu0 0.0
        %3777 = vmatpush1.msra.mxu0 0.0
        %3778 = vmatprep.subr.mxu0 0.0
        %3779 = vmatpush1.msra.mxu0 0.0
        %3780 = vmatprep.subr.mxu0 0.0
        %3781 = vmatpush1.msra.mxu0 0.0
        %3782 = vmatprep.subr.mxu0 0.0
        %3783 = vmatpush1.msra.mxu0 %v3747
        %3784 = vmatprep.subr.mxu0 0.0
        %3785 = vmatpush2.msra.mxu0 0.0
        %3786 = vmatprep.subr.mxu0 0.0
        %3787 = vmatpush2.msra.mxu0 0.0
        %3788 = vmatprep.subr.mxu0 0.0
        %3789 = vmatpush2.msra.mxu0 0.0
        %3790 = vmatprep.subr.mxu0 0.0
        %3791 = vmatpush2.msra.mxu0 0.0
        %3792 = vmatprep.subr.mxu0 0.0
        %3793 = vmatpush2.msra.mxu0 0.0
        %3794 = vmatprep.subr.mxu0 0.0
        %3795 = vmatpush2.msra.mxu0 0.0
        %3796 = vmatprep.subr.mxu0 0.0
        %3797 = vmatpush2.msra.mxu0 0.0
        %3798 = vmatprep.subr.mxu0 0.0
        %3799 = vmatpush2.msra.mxu0 0.0
        %3800 = vmatprep.subr.mxu0 0.0
        %3801 = vmatpush2.msra.mxu0 0.0
        %3802 = vmatprep.subr.mxu0 0.0
        %3803 = vmatpush2.msra.mxu0 0.0
        %3804 = vmatprep.subr.mxu0 0.0
        %3805 = vmatpush2.msra.mxu0 0.0
        %3806 = vmatprep.subr.mxu0 0.0
        %3807 = vmatpush2.msra.mxu0 0.0
        %3808 = vmatprep.subr.mxu0 0.0
        %3809 = vmatpush2.msra.mxu0 0.0
        %3810 = vmatprep.subr.mxu0 0.0
        %3811 = vmatpush2.msra.mxu0 0.0
        %3812 = vmatprep.subr.mxu0 0.0
        %3813 = vmatpush2.msra.mxu0 0.0
        %3814 = vmatprep.subr.mxu0 0.0
        %3815 = vmatpush2.msra.mxu0 0.0
        %3816 = vmatprep.mubr.f32.mxu0 0.0
        %3817 = vmatmul.mubr.f32.gmra.mxu0 %v3750
        %v3818 = vpop.f32.mrf.mxu0
        %v3819 = vadd.f32 0.0, %v3818
        %v3820 = vpop.f32.mrf.mxu0
        %3821 = vdwg.mxu0
        %3822 = vrot.lane.b32.xlu0 %v3319, 104
        %v3823 = vpop.permute.xlu0 %3822
        %3824 = vrot.lane.b32.xlu0 %v3319, 72
        %v3825 = vpop.permute.xlu0 %3824
        %v3826 = vsel %vm1166, %v3823, 0
        %v3828 = vsel %vm1166, %v3825, 0
        %3830 = vmatprep.subr.mxu0 0.0
        %3831 = vmatpush1.xpose.msra.mxu0 0.0
        %3832 = vmatprep.subr.mxu0 0.0
        %3833 = vmatpush1.xpose.msra.mxu0 0.0
        %3834 = vmatprep.subr.mxu0 0.0
        %3835 = vmatpush1.xpose.msra.mxu0 0.0
        %3836 = vmatprep.subr.mxu0 0.0
        %3837 = vmatpush1.xpose.msra.mxu0 0.0
        %3838 = vmatprep.subr.mxu0 0.0
        %3839 = vmatpush1.xpose.msra.mxu0 0.0
        %3840 = vmatprep.subr.mxu0 0.0
        %3841 = vmatpush1.xpose.msra.mxu0 0.0
        %3842 = vmatprep.subr.mxu0 0.0
        %3843 = vmatpush1.xpose.msra.mxu0 0.0
        %3844 = vmatprep.subr.mxu0 0.0
        %3845 = vmatpush1.xpose.msra.mxu0 0.0
        %3846 = vmatprep.subr.mxu0 0.0
        %3847 = vmatpush1.xpose.msra.mxu0 0.0
        %3848 = vmatprep.subr.mxu0 0.0
        %3849 = vmatpush1.xpose.msra.mxu0 0.0
        %3850 = vmatprep.subr.mxu0 0.0
        %3851 = vmatpush1.xpose.msra.mxu0 0.0
        %3852 = vmatprep.subr.mxu0 0.0
        %3853 = vmatpush1.xpose.msra.mxu0 0.0
        %3854 = vmatprep.subr.mxu0 0.0
        %3855 = vmatpush1.xpose.msra.mxu0 0.0
        %3856 = vmatprep.subr.mxu0 0.0
        %3857 = vmatpush1.xpose.msra.mxu0 0.0
        %3858 = vmatprep.subr.mxu0 0.0
        %3859 = vmatpush1.xpose.msra.mxu0 0.0
        %3860 = vmatprep.subr.mxu0 0.0
        %3861 = vmatpush1.xpose.msra.mxu0 %v3828
        %3862 = vmatprep.subr.mxu0 0.0
        %3863 = vmatpush2.xpose.msra.mxu0 0.0
        %3864 = vmatprep.subr.mxu0 0.0
        %3865 = vmatpush2.xpose.msra.mxu0 0.0
        %3866 = vmatprep.subr.mxu0 0.0
        %3867 = vmatpush2.xpose.msra.mxu0 0.0
        %3868 = vmatprep.subr.mxu0 0.0
        %3869 = vmatpush2.xpose.msra.mxu0 0.0
        %3870 = vmatprep.subr.mxu0 0.0
        %3871 = vmatpush2.xpose.msra.mxu0 0.0
        %3872 = vmatprep.subr.mxu0 0.0
        %3873 = vmatpush2.xpose.msra.mxu0 0.0
        %3874 = vmatprep.subr.mxu0 0.0
        %3875 = vmatpush2.xpose.msra.mxu0 0.0
        %3876 = vmatprep.subr.mxu0 0.0
        %3877 = vmatpush2.xpose.msra.mxu0 0.0
        %3878 = vmatprep.subr.mxu0 0.0
        %3879 = vmatpush2.xpose.msra.mxu0 0.0
        %3880 = vmatprep.subr.mxu0 0.0
        %3881 = vmatpush2.xpose.msra.mxu0 0.0
        %3882 = vmatprep.subr.mxu0 0.0
        %3883 = vmatpush2.xpose.msra.mxu0 0.0
        %3884 = vmatprep.subr.mxu0 0.0
        %3885 = vmatpush2.xpose.msra.mxu0 0.0
        %3886 = vmatprep.subr.mxu0 0.0
        %3887 = vmatpush2.xpose.msra.mxu0 0.0
        %3888 = vmatprep.subr.mxu0 0.0
        %3889 = vmatpush2.xpose.msra.mxu0 0.0
        %3890 = vmatprep.subr.mxu0 0.0
        %3891 = vmatpush2.xpose.msra.mxu0 0.0
        %3892 = vmatprep.subr.mxu0 0.0
        %3893 = vmatpush2.xpose.msra.mxu0 0.0
        %3894 = vmatprep.mubr.f32.mxu0 0.0
        %3895 = vmatmul.mubr.f32.gmra.mxu0 %v3826
        %v3896 = vpop.f32.mrf.mxu0
        %v3897 = vadd.f32 0.0, %v3896
        %v3898 = vpop.f32.mrf.mxu0
        %3899 = vdwg.mxu0
        %v3900 = vmul.f32 %v3897, 0.35355338
        %v3901 = vadd.f32 %v3900, %v1075
        %v3902 = vsel %vm1166, %v3901, -inf
        %3903 = vmax.xlane.f32.xlu0 %v3902
        %v3904 = vpop.xlane.xlu0 %3903
        %v3905 = vsub.f32 %v3901, %v3904
        %v3906 = vmul.f32 %v3905, 1.442695
        %v3907 = vpow.pop %v3906
        %v3908 = vsel %vm1166, %v3907, 0.0
        %3909 = vadd.xlane.f32.xlu0 %v3908
        %v3910 = vpop.xlane.xlu0 %3909
        %v3911 = vrcp.pop %v3910
        %v3912 = vmul.f32 %v3907, %v3911
        %3913 = vrot.lane.b32.xlu0 %v3319, 40
        %v3914 = vpop.permute.xlu0 %3913
        %v3917 = vsel %vm1166, %v3912, 0
        %3919 = vmatprep.subr.mxu0 0.0
        %3920 = vmatpush1.msra.mxu0 0.0
        %3921 = vmatprep.subr.mxu0 0.0
        %3922 = vmatpush1.msra.mxu0 0.0
        %3923 = vmatprep.subr.mxu0 0.0
        %3924 = vmatpush1.msra.mxu0 0.0
        %3925 = vmatprep.subr.mxu0 0.0
        %3926 = vmatpush1.msra.mxu0 0.0
        %3927 = vmatprep.subr.mxu0 0.0
        %3928 = vmatpush1.msra.mxu0 0.0
        %3929 = vmatprep.subr.mxu0 0.0
        %3930 = vmatpush1.msra.mxu0 0.0
        %3931 = vmatprep.subr.mxu0 0.0
        %3932 = vmatpush1.msra.mxu0 0.0
        %3933 = vmatprep.subr.mxu0 0.0
        %3934 = vmatpush1.msra.mxu0 0.0
        %3935 = vmatprep.subr.mxu0 0.0
        %3936 = vmatpush1.msra.mxu0 0.0
        %3937 = vmatprep.subr.mxu0 0.0
        %3938 = vmatpush1.msra.mxu0 0.0
        %3939 = vmatprep.subr.mxu0 0.0
        %3940 = vmatpush1.msra.mxu0 0.0
        %3941 = vmatprep.subr.mxu0 0.0
        %3942 = vmatpush1.msra.mxu0 0.0
        %3943 = vmatprep.subr.mxu0 0.0
        %3944 = vmatpush1.msra.mxu0 0.0
        %3945 = vmatprep.subr.mxu0 0.0
        %3946 = vmatpush1.msra.mxu0 0.0
        %3947 = vmatprep.subr.mxu0 0.0
        %3948 = vmatpush1.msra.mxu0 0.0
        %3949 = vmatprep.subr.mxu0 0.0
        %3950 = vmatpush1.msra.mxu0 %v3914
        %3951 = vmatprep.subr.mxu0 0.0
        %3952 = vmatpush2.msra.mxu0 0.0
        %3953 = vmatprep.subr.mxu0 0.0
        %3954 = vmatpush2.msra.mxu0 0.0
        %3955 = vmatprep.subr.mxu0 0.0
        %3956 = vmatpush2.msra.mxu0 0.0
        %3957 = vmatprep.subr.mxu0 0.0
        %3958 = vmatpush2.msra.mxu0 0.0
        %3959 = vmatprep.subr.mxu0 0.0
        %3960 = vmatpush2.msra.mxu0 0.0
        %3961 = vmatprep.subr.mxu0 0.0
        %3962 = vmatpush2.msra.mxu0 0.0
        %3963 = vmatprep.subr.mxu0 0.0
        %3964 = vmatpush2.msra.mxu0 0.0
        %3965 = vmatprep.subr.mxu0 0.0
        %3966 = vmatpush2.msra.mxu0 0.0
        %3967 = vmatprep.subr.mxu0 0.0
        %3968 = vmatpush2.msra.mxu0 0.0
        %3969 = vmatprep.subr.mxu0 0.0
        %3970 = vmatpush2.msra.mxu0 0.0
        %3971 = vmatprep.subr.mxu0 0.0
        %3972 = vmatpush2.msra.mxu0 0.0
        %3973 = vmatprep.subr.mxu0 0.0
        %3974 = vmatpush2.msra.mxu0 0.0
        %3975 = vmatprep.subr.mxu0 0.0
        %3976 = vmatpush2.msra.mxu0 0.0
        %3977 = vmatprep.subr.mxu0 0.0
        %3978 = vmatpush2.msra.mxu0 0.0
        %3979 = vmatprep.subr.mxu0 0.0
        %3980 = vmatpush2.msra.mxu0 0.0
        %3981 = vmatprep.subr.mxu0 0.0
        %3982 = vmatpush2.msra.mxu0 0.0
        %3983 = vmatprep.mubr.f32.mxu0 0.0
        %3984 = vmatmul.mubr.f32.gmra.mxu0 %v3917
        %v3985 = vpop.f32.mrf.mxu0
        %v3986 = vadd.f32 0.0, %v3985
        %v3987 = vpop.f32.mrf.mxu0
        %3988 = vdwg.mxu0
        %3990 = vrot.lane.b32.xlu0 %v3652, 8
        %v3991 = vpop.permute.xlu0 %3990
        %3994 = vrot.lane.b32.xlu0 %v3819, 16
        %v3995 = vpop.permute.xlu0 %3994
        %3998 = vrot.lane.b32.xlu0 %v3986, 24
        %v3999 = vpop.permute.xlu0 %3998
        %v4001 = vsel %vm1166, %v3485, %v3991
        %v4002 = vsel %vm1844, %v4001, %v3995
        %v4003 = vsel %vm1846, %v4002, %v3999
        %v4004 = vld [vmem:[%s13] sm:$0xff]
        %v4005 = vld [vmem:[%s13 + $0x8] sm:$0xff]
        %v4006 = vld [vmem:[%s13 + $0x10] sm:$0xff]
        %v4007 = vld [vmem:[%s13 + $0x18] sm:$0xff]
        %v4008 = vld [vmem:[#allocation14] sm:$0x1]
        %v4010 = vlaneseq
        %v4011 = vshrl.u32 %v4010, 7
        %v4012 = vsub.s32 0, %v4011
        %v4013 = vrot.slane %v4008, %v4012
        %v4016 = vsel %vm1089, %v4003, 0
        %4018 = vmatprep.subr.mxu0 0.0
        %4019 = vmatpush1.msra.mxu0 0.0
        %4020 = vmatprep.subr.mxu0 0.0
        %4021 = vmatpush1.msra.mxu0 0.0
        %4022 = vmatprep.subr.mxu0 0.0
        %4023 = vmatpush1.msra.mxu0 0.0
        %4024 = vmatprep.subr.mxu0 0.0
        %4025 = vmatpush1.msra.mxu0 0.0
        %4026 = vmatprep.subr.mxu0 0.0
        %4027 = vmatpush1.msra.mxu0 0.0
        %4028 = vmatprep.subr.mxu0 0.0
        %4029 = vmatpush1.msra.mxu0 0.0
        %4030 = vmatprep.subr.mxu0 0.0
        %4031 = vmatpush1.msra.mxu0 0.0
        %4032 = vmatprep.subr.mxu0 0.0
        %4033 = vmatpush1.msra.mxu0 0.0
        %4034 = vmatprep.subr.mxu0 0.0
        %4035 = vmatpush1.msra.mxu0 0.0
        %4036 = vmatprep.subr.mxu0 0.0
        %4037 = vmatpush1.msra.mxu0 0.0
        %4038 = vmatprep.subr.mxu0 0.0
        %4039 = vmatpush1.msra.mxu0 0.0
        %4040 = vmatprep.subr.mxu0 0.0
        %4041 = vmatpush1.msra.mxu0 0.0
        %4042 = vmatprep.subr.mxu0 0.0
        %4043 = vmatpush1.msra.mxu0 %v4007
        %4044 = vmatprep.subr.mxu0 0.0
        %4045 = vmatpush1.msra.mxu0 %v4006
        %4046 = vmatprep.subr.mxu0 0.0
        %4047 = vmatpush1.msra.mxu0 %v4005
        %4048 = vmatprep.subr.mxu0 0.0
        %4049 = vmatpush1.msra.mxu0 %v4004
        %4050 = vmatprep.subr.mxu0 0.0
        %4051 = vmatpush2.msra.mxu0 0.0
        %4052 = vmatprep.subr.mxu0 0.0
        %4053 = vmatpush2.msra.mxu0 0.0
        %4054 = vmatprep.subr.mxu0 0.0
        %4055 = vmatpush2.msra.mxu0 0.0
        %4056 = vmatprep.subr.mxu0 0.0
        %4057 = vmatpush2.msra.mxu0 0.0
        %4058 = vmatprep.subr.mxu0 0.0
        %4059 = vmatpush2.msra.mxu0 0.0
        %4060 = vmatprep.subr.mxu0 0.0
        %4061 = vmatpush2.msra.mxu0 0.0
        %4062 = vmatprep.subr.mxu0 0.0
        %4063 = vmatpush2.msra.mxu0 0.0
        %4064 = vmatprep.subr.mxu0 0.0
        %4065 = vmatpush2.msra.mxu0 0.0
        %4066 = vmatprep.subr.mxu0 0.0
        %4067 = vmatpush2.msra.mxu0 0.0
        %4068 = vmatprep.subr.mxu0 0.0
        %4069 = vmatpush2.msra.mxu0 0.0
        %4070 = vmatprep.subr.mxu0 0.0
        %4071 = vmatpush2.msra.mxu0 0.0
        %4072 = vmatprep.subr.mxu0 0.0
        %4073 = vmatpush2.msra.mxu0 0.0
        %4074 = vmatprep.subr.mxu0 0.0
        %4075 = vmatpush2.msra.mxu0 0.0
        %4076 = vmatprep.subr.mxu0 0.0
        %4077 = vmatpush2.msra.mxu0 0.0
        %4078 = vmatprep.subr.mxu0 0.0
        %4079 = vmatpush2.msra.mxu0 0.0
        %4080 = vmatprep.subr.mxu0 0.0
        %4081 = vmatpush2.msra.mxu0 0.0
        %4082 = vmatprep.mubr.f32.mxu0 0.0
        %4083 = vmatmul.mubr.f32.gmra.mxu0 %v4016
        %v4084 = vpop.f32.mrf.mxu0
        %v4085 = vadd.f32 %v4013, %v4084
        %v4086 = vpop.f32.mrf.mxu0
        %4087 = vdwg.mxu0
        %v4088 = vadd.f32 %v3236, %v4085
        %v4089 = vsel %vm1089, %v4088, 0.0
        %4090 = vadd.xlane.f32.xlu0 %v4089
        %v4091 = vpop.xlane.xlu0 %4090
        %v4092 = vmul.f32 %v4091, %v1936
        %v4093 = vsub.f32 %v4088, %v4092
        %v4094 = vmul.f32 %v4093, %v4093
        %v4095 = vsel %vm1089, %v4094, 0.0
        %4096 = vadd.xlane.f32.xlu0 %v4095
        %v4097 = vpop.xlane.xlu0 %4096
        %v4098 = vmul.f32 %v4097, %v1936
        %v4099 = vadd.f32 %v4098, 1e-05
        %v4100 = vrsqrt.pop %v4099
        %v4101 = vmul.f32 %v4093, %v4100
        %v4102 = vlaneseq
        %v4103 = vshrl.u32 %v4102, 7
        %v4104 = vsub.s32 0, %v4103
        %v4105 = vrot.slane %v3237, %v4104
        %v4106 = vmul.f32 %v4101, %v4105
        %v4107 = vlaneseq
        %v4108 = vshrl.u32 %v4107, 7
        %v4109 = vsub.s32 1, %v4108
        %v4110 = vrot.slane %v3237, %v4109
        %v4111 = vadd.f32 %v4106, %v4110
        %v4112 = vld [vmem:[#allocation16] sm:$0xff]
        %v4113 = vld [vmem:[#allocation16 + $0x8] sm:$0xff]
        %v4114 = vld [vmem:[#allocation16 + $0x10] sm:$0xff]
        %v4115 = vld [vmem:[#allocation16 + $0x18] sm:$0xff]
        %v4116 = vld [vmem:[#allocation17] sm:$0x1]
        %v4118 = vlaneseq
        %v4119 = vshrl.u32 %v4118, 7
        %v4120 = vsub.s32 0, %v4119
        %v4121 = vrot.slane %v4116, %v4120
        %v4124 = vsel %vm1089, %v4111, 0
        %4126 = vmatprep.subr.mxu0 0.0
        %4127 = vmatpush1.msra.mxu0 0.0
        %4128 = vmatprep.subr.mxu0 0.0
        %4129 = vmatpush1.msra.mxu0 0.0
        %4130 = vmatprep.subr.mxu0 0.0
        %4131 = vmatpush1.msra.mxu0 0.0
        %4132 = vmatprep.subr.mxu0 0.0
        %4133 = vmatpush1.msra.mxu0 0.0
        %4134 = vmatprep.subr.mxu0 0.0
        %4135 = vmatpush1.msra.mxu0 0.0
        %4136 = vmatprep.subr.mxu0 0.0
        %4137 = vmatpush1.msra.mxu0 0.0
        %4138 = vmatprep.subr.mxu0 0.0
        %4139 = vmatpush1.msra.mxu0 0.0
        %4140 = vmatprep.subr.mxu0 0.0
        %4141 = vmatpush1.msra.mxu0 0.0
        %4142 = vmatprep.subr.mxu0 0.0
        %4143 = vmatpush1.msra.mxu0 0.0
        %4144 = vmatprep.subr.mxu0 0.0
        %4145 = vmatpush1.msra.mxu0 0.0
        %4146 = vmatprep.subr.mxu0 0.0
        %4147 = vmatpush1.msra.mxu0 0.0
        %4148 = vmatprep.subr.mxu0 0.0
        %4149 = vmatpush1.msra.mxu0 0.0
        %4150 = vmatprep.subr.mxu0 0.0
        %4151 = vmatpush1.msra.mxu0 %v4115
        %4152 = vmatprep.subr.mxu0 0.0
        %4153 = vmatpush1.msra.mxu0 %v4114
        %4154 = vmatprep.subr.mxu0 0.0
        %4155 = vmatpush1.msra.mxu0 %v4113
        %4156 = vmatprep.subr.mxu0 0.0
        %4157 = vmatpush1.msra.mxu0 %v4112
        %4158 = vmatprep.subr.mxu0 0.0
        %4159 = vmatpush2.msra.mxu0 0.0
        %4160 = vmatprep.subr.mxu0 0.0
        %4161 = vmatpush2.msra.mxu0 0.0
        %4162 = vmatprep.subr.mxu0 0.0
        %4163 = vmatpush2.msra.mxu0 0.0
        %4164 = vmatprep.subr.mxu0 0.0
        %4165 = vmatpush2.msra.mxu0 0.0
        %4166 = vmatprep.subr.mxu0 0.0
        %4167 = vmatpush2.msra.mxu0 0.0
        %4168 = vmatprep.subr.mxu0 0.0
        %4169 = vmatpush2.msra.mxu0 0.0
        %4170 = vmatprep.subr.mxu0 0.0
        %4171 = vmatpush2.msra.mxu0 0.0
        %4172 = vmatprep.subr.mxu0 0.0
        %4173 = vmatpush2.msra.mxu0 0.0
        %4174 = vmatprep.subr.mxu0 0.0
        %4175 = vmatpush2.msra.mxu0 0.0
        %4176 = vmatprep.subr.mxu0 0.0
        %4177 = vmatpush2.msra.mxu0 0.0
        %4178 = vmatprep.subr.mxu0 0.0
        %4179 = vmatpush2.msra.mxu0 0.0
        %4180 = vmatprep.subr.mxu0 0.0
        %4181 = vmatpush2.msra.mxu0 0.0
        %4182 = vmatprep.subr.mxu0 0.0
        %4183 = vmatpush2.msra.mxu0 0.0
        %4184 = vmatprep.subr.mxu0 0.0
        %4185 = vmatpush2.msra.mxu0 0.0
        %4186 = vmatprep.subr.mxu0 0.0
        %4187 = vmatpush2.msra.mxu0 0.0
        %4188 = vmatprep.subr.mxu0 0.0
        %4189 = vmatpush2.msra.mxu0 0.0
        %4190 = vmatprep.mubr.f32.mxu0 0.0
        %4191 = vmatmul.mubr.f32.gmra.mxu0 %v4124
        %v4192 = vpop.f32.mrf.mxu0
        %v4193 = vadd.f32 %v4121, %v4192
        %v4194 = vpop.f32.mrf.mxu0
        %4195 = vdwg.mxu0
        %v4196 = vld [vmem:[#allocation19] sm:$0xff]
        %v4197 = vld [vmem:[#allocation19 + $0x8] sm:$0xff]
        %v4198 = vld [vmem:[#allocation19 + $0x10] sm:$0xff]
        %v4199 = vld [vmem:[#allocation19 + $0x18] sm:$0xff]
        %v4200 = vld [vmem:[#allocation20] sm:$0x1]
        %v4202 = vlaneseq
        %v4203 = vshrl.u32 %v4202, 7
        %v4204 = vsub.s32 0, %v4203
        %v4205 = vrot.slane %v4200, %v4204
        %v4208 = vsel %vm1089, %v3235, 0
        %4210 = vmatprep.subr.mxu0 0.0
        %4211 = vmatpush1.msra.mxu0 0.0
        %4212 = vmatprep.subr.mxu0 0.0
        %4213 = vmatpush1.msra.mxu0 0.0
        %4214 = vmatprep.subr.mxu0 0.0
        %4215 = vmatpush1.msra.mxu0 0.0
        %4216 = vmatprep.subr.mxu0 0.0
        %4217 = vmatpush1.msra.mxu0 0.0
        %4218 = vmatprep.subr.mxu0 0.0
        %4219 = vmatpush1.msra.mxu0 0.0
        %4220 = vmatprep.subr.mxu0 0.0
        %4221 = vmatpush1.msra.mxu0 0.0
        %4222 = vmatprep.subr.mxu0 0.0
        %4223 = vmatpush1.msra.mxu0 0.0
        %4224 = vmatprep.subr.mxu0 0.0
        %4225 = vmatpush1.msra.mxu0 0.0
        %4226 = vmatprep.subr.mxu0 0.0
        %4227 = vmatpush1.msra.mxu0 0.0
        %4228 = vmatprep.subr.mxu0 0.0
        %4229 = vmatpush1.msra.mxu0 0.0
        %4230 = vmatprep.subr.mxu0 0.0
        %4231 = vmatpush1.msra.mxu0 0.0
        %4232 = vmatprep.subr.mxu0 0.0
        %4233 = vmatpush1.msra.mxu0 0.0
        %4234 = vmatprep.subr.mxu0 0.0
        %4235 = vmatpush1.msra.mxu0 %v4199
        %4236 = vmatprep.subr.mxu0 0.0
        %4237 = vmatpush1.msra.mxu0 %v4198
        %4238 = vmatprep.subr.mxu0 0.0
        %4239 = vmatpush1.msra.mxu0 %v4197
        %4240 = vmatprep.subr.mxu0 0.0
        %4241 = vmatpush1.msra.mxu0 %v4196
        %4242 = vmatprep.subr.mxu0 0.0
        %4243 = vmatpush2.msra.mxu0 0.0
        %4244 = vmatprep.subr.mxu0 0.0
        %4245 = vmatpush2.msra.mxu0 0.0
        %4246 = vmatprep.subr.mxu0 0.0
        %4247 = vmatpush2.msra.mxu0 0.0
        %4248 = vmatprep.subr.mxu0 0.0
        %4249 = vmatpush2.msra.mxu0 0.0
        %4250 = vmatprep.subr.mxu0 0.0
        %4251 = vmatpush2.msra.mxu0 0.0
        %4252 = vmatprep.subr.mxu0 0.0
        %4253 = vmatpush2.msra.mxu0 0.0
        %4254 = vmatprep.subr.mxu0 0.0
        %4255 = vmatpush2.msra.mxu0 0.0
        %4256 = vmatprep.subr.mxu0 0.0
        %4257 = vmatpush2.msra.mxu0 0.0
        %4258 = vmatprep.subr.mxu0 0.0
        %4259 = vmatpush2.msra.mxu0 0.0
        %4260 = vmatprep.subr.mxu0 0.0
        %4261 = vmatpush2.msra.mxu0 0.0
        %4262 = vmatprep.subr.mxu0 0.0
        %4263 = vmatpush2.msra.mxu0 0.0
        %4264 = vmatprep.subr.mxu0 0.0
        %4265 = vmatpush2.msra.mxu0 0.0
        %4266 = vmatprep.subr.mxu0 0.0
        %4267 = vmatpush2.msra.mxu0 0.0
        %4268 = vmatprep.subr.mxu0 0.0
        %4269 = vmatpush2.msra.mxu0 0.0
        %4270 = vmatprep.subr.mxu0 0.0
        %4271 = vmatpush2.msra.mxu0 0.0
        %4272 = vmatprep.subr.mxu0 0.0
        %4273 = vmatpush2.msra.mxu0 0.0
        %4274 = vmatprep.mubr.f32.mxu0 0.0
        %4275 = vmatmul.mubr.f32.gmra.mxu0 %v4208
        %v4276 = vpop.f32.mrf.mxu0
        %v4277 = vadd.f32 %v4205, %v4276
        %v4278 = vpop.f32.mrf.mxu0
        %4279 = vdwg.mxu0
        %v4281 = vsel %vm1166, %v4193, 0
        %v4284 = vsel %vm1166, %v4277, 0
        %4286 = vmatprep.subr.mxu0 0.0
        %4287 = vmatpush1.xpose.msra.mxu0 0.0
        %4288 = vmatprep.subr.mxu0 0.0
        %4289 = vmatpush1.xpose.msra.mxu0 0.0
        %4290 = vmatprep.subr.mxu0 0.0
        %4291 = vmatpush1.xpose.msra.mxu0 0.0
        %4292 = vmatprep.subr.mxu0 0.0
        %4293 = vmatpush1.xpose.msra.mxu0 0.0
        %4294 = vmatprep.subr.mxu0 0.0
        %4295 = vmatpush1.xpose.msra.mxu0 0.0
        %4296 = vmatprep.subr.mxu0 0.0
        %4297 = vmatpush1.xpose.msra.mxu0 0.0
        %4298 = vmatprep.subr.mxu0 0.0
        %4299 = vmatpush1.xpose.msra.mxu0 0.0
        %4300 = vmatprep.subr.mxu0 0.0
        %4301 = vmatpush1.xpose.msra.mxu0 0.0
        %4302 = vmatprep.subr.mxu0 0.0
        %4303 = vmatpush1.xpose.msra.mxu0 0.0
        %4304 = vmatprep.subr.mxu0 0.0
        %4305 = vmatpush1.xpose.msra.mxu0 0.0
        %4306 = vmatprep.subr.mxu0 0.0
        %4307 = vmatpush1.xpose.msra.mxu0 0.0
        %4308 = vmatprep.subr.mxu0 0.0
        %4309 = vmatpush1.xpose.msra.mxu0 0.0
        %4310 = vmatprep.subr.mxu0 0.0
        %4311 = vmatpush1.xpose.msra.mxu0 0.0
        %4312 = vmatprep.subr.mxu0 0.0
        %4313 = vmatpush1.xpose.msra.mxu0 0.0
        %4314 = vmatprep.subr.mxu0 0.0
        %4315 = vmatpush1.xpose.msra.mxu0 0.0
        %4316 = vmatprep.subr.mxu0 0.0
        %4317 = vmatpush1.xpose.msra.mxu0 %v4284
        %4318 = vmatprep.subr.mxu0 0.0
        %4319 = vmatpush2.xpose.msra.mxu0 0.0
        %4320 = vmatprep.subr.mxu0 0.0
        %4321 = vmatpush2.xpose.msra.mxu0 0.0
        %4322 = vmatprep.subr.mxu0 0.0
        %4323 = vmatpush2.xpose.msra.mxu0 0.0
        %4324 = vmatprep.subr.mxu0 0.0
        %4325 = vmatpush2.xpose.msra.mxu0 0.0
        %4326 = vmatprep.subr.mxu0 0.0
        %4327 = vmatpush2.xpose.msra.mxu0 0.0
        %4328 = vmatprep.subr.mxu0 0.0
        %4329 = vmatpush2.xpose.msra.mxu0 0.0
        %4330 = vmatprep.subr.mxu0 0.0
        %4331 = vmatpush2.xpose.msra.mxu0 0.0
        %4332 = vmatprep.subr.mxu0 0.0
        %4333 = vmatpush2.xpose.msra.mxu0 0.0
        %4334 = vmatprep.subr.mxu0 0.0
        %4335 = vmatpush2.xpose.msra.mxu0 0.0
        %4336 = vmatprep.subr.mxu0 0.0
        %4337 = vmatpush2.xpose.msra.mxu0 0.0
        %4338 = vmatprep.subr.mxu0 0.0
        %4339 = vmatpush2.xpose.msra.mxu0 0.0
        %4340 = vmatprep.subr.mxu0 0.0
        %4341 = vmatpush2.xpose.msra.mxu0 0.0
        %4342 = vmatprep.subr.mxu0 0.0
        %4343 = vmatpush2.xpose.msra.mxu0 0.0
        %4344 = vmatprep.subr.mxu0 0.0
        %4345 = vmatpush2.xpose.msra.mxu0 0.0
        %4346 = vmatprep.subr.mxu0 0.0
        %4347 = vmatpush2.xpose.msra.mxu0 0.0
        %4348 = vmatprep.subr.mxu0 0.0
        %4349 = vmatpush2.xpose.msra.mxu0 0.0
        %4350 = vmatprep.mubr.f32.mxu0 0.0
        %4351 = vmatmul.mubr.f32.gmra.mxu0 %v4281
        %v4352 = vpop.f32.mrf.mxu0
        %v4353 = vadd.f32 0.0, %v4352
        %v4354 = vpop.f32.mrf.mxu0
        %4355 = vdwg.mxu0
        %v4356 = vmul.f32 %v4353, 0.35355338
        %v4357 = vadd.f32 %v4356, %v1075
        %v4358 = vsel %vm1166, %v4357, -inf
        %4359 = vmax.xlane.f32.xlu0 %v4358
        %v4360 = vpop.xlane.xlu0 %4359
        %v4361 = vsub.f32 %v4357, %v4360
        %v4362 = vmul.f32 %v4361, 1.442695
        %v4363 = vpow.pop %v4362
        %v4364 = vsel %vm1166, %v4363, 0.0
        %4365 = vadd.xlane.f32.xlu0 %v4364
        %v4366 = vpop.xlane.xlu0 %4365
        %v4367 = vrcp.pop %v4366
        %v4368 = vmul.f32 %v4363, %v4367
        %4369 = vrot.lane.b32.xlu0 %v4277, 96
        %v4370 = vpop.permute.xlu0 %4369
        %v4373 = vsel %vm1166, %v4368, 0
        %4375 = vmatprep.subr.mxu0 0.0
        %4376 = vmatpush1.msra.mxu0 0.0
        %4377 = vmatprep.subr.mxu0 0.0
        %4378 = vmatpush1.msra.mxu0 0.0
        %4379 = vmatprep.subr.mxu0 0.0
        %4380 = vmatpush1.msra.mxu0 0.0
        %4381 = vmatprep.subr.mxu0 0.0
        %4382 = vmatpush1.msra.mxu0 0.0
        %4383 = vmatprep.subr.mxu0 0.0
        %4384 = vmatpush1.msra.mxu0 0.0
        %4385 = vmatprep.subr.mxu0 0.0
        %4386 = vmatpush1.msra.mxu0 0.0
        %4387 = vmatprep.subr.mxu0 0.0
        %4388 = vmatpush1.msra.mxu0 0.0
        %4389 = vmatprep.subr.mxu0 0.0
        %4390 = vmatpush1.msra.mxu0 0.0
        %4391 = vmatprep.subr.mxu0 0.0
        %4392 = vmatpush1.msra.mxu0 0.0
        %4393 = vmatprep.subr.mxu0 0.0
        %4394 = vmatpush1.msra.mxu0 0.0
        %4395 = vmatprep.subr.mxu0 0.0
        %4396 = vmatpush1.msra.mxu0 0.0
        %4397 = vmatprep.subr.mxu0 0.0
        %4398 = vmatpush1.msra.mxu0 0.0
        %4399 = vmatprep.subr.mxu0 0.0
        %4400 = vmatpush1.msra.mxu0 0.0
        %4401 = vmatprep.subr.mxu0 0.0
        %4402 = vmatpush1.msra.mxu0 0.0
        %4403 = vmatprep.subr.mxu0 0.0
        %4404 = vmatpush1.msra.mxu0 0.0
        %4405 = vmatprep.subr.mxu0 0.0
        %4406 = vmatpush1.msra.mxu0 %v4370
        %4407 = vmatprep.subr.mxu0 0.0
        %4408 = vmatpush2.msra.mxu0 0.0
        %4409 = vmatprep.subr.mxu0 0.0
        %4410 = vmatpush2.msra.mxu0 0.0
        %4411 = vmatprep.subr.mxu0 0.0
        %4412 = vmatpush2.msra.mxu0 0.0
        %4413 = vmatprep.subr.mxu0 0.0
        %4414 = vmatpush2.msra.mxu0 0.0
        %4415 = vmatprep.subr.mxu0 0.0
        %4416 = vmatpush2.msra.mxu0 0.0
        %4417 = vmatprep.subr.mxu0 0.0
        %4418 = vmatpush2.msra.mxu0 0.0
        %4419 = vmatprep.subr.mxu0 0.0
        %4420 = vmatpush2.msra.mxu0 0.0
        %4421 = vmatprep.subr.mxu0 0.0
        %4422 = vmatpush2.msra.mxu0 0.0
        %4423 = vmatprep.subr.mxu0 0.0
        %4424 = vmatpush2.msra.mxu0 0.0
        %4425 = vmatprep.subr.mxu0 0.0
        %4426 = vmatpush2.msra.mxu0 0.0
        %4427 = vmatprep.subr.mxu0 0.0
        %4428 = vmatpush2.msra.mxu0 0.0
        %4429 = vmatprep.subr.mxu0 0.0
        %4430 = vmatpush2.msra.mxu0 0.0
        %4431 = vmatprep.subr.mxu0 0.0
        %4432 = vmatpush2.msra.mxu0 0.0
        %4433 = vmatprep.subr.mxu0 0.0
        %4434 = vmatpush2.msra.mxu0 0.0
        %4435 = vmatprep.subr.mxu0 0.0
        %4436 = vmatpush2.msra.mxu0 0.0
        %4437 = vmatprep.subr.mxu0 0.0
        %4438 = vmatpush2.msra.mxu0 0.0
        %4439 = vmatprep.mubr.f32.mxu0 0.0
        %4440 = vmatmul.mubr.f32.gmra.mxu0 %v4373
        %v4441 = vpop.f32.mrf.mxu0
        %v4442 = vadd.f32 0.0, %v4441
        %v4443 = vpop.f32.mrf.mxu0
        %4444 = vdwg.mxu0
        %4445 = vrot.lane.b32.xlu0 %v4193, 120
        %v4446 = vpop.permute.xlu0 %4445
        %4447 = vrot.lane.b32.xlu0 %v4277, 120
        %v4448 = vpop.permute.xlu0 %4447
        %v4449 = vsel %vm1166, %v4446, 0
        %v4451 = vsel %vm1166, %v4448, 0
        %4453 = vmatprep.subr.mxu0 0.0
        %4454 = vmatpush1.xpose.msra.mxu0 0.0
        %4455 = vmatprep.subr.mxu0 0.0
        %4456 = vmatpush1.xpose.msra.mxu0 0.0
        %4457 = vmatprep.subr.mxu0 0.0
        %4458 = vmatpush1.xpose.msra.mxu0 0.0
        %4459 = vmatprep.subr.mxu0 0.0
        %4460 = vmatpush1.xpose.msra.mxu0 0.0
        %4461 = vmatprep.subr.mxu0 0.0
        %4462 = vmatpush1.xpose.msra.mxu0 0.0
        %4463 = vmatprep.subr.mxu0 0.0
        %4464 = vmatpush1.xpose.msra.mxu0 0.0
        %4465 = vmatprep.subr.mxu0 0.0
        %4466 = vmatpush1.xpose.msra.mxu0 0.0
        %4467 = vmatprep.subr.mxu0 0.0
        %4468 = vmatpush1.xpose.msra.mxu0 0.0
        %4469 = vmatprep.subr.mxu0 0.0
        %4470 = vmatpush1.xpose.msra.mxu0 0.0
        %4471 = vmatprep.subr.mxu0 0.0
        %4472 = vmatpush1.xpose.msra.mxu0 0.0
        %4473 = vmatprep.subr.mxu0 0.0
        %4474 = vmatpush1.xpose.msra.mxu0 0.0
        %4475 = vmatprep.subr.mxu0 0.0
        %4476 = vmatpush1.xpose.msra.mxu0 0.0
        %4477 = vmatprep.subr.mxu0 0.0
        %4478 = vmatpush1.xpose.msra.mxu0 0.0
        %4479 = vmatprep.subr.mxu0 0.0
        %4480 = vmatpush1.xpose.msra.mxu0 0.0
        %4481 = vmatprep.subr.mxu0 0.0
        %4482 = vmatpush1.xpose.msra.mxu0 0.0
        %4483 = vmatprep.subr.mxu0 0.0
        %4484 = vmatpush1.xpose.msra.mxu0 %v4451
        %4485 = vmatprep.subr.mxu0 0.0
        %4486 = vmatpush2.xpose.msra.mxu0 0.0
        %4487 = vmatprep.subr.mxu0 0.0
        %4488 = vmatpush2.xpose.msra.mxu0 0.0
        %4489 = vmatprep.subr.mxu0 0.0
        %4490 = vmatpush2.xpose.msra.mxu0 0.0
        %4491 = vmatprep.subr.mxu0 0.0
        %4492 = vmatpush2.xpose.msra.mxu0 0.0
        %4493 = vmatprep.subr.mxu0 0.0
        %4494 = vmatpush2.xpose.msra.mxu0 0.0
        %4495 = vmatprep.subr.mxu0 0.0
        %4496 = vmatpush2.xpose.msra.mxu0 0.0
        %4497 = vmatprep.subr.mxu0 0.0
        %4498 = vmatpush2.xpose.msra.mxu0 0.0
        %4499 = vmatprep.subr.mxu0 0.0
        %4500 = vmatpush2.xpose.msra.mxu0 0.0
        %4501 = vmatprep.subr.mxu0 0.0
        %4502 = vmatpush2.xpose.msra.mxu0 0.0
        %4503 = vmatprep.subr.mxu0 0.0
        %4504 = vmatpush2.xpose.msra.mxu0 0.0
        %4505 = vmatprep.subr.mxu0 0.0
        %4506 = vmatpush2.xpose.msra.mxu0 0.0
        %4507 = vmatprep.subr.mxu0 0.0
        %4508 = vmatpush2.xpose.msra.mxu0 0.0
        %4509 = vmatprep.subr.mxu0 0.0
        %4510 = vmatpush2.xpose.msra.mxu0 0.0
        %4511 = vmatprep.subr.mxu0 0.0
        %4512 = vmatpush2.xpose.msra.mxu0 0.0
        %4513 = vmatprep.subr.mxu0 0.0
        %4514 = vmatpush2.xpose.msra.mxu0 0.0
        %4515 = vmatprep.subr.mxu0 0.0
        %4516 = vmatpush2.xpose.msra.mxu0 0.0
        %4517 = vmatprep.mubr.f32.mxu0 0.0
        %4518 = vmatmul.mubr.f32.gmra.mxu0 %v4449
        %v4519 = vpop.f32.mrf.mxu0
        %v4520 = vadd.f32 0.0, %v4519
        %v4521 = vpop.f32.mrf.mxu0
        %4522 = vdwg.mxu0
        %v4523 = vmul.f32 %v4520, 0.35355338
        %v4524 = vadd.f32 %v4523, %v1075
        %v4525 = vsel %vm1166, %v4524, -inf
        %4526 = vmax.xlane.f32.xlu0 %v4525
        %v4527 = vpop.xlane.xlu0 %4526
        %v4528 = vsub.f32 %v4524, %v4527
        %v4529 = vmul.f32 %v4528, 1.442695
        %v4530 = vpow.pop %v4529
        %v4531 = vsel %vm1166, %v4530, 0.0
        %4532 = vadd.xlane.f32.xlu0 %v4531
        %v4533 = vpop.xlane.xlu0 %4532
        %v4534 = vrcp.pop %v4533
        %v4535 = vmul.f32 %v4530, %v4534
        %4536 = vrot.lane.b32.xlu0 %v4277, 88
        %v4537 = vpop.permute.xlu0 %4536
        %v4540 = vsel %vm1166, %v4535, 0
        %4542 = vmatprep.subr.mxu0 0.0
        %4543 = vmatpush1.msra.mxu0 0.0
        %4544 = vmatprep.subr.mxu0 0.0
        %4545 = vmatpush1.msra.mxu0 0.0
        %4546 = vmatprep.subr.mxu0 0.0
        %4547 = vmatpush1.msra.mxu0 0.0
        %4548 = vmatprep.subr.mxu0 0.0
        %4549 = vmatpush1.msra.mxu0 0.0
        %4550 = vmatprep.subr.mxu0 0.0
        %4551 = vmatpush1.msra.mxu0 0.0
        %4552 = vmatprep.subr.mxu0 0.0
        %4553 = vmatpush1.msra.mxu0 0.0
        %4554 = vmatprep.subr.mxu0 0.0
        %4555 = vmatpush1.msra.mxu0 0.0
        %4556 = vmatprep.subr.mxu0 0.0
        %4557 = vmatpush1.msra.mxu0 0.0
        %4558 = vmatprep.subr.mxu0 0.0
        %4559 = vmatpush1.msra.mxu0 0.0
        %4560 = vmatprep.subr.mxu0 0.0
        %4561 = vmatpush1.msra.mxu0 0.0
        %4562 = vmatprep.subr.mxu0 0.0
        %4563 = vmatpush1.msra.mxu0 0.0
        %4564 = vmatprep.subr.mxu0 0.0
        %4565 = vmatpush1.msra.mxu0 0.0
        %4566 = vmatprep.subr.mxu0 0.0
        %4567 = vmatpush1.msra.mxu0 0.0
        %4568 = vmatprep.subr.mxu0 0.0
        %4569 = vmatpush1.msra.mxu0 0.0
        %4570 = vmatprep.subr.mxu0 0.0
        %4571 = vmatpush1.msra.mxu0 0.0
        %4572 = vmatprep.subr.mxu0 0.0
        %4573 = vmatpush1.msra.mxu0 %v4537
        %4574 = vmatprep.subr.mxu0 0.0
        %4575 = vmatpush2.msra.mxu0 0.0
        %4576 = vmatprep.subr.mxu0 0.0
        %4577 = vmatpush2.msra.mxu0 0.0
        %4578 = vmatprep.subr.mxu0 0.0
        %4579 = vmatpush2.msra.mxu0 0.0
        %4580 = vmatprep.subr.mxu0 0.0
        %4581 = vmatpush2.msra.mxu0 0.0
        %4582 = vmatprep.subr.mxu0 0.0
        %4583 = vmatpush2.msra.mxu0 0.0
        %4584 = vmatprep.subr.mxu0 0.0
        %4585 = vmatpush2.msra.mxu0 0.0
        %4586 = vmatprep.subr.mxu0 0.0
        %4587 = vmatpush2.msra.mxu0 0.0
        %4588 = vmatprep.subr.mxu0 0.0
        %4589 = vmatpush2.msra.mxu0 0.0
        %4590 = vmatprep.subr.mxu0 0.0
        %4591 = vmatpush2.msra.mxu0 0.0
        %4592 = vmatprep.subr.mxu0 0.0
        %4593 = vmatpush2.msra.mxu0 0.0
        %4594 = vmatprep.subr.mxu0 0.0
        %4595 = vmatpush2.msra.mxu0 0.0
        %4596 = vmatprep.subr.mxu0 0.0
        %4597 = vmatpush2.msra.mxu0 0.0
        %4598 = vmatprep.subr.mxu0 0.0
        %4599 = vmatpush2.msra.mxu0 0.0
        %4600 = vmatprep.subr.mxu0 0.0
        %4601 = vmatpush2.msra.mxu0 0.0
        %4602 = vmatprep.subr.mxu0 0.0
        %4603 = vmatpush2.msra.mxu0 0.0
        %4604 = vmatprep.subr.mxu0 0.0
        %4605 = vmatpush2.msra.mxu0 0.0
        %4606 = vmatprep.mubr.f32.mxu0 0.0
        %4607 = vmatmul.mubr.f32.gmra.mxu0 %v4540
        %v4608 = vpop.f32.mrf.mxu0
        %v4609 = vadd.f32 0.0, %v4608
        %v4610 = vpop.f32.mrf.mxu0
        %4611 = vdwg.mxu0
        %4612 = vrot.lane.b32.xlu0 %v4193, 112
        %v4613 = vpop.permute.xlu0 %4612
        %4614 = vrot.lane.b32.xlu0 %v4277, 112
        %v4615 = vpop.permute.xlu0 %4614
        %v4616 = vsel %vm1166, %v4613, 0
        %v4618 = vsel %vm1166, %v4615, 0
        %4620 = vmatprep.subr.mxu0 0.0
        %4621 = vmatpush1.xpose.msra.mxu0 0.0
        %4622 = vmatprep.subr.mxu0 0.0
        %4623 = vmatpush1.xpose.msra.mxu0 0.0
        %4624 = vmatprep.subr.mxu0 0.0
        %4625 = vmatpush1.xpose.msra.mxu0 0.0
        %4626 = vmatprep.subr.mxu0 0.0
        %4627 = vmatpush1.xpose.msra.mxu0 0.0
        %4628 = vmatprep.subr.mxu0 0.0
        %4629 = vmatpush1.xpose.msra.mxu0 0.0
        %4630 = vmatprep.subr.mxu0 0.0
        %4631 = vmatpush1.xpose.msra.mxu0 0.0
        %4632 = vmatprep.subr.mxu0 0.0
        %4633 = vmatpush1.xpose.msra.mxu0 0.0
        %4634 = vmatprep.subr.mxu0 0.0
        %4635 = vmatpush1.xpose.msra.mxu0 0.0
        %4636 = vmatprep.subr.mxu0 0.0
        %4637 = vmatpush1.xpose.msra.mxu0 0.0
        %4638 = vmatprep.subr.mxu0 0.0
        %4639 = vmatpush1.xpose.msra.mxu0 0.0
        %4640 = vmatprep.subr.mxu0 0.0
        %4641 = vmatpush1.xpose.msra.mxu0 0.0
        %4642 = vmatprep.subr.mxu0 0.0
        %4643 = vmatpush1.xpose.msra.mxu0 0.0
        %4644 = vmatprep.subr.mxu0 0.0
        %4645 = vmatpush1.xpose.msra.mxu0 0.0
        %4646 = vmatprep.subr.mxu0 0.0
        %4647 = vmatpush1.xpose.msra.mxu0 0.0
        %4648 = vmatprep.subr.mxu0 0.0
        %4649 = vmatpush1.xpose.msra.mxu0 0.0
        %4650 = vmatprep.subr.mxu0 0.0
        %4651 = vmatpush1.xpose.msra.mxu0 %v4618
        %4652 = vmatprep.subr.mxu0 0.0
        %4653 = vmatpush2.xpose.msra.mxu0 0.0
        %4654 = vmatprep.subr.mxu0 0.0
        %4655 = vmatpush2.xpose.msra.mxu0 0.0
        %4656 = vmatprep.subr.mxu0 0.0
        %4657 = vmatpush2.xpose.msra.mxu0 0.0
        %4658 = vmatprep.subr.mxu0 0.0
        %4659 = vmatpush2.xpose.msra.mxu0 0.0
        %4660 = vmatprep.subr.mxu0 0.0
        %4661 = vmatpush2.xpose.msra.mxu0 0.0
        %4662 = vmatprep.subr.mxu0 0.0
        %4663 = vmatpush2.xpose.msra.mxu0 0.0
        %4664 = vmatprep.subr.mxu0 0.0
        %4665 = vmatpush2.xpose.msra.mxu0 0.0
        %4666 = vmatprep.subr.mxu0 0.0
        %4667 = vmatpush2.xpose.msra.mxu0 0.0
        %4668 = vmatprep.subr.mxu0 0.0
        %4669 = vmatpush2.xpose.msra.mxu0 0.0
        %4670 = vmatprep.subr.mxu0 0.0
        %4671 = vmatpush2.xpose.msra.mxu0 0.0
        %4672 = vmatprep.subr.mxu0 0.0
        %4673 = vmatpush2.xpose.msra.mxu0 0.0
        %4674 = vmatprep.subr.mxu0 0.0
        %4675 = vmatpush2.xpose.msra.mxu0 0.0
        %4676 = vmatprep.subr.mxu0 0.0
        %4677 = vmatpush2.xpose.msra.mxu0 0.0
        %4678 = vmatprep.subr.mxu0 0.0
        %4679 = vmatpush2.xpose.msra.mxu0 0.0
        %4680 = vmatprep.subr.mxu0 0.0
        %4681 = vmatpush2.xpose.msra.mxu0 0.0
        %4682 = vmatprep.subr.mxu0 0.0
        %4683 = vmatpush2.xpose.msra.mxu0 0.0
        %4684 = vmatprep.mubr.f32.mxu0 0.0
        %4685 = vmatmul.mubr.f32.gmra.mxu0 %v4616
        %v4686 = vpop.f32.mrf.mxu0
        %v4687 = vadd.f32 0.0, %v4686
        %v4688 = vpop.f32.mrf.mxu0
        %4689 = vdwg.mxu0
        %v4690 = vmul.f32 %v4687, 0.35355338
        %v4691 = vadd.f32 %v4690, %v1075
        %v4692 = vsel %vm1166, %v4691, -inf
        %4693 = vmax.xlane.f32.xlu0 %v4692
        %v4694 = vpop.xlane.xlu0 %4693
        %v4695 = vsub.f32 %v4691, %v4694
        %v4696 = vmul.f32 %v4695, 1.442695
        %v4697 = vpow.pop %v4696
        %v4698 = vsel %vm1166, %v4697, 0.0
        %4699 = vadd.xlane.f32.xlu0 %v4698
        %v4700 = vpop.xlane.xlu0 %4699
        %v4701 = vrcp.pop %v4700
        %v4702 = vmul.f32 %v4697, %v4701
        %4703 = vrot.lane.b32.xlu0 %v4277, 80
        %v4704 = vpop.permute.xlu0 %4703
        %v4707 = vsel %vm1166, %v4702, 0
        %4709 = vmatprep.subr.mxu0 0.0
        %4710 = vmatpush1.msra.mxu0 0.0
        %4711 = vmatprep.subr.mxu0 0.0
        %4712 = vmatpush1.msra.mxu0 0.0
        %4713 = vmatprep.subr.mxu0 0.0
        %4714 = vmatpush1.msra.mxu0 0.0
        %4715 = vmatprep.subr.mxu0 0.0
        %4716 = vmatpush1.msra.mxu0 0.0
        %4717 = vmatprep.subr.mxu0 0.0
        %4718 = vmatpush1.msra.mxu0 0.0
        %4719 = vmatprep.subr.mxu0 0.0
        %4720 = vmatpush1.msra.mxu0 0.0
        %4721 = vmatprep.subr.mxu0 0.0
        %4722 = vmatpush1.msra.mxu0 0.0
        %4723 = vmatprep.subr.mxu0 0.0
        %4724 = vmatpush1.msra.mxu0 0.0
        %4725 = vmatprep.subr.mxu0 0.0
        %4726 = vmatpush1.msra.mxu0 0.0
        %4727 = vmatprep.subr.mxu0 0.0
        %4728 = vmatpush1.msra.mxu0 0.0
        %4729 = vmatprep.subr.mxu0 0.0
        %4730 = vmatpush1.msra.mxu0 0.0
        %4731 = vmatprep.subr.mxu0 0.0
        %4732 = vmatpush1.msra.mxu0 0.0
        %4733 = vmatprep.subr.mxu0 0.0
        %4734 = vmatpush1.msra.mxu0 0.0
        %4735 = vmatprep.subr.mxu0 0.0
        %4736 = vmatpush1.msra.mxu0 0.0
        %4737 = vmatprep.subr.mxu0 0.0
        %4738 = vmatpush1.msra.mxu0 0.0
        %4739 = vmatprep.subr.mxu0 0.0
        %4740 = vmatpush1.msra.mxu0 %v4704
        %4741 = vmatprep.subr.mxu0 0.0
        %4742 = vmatpush2.msra.mxu0 0.0
        %4743 = vmatprep.subr.mxu0 0.0
        %4744 = vmatpush2.msra.mxu0 0.0
        %4745 = vmatprep.subr.mxu0 0.0
        %4746 = vmatpush2.msra.mxu0 0.0
        %4747 = vmatprep.subr.mxu0 0.0
        %4748 = vmatpush2.msra.mxu0 0.0
        %4749 = vmatprep.subr.mxu0 0.0
        %4750 = vmatpush2.msra.mxu0 0.0
        %4751 = vmatprep.subr.mxu0 0.0
        %4752 = vmatpush2.msra.mxu0 0.0
        %4753 = vmatprep.subr.mxu0 0.0
        %4754 = vmatpush2.msra.mxu0 0.0
        %4755 = vmatprep.subr.mxu0 0.0
        %4756 = vmatpush2.msra.mxu0 0.0
        %4757 = vmatprep.subr.mxu0 0.0
        %4758 = vmatpush2.msra.mxu0 0.0
        %4759 = vmatprep.subr.mxu0 0.0
        %4760 = vmatpush2.msra.mxu0 0.0
        %4761 = vmatprep.subr.mxu0 0.0
        %4762 = vmatpush2.msra.mxu0 0.0
        %4763 = vmatprep.subr.mxu0 0.0
        %4764 = vmatpush2.msra.mxu0 0.0
        %4765 = vmatprep.subr.mxu0 0.0
        %4766 = vmatpush2.msra.mxu0 0.0
        %4767 = vmatprep.subr.mxu0 0.0
        %4768 = vmatpush2.msra.mxu0 0.0
        %4769 = vmatprep.subr.mxu0 0.0
        %4770 = vmatpush2.msra.mxu0 0.0
        %4771 = vmatprep.subr.mxu0 0.0
        %4772 = vmatpush2.msra.mxu0 0.0
        %4773 = vmatprep.mubr.f32.mxu0 0.0
        %4774 = vmatmul.mubr.f32.gmra.mxu0 %v4707
        %v4775 = vpop.f32.mrf.mxu0
        %v4776 = vadd.f32 0.0, %v4775
        %v4777 = vpop.f32.mrf.mxu0
        %4778 = vdwg.mxu0
        %4779 = vrot.lane.b32.xlu0 %v4193, 104
        %v4780 = vpop.permute.xlu0 %4779
        %4781 = vrot.lane.b32.xlu0 %v4277, 104
        %v4782 = vpop.permute.xlu0 %4781
        %v4783 = vsel %vm1166, %v4780, 0
        %v4785 = vsel %vm1166, %v4782, 0
        %4787 = vmatprep.subr.mxu0 0.0
        %4788 = vmatpush1.xpose.msra.mxu0 0.0
        %4789 = vmatprep.subr.mxu0 0.0
        %4790 = vmatpush1.xpose.msra.mxu0 0.0
        %4791 = vmatprep.subr.mxu0 0.0
        %4792 = vmatpush1.xpose.msra.mxu0 0.0
        %4793 = vmatprep.subr.mxu0 0.0
        %4794 = vmatpush1.xpose.msra.mxu0 0.0
        %4795 = vmatprep.subr.mxu0 0.0
        %4796 = vmatpush1.xpose.msra.mxu0 0.0
        %4797 = vmatprep.subr.mxu0 0.0
        %4798 = vmatpush1.xpose.msra.mxu0 0.0
        %4799 = vmatprep.subr.mxu0 0.0
        %4800 = vmatpush1.xpose.msra.mxu0 0.0
        %4801 = vmatprep.subr.mxu0 0.0
        %4802 = vmatpush1.xpose.msra.mxu0 0.0
        %4803 = vmatprep.subr.mxu0 0.0
        %4804 = vmatpush1.xpose.msra.mxu0 0.0
        %4805 = vmatprep.subr.mxu0 0.0
        %4806 = vmatpush1.xpose.msra.mxu0 0.0
        %4807 = vmatprep.subr.mxu0 0.0
        %4808 = vmatpush1.xpose.msra.mxu0 0.0
        %4809 = vmatprep.subr.mxu0 0.0
        %4810 = vmatpush1.xpose.msra.mxu0 0.0
        %4811 = vmatprep.subr.mxu0 0.0
        %4812 = vmatpush1.xpose.msra.mxu0 0.0
        %4813 = vmatprep.subr.mxu0 0.0
        %4814 = vmatpush1.xpose.msra.mxu0 0.0
        %4815 = vmatprep.subr.mxu0 0.0
        %4816 = vmatpush1.xpose.msra.mxu0 0.0
        %4817 = vmatprep.subr.mxu0 0.0
        %4818 = vmatpush1.xpose.msra.mxu0 %v4785
        %4819 = vmatprep.subr.mxu0 0.0
        %4820 = vmatpush2.xpose.msra.mxu0 0.0
        %4821 = vmatprep.subr.mxu0 0.0
        %4822 = vmatpush2.xpose.msra.mxu0 0.0
        %4823 = vmatprep.subr.mxu0 0.0
        %4824 = vmatpush2.xpose.msra.mxu0 0.0
        %4825 = vmatprep.subr.mxu0 0.0
        %4826 = vmatpush2.xpose.msra.mxu0 0.0
        %4827 = vmatprep.subr.mxu0 0.0
        %4828 = vmatpush2.xpose.msra.mxu0 0.0
        %4829 = vmatprep.subr.mxu0 0.0
        %4830 = vmatpush2.xpose.msra.mxu0 0.0
        %4831 = vmatprep.subr.mxu0 0.0
        %4832 = vmatpush2.xpose.msra.mxu0 0.0
        %4833 = vmatprep.subr.mxu0 0.0
        %4834 = vmatpush2.xpose.msra.mxu0 0.0
        %4835 = vmatprep.subr.mxu0 0.0
        %4836 = vmatpush2.xpose.msra.mxu0 0.0
        %4837 = vmatprep.subr.mxu0 0.0
        %4838 = vmatpush2.xpose.msra.mxu0 0.0
        %4839 = vmatprep.subr.mxu0 0.0
        %4840 = vmatpush2.xpose.msra.mxu0 0.0
        %4841 = vmatprep.subr.mxu0 0.0
        %4842 = vmatpush2.xpose.msra.mxu0 0.0
        %4843 = vmatprep.subr.mxu0 0.0
        %4844 = vmatpush2.xpose.msra.mxu0 0.0
        %4845 = vmatprep.subr.mxu0 0.0
        %4846 = vmatpush2.xpose.msra.mxu0 0.0
        %4847 = vmatprep.subr.mxu0 0.0
        %4848 = vmatpush2.xpose.msra.mxu0 0.0
        %4849 = vmatprep.subr.mxu0 0.0
        %4850 = vmatpush2.xpose.msra.mxu0 0.0
        %4851 = vmatprep.mubr.f32.mxu0 0.0
        %4852 = vmatmul.mubr.f32.gmra.mxu0 %v4783
        %v4853 = vpop.f32.mrf.mxu0
        %v4854 = vadd.f32 0.0, %v4853
        %v4855 = vpop.f32.mrf.mxu0
        %4856 = vdwg.mxu0
        %v4857 = vmul.f32 %v4854, 0.35355338
        %v4858 = vadd.f32 %v4857, %v1075
        %v4859 = vsel %vm1166, %v4858, -inf
        %4860 = vmax.xlane.f32.xlu0 %v4859
        %v4861 = vpop.xlane.xlu0 %4860
        %v4862 = vsub.f32 %v4858, %v4861
        %v4863 = vmul.f32 %v4862, 1.442695
        %v4864 = vpow.pop %v4863
        %v4865 = vsel %vm1166, %v4864, 0.0
        %4866 = vadd.xlane.f32.xlu0 %v4865
        %v4867 = vpop.xlane.xlu0 %4866
        %v4868 = vrcp.pop %v4867
        %v4869 = vmul.f32 %v4864, %v4868
        %4870 = vrot.lane.b32.xlu0 %v4277, 72
        %v4871 = vpop.permute.xlu0 %4870
        %v4874 = vsel %vm1166, %v4869, 0
        %4876 = vmatprep.subr.mxu0 0.0
        %4877 = vmatpush1.msra.mxu0 0.0
        %4878 = vmatprep.subr.mxu0 0.0
        %4879 = vmatpush1.msra.mxu0 0.0
        %4880 = vmatprep.subr.mxu0 0.0
        %4881 = vmatpush1.msra.mxu0 0.0
        %4882 = vmatprep.subr.mxu0 0.0
        %4883 = vmatpush1.msra.mxu0 0.0
        %4884 = vmatprep.subr.mxu0 0.0
        %4885 = vmatpush1.msra.mxu0 0.0
        %4886 = vmatprep.subr.mxu0 0.0
        %4887 = vmatpush1.msra.mxu0 0.0
        %4888 = vmatprep.subr.mxu0 0.0
        %4889 = vmatpush1.msra.mxu0 0.0
        %4890 = vmatprep.subr.mxu0 0.0
        %4891 = vmatpush1.msra.mxu0 0.0
        %4892 = vmatprep.subr.mxu0 0.0
        %4893 = vmatpush1.msra.mxu0 0.0
        %4894 = vmatprep.subr.mxu0 0.0
        %4895 = vmatpush1.msra.mxu0 0.0
        %4896 = vmatprep.subr.mxu0 0.0
        %4897 = vmatpush1.msra.mxu0 0.0
        %4898 = vmatprep.subr.mxu0 0.0
        %4899 = vmatpush1.msra.mxu0 0.0
        %4900 = vmatprep.subr.mxu0 0.0
        %4901 = vmatpush1.msra.mxu0 0.0
        %4902 = vmatprep.subr.mxu0 0.0
        %4903 = vmatpush1.msra.mxu0 0.0
        %4904 = vmatprep.subr.mxu0 0.0
        %4905 = vmatpush1.msra.mxu0 0.0
        %4906 = vmatprep.subr.mxu0 0.0
        %4907 = vmatpush1.msra.mxu0 %v4871
        %4908 = vmatprep.subr.mxu0 0.0
        %4909 = vmatpush2.msra.mxu0 0.0
        %4910 = vmatprep.subr.mxu0 0.0
        %4911 = vmatpush2.msra.mxu0 0.0
        %4912 = vmatprep.subr.mxu0 0.0
        %4913 = vmatpush2.msra.mxu0 0.0
        %4914 = vmatprep.subr.mxu0 0.0
        %4915 = vmatpush2.msra.mxu0 0.0
        %4916 = vmatprep.subr.mxu0 0.0
        %4917 = vmatpush2.msra.mxu0 0.0
        %4918 = vmatprep.subr.mxu0 0.0
        %4919 = vmatpush2.msra.mxu0 0.0
        %4920 = vmatprep.subr.mxu0 0.0
        %4921 = vmatpush2.msra.mxu0 0.0
        %4922 = vmatprep.subr.mxu0 0.0
        %4923 = vmatpush2.msra.mxu0 0.0
        %4924 = vmatprep.subr.mxu0 0.0
        %4925 = vmatpush2.msra.mxu0 0.0
        %4926 = vmatprep.subr.mxu0 0.0
        %4927 = vmatpush2.msra.mxu0 0.0
        %4928 = vmatprep.subr.mxu0 0.0
        %4929 = vmatpush2.msra.mxu0 0.0
        %4930 = vmatprep.subr.mxu0 0.0
        %4931 = vmatpush2.msra.mxu0 0.0
        %4932 = vmatprep.subr.mxu0 0.0
        %4933 = vmatpush2.msra.mxu0 0.0
        %4934 = vmatprep.subr.mxu0 0.0
        %4935 = vmatpush2.msra.mxu0 0.0
        %4936 = vmatprep.subr.mxu0 0.0
        %4937 = vmatpush2.msra.mxu0 0.0
        %4938 = vmatprep.subr.mxu0 0.0
        %4939 = vmatpush2.msra.mxu0 0.0
        %4940 = vmatprep.mubr.f32.mxu0 0.0
        %4941 = vmatmul.mubr.f32.gmra.mxu0 %v4874
        %v4942 = vpop.f32.mrf.mxu0
        %v4943 = vadd.f32 0.0, %v4942
        %v4944 = vpop.f32.mrf.mxu0
        %4945 = vdwg.mxu0
        %4947 = vrot.lane.b32.xlu0 %v4609, 8
        %v4948 = vpop.permute.xlu0 %4947
        %4951 = vrot.lane.b32.xlu0 %v4776, 16
        %v4952 = vpop.permute.xlu0 %4951
        %4955 = vrot.lane.b32.xlu0 %v4943, 24
        %v4956 = vpop.permute.xlu0 %4955
        %v4958 = vsel %vm1166, %v4442, %v4948
        %v4959 = vsel %vm1844, %v4958, %v4952
        %v4960 = vsel %vm1846, %v4959, %v4956
        %v4961 = vld [vmem:[#allocation22] sm:$0xff]
        %v4962 = vld [vmem:[#allocation22 + $0x8] sm:$0xff]
        %v4963 = vld [vmem:[#allocation22 + $0x10] sm:$0xff]
        %v4964 = vld [vmem:[#allocation22 + $0x18] sm:$0xff]
        %v4965 = vld [vmem:[#allocation23] sm:$0x1]
        %v4967 = vlaneseq
        %v4968 = vshrl.u32 %v4967, 7
        %v4969 = vsub.s32 0, %v4968
        %v4970 = vrot.slane %v4965, %v4969
        %v4973 = vsel %vm1089, %v4960, 0
        %4975 = vmatprep.subr.mxu0 0.0
        %4976 = vmatpush1.msra.mxu0 0.0
        %4977 = vmatprep.subr.mxu0 0.0
        %4978 = vmatpush1.msra.mxu0 0.0
        %4979 = vmatprep.subr.mxu0 0.0
        %4980 = vmatpush1.msra.mxu0 0.0
        %4981 = vmatprep.subr.mxu0 0.0
        %4982 = vmatpush1.msra.mxu0 0.0
        %4983 = vmatprep.subr.mxu0 0.0
        %4984 = vmatpush1.msra.mxu0 0.0
        %4985 = vmatprep.subr.mxu0 0.0
        %4986 = vmatpush1.msra.mxu0 0.0
        %4987 = vmatprep.subr.mxu0 0.0
        %4988 = vmatpush1.msra.mxu0 0.0
        %4989 = vmatprep.subr.mxu0 0.0
        %4990 = vmatpush1.msra.mxu0 0.0
        %4991 = vmatprep.subr.mxu0 0.0
        %4992 = vmatpush1.msra.mxu0 0.0
        %4993 = vmatprep.subr.mxu0 0.0
        %4994 = vmatpush1.msra.mxu0 0.0
        %4995 = vmatprep.subr.mxu0 0.0
        %4996 = vmatpush1.msra.mxu0 0.0
        %4997 = vmatprep.subr.mxu0 0.0
        %4998 = vmatpush1.msra.mxu0 0.0
        %4999 = vmatprep.subr.mxu0 0.0
        %5000 = vmatpush1.msra.mxu0 %v4964
        %5001 = vmatprep.subr.mxu0 0.0
        %5002 = vmatpush1.msra.mxu0 %v4963
        %5003 = vmatprep.subr.mxu0 0.0
        %5004 = vmatpush1.msra.mxu0 %v4962
        %5005 = vmatprep.subr.mxu0 0.0
        %5006 = vmatpush1.msra.mxu0 %v4961
        %5007 = vmatprep.subr.mxu0 0.0
        %5008 = vmatpush2.msra.mxu0 0.0
        %5009 = vmatprep.subr.mxu0 0.0
        %5010 = vmatpush2.msra.mxu0 0.0
        %5011 = vmatprep.subr.mxu0 0.0
        %5012 = vmatpush2.msra.mxu0 0.0
        %5013 = vmatprep.subr.mxu0 0.0
        %5014 = vmatpush2.msra.mxu0 0.0
        %5015 = vmatprep.subr.mxu0 0.0
        %5016 = vmatpush2.msra.mxu0 0.0
        %5017 = vmatprep.subr.mxu0 0.0
        %5018 = vmatpush2.msra.mxu0 0.0
        %5019 = vmatprep.subr.mxu0 0.0
        %5020 = vmatpush2.msra.mxu0 0.0
        %5021 = vmatprep.subr.mxu0 0.0
        %5022 = vmatpush2.msra.mxu0 0.0
        %5023 = vmatprep.subr.mxu0 0.0
        %5024 = vmatpush2.msra.mxu0 0.0
        %5025 = vmatprep.subr.mxu0 0.0
        %5026 = vmatpush2.msra.mxu0 0.0
        %5027 = vmatprep.subr.mxu0 0.0
        %5028 = vmatpush2.msra.mxu0 0.0
        %5029 = vmatprep.subr.mxu0 0.0
        %5030 = vmatpush2.msra.mxu0 0.0
        %5031 = vmatprep.subr.mxu0 0.0
        %5032 = vmatpush2.msra.mxu0 0.0
        %5033 = vmatprep.subr.mxu0 0.0
        %5034 = vmatpush2.msra.mxu0 0.0
        %5035 = vmatprep.subr.mxu0 0.0
        %5036 = vmatpush2.msra.mxu0 0.0
        %5037 = vmatprep.subr.mxu0 0.0
        %5038 = vmatpush2.msra.mxu0 0.0
        %5039 = vmatprep.mubr.f32.mxu0 0.0
        %5040 = vmatmul.mubr.f32.gmra.mxu0 %v4973
        %v5041 = vpop.f32.mrf.mxu0
        %v5042 = vadd.f32 %v4970, %v5041
        %v5043 = vpop.f32.mrf.mxu0
        %5044 = vdwg.mxu0
        %v5045 = vadd.f32 %v4111, %v5042
        %v5046 = vsel %vm1089, %v5045, 0.0
        %5047 = vadd.xlane.f32.xlu0 %v5046
        %v5048 = vpop.xlane.xlu0 %5047
        %v5049 = vmul.f32 %v5048, %v1936
        %v5050 = vsub.f32 %v5045, %v5049
        %v5051 = vmul.f32 %v5050, %v5050
        %v5052 = vsel %vm1089, %v5051, 0.0
        %5053 = vadd.xlane.f32.xlu0 %v5052
        %v5054 = vpop.xlane.xlu0 %5053
        %v5055 = vmul.f32 %v5054, %v1936
        %v5056 = vadd.f32 %v5055, 1e-05
        %v5057 = vrsqrt.pop %v5056
        %v5058 = vmul.f32 %v5050, %v5057
        %v5059 = vlaneseq
        %v5060 = vshrl.u32 %v5059, 7
        %v5061 = vsub.s32 2, %v5060
        %v5062 = vrot.slane %v3237, %v5061
        %v5063 = vmul.f32 %v5058, %v5062
        %v5064 = vlaneseq
        %v5065 = vshrl.u32 %v5064, 7
        %v5066 = vsub.s32 3, %v5065
        %v5067 = vrot.slane %v3237, %v5066
        %v5068 = vadd.f32 %v5063, %v5067
        %v5069 = vld [vmem:[%s21] sm:$0xff]
        %v5070 = vld [vmem:[%s21 + $0x8] sm:$0xff]
        %v5071 = vld [vmem:[%s21 + $0x10] sm:$0xff]
        %v5072 = vld [vmem:[%s21 + $0x18] sm:$0xff]
        %v5073 = vld [vmem:[#allocation25] sm:$0x1]
        %v5075 = vlaneseq
        %v5076 = vshrl.u32 %v5075, 7
        %v5077 = vsub.s32 0, %v5076
        %v5078 = vrot.slane %v5073, %v5077
        %v5081 = vsel %vm1089, %v5068, 0
        %5083 = vmatprep.subr.mxu0 0.0
        %5084 = vmatpush1.msra.mxu0 0.0
        %5085 = vmatprep.subr.mxu0 0.0
        %5086 = vmatpush1.msra.mxu0 0.0
        %5087 = vmatprep.subr.mxu0 0.0
        %5088 = vmatpush1.msra.mxu0 0.0
        %5089 = vmatprep.subr.mxu0 0.0
        %5090 = vmatpush1.msra.mxu0 0.0
        %5091 = vmatprep.subr.mxu0 0.0
        %5092 = vmatpush1.msra.mxu0 0.0
        %5093 = vmatprep.subr.mxu0 0.0
        %5094 = vmatpush1.msra.mxu0 0.0
        %5095 = vmatprep.subr.mxu0 0.0
        %5096 = vmatpush1.msra.mxu0 0.0
        %5097 = vmatprep.subr.mxu0 0.0
        %5098 = vmatpush1.msra.mxu0 0.0
        %5099 = vmatprep.subr.mxu0 0.0
        %5100 = vmatpush1.msra.mxu0 0.0
        %5101 = vmatprep.subr.mxu0 0.0
        %5102 = vmatpush1.msra.mxu0 0.0
        %5103 = vmatprep.subr.mxu0 0.0
        %5104 = vmatpush1.msra.mxu0 0.0
        %5105 = vmatprep.subr.mxu0 0.0
        %5106 = vmatpush1.msra.mxu0 0.0
        %5107 = vmatprep.subr.mxu0 0.0
        %5108 = vmatpush1.msra.mxu0 %v5072
        %5109 = vmatprep.subr.mxu0 0.0
        %5110 = vmatpush1.msra.mxu0 %v5071
        %5111 = vmatprep.subr.mxu0 0.0
        %5112 = vmatpush1.msra.mxu0 %v5070
        %5113 = vmatprep.subr.mxu0 0.0
        %5114 = vmatpush1.msra.mxu0 %v5069
        %5115 = vmatprep.subr.mxu0 0.0
        %5116 = vmatpush2.msra.mxu0 0.0
        %5117 = vmatprep.subr.mxu0 0.0
        %5118 = vmatpush2.msra.mxu0 0.0
        %5119 = vmatprep.subr.mxu0 0.0
        %5120 = vmatpush2.msra.mxu0 0.0
        %5121 = vmatprep.subr.mxu0 0.0
        %5122 = vmatpush2.msra.mxu0 0.0
        %5123 = vmatprep.subr.mxu0 0.0
        %5124 = vmatpush2.msra.mxu0 0.0
        %5125 = vmatprep.subr.mxu0 0.0
        %5126 = vmatpush2.msra.mxu0 0.0
        %5127 = vmatprep.subr.mxu0 0.0
        %5128 = vmatpush2.msra.mxu0 0.0
        %5129 = vmatprep.subr.mxu0 0.0
        %5130 = vmatpush2.msra.mxu0 0.0
        %5131 = vmatprep.subr.mxu0 0.0
        %5132 = vmatpush2.msra.mxu0 0.0
        %5133 = vmatprep.subr.mxu0 0.0
        %5134 = vmatpush2.msra.mxu0 0.0
        %5135 = vmatprep.subr.mxu0 0.0
        %5136 = vmatpush2.msra.mxu0 0.0
        %5137 = vmatprep.subr.mxu0 0.0
        %5138 = vmatpush2.msra.mxu0 0.0
        %5139 = vmatprep.subr.mxu0 0.0
        %5140 = vmatpush2.msra.mxu0 0.0
        %5141 = vmatprep.subr.mxu0 0.0
        %5142 = vmatpush2.msra.mxu0 0.0
        %5143 = vmatprep.subr.mxu0 0.0
        %5144 = vmatpush2.msra.mxu0 0.0
        %5145 = vmatprep.subr.mxu0 0.0
        %5146 = vmatpush2.msra.mxu0 0.0
        %5147 = vmatprep.mubr.f32.mxu0 0.0
        %5148 = vmatmul.mubr.f32.gmra.mxu0 %v5081
        %v5149 = vpop.f32.mrf.mxu0
        %v5150 = vadd.f32 %v5078, %v5149
        %v5151 = vpop.f32.mrf.mxu0
        %5152 = vdwg.mxu0
        %v5153 = vmax.f32 %v5150, 0.0
        %v5154 = vld [vmem:[%s23] sm:$0xff]
        %v5155 = vld [vmem:[%s23 + $0x8] sm:$0xff]
        %v5156 = vld [vmem:[%s23 + $0x10] sm:$0xff]
        %v5157 = vld [vmem:[%s23 + $0x18] sm:$0xff]
        %v5158 = vld [vmem:[%s23 + $0x20] sm:$0xff]
        %v5159 = vld [vmem:[%s23 + $0x28] sm:$0xff]
        %v5160 = vld [vmem:[%s23 + $0x30] sm:$0xff]
        %v5161 = vld [vmem:[%s23 + $0x38] sm:$0xff]
        %v5162 = vld [vmem:[%s24] sm:$0x1]
        %v5164 = vlaneseq
        %v5165 = vshrl.u32 %v5164, 7
        %v5166 = vsub.s32 0, %v5165
        %v5167 = vrot.slane %v5162, %v5166
        %v5170 = vsel %vm2057, %v5153, 0
        %5172 = vmatprep.subr.mxu0 0.0
        %5173 = vmatpush1.msra.mxu0 0.0
        %5174 = vmatprep.subr.mxu0 0.0
        %5175 = vmatpush1.msra.mxu0 0.0
        %5176 = vmatprep.subr.mxu0 0.0
        %5177 = vmatpush1.msra.mxu0 0.0
        %5178 = vmatprep.subr.mxu0 0.0
        %5179 = vmatpush1.msra.mxu0 0.0
        %5180 = vmatprep.subr.mxu0 0.0
        %5181 = vmatpush1.msra.mxu0 0.0
        %5182 = vmatprep.subr.mxu0 0.0
        %5183 = vmatpush1.msra.mxu0 0.0
        %5184 = vmatprep.subr.mxu0 0.0
        %5185 = vmatpush1.msra.mxu0 0.0
        %5186 = vmatprep.subr.mxu0 0.0
        %5187 = vmatpush1.msra.mxu0 0.0
        %5188 = vmatprep.subr.mxu0 0.0
        %5189 = vmatpush1.msra.mxu0 %v5161
        %5190 = vmatprep.subr.mxu0 0.0
        %5191 = vmatpush1.msra.mxu0 %v5160
        %5192 = vmatprep.subr.mxu0 0.0
        %5193 = vmatpush1.msra.mxu0 %v5159
        %5194 = vmatprep.subr.mxu0 0.0
        %5195 = vmatpush1.msra.mxu0 %v5158
        %5196 = vmatprep.subr.mxu0 0.0
        %5197 = vmatpush1.msra.mxu0 %v5157
        %5198 = vmatprep.subr.mxu0 0.0
        %5199 = vmatpush1.msra.mxu0 %v5156
        %5200 = vmatprep.subr.mxu0 0.0
        %5201 = vmatpush1.msra.mxu0 %v5155
        %5202 = vmatprep.subr.mxu0 0.0
        %5203 = vmatpush1.msra.mxu0 %v5154
        %5204 = vmatprep.subr.mxu0 0.0
        %5205 = vmatpush2.msra.mxu0 0.0
        %5206 = vmatprep.subr.mxu0 0.0
        %5207 = vmatpush2.msra.mxu0 0.0
        %5208 = vmatprep.subr.mxu0 0.0
        %5209 = vmatpush2.msra.mxu0 0.0
        %5210 = vmatprep.subr.mxu0 0.0
        %5211 = vmatpush2.msra.mxu0 0.0
        %5212 = vmatprep.subr.mxu0 0.0
        %5213 = vmatpush2.msra.mxu0 0.0
        %5214 = vmatprep.subr.mxu0 0.0
        %5215 = vmatpush2.msra.mxu0 0.0
        %5216 = vmatprep.subr.mxu0 0.0
        %5217 = vmatpush2.msra.mxu0 0.0
        %5218 = vmatprep.subr.mxu0 0.0
        %5219 = vmatpush2.msra.mxu0 0.0
        %5220 = vmatprep.subr.mxu0 0.0
        %5221 = vmatpush2.msra.mxu0 0.0
        %5222 = vmatprep.subr.mxu0 0.0
        %5223 = vmatpush2.msra.mxu0 0.0
        %5224 = vmatprep.subr.mxu0 0.0
        %5225 = vmatpush2.msra.mxu0 0.0
        %5226 = vmatprep.subr.mxu0 0.0
        %5227 = vmatpush2.msra.mxu0 0.0
        %5228 = vmatprep.subr.mxu0 0.0
        %5229 = vmatpush2.msra.mxu0 0.0
        %5230 = vmatprep.subr.mxu0 0.0
        %5231 = vmatpush2.msra.mxu0 0.0
        %5232 = vmatprep.subr.mxu0 0.0
        %5233 = vmatpush2.msra.mxu0 0.0
        %5234 = vmatprep.subr.mxu0 0.0
        %5235 = vmatpush2.msra.mxu0 0.0
        %5236 = vmatprep.mubr.f32.mxu0 0.0
        %5237 = vmatmul.mubr.f32.gmra.mxu0 %v5170
        %v5238 = vpop.f32.mrf.mxu0
        %v5239 = vadd.f32 %v5167, %v5238
        %v5240 = vpop.f32.mrf.mxu0
        %5241 = vdwg.mxu0
        %v5242 = vadd.f32 %v5068, %v5239
        %v5243 = vsel %vm1089, %v5242, 0.0
        %5244 = vadd.xlane.f32.xlu0 %v5243
        %v5245 = vpop.xlane.xlu0 %5244
        %v5246 = vmul.f32 %v5245, %v1936
        %v5247 = vsub.f32 %v5242, %v5246
        %v5248 = vmul.f32 %v5247, %v5247
        %v5249 = vsel %vm1089, %v5248, 0.0
        %5250 = vadd.xlane.f32.xlu0 %v5249
        %v5251 = vpop.xlane.xlu0 %5250
        %v5252 = vmul.f32 %v5251, %v1936
        %v5253 = vadd.f32 %v5252, 1e-05
        %v5254 = vrsqrt.pop %v5253
        %v5255 = vmul.f32 %v5247, %v5254
        %v5256 = vlaneseq
        %v5257 = vshrl.u32 %v5256, 7
        %v5258 = vsub.s32 4, %v5257
        %v5259 = vrot.slane %v3237, %v5258
        %v5260 = vmul.f32 %v5255, %v5259
        %v5261 = vlaneseq
        %v5262 = vshrl.u32 %v5261, 7
        %v5263 = vsub.s32 5, %v5262
        %v5264 = vrot.slane %v3237, %v5263
        %v5265 = vadd.f32 %v5260, %v5264
        %s5266 = scalar_lea.vmem %s25, 8
        %v5267 = vld [vmem:[%s5266] sm:$0x3f]
        %s5268 = scalar_lea.vmem %s11, 32
        %v5269 = vld [vmem:[%s5268] sm:$0xff]
        %v5270 = vld [vmem:[%s5268 + $0x8] sm:$0xff]
        %v5271 = vld [vmem:[%s5268 + $0x10] sm:$0xff]
        %v5272 = vld [vmem:[%s5268 + $0x18] sm:$0xff]
        %s5273 = scalar_lea.vmem [#allocation13], 1
        %v5274 = vld [vmem:[%s5273] sm:$0x1]
        %v5276 = vlaneseq
        %v5277 = vshrl.u32 %v5276, 7
        %v5278 = vsub.s32 0, %v5277
        %v5279 = vrot.slane %v5274, %v5278
        %v5282 = vsel %vm1089, %v5265, 0
        %5284 = vmatprep.subr.mxu0 0.0
        %5285 = vmatpush1.msra.mxu0 0.0
        %5286 = vmatprep.subr.mxu0 0.0
        %5287 = vmatpush1.msra.mxu0 0.0
        %5288 = vmatprep.subr.mxu0 0.0
        %5289 = vmatpush1.msra.mxu0 0.0
        %5290 = vmatprep.subr.mxu0 0.0
        %5291 = vmatpush1.msra.mxu0 0.0
        %5292 = vmatprep.subr.mxu0 0.0
        %5293 = vmatpush1.msra.mxu0 0.0
        %5294 = vmatprep.subr.mxu0 0.0
        %5295 = vmatpush1.msra.mxu0 0.0
        %5296 = vmatprep.subr.mxu0 0.0
        %5297 = vmatpush1.msra.mxu0 0.0
        %5298 = vmatprep.subr.mxu0 0.0
        %5299 = vmatpush1.msra.mxu0 0.0
        %5300 = vmatprep.subr.mxu0 0.0
        %5301 = vmatpush1.msra.mxu0 0.0
        %5302 = vmatprep.subr.mxu0 0.0
        %5303 = vmatpush1.msra.mxu0 0.0
        %5304 = vmatprep.subr.mxu0 0.0
        %5305 = vmatpush1.msra.mxu0 0.0
        %5306 = vmatprep.subr.mxu0 0.0
        %5307 = vmatpush1.msra.mxu0 0.0
        %5308 = vmatprep.subr.mxu0 0.0
        %5309 = vmatpush1.msra.mxu0 %v5272
        %5310 = vmatprep.subr.mxu0 0.0
        %5311 = vmatpush1.msra.mxu0 %v5271
        %5312 = vmatprep.subr.mxu0 0.0
        %5313 = vmatpush1.msra.mxu0 %v5270
        %5314 = vmatprep.subr.mxu0 0.0
        %5315 = vmatpush1.msra.mxu0 %v5269
        %5316 = vmatprep.subr.mxu0 0.0
        %5317 = vmatpush2.msra.mxu0 0.0
        %5318 = vmatprep.subr.mxu0 0.0
        %5319 = vmatpush2.msra.mxu0 0.0
        %5320 = vmatprep.subr.mxu0 0.0
        %5321 = vmatpush2.msra.mxu0 0.0
        %5322 = vmatprep.subr.mxu0 0.0
        %5323 = vmatpush2.msra.mxu0 0.0
        %5324 = vmatprep.subr.mxu0 0.0
        %5325 = vmatpush2.msra.mxu0 0.0
        %5326 = vmatprep.subr.mxu0 0.0
        %5327 = vmatpush2.msra.mxu0 0.0
        %5328 = vmatprep.subr.mxu0 0.0
        %5329 = vmatpush2.msra.mxu0 0.0
        %5330 = vmatprep.subr.mxu0 0.0
        %5331 = vmatpush2.msra.mxu0 0.0
        %5332 = vmatprep.subr.mxu0 0.0
        %5333 = vmatpush2.msra.mxu0 0.0
        %5334 = vmatprep.subr.mxu0 0.0
        %5335 = vmatpush2.msra.mxu0 0.0
        %5336 = vmatprep.subr.mxu0 0.0
        %5337 = vmatpush2.msra.mxu0 0.0
        %5338 = vmatprep.subr.mxu0 0.0
        %5339 = vmatpush2.msra.mxu0 0.0
        %5340 = vmatprep.subr.mxu0 0.0
        %5341 = vmatpush2.msra.mxu0 0.0
        %5342 = vmatprep.subr.mxu0 0.0
        %5343 = vmatpush2.msra.mxu0 0.0
        %5344 = vmatprep.subr.mxu0 0.0
        %5345 = vmatpush2.msra.mxu0 0.0
        %5346 = vmatprep.subr.mxu0 0.0
        %5347 = vmatpush2.msra.mxu0 0.0
        %5348 = vmatprep.mubr.f32.mxu0 0.0
        %5349 = vmatmul.mubr.f32.gmra.mxu0 %v5282
        %v5350 = vpop.f32.mrf.mxu0
        %v5351 = vadd.f32 %v5279, %v5350
        %v5352 = vpop.f32.mrf.mxu0
        %5353 = vdwg.mxu0
        %5355 = vrot.lane.b32.xlu0 %v5351, 96
        %v5356 = vpop.permute.xlu0 %5355
        %v5357 = vsel %vm1166, %v5351, 0
        %v5359 = vsel %vm1166, %v5356, 0
        %5361 = vmatprep.subr.mxu0 0.0
        %5362 = vmatpush1.xpose.msra.mxu0 0.0
        %5363 = vmatprep.subr.mxu0 0.0
        %5364 = vmatpush1.xpose.msra.mxu0 0.0
        %5365 = vmatprep.subr.mxu0 0.0
        %5366 = vmatpush1.xpose.msra.mxu0 0.0
        %5367 = vmatprep.subr.mxu0 0.0
        %5368 = vmatpush1.xpose.msra.mxu0 0.0
        %5369 = vmatprep.subr.mxu0 0.0
        %5370 = vmatpush1.xpose.msra.mxu0 0.0
        %5371 = vmatprep.subr.mxu0 0.0
        %5372 = vmatpush1.xpose.msra.mxu0 0.0
        %5373 = vmatprep.subr.mxu0 0.0
        %5374 = vmatpush1.xpose.msra.mxu0 0.0
        %5375 = vmatprep.subr.mxu0 0.0
        %5376 = vmatpush1.xpose.msra.mxu0 0.0
        %5377 = vmatprep.subr.mxu0 0.0
        %5378 = vmatpush1.xpose.msra.mxu0 0.0
        %5379 = vmatprep.subr.mxu0 0.0
        %5380 = vmatpush1.xpose.msra.mxu0 0.0
        %5381 = vmatprep.subr.mxu0 0.0
        %5382 = vmatpush1.xpose.msra.mxu0 0.0
        %5383 = vmatprep.subr.mxu0 0.0
        %5384 = vmatpush1.xpose.msra.mxu0 0.0
        %5385 = vmatprep.subr.mxu0 0.0
        %5386 = vmatpush1.xpose.msra.mxu0 0.0
        %5387 = vmatprep.subr.mxu0 0.0
        %5388 = vmatpush1.xpose.msra.mxu0 0.0
        %5389 = vmatprep.subr.mxu0 0.0
        %5390 = vmatpush1.xpose.msra.mxu0 0.0
        %5391 = vmatprep.subr.mxu0 0.0
        %5392 = vmatpush1.xpose.msra.mxu0 %v5359
        %5393 = vmatprep.subr.mxu0 0.0
        %5394 = vmatpush2.xpose.msra.mxu0 0.0
        %5395 = vmatprep.subr.mxu0 0.0
        %5396 = vmatpush2.xpose.msra.mxu0 0.0
        %5397 = vmatprep.subr.mxu0 0.0
        %5398 = vmatpush2.xpose.msra.mxu0 0.0
        %5399 = vmatprep.subr.mxu0 0.0
        %5400 = vmatpush2.xpose.msra.mxu0 0.0
        %5401 = vmatprep.subr.mxu0 0.0
        %5402 = vmatpush2.xpose.msra.mxu0 0.0
        %5403 = vmatprep.subr.mxu0 0.0
        %5404 = vmatpush2.xpose.msra.mxu0 0.0
        %5405 = vmatprep.subr.mxu0 0.0
        %5406 = vmatpush2.xpose.msra.mxu0 0.0
        %5407 = vmatprep.subr.mxu0 0.0
        %5408 = vmatpush2.xpose.msra.mxu0 0.0
        %5409 = vmatprep.subr.mxu0 0.0
        %5410 = vmatpush2.xpose.msra.mxu0 0.0
        %5411 = vmatprep.subr.mxu0 0.0
        %5412 = vmatpush2.xpose.msra.mxu0 0.0
        %5413 = vmatprep.subr.mxu0 0.0
        %5414 = vmatpush2.xpose.msra.mxu0 0.0
        %5415 = vmatprep.subr.mxu0 0.0
        %5416 = vmatpush2.xpose.msra.mxu0 0.0
        %5417 = vmatprep.subr.mxu0 0.0
        %5418 = vmatpush2.xpose.msra.mxu0 0.0
        %5419 = vmatprep.subr.mxu0 0.0
        %5420 = vmatpush2.xpose.msra.mxu0 0.0
        %5421 = vmatprep.subr.mxu0 0.0
        %5422 = vmatpush2.xpose.msra.mxu0 0.0
        %5423 = vmatprep.subr.mxu0 0.0
        %5424 = vmatpush2.xpose.msra.mxu0 0.0
        %5425 = vmatprep.mubr.f32.mxu0 0.0
        %5426 = vmatmul.mubr.f32.gmra.mxu0 %v5357
        %v5427 = vpop.f32.mrf.mxu0
        %v5428 = vadd.f32 0.0, %v5427
        %v5429 = vpop.f32.mrf.mxu0
        %5430 = vdwg.mxu0
        %v5431 = vmul.f32 %v5428, 0.35355338
        %v5432 = vadd.f32 %v5431, %v1075
        %v5433 = vsel %vm1166, %v5432, -inf
        %5434 = vmax.xlane.f32.xlu0 %v5433
        %v5435 = vpop.xlane.xlu0 %5434
        %v5436 = vsub.f32 %v5432, %v5435
        %v5437 = vmul.f32 %v5436, 1.442695
        %v5438 = vpow.pop %v5437
        %v5439 = vsel %vm1166, %v5438, 0.0
        %5440 = vadd.xlane.f32.xlu0 %v5439
        %v5441 = vpop.xlane.xlu0 %5440
        %v5442 = vrcp.pop %v5441
        %v5443 = vmul.f32 %v5438, %v5442
        %5444 = vrot.lane.b32.xlu0 %v5351, 64
        %v5445 = vpop.permute.xlu0 %5444
        %v5448 = vsel %vm1166, %v5443, 0
        %5450 = vmatprep.subr.mxu0 0.0
        %5451 = vmatpush1.msra.mxu0 0.0
        %5452 = vmatprep.subr.mxu0 0.0
        %5453 = vmatpush1.msra.mxu0 0.0
        %5454 = vmatprep.subr.mxu0 0.0
        %5455 = vmatpush1.msra.mxu0 0.0
        %5456 = vmatprep.subr.mxu0 0.0
        %5457 = vmatpush1.msra.mxu0 0.0
        %5458 = vmatprep.subr.mxu0 0.0
        %5459 = vmatpush1.msra.mxu0 0.0
        %5460 = vmatprep.subr.mxu0 0.0
        %5461 = vmatpush1.msra.mxu0 0.0
        %5462 = vmatprep.subr.mxu0 0.0
        %5463 = vmatpush1.msra.mxu0 0.0
        %5464 = vmatprep.subr.mxu0 0.0
        %5465 = vmatpush1.msra.mxu0 0.0
        %5466 = vmatprep.subr.mxu0 0.0
        %5467 = vmatpush1.msra.mxu0 0.0
        %5468 = vmatprep.subr.mxu0 0.0
        %5469 = vmatpush1.msra.mxu0 0.0
        %5470 = vmatprep.subr.mxu0 0.0
        %5471 = vmatpush1.msra.mxu0 0.0
        %5472 = vmatprep.subr.mxu0 0.0
        %5473 = vmatpush1.msra.mxu0 0.0
        %5474 = vmatprep.subr.mxu0 0.0
        %5475 = vmatpush1.msra.mxu0 0.0
        %5476 = vmatprep.subr.mxu0 0.0
        %5477 = vmatpush1.msra.mxu0 0.0
        %5478 = vmatprep.subr.mxu0 0.0
        %5479 = vmatpush1.msra.mxu0 0.0
        %5480 = vmatprep.subr.mxu0 0.0
        %5481 = vmatpush1.msra.mxu0 %v5445
        %5482 = vmatprep.subr.mxu0 0.0
        %5483 = vmatpush2.msra.mxu0 0.0
        %5484 = vmatprep.subr.mxu0 0.0
        %5485 = vmatpush2.msra.mxu0 0.0
        %5486 = vmatprep.subr.mxu0 0.0
        %5487 = vmatpush2.msra.mxu0 0.0
        %5488 = vmatprep.subr.mxu0 0.0
        %5489 = vmatpush2.msra.mxu0 0.0
        %5490 = vmatprep.subr.mxu0 0.0
        %5491 = vmatpush2.msra.mxu0 0.0
        %5492 = vmatprep.subr.mxu0 0.0
        %5493 = vmatpush2.msra.mxu0 0.0
        %5494 = vmatprep.subr.mxu0 0.0
        %5495 = vmatpush2.msra.mxu0 0.0
        %5496 = vmatprep.subr.mxu0 0.0
        %5497 = vmatpush2.msra.mxu0 0.0
        %5498 = vmatprep.subr.mxu0 0.0
        %5499 = vmatpush2.msra.mxu0 0.0
        %5500 = vmatprep.subr.mxu0 0.0
        %5501 = vmatpush2.msra.mxu0 0.0
        %5502 = vmatprep.subr.mxu0 0.0
        %5503 = vmatpush2.msra.mxu0 0.0
        %5504 = vmatprep.subr.mxu0 0.0
        %5505 = vmatpush2.msra.mxu0 0.0
        %5506 = vmatprep.subr.mxu0 0.0
        %5507 = vmatpush2.msra.mxu0 0.0
        %5508 = vmatprep.subr.mxu0 0.0
        %5509 = vmatpush2.msra.mxu0 0.0
        %5510 = vmatprep.subr.mxu0 0.0
        %5511 = vmatpush2.msra.mxu0 0.0
        %5512 = vmatprep.subr.mxu0 0.0
        %5513 = vmatpush2.msra.mxu0 0.0
        %5514 = vmatprep.mubr.f32.mxu0 0.0
        %5515 = vmatmul.mubr.f32.gmra.mxu0 %v5448
        %v5516 = vpop.f32.mrf.mxu0
        %v5517 = vadd.f32 0.0, %v5516
        %v5518 = vpop.f32.mrf.mxu0
        %5519 = vdwg.mxu0
        %5520 = vrot.lane.b32.xlu0 %v5351, 120
        %v5521 = vpop.permute.xlu0 %5520
        %5522 = vrot.lane.b32.xlu0 %v5351, 88
        %v5523 = vpop.permute.xlu0 %5522
        %v5524 = vsel %vm1166, %v5521, 0
        %v5526 = vsel %vm1166, %v5523, 0
        %5528 = vmatprep.subr.mxu0 0.0
        %5529 = vmatpush1.xpose.msra.mxu0 0.0
        %5530 = vmatprep.subr.mxu0 0.0
        %5531 = vmatpush1.xpose.msra.mxu0 0.0
        %5532 = vmatprep.subr.mxu0 0.0
        %5533 = vmatpush1.xpose.msra.mxu0 0.0
        %5534 = vmatprep.subr.mxu0 0.0
        %5535 = vmatpush1.xpose.msra.mxu0 0.0
        %5536 = vmatprep.subr.mxu0 0.0
        %5537 = vmatpush1.xpose.msra.mxu0 0.0
        %5538 = vmatprep.subr.mxu0 0.0
        %5539 = vmatpush1.xpose.msra.mxu0 0.0
        %5540 = vmatprep.subr.mxu0 0.0
        %5541 = vmatpush1.xpose.msra.mxu0 0.0
        %5542 = vmatprep.subr.mxu0 0.0
        %5543 = vmatpush1.xpose.msra.mxu0 0.0
        %5544 = vmatprep.subr.mxu0 0.0
        %5545 = vmatpush1.xpose.msra.mxu0 0.0
        %5546 = vmatprep.subr.mxu0 0.0
        %5547 = vmatpush1.xpose.msra.mxu0 0.0
        %5548 = vmatprep.subr.mxu0 0.0
        %5549 = vmatpush1.xpose.msra.mxu0 0.0
        %5550 = vmatprep.subr.mxu0 0.0
        %5551 = vmatpush1.xpose.msra.mxu0 0.0
        %5552 = vmatprep.subr.mxu0 0.0
        %5553 = vmatpush1.xpose.msra.mxu0 0.0
        %5554 = vmatprep.subr.mxu0 0.0
        %5555 = vmatpush1.xpose.msra.mxu0 0.0
        %5556 = vmatprep.subr.mxu0 0.0
        %5557 = vmatpush1.xpose.msra.mxu0 0.0
        %5558 = vmatprep.subr.mxu0 0.0
        %5559 = vmatpush1.xpose.msra.mxu0 %v5526
        %5560 = vmatprep.subr.mxu0 0.0
        %5561 = vmatpush2.xpose.msra.mxu0 0.0
        %5562 = vmatprep.subr.mxu0 0.0
        %5563 = vmatpush2.xpose.msra.mxu0 0.0
        %5564 = vmatprep.subr.mxu0 0.0
        %5565 = vmatpush2.xpose.msra.mxu0 0.0
        %5566 = vmatprep.subr.mxu0 0.0
        %5567 = vmatpush2.xpose.msra.mxu0 0.0
        %5568 = vmatprep.subr.mxu0 0.0
        %5569 = vmatpush2.xpose.msra.mxu0 0.0
        %5570 = vmatprep.subr.mxu0 0.0
        %5571 = vmatpush2.xpose.msra.mxu0 0.0
        %5572 = vmatprep.subr.mxu0 0.0
        %5573 = vmatpush2.xpose.msra.mxu0 0.0
        %5574 = vmatprep.subr.mxu0 0.0
        %5575 = vmatpush2.xpose.msra.mxu0 0.0
        %5576 = vmatprep.subr.mxu0 0.0
        %5577 = vmatpush2.xpose.msra.mxu0 0.0
        %5578 = vmatprep.subr.mxu0 0.0
        %5579 = vmatpush2.xpose.msra.mxu0 0.0
        %5580 = vmatprep.subr.mxu0 0.0
        %5581 = vmatpush2.xpose.msra.mxu0 0.0
        %5582 = vmatprep.subr.mxu0 0.0
        %5583 = vmatpush2.xpose.msra.mxu0 0.0
        %5584 = vmatprep.subr.mxu0 0.0
        %5585 = vmatpush2.xpose.msra.mxu0 0.0
        %5586 = vmatprep.subr.mxu0 0.0
        %5587 = vmatpush2.xpose.msra.mxu0 0.0
        %5588 = vmatprep.subr.mxu0 0.0
        %5589 = vmatpush2.xpose.msra.mxu0 0.0
        %5590 = vmatprep.subr.mxu0 0.0
        %5591 = vmatpush2.xpose.msra.mxu0 0.0
        %5592 = vmatprep.mubr.f32.mxu0 0.0
        %5593 = vmatmul.mubr.f32.gmra.mxu0 %v5524
        %v5594 = vpop.f32.mrf.mxu0
        %v5595 = vadd.f32 0.0, %v5594
        %v5596 = vpop.f32.mrf.mxu0
        %5597 = vdwg.mxu0
        %v5598 = vmul.f32 %v5595, 0.35355338
        %v5599 = vadd.f32 %v5598, %v1075
        %v5600 = vsel %vm1166, %v5599, -inf
        %5601 = vmax.xlane.f32.xlu0 %v5600
        %v5602 = vpop.xlane.xlu0 %5601
        %v5603 = vsub.f32 %v5599, %v5602
        %v5604 = vmul.f32 %v5603, 1.442695
        %v5605 = vpow.pop %v5604
        %v5606 = vsel %vm1166, %v5605, 0.0
        %5607 = vadd.xlane.f32.xlu0 %v5606
        %v5608 = vpop.xlane.xlu0 %5607
        %v5609 = vrcp.pop %v5608
        %v5610 = vmul.f32 %v5605, %v5609
        %5611 = vrot.lane.b32.xlu0 %v5351, 56
        %v5612 = vpop.permute.xlu0 %5611
        %v5615 = vsel %vm1166, %v5610, 0
        %5617 = vmatprep.subr.mxu0 0.0
        %5618 = vmatpush1.msra.mxu0 0.0
        %5619 = vmatprep.subr.mxu0 0.0
        %5620 = vmatpush1.msra.mxu0 0.0
        %5621 = vmatprep.subr.mxu0 0.0
        %5622 = vmatpush1.msra.mxu0 0.0
        %5623 = vmatprep.subr.mxu0 0.0
        %5624 = vmatpush1.msra.mxu0 0.0
        %5625 = vmatprep.subr.mxu0 0.0
        %5626 = vmatpush1.msra.mxu0 0.0
        %5627 = vmatprep.subr.mxu0 0.0
        %5628 = vmatpush1.msra.mxu0 0.0
        %5629 = vmatprep.subr.mxu0 0.0
        %5630 = vmatpush1.msra.mxu0 0.0
        %5631 = vmatprep.subr.mxu0 0.0
        %5632 = vmatpush1.msra.mxu0 0.0
        %5633 = vmatprep.subr.mxu0 0.0
        %5634 = vmatpush1.msra.mxu0 0.0
        %5635 = vmatprep.subr.mxu0 0.0
        %5636 = vmatpush1.msra.mxu0 0.0
        %5637 = vmatprep.subr.mxu0 0.0
        %5638 = vmatpush1.msra.mxu0 0.0
        %5639 = vmatprep.subr.mxu0 0.0
        %5640 = vmatpush1.msra.mxu0 0.0
        %5641 = vmatprep.subr.mxu0 0.0
        %5642 = vmatpush1.msra.mxu0 0.0
        %5643 = vmatprep.subr.mxu0 0.0
        %5644 = vmatpush1.msra.mxu0 0.0
        %5645 = vmatprep.subr.mxu0 0.0
        %5646 = vmatpush1.msra.mxu0 0.0
        %5647 = vmatprep.subr.mxu0 0.0
        %5648 = vmatpush1.msra.mxu0 %v5612
        %5649 = vmatprep.subr.mxu0 0.0
        %5650 = vmatpush2.msra.mxu0 0.0
        %5651 = vmatprep.subr.mxu0 0.0
        %5652 = vmatpush2.msra.mxu0 0.0
        %5653 = vmatprep.subr.mxu0 0.0
        %5654 = vmatpush2.msra.mxu0 0.0
        %5655 = vmatprep.subr.mxu0 0.0
        %5656 = vmatpush2.msra.mxu0 0.0
        %5657 = vmatprep.subr.mxu0 0.0
        %5658 = vmatpush2.msra.mxu0 0.0
        %5659 = vmatprep.subr.mxu0 0.0
        %5660 = vmatpush2.msra.mxu0 0.0
        %5661 = vmatprep.subr.mxu0 0.0
        %5662 = vmatpush2.msra.mxu0 0.0
        %5663 = vmatprep.subr.mxu0 0.0
        %5664 = vmatpush2.msra.mxu0 0.0
        %5665 = vmatprep.subr.mxu0 0.0
        %5666 = vmatpush2.msra.mxu0 0.0
        %5667 = vmatprep.subr.mxu0 0.0
        %5668 = vmatpush2.msra.mxu0 0.0
        %5669 = vmatprep.subr.mxu0 0.0
        %5670 = vmatpush2.msra.mxu0 0.0
        %5671 = vmatprep.subr.mxu0 0.0
        %5672 = vmatpush2.msra.mxu0 0.0
        %5673 = vmatprep.subr.mxu0 0.0
        %5674 = vmatpush2.msra.mxu0 0.0
        %5675 = vmatprep.subr.mxu0 0.0
        %5676 = vmatpush2.msra.mxu0 0.0
        %5677 = vmatprep.subr.mxu0 0.0
        %5678 = vmatpush2.msra.mxu0 0.0
        %5679 = vmatprep.subr.mxu0 0.0
        %5680 = vmatpush2.msra.mxu0 0.0
        %5681 = vmatprep.mubr.f32.mxu0 0.0
        %5682 = vmatmul.mubr.f32.gmra.mxu0 %v5615
        %v5683 = vpop.f32.mrf.mxu0
        %v5684 = vadd.f32 0.0, %v5683
        %v5685 = vpop.f32.mrf.mxu0
        %5686 = vdwg.mxu0
        %5687 = vrot.lane.b32.xlu0 %v5351, 112
        %v5688 = vpop.permute.xlu0 %5687
        %5689 = vrot.lane.b32.xlu0 %v5351, 80
        %v5690 = vpop.permute.xlu0 %5689
        %v5691 = vsel %vm1166, %v5688, 0
        %v5693 = vsel %vm1166, %v5690, 0
        %5695 = vmatprep.subr.mxu0 0.0
        %5696 = vmatpush1.xpose.msra.mxu0 0.0
        %5697 = vmatprep.subr.mxu0 0.0
        %5698 = vmatpush1.xpose.msra.mxu0 0.0
        %5699 = vmatprep.subr.mxu0 0.0
        %5700 = vmatpush1.xpose.msra.mxu0 0.0
        %5701 = vmatprep.subr.mxu0 0.0
        %5702 = vmatpush1.xpose.msra.mxu0 0.0
        %5703 = vmatprep.subr.mxu0 0.0
        %5704 = vmatpush1.xpose.msra.mxu0 0.0
        %5705 = vmatprep.subr.mxu0 0.0
        %5706 = vmatpush1.xpose.msra.mxu0 0.0
        %5707 = vmatprep.subr.mxu0 0.0
        %5708 = vmatpush1.xpose.msra.mxu0 0.0
        %5709 = vmatprep.subr.mxu0 0.0
        %5710 = vmatpush1.xpose.msra.mxu0 0.0
        %5711 = vmatprep.subr.mxu0 0.0
        %5712 = vmatpush1.xpose.msra.mxu0 0.0
        %5713 = vmatprep.subr.mxu0 0.0
        %5714 = vmatpush1.xpose.msra.mxu0 0.0
        %5715 = vmatprep.subr.mxu0 0.0
        %5716 = vmatpush1.xpose.msra.mxu0 0.0
        %5717 = vmatprep.subr.mxu0 0.0
        %5718 = vmatpush1.xpose.msra.mxu0 0.0
        %5719 = vmatprep.subr.mxu0 0.0
        %5720 = vmatpush1.xpose.msra.mxu0 0.0
        %5721 = vmatprep.subr.mxu0 0.0
        %5722 = vmatpush1.xpose.msra.mxu0 0.0
        %5723 = vmatprep.subr.mxu0 0.0
        %5724 = vmatpush1.xpose.msra.mxu0 0.0
        %5725 = vmatprep.subr.mxu0 0.0
        %5726 = vmatpush1.xpose.msra.mxu0 %v5693
        %5727 = vmatprep.subr.mxu0 0.0
        %5728 = vmatpush2.xpose.msra.mxu0 0.0
        %5729 = vmatprep.subr.mxu0 0.0
        %5730 = vmatpush2.xpose.msra.mxu0 0.0
        %5731 = vmatprep.subr.mxu0 0.0
        %5732 = vmatpush2.xpose.msra.mxu0 0.0
        %5733 = vmatprep.subr.mxu0 0.0
        %5734 = vmatpush2.xpose.msra.mxu0 0.0
        %5735 = vmatprep.subr.mxu0 0.0
        %5736 = vmatpush2.xpose.msra.mxu0 0.0
        %5737 = vmatprep.subr.mxu0 0.0
        %5738 = vmatpush2.xpose.msra.mxu0 0.0
        %5739 = vmatprep.subr.mxu0 0.0
        %5740 = vmatpush2.xpose.msra.mxu0 0.0
        %5741 = vmatprep.subr.mxu0 0.0
        %5742 = vmatpush2.xpose.msra.mxu0 0.0
        %5743 = vmatprep.subr.mxu0 0.0
        %5744 = vmatpush2.xpose.msra.mxu0 0.0
        %5745 = vmatprep.subr.mxu0 0.0
        %5746 = vmatpush2.xpose.msra.mxu0 0.0
        %5747 = vmatprep.subr.mxu0 0.0
        %5748 = vmatpush2.xpose.msra.mxu0 0.0
        %5749 = vmatprep.subr.mxu0 0.0
        %5750 = vmatpush2.xpose.msra.mxu0 0.0
        %5751 = vmatprep.subr.mxu0 0.0
        %5752 = vmatpush2.xpose.msra.mxu0 0.0
        %5753 = vmatprep.subr.mxu0 0.0
        %5754 = vmatpush2.xpose.msra.mxu0 0.0
        %5755 = vmatprep.subr.mxu0 0.0
        %5756 = vmatpush2.xpose.msra.mxu0 0.0
        %5757 = vmatprep.subr.mxu0 0.0
        %5758 = vmatpush2.xpose.msra.mxu0 0.0
        %5759 = vmatprep.mubr.f32.mxu0 0.0
        %5760 = vmatmul.mubr.f32.gmra.mxu0 %v5691
        %v5761 = vpop.f32.mrf.mxu0
        %v5762 = vadd.f32 0.0, %v5761
        %v5763 = vpop.f32.mrf.mxu0
        %5764 = vdwg.mxu0
        %v5765 = vmul.f32 %v5762, 0.35355338
        %v5766 = vadd.f32 %v5765, %v1075
        %v5767 = vsel %vm1166, %v5766, -inf
        %5768 = vmax.xlane.f32.xlu0 %v5767
        %v5769 = vpop.xlane.xlu0 %5768
        %v5770 = vsub.f32 %v5766, %v5769
        %v5771 = vmul.f32 %v5770, 1.442695
        %v5772 = vpow.pop %v5771
        %v5773 = vsel %vm1166, %v5772, 0.0
        %5774 = vadd.xlane.f32.xlu0 %v5773
        %v5775 = vpop.xlane.xlu0 %5774
        %v5776 = vrcp.pop %v5775
        %v5777 = vmul.f32 %v5772, %v5776
        %5778 = vrot.lane.b32.xlu0 %v5351, 48
        %v5779 = vpop.permute.xlu0 %5778
        %v5782 = vsel %vm1166, %v5777, 0
        %5784 = vmatprep.subr.mxu0 0.0
        %5785 = vmatpush1.msra.mxu0 0.0
        %5786 = vmatprep.subr.mxu0 0.0
        %5787 = vmatpush1.msra.mxu0 0.0
        %5788 = vmatprep.subr.mxu0 0.0
        %5789 = vmatpush1.msra.mxu0 0.0
        %5790 = vmatprep.subr.mxu0 0.0
        %5791 = vmatpush1.msra.mxu0 0.0
        %5792 = vmatprep.subr.mxu0 0.0
        %5793 = vmatpush1.msra.mxu0 0.0
        %5794 = vmatprep.subr.mxu0 0.0
        %5795 = vmatpush1.msra.mxu0 0.0
        %5796 = vmatprep.subr.mxu0 0.0
        %5797 = vmatpush1.msra.mxu0 0.0
        %5798 = vmatprep.subr.mxu0 0.0
        %5799 = vmatpush1.msra.mxu0 0.0
        %5800 = vmatprep.subr.mxu0 0.0
        %5801 = vmatpush1.msra.mxu0 0.0
        %5802 = vmatprep.subr.mxu0 0.0
        %5803 = vmatpush1.msra.mxu0 0.0
        %5804 = vmatprep.subr.mxu0 0.0
        %5805 = vmatpush1.msra.mxu0 0.0
        %5806 = vmatprep.subr.mxu0 0.0
        %5807 = vmatpush1.msra.mxu0 0.0
        %5808 = vmatprep.subr.mxu0 0.0
        %5809 = vmatpush1.msra.mxu0 0.0
        %5810 = vmatprep.subr.mxu0 0.0
        %5811 = vmatpush1.msra.mxu0 0.0
        %5812 = vmatprep.subr.mxu0 0.0
        %5813 = vmatpush1.msra.mxu0 0.0
        %5814 = vmatprep.subr.mxu0 0.0
        %5815 = vmatpush1.msra.mxu0 %v5779
        %5816 = vmatprep.subr.mxu0 0.0
        %5817 = vmatpush2.msra.mxu0 0.0
        %5818 = vmatprep.subr.mxu0 0.0
        %5819 = vmatpush2.msra.mxu0 0.0
        %5820 = vmatprep.subr.mxu0 0.0
        %5821 = vmatpush2.msra.mxu0 0.0
        %5822 = vmatprep.subr.mxu0 0.0
        %5823 = vmatpush2.msra.mxu0 0.0
        %5824 = vmatprep.subr.mxu0 0.0
        %5825 = vmatpush2.msra.mxu0 0.0
        %5826 = vmatprep.subr.mxu0 0.0
        %5827 = vmatpush2.msra.mxu0 0.0
        %5828 = vmatprep.subr.mxu0 0.0
        %5829 = vmatpush2.msra.mxu0 0.0
        %5830 = vmatprep.subr.mxu0 0.0
        %5831 = vmatpush2.msra.mxu0 0.0
        %5832 = vmatprep.subr.mxu0 0.0
        %5833 = vmatpush2.msra.mxu0 0.0
        %5834 = vmatprep.subr.mxu0 0.0
        %5835 = vmatpush2.msra.mxu0 0.0
        %5836 = vmatprep.subr.mxu0 0.0
        %5837 = vmatpush2.msra.mxu0 0.0
        %5838 = vmatprep.subr.mxu0 0.0
        %5839 = vmatpush2.msra.mxu0 0.0
        %5840 = vmatprep.subr.mxu0 0.0
        %5841 = vmatpush2.msra.mxu0 0.0
        %5842 = vmatprep.subr.mxu0 0.0
        %5843 = vmatpush2.msra.mxu0 0.0
        %5844 = vmatprep.subr.mxu0 0.0
        %5845 = vmatpush2.msra.mxu0 0.0
        %5846 = vmatprep.subr.mxu0 0.0
        %5847 = vmatpush2.msra.mxu0 0.0
        %5848 = vmatprep.mubr.f32.mxu0 0.0
        %5849 = vmatmul.mubr.f32.gmra.mxu0 %v5782
        %v5850 = vpop.f32.mrf.mxu0
        %v5851 = vadd.f32 0.0, %v5850
        %v5852 = vpop.f32.mrf.mxu0
        %5853 = vdwg.mxu0
        %5854 = vrot.lane.b32.xlu0 %v5351, 104
        %v5855 = vpop.permute.xlu0 %5854
        %5856 = vrot.lane.b32.xlu0 %v5351, 72
        %v5857 = vpop.permute.xlu0 %5856
        %v5858 = vsel %vm1166, %v5855, 0
        %v5860 = vsel %vm1166, %v5857, 0
        %5862 = vmatprep.subr.mxu0 0.0
        %5863 = vmatpush1.xpose.msra.mxu0 0.0
        %5864 = vmatprep.subr.mxu0 0.0
        %5865 = vmatpush1.xpose.msra.mxu0 0.0
        %5866 = vmatprep.subr.mxu0 0.0
        %5867 = vmatpush1.xpose.msra.mxu0 0.0
        %5868 = vmatprep.subr.mxu0 0.0
        %5869 = vmatpush1.xpose.msra.mxu0 0.0
        %5870 = vmatprep.subr.mxu0 0.0
        %5871 = vmatpush1.xpose.msra.mxu0 0.0
        %5872 = vmatprep.subr.mxu0 0.0
        %5873 = vmatpush1.xpose.msra.mxu0 0.0
        %5874 = vmatprep.subr.mxu0 0.0
        %5875 = vmatpush1.xpose.msra.mxu0 0.0
        %5876 = vmatprep.subr.mxu0 0.0
        %5877 = vmatpush1.xpose.msra.mxu0 0.0
        %5878 = vmatprep.subr.mxu0 0.0
        %5879 = vmatpush1.xpose.msra.mxu0 0.0
        %5880 = vmatprep.subr.mxu0 0.0
        %5881 = vmatpush1.xpose.msra.mxu0 0.0
        %5882 = vmatprep.subr.mxu0 0.0
        %5883 = vmatpush1.xpose.msra.mxu0 0.0
        %5884 = vmatprep.subr.mxu0 0.0
        %5885 = vmatpush1.xpose.msra.mxu0 0.0
        %5886 = vmatprep.subr.mxu0 0.0
        %5887 = vmatpush1.xpose.msra.mxu0 0.0
        %5888 = vmatprep.subr.mxu0 0.0
        %5889 = vmatpush1.xpose.msra.mxu0 0.0
        %5890 = vmatprep.subr.mxu0 0.0
        %5891 = vmatpush1.xpose.msra.mxu0 0.0
        %5892 = vmatprep.subr.mxu0 0.0
        %5893 = vmatpush1.xpose.msra.mxu0 %v5860
        %5894 = vmatprep.subr.mxu0 0.0
        %5895 = vmatpush2.xpose.msra.mxu0 0.0
        %5896 = vmatprep.subr.mxu0 0.0
        %5897 = vmatpush2.xpose.msra.mxu0 0.0
        %5898 = vmatprep.subr.mxu0 0.0
        %5899 = vmatpush2.xpose.msra.mxu0 0.0
        %5900 = vmatprep.subr.mxu0 0.0
        %5901 = vmatpush2.xpose.msra.mxu0 0.0
        %5902 = vmatprep.subr.mxu0 0.0
        %5903 = vmatpush2.xpose.msra.mxu0 0.0
        %5904 = vmatprep.subr.mxu0 0.0
        %5905 = vmatpush2.xpose.msra.mxu0 0.0
        %5906 = vmatprep.subr.mxu0 0.0
        %5907 = vmatpush2.xpose.msra.mxu0 0.0
        %5908 = vmatprep.subr.mxu0 0.0
        %5909 = vmatpush2.xpose.msra.mxu0 0.0
        %5910 = vmatprep.subr.mxu0 0.0
        %5911 = vmatpush2.xpose.msra.mxu0 0.0
        %5912 = vmatprep.subr.mxu0 0.0
        %5913 = vmatpush2.xpose.msra.mxu0 0.0
        %5914 = vmatprep.subr.mxu0 0.0
        %5915 = vmatpush2.xpose.msra.mxu0 0.0
        %5916 = vmatprep.subr.mxu0 0.0
        %5917 = vmatpush2.xpose.msra.mxu0 0.0
        %5918 = vmatprep.subr.mxu0 0.0
        %5919 = vmatpush2.xpose.msra.mxu0 0.0
        %5920 = vmatprep.subr.mxu0 0.0
        %5921 = vmatpush2.xpose.msra.mxu0 0.0
        %5922 = vmatprep.subr.mxu0 0.0
        %5923 = vmatpush2.xpose.msra.mxu0 0.0
        %5924 = vmatprep.subr.mxu0 0.0
        %5925 = vmatpush2.xpose.msra.mxu0 0.0
        %5926 = vmatprep.mubr.f32.mxu0 0.0
        %5927 = vmatmul.mubr.f32.gmra.mxu0 %v5858
        %v5928 = vpop.f32.mrf.mxu0
        %v5929 = vadd.f32 0.0, %v5928
        %v5930 = vpop.f32.mrf.mxu0
        %5931 = vdwg.mxu0
        %v5932 = vmul.f32 %v5929, 0.35355338
        %v5933 = vadd.f32 %v5932, %v1075
        %v5934 = vsel %vm1166, %v5933, -inf
        %5935 = vmax.xlane.f32.xlu0 %v5934
        %v5936 = vpop.xlane.xlu0 %5935
        %v5937 = vsub.f32 %v5933, %v5936
        %v5938 = vmul.f32 %v5937, 1.442695
        %v5939 = vpow.pop %v5938
        %v5940 = vsel %vm1166, %v5939, 0.0
        %5941 = vadd.xlane.f32.xlu0 %v5940
        %v5942 = vpop.xlane.xlu0 %5941
        %v5943 = vrcp.pop %v5942
        %v5944 = vmul.f32 %v5939, %v5943
        %5945 = vrot.lane.b32.xlu0 %v5351, 40
        %v5946 = vpop.permute.xlu0 %5945
        %v5949 = vsel %vm1166, %v5944, 0
        %5951 = vmatprep.subr.mxu0 0.0
        %5952 = vmatpush1.msra.mxu0 0.0
        %5953 = vmatprep.subr.mxu0 0.0
        %5954 = vmatpush1.msra.mxu0 0.0
        %5955 = vmatprep.subr.mxu0 0.0
        %5956 = vmatpush1.msra.mxu0 0.0
        %5957 = vmatprep.subr.mxu0 0.0
        %5958 = vmatpush1.msra.mxu0 0.0
        %5959 = vmatprep.subr.mxu0 0.0
        %5960 = vmatpush1.msra.mxu0 0.0
        %5961 = vmatprep.subr.mxu0 0.0
        %5962 = vmatpush1.msra.mxu0 0.0
        %5963 = vmatprep.subr.mxu0 0.0
        %5964 = vmatpush1.msra.mxu0 0.0
        %5965 = vmatprep.subr.mxu0 0.0
        %5966 = vmatpush1.msra.mxu0 0.0
        %5967 = vmatprep.subr.mxu0 0.0
        %5968 = vmatpush1.msra.mxu0 0.0
        %5969 = vmatprep.subr.mxu0 0.0
        %5970 = vmatpush1.msra.mxu0 0.0
        %5971 = vmatprep.subr.mxu0 0.0
        %5972 = vmatpush1.msra.mxu0 0.0
        %5973 = vmatprep.subr.mxu0 0.0
        %5974 = vmatpush1.msra.mxu0 0.0
        %5975 = vmatprep.subr.mxu0 0.0
        %5976 = vmatpush1.msra.mxu0 0.0
        %5977 = vmatprep.subr.mxu0 0.0
        %5978 = vmatpush1.msra.mxu0 0.0
        %5979 = vmatprep.subr.mxu0 0.0
        %5980 = vmatpush1.msra.mxu0 0.0
        %5981 = vmatprep.subr.mxu0 0.0
        %5982 = vmatpush1.msra.mxu0 %v5946
        %5983 = vmatprep.subr.mxu0 0.0
        %5984 = vmatpush2.msra.mxu0 0.0
        %5985 = vmatprep.subr.mxu0 0.0
        %5986 = vmatpush2.msra.mxu0 0.0
        %5987 = vmatprep.subr.mxu0 0.0
        %5988 = vmatpush2.msra.mxu0 0.0
        %5989 = vmatprep.subr.mxu0 0.0
        %5990 = vmatpush2.msra.mxu0 0.0
        %5991 = vmatprep.subr.mxu0 0.0
        %5992 = vmatpush2.msra.mxu0 0.0
        %5993 = vmatprep.subr.mxu0 0.0
        %5994 = vmatpush2.msra.mxu0 0.0
        %5995 = vmatprep.subr.mxu0 0.0
        %5996 = vmatpush2.msra.mxu0 0.0
        %5997 = vmatprep.subr.mxu0 0.0
        %5998 = vmatpush2.msra.mxu0 0.0
        %5999 = vmatprep.subr.mxu0 0.0
        %6000 = vmatpush2.msra.mxu0 0.0
        %6001 = vmatprep.subr.mxu0 0.0
        %6002 = vmatpush2.msra.mxu0 0.0
        %6003 = vmatprep.subr.mxu0 0.0
        %6004 = vmatpush2.msra.mxu0 0.0
        %6005 = vmatprep.subr.mxu0 0.0
        %6006 = vmatpush2.msra.mxu0 0.0
        %6007 = vmatprep.subr.mxu0 0.0
        %6008 = vmatpush2.msra.mxu0 0.0
        %6009 = vmatprep.subr.mxu0 0.0
        %6010 = vmatpush2.msra.mxu0 0.0
        %6011 = vmatprep.subr.mxu0 0.0
        %6012 = vmatpush2.msra.mxu0 0.0
        %6013 = vmatprep.subr.mxu0 0.0
        %6014 = vmatpush2.msra.mxu0 0.0
        %6015 = vmatprep.mubr.f32.mxu0 0.0
        %6016 = vmatmul.mubr.f32.gmra.mxu0 %v5949
        %v6017 = vpop.f32.mrf.mxu0
        %v6018 = vadd.f32 0.0, %v6017
        %v6019 = vpop.f32.mrf.mxu0
        %6020 = vdwg.mxu0
        %6022 = vrot.lane.b32.xlu0 %v5684, 8
        %v6023 = vpop.permute.xlu0 %6022
        %6026 = vrot.lane.b32.xlu0 %v5851, 16
        %v6027 = vpop.permute.xlu0 %6026
        %6030 = vrot.lane.b32.xlu0 %v6018, 24
        %v6031 = vpop.permute.xlu0 %6030
        %v6033 = vsel %vm1166, %v5517, %v6023
        %v6034 = vsel %vm1844, %v6033, %v6027
        %v6035 = vsel %vm1846, %v6034, %v6031
        %s6036 = scalar_lea.vmem %s13, 32
        %v6037 = vld [vmem:[%s6036] sm:$0xff]
        %v6038 = vld [vmem:[%s6036 + $0x8] sm:$0xff]
        %v6039 = vld [vmem:[%s6036 + $0x10] sm:$0xff]
        %v6040 = vld [vmem:[%s6036 + $0x18] sm:$0xff]
        %s6041 = scalar_lea.vmem [#allocation14], 1
        %v6042 = vld [vmem:[%s6041] sm:$0x1]
        %v6044 = vlaneseq
        %v6045 = vshrl.u32 %v6044, 7
        %v6046 = vsub.s32 0, %v6045
        %v6047 = vrot.slane %v6042, %v6046
        %v6050 = vsel %vm1089, %v6035, 0
        %6052 = vmatprep.subr.mxu0 0.0
        %6053 = vmatpush1.msra.mxu0 0.0
        %6054 = vmatprep.subr.mxu0 0.0
        %6055 = vmatpush1.msra.mxu0 0.0
        %6056 = vmatprep.subr.mxu0 0.0
        %6057 = vmatpush1.msra.mxu0 0.0
        %6058 = vmatprep.subr.mxu0 0.0
        %6059 = vmatpush1.msra.mxu0 0.0
        %6060 = vmatprep.subr.mxu0 0.0
        %6061 = vmatpush1.msra.mxu0 0.0
        %6062 = vmatprep.subr.mxu0 0.0
        %6063 = vmatpush1.msra.mxu0 0.0
        %6064 = vmatprep.subr.mxu0 0.0
        %6065 = vmatpush1.msra.mxu0 0.0
        %6066 = vmatprep.subr.mxu0 0.0
        %6067 = vmatpush1.msra.mxu0 0.0
        %6068 = vmatprep.subr.mxu0 0.0
        %6069 = vmatpush1.msra.mxu0 0.0
        %6070 = vmatprep.subr.mxu0 0.0
        %6071 = vmatpush1.msra.mxu0 0.0
        %6072 = vmatprep.subr.mxu0 0.0
        %6073 = vmatpush1.msra.mxu0 0.0
        %6074 = vmatprep.subr.mxu0 0.0
        %6075 = vmatpush1.msra.mxu0 0.0
        %6076 = vmatprep.subr.mxu0 0.0
        %6077 = vmatpush1.msra.mxu0 %v6040
        %6078 = vmatprep.subr.mxu0 0.0
        %6079 = vmatpush1.msra.mxu0 %v6039
        %6080 = vmatprep.subr.mxu0 0.0
        %6081 = vmatpush1.msra.mxu0 %v6038
        %6082 = vmatprep.subr.mxu0 0.0
        %6083 = vmatpush1.msra.mxu0 %v6037
        %6084 = vmatprep.subr.mxu0 0.0
        %6085 = vmatpush2.msra.mxu0 0.0
        %6086 = vmatprep.subr.mxu0 0.0
        %6087 = vmatpush2.msra.mxu0 0.0
        %6088 = vmatprep.subr.mxu0 0.0
        %6089 = vmatpush2.msra.mxu0 0.0
        %6090 = vmatprep.subr.mxu0 0.0
        %6091 = vmatpush2.msra.mxu0 0.0
        %6092 = vmatprep.subr.mxu0 0.0
        %6093 = vmatpush2.msra.mxu0 0.0
        %6094 = vmatprep.subr.mxu0 0.0
        %6095 = vmatpush2.msra.mxu0 0.0
        %6096 = vmatprep.subr.mxu0 0.0
        %6097 = vmatpush2.msra.mxu0 0.0
        %6098 = vmatprep.subr.mxu0 0.0
        %6099 = vmatpush2.msra.mxu0 0.0
        %6100 = vmatprep.subr.mxu0 0.0
        %6101 = vmatpush2.msra.mxu0 0.0
        %6102 = vmatprep.subr.mxu0 0.0
        %6103 = vmatpush2.msra.mxu0 0.0
        %6104 = vmatprep.subr.mxu0 0.0
        %6105 = vmatpush2.msra.mxu0 0.0
        %6106 = vmatprep.subr.mxu0 0.0
        %6107 = vmatpush2.msra.mxu0 0.0
        %6108 = vmatprep.subr.mxu0 0.0
        %6109 = vmatpush2.msra.mxu0 0.0
        %6110 = vmatprep.subr.mxu0 0.0
        %6111 = vmatpush2.msra.mxu0 0.0
        %6112 = vmatprep.subr.mxu0 0.0
        %6113 = vmatpush2.msra.mxu0 0.0
        %6114 = vmatprep.subr.mxu0 0.0
        %6115 = vmatpush2.msra.mxu0 0.0
        %6116 = vmatprep.mubr.f32.mxu0 0.0
        %6117 = vmatmul.mubr.f32.gmra.mxu0 %v6050
        %v6118 = vpop.f32.mrf.mxu0
        %v6119 = vadd.f32 %v6047, %v6118
        %v6120 = vpop.f32.mrf.mxu0
        %6121 = vdwg.mxu0
        %v6122 = vadd.f32 %v5265, %v6119
        %v6123 = vsel %vm1089, %v6122, 0.0
        %6124 = vadd.xlane.f32.xlu0 %v6123
        %v6125 = vpop.xlane.xlu0 %6124
        %v6126 = vmul.f32 %v6125, %v1936
        %v6127 = vsub.f32 %v6122, %v6126
        %v6128 = vmul.f32 %v6127, %v6127
        %v6129 = vsel %vm1089, %v6128, 0.0
        %6130 = vadd.xlane.f32.xlu0 %v6129
        %v6131 = vpop.xlane.xlu0 %6130
        %v6132 = vmul.f32 %v6131, %v1936
        %v6133 = vadd.f32 %v6132, 1e-05
        %v6134 = vrsqrt.pop %v6133
        %v6135 = vmul.f32 %v6127, %v6134
        %v6136 = vlaneseq
        %v6137 = vshrl.u32 %v6136, 7
        %v6138 = vsub.s32 0, %v6137
        %v6139 = vrot.slane %v5267, %v6138
        %v6140 = vmul.f32 %v6135, %v6139
        %v6141 = vlaneseq
        %v6142 = vshrl.u32 %v6141, 7
        %v6143 = vsub.s32 1, %v6142
        %v6144 = vrot.slane %v5267, %v6143
        %v6145 = vadd.f32 %v6140, %v6144
        %s6146 = scalar_lea.vmem [#allocation16], 32
        %v6147 = vld [vmem:[%s6146] sm:$0xff]
        %v6148 = vld [vmem:[%s6146 + $0x8] sm:$0xff]
        %v6149 = vld [vmem:[%s6146 + $0x10] sm:$0xff]
        %v6150 = vld [vmem:[%s6146 + $0x18] sm:$0xff]
        %s6151 = scalar_lea.vmem [#allocation17], 1
        %v6152 = vld [vmem:[%s6151] sm:$0x1]
        %v6154 = vlaneseq
        %v6155 = vshrl.u32 %v6154, 7
        %v6156 = vsub.s32 0, %v6155
        %v6157 = vrot.slane %v6152, %v6156
        %v6160 = vsel %vm1089, %v6145, 0
        %6162 = vmatprep.subr.mxu0 0.0
        %6163 = vmatpush1.msra.mxu0 0.0
        %6164 = vmatprep.subr.mxu0 0.0
        %6165 = vmatpush1.msra.mxu0 0.0
        %6166 = vmatprep.subr.mxu0 0.0
        %6167 = vmatpush1.msra.mxu0 0.0
        %6168 = vmatprep.subr.mxu0 0.0
        %6169 = vmatpush1.msra.mxu0 0.0
        %6170 = vmatprep.subr.mxu0 0.0
        %6171 = vmatpush1.msra.mxu0 0.0
        %6172 = vmatprep.subr.mxu0 0.0
        %6173 = vmatpush1.msra.mxu0 0.0
        %6174 = vmatprep.subr.mxu0 0.0
        %6175 = vmatpush1.msra.mxu0 0.0
        %6176 = vmatprep.subr.mxu0 0.0
        %6177 = vmatpush1.msra.mxu0 0.0
        %6178 = vmatprep.subr.mxu0 0.0
        %6179 = vmatpush1.msra.mxu0 0.0
        %6180 = vmatprep.subr.mxu0 0.0
        %6181 = vmatpush1.msra.mxu0 0.0
        %6182 = vmatprep.subr.mxu0 0.0
        %6183 = vmatpush1.msra.mxu0 0.0
        %6184 = vmatprep.subr.mxu0 0.0
        %6185 = vmatpush1.msra.mxu0 0.0
        %6186 = vmatprep.subr.mxu0 0.0
        %6187 = vmatpush1.msra.mxu0 %v6150
        %6188 = vmatprep.subr.mxu0 0.0
        %6189 = vmatpush1.msra.mxu0 %v6149
        %6190 = vmatprep.subr.mxu0 0.0
        %6191 = vmatpush1.msra.mxu0 %v6148
        %6192 = vmatprep.subr.mxu0 0.0
        %6193 = vmatpush1.msra.mxu0 %v6147
        %6194 = vmatprep.subr.mxu0 0.0
        %6195 = vmatpush2.msra.mxu0 0.0
        %6196 = vmatprep.subr.mxu0 0.0
        %6197 = vmatpush2.msra.mxu0 0.0
        %6198 = vmatprep.subr.mxu0 0.0
        %6199 = vmatpush2.msra.mxu0 0.0
        %6200 = vmatprep.subr.mxu0 0.0
        %6201 = vmatpush2.msra.mxu0 0.0
        %6202 = vmatprep.subr.mxu0 0.0
        %6203 = vmatpush2.msra.mxu0 0.0
        %6204 = vmatprep.subr.mxu0 0.0
        %6205 = vmatpush2.msra.mxu0 0.0
        %6206 = vmatprep.subr.mxu0 0.0
        %6207 = vmatpush2.msra.mxu0 0.0
        %6208 = vmatprep.subr.mxu0 0.0
        %6209 = vmatpush2.msra.mxu0 0.0
        %6210 = vmatprep.subr.mxu0 0.0
        %6211 = vmatpush2.msra.mxu0 0.0
        %6212 = vmatprep.subr.mxu0 0.0
        %6213 = vmatpush2.msra.mxu0 0.0
        %6214 = vmatprep.subr.mxu0 0.0
        %6215 = vmatpush2.msra.mxu0 0.0
        %6216 = vmatprep.subr.mxu0 0.0
        %6217 = vmatpush2.msra.mxu0 0.0
        %6218 = vmatprep.subr.mxu0 0.0
        %6219 = vmatpush2.msra.mxu0 0.0
        %6220 = vmatprep.subr.mxu0 0.0
        %6221 = vmatpush2.msra.mxu0 0.0
        %6222 = vmatprep.subr.mxu0 0.0
        %6223 = vmatpush2.msra.mxu0 0.0
        %6224 = vmatprep.subr.mxu0 0.0
        %6225 = vmatpush2.msra.mxu0 0.0
        %6226 = vmatprep.mubr.f32.mxu0 0.0
        %6227 = vmatmul.mubr.f32.gmra.mxu0 %v6160
        %v6228 = vpop.f32.mrf.mxu0
        %v6229 = vadd.f32 %v6157, %v6228
        %v6230 = vpop.f32.mrf.mxu0
        %6231 = vdwg.mxu0
        %s6232 = scalar_lea.vmem [#allocation19], 32
        %v6233 = vld [vmem:[%s6232] sm:$0xff]
        %v6234 = vld [vmem:[%s6232 + $0x8] sm:$0xff]
        %v6235 = vld [vmem:[%s6232 + $0x10] sm:$0xff]
        %v6236 = vld [vmem:[%s6232 + $0x18] sm:$0xff]
        %s6237 = scalar_lea.vmem [#allocation20], 1
        %v6238 = vld [vmem:[%s6237] sm:$0x1]
        %v6240 = vlaneseq
        %v6241 = vshrl.u32 %v6240, 7
        %v6242 = vsub.s32 0, %v6241
        %v6243 = vrot.slane %v6238, %v6242
        %6245 = vmatprep.subr.mxu0 0.0
        %6246 = vmatpush1.msra.mxu0 0.0
        %6247 = vmatprep.subr.mxu0 0.0
        %6248 = vmatpush1.msra.mxu0 0.0
        %6249 = vmatprep.subr.mxu0 0.0
        %6250 = vmatpush1.msra.mxu0 0.0
        %6251 = vmatprep.subr.mxu0 0.0
        %6252 = vmatpush1.msra.mxu0 0.0
        %6253 = vmatprep.subr.mxu0 0.0
        %6254 = vmatpush1.msra.mxu0 0.0
        %6255 = vmatprep.subr.mxu0 0.0
        %6256 = vmatpush1.msra.mxu0 0.0
        %6257 = vmatprep.subr.mxu0 0.0
        %6258 = vmatpush1.msra.mxu0 0.0
        %6259 = vmatprep.subr.mxu0 0.0
        %6260 = vmatpush1.msra.mxu0 0.0
        %6261 = vmatprep.subr.mxu0 0.0
        %6262 = vmatpush1.msra.mxu0 0.0
        %6263 = vmatprep.subr.mxu0 0.0
        %6264 = vmatpush1.msra.mxu0 0.0
        %6265 = vmatprep.subr.mxu0 0.0
        %6266 = vmatpush1.msra.mxu0 0.0
        %6267 = vmatprep.subr.mxu0 0.0
        %6268 = vmatpush1.msra.mxu0 0.0
        %6269 = vmatprep.subr.mxu0 0.0
        %6270 = vmatpush1.msra.mxu0 %v6236
        %6271 = vmatprep.subr.mxu0 0.0
        %6272 = vmatpush1.msra.mxu0 %v6235
        %6273 = vmatprep.subr.mxu0 0.0
        %6274 = vmatpush1.msra.mxu0 %v6234
        %6275 = vmatprep.subr.mxu0 0.0
        %6276 = vmatpush1.msra.mxu0 %v6233
        %6277 = vmatprep.subr.mxu0 0.0
        %6278 = vmatpush2.msra.mxu0 0.0
        %6279 = vmatprep.subr.mxu0 0.0
        %6280 = vmatpush2.msra.mxu0 0.0
        %6281 = vmatprep.subr.mxu0 0.0
        %6282 = vmatpush2.msra.mxu0 0.0
        %6283 = vmatprep.subr.mxu0 0.0
        %6284 = vmatpush2.msra.mxu0 0.0
        %6285 = vmatprep.subr.mxu0 0.0
        %6286 = vmatpush2.msra.mxu0 0.0
        %6287 = vmatprep.subr.mxu0 0.0
        %6288 = vmatpush2.msra.mxu0 0.0
        %6289 = vmatprep.subr.mxu0 0.0
        %6290 = vmatpush2.msra.mxu0 0.0
        %6291 = vmatprep.subr.mxu0 0.0
        %6292 = vmatpush2.msra.mxu0 0.0
        %6293 = vmatprep.subr.mxu0 0.0
        %6294 = vmatpush2.msra.mxu0 0.0
        %6295 = vmatprep.subr.mxu0 0.0
        %6296 = vmatpush2.msra.mxu0 0.0
        %6297 = vmatprep.subr.mxu0 0.0
        %6298 = vmatpush2.msra.mxu0 0.0
        %6299 = vmatprep.subr.mxu0 0.0
        %6300 = vmatpush2.msra.mxu0 0.0
        %6301 = vmatprep.subr.mxu0 0.0
        %6302 = vmatpush2.msra.mxu0 0.0
        %6303 = vmatprep.subr.mxu0 0.0
        %6304 = vmatpush2.msra.mxu0 0.0
        %6305 = vmatprep.subr.mxu0 0.0
        %6306 = vmatpush2.msra.mxu0 0.0
        %6307 = vmatprep.subr.mxu0 0.0
        %6308 = vmatpush2.msra.mxu0 0.0
        %6309 = vmatprep.mubr.f32.mxu0 0.0
        %6310 = vmatmul.mubr.f32.gmra.mxu0 %v4208
        %v6311 = vpop.f32.mrf.mxu0
        %v6312 = vadd.f32 %v6243, %v6311
        %v6313 = vpop.f32.mrf.mxu0
        %6314 = vdwg.mxu0
        %v6316 = vsel %vm1166, %v6229, 0
        %v6319 = vsel %vm1166, %v6312, 0
        %6321 = vmatprep.subr.mxu0 0.0
        %6322 = vmatpush1.xpose.msra.mxu0 0.0
        %6323 = vmatprep.subr.mxu0 0.0
        %6324 = vmatpush1.xpose.msra.mxu0 0.0
        %6325 = vmatprep.subr.mxu0 0.0
        %6326 = vmatpush1.xpose.msra.mxu0 0.0
        %6327 = vmatprep.subr.mxu0 0.0
        %6328 = vmatpush1.xpose.msra.mxu0 0.0
        %6329 = vmatprep.subr.mxu0 0.0
        %6330 = vmatpush1.xpose.msra.mxu0 0.0
        %6331 = vmatprep.subr.mxu0 0.0
        %6332 = vmatpush1.xpose.msra.mxu0 0.0
        %6333 = vmatprep.subr.mxu0 0.0
        %6334 = vmatpush1.xpose.msra.mxu0 0.0
        %6335 = vmatprep.subr.mxu0 0.0
        %6336 = vmatpush1.xpose.msra.mxu0 0.0
        %6337 = vmatprep.subr.mxu0 0.0
        %6338 = vmatpush1.xpose.msra.mxu0 0.0
        %6339 = vmatprep.subr.mxu0 0.0
        %6340 = vmatpush1.xpose.msra.mxu0 0.0
        %6341 = vmatprep.subr.mxu0 0.0
        %6342 = vmatpush1.xpose.msra.mxu0 0.0
        %6343 = vmatprep.subr.mxu0 0.0
        %6344 = vmatpush1.xpose.msra.mxu0 0.0
        %6345 = vmatprep.subr.mxu0 0.0
        %6346 = vmatpush1.xpose.msra.mxu0 0.0
        %6347 = vmatprep.subr.mxu0 0.0
        %6348 = vmatpush1.xpose.msra.mxu0 0.0
        %6349 = vmatprep.subr.mxu0 0.0
        %6350 = vmatpush1.xpose.msra.mxu0 0.0
        %6351 = vmatprep.subr.mxu0 0.0
        %6352 = vmatpush1.xpose.msra.mxu0 %v6319
        %6353 = vmatprep.subr.mxu0 0.0
        %6354 = vmatpush2.xpose.msra.mxu0 0.0
        %6355 = vmatprep.subr.mxu0 0.0
        %6356 = vmatpush2.xpose.msra.mxu0 0.0
        %6357 = vmatprep.subr.mxu0 0.0
        %6358 = vmatpush2.xpose.msra.mxu0 0.0
        %6359 = vmatprep.subr.mxu0 0.0
        %6360 = vmatpush2.xpose.msra.mxu0 0.0
        %6361 = vmatprep.subr.mxu0 0.0
        %6362 = vmatpush2.xpose.msra.mxu0 0.0
        %6363 = vmatprep.subr.mxu0 0.0
        %6364 = vmatpush2.xpose.msra.mxu0 0.0
        %6365 = vmatprep.subr.mxu0 0.0
        %6366 = vmatpush2.xpose.msra.mxu0 0.0
        %6367 = vmatprep.subr.mxu0 0.0
        %6368 = vmatpush2.xpose.msra.mxu0 0.0
        %6369 = vmatprep.subr.mxu0 0.0
        %6370 = vmatpush2.xpose.msra.mxu0 0.0
        %6371 = vmatprep.subr.mxu0 0.0
        %6372 = vmatpush2.xpose.msra.mxu0 0.0
        %6373 = vmatprep.subr.mxu0 0.0
        %6374 = vmatpush2.xpose.msra.mxu0 0.0
        %6375 = vmatprep.subr.mxu0 0.0
        %6376 = vmatpush2.xpose.msra.mxu0 0.0
        %6377 = vmatprep.subr.mxu0 0.0
        %6378 = vmatpush2.xpose.msra.mxu0 0.0
        %6379 = vmatprep.subr.mxu0 0.0
        %6380 = vmatpush2.xpose.msra.mxu0 0.0
        %6381 = vmatprep.subr.mxu0 0.0
        %6382 = vmatpush2.xpose.msra.mxu0 0.0
        %6383 = vmatprep.subr.mxu0 0.0
        %6384 = vmatpush2.xpose.msra.mxu0 0.0
        %6385 = vmatprep.mubr.f32.mxu0 0.0
        %6386 = vmatmul.mubr.f32.gmra.mxu0 %v6316
        %v6387 = vpop.f32.mrf.mxu0
        %v6388 = vadd.f32 0.0, %v6387
        %v6389 = vpop.f32.mrf.mxu0
        %6390 = vdwg.mxu0
        %v6391 = vmul.f32 %v6388, 0.35355338
        %v6392 = vadd.f32 %v6391, %v1075
        %v6393 = vsel %vm1166, %v6392, -inf
        %6394 = vmax.xlane.f32.xlu0 %v6393
        %v6395 = vpop.xlane.xlu0 %6394
        %v6396 = vsub.f32 %v6392, %v6395
        %v6397 = vmul.f32 %v6396, 1.442695
        %v6398 = vpow.pop %v6397
        %v6399 = vsel %vm1166, %v6398, 0.0
        %6400 = vadd.xlane.f32.xlu0 %v6399
        %v6401 = vpop.xlane.xlu0 %6400
        %v6402 = vrcp.pop %v6401
        %v6403 = vmul.f32 %v6398, %v6402
        %6404 = vrot.lane.b32.xlu0 %v6312, 96
        %v6405 = vpop.permute.xlu0 %6404
        %v6408 = vsel %vm1166, %v6403, 0
        %6410 = vmatprep.subr.mxu0 0.0
        %6411 = vmatpush1.msra.mxu0 0.0
        %6412 = vmatprep.subr.mxu0 0.0
        %6413 = vmatpush1.msra.mxu0 0.0
        %6414 = vmatprep.subr.mxu0 0.0
        %6415 = vmatpush1.msra.mxu0 0.0
        %6416 = vmatprep.subr.mxu0 0.0
        %6417 = vmatpush1.msra.mxu0 0.0
        %6418 = vmatprep.subr.mxu0 0.0
        %6419 = vmatpush1.msra.mxu0 0.0
        %6420 = vmatprep.subr.mxu0 0.0
        %6421 = vmatpush1.msra.mxu0 0.0
        %6422 = vmatprep.subr.mxu0 0.0
        %6423 = vmatpush1.msra.mxu0 0.0
        %6424 = vmatprep.subr.mxu0 0.0
        %6425 = vmatpush1.msra.mxu0 0.0
        %6426 = vmatprep.subr.mxu0 0.0
        %6427 = vmatpush1.msra.mxu0 0.0
        %6428 = vmatprep.subr.mxu0 0.0
        %6429 = vmatpush1.msra.mxu0 0.0
        %6430 = vmatprep.subr.mxu0 0.0
        %6431 = vmatpush1.msra.mxu0 0.0
        %6432 = vmatprep.subr.mxu0 0.0
        %6433 = vmatpush1.msra.mxu0 0.0
        %6434 = vmatprep.subr.mxu0 0.0
        %6435 = vmatpush1.msra.mxu0 0.0
        %6436 = vmatprep.subr.mxu0 0.0
        %6437 = vmatpush1.msra.mxu0 0.0
        %6438 = vmatprep.subr.mxu0 0.0
        %6439 = vmatpush1.msra.mxu0 0.0
        %6440 = vmatprep.subr.mxu0 0.0
        %6441 = vmatpush1.msra.mxu0 %v6405
        %6442 = vmatprep.subr.mxu0 0.0
        %6443 = vmatpush2.msra.mxu0 0.0
        %6444 = vmatprep.subr.mxu0 0.0
        %6445 = vmatpush2.msra.mxu0 0.0
        %6446 = vmatprep.subr.mxu0 0.0
        %6447 = vmatpush2.msra.mxu0 0.0
        %6448 = vmatprep.subr.mxu0 0.0
        %6449 = vmatpush2.msra.mxu0 0.0
        %6450 = vmatprep.subr.mxu0 0.0
        %6451 = vmatpush2.msra.mxu0 0.0
        %6452 = vmatprep.subr.mxu0 0.0
        %6453 = vmatpush2.msra.mxu0 0.0
        %6454 = vmatprep.subr.mxu0 0.0
        %6455 = vmatpush2.msra.mxu0 0.0
        %6456 = vmatprep.subr.mxu0 0.0
        %6457 = vmatpush2.msra.mxu0 0.0
        %6458 = vmatprep.subr.mxu0 0.0
        %6459 = vmatpush2.msra.mxu0 0.0
        %6460 = vmatprep.subr.mxu0 0.0
        %6461 = vmatpush2.msra.mxu0 0.0
        %6462 = vmatprep.subr.mxu0 0.0
        %6463 = vmatpush2.msra.mxu0 0.0
        %6464 = vmatprep.subr.mxu0 0.0
        %6465 = vmatpush2.msra.mxu0 0.0
        %6466 = vmatprep.subr.mxu0 0.0
        %6467 = vmatpush2.msra.mxu0 0.0
        %6468 = vmatprep.subr.mxu0 0.0
        %6469 = vmatpush2.msra.mxu0 0.0
        %6470 = vmatprep.subr.mxu0 0.0
        %6471 = vmatpush2.msra.mxu0 0.0
        %6472 = vmatprep.subr.mxu0 0.0
        %6473 = vmatpush2.msra.mxu0 0.0
        %6474 = vmatprep.mubr.f32.mxu0 0.0
        %6475 = vmatmul.mubr.f32.gmra.mxu0 %v6408
        %v6476 = vpop.f32.mrf.mxu0
        %v6477 = vadd.f32 0.0, %v6476
        %v6478 = vpop.f32.mrf.mxu0
        %6479 = vdwg.mxu0
        %6480 = vrot.lane.b32.xlu0 %v6229, 120
        %v6481 = vpop.permute.xlu0 %6480
        %6482 = vrot.lane.b32.xlu0 %v6312, 120
        %v6483 = vpop.permute.xlu0 %6482
        %v6484 = vsel %vm1166, %v6481, 0
        %v6486 = vsel %vm1166, %v6483, 0
        %6488 = vmatprep.subr.mxu0 0.0
        %6489 = vmatpush1.xpose.msra.mxu0 0.0
        %6490 = vmatprep.subr.mxu0 0.0
        %6491 = vmatpush1.xpose.msra.mxu0 0.0
        %6492 = vmatprep.subr.mxu0 0.0
        %6493 = vmatpush1.xpose.msra.mxu0 0.0
        %6494 = vmatprep.subr.mxu0 0.0
        %6495 = vmatpush1.xpose.msra.mxu0 0.0
        %6496 = vmatprep.subr.mxu0 0.0
        %6497 = vmatpush1.xpose.msra.mxu0 0.0
        %6498 = vmatprep.subr.mxu0 0.0
        %6499 = vmatpush1.xpose.msra.mxu0 0.0
        %6500 = vmatprep.subr.mxu0 0.0
        %6501 = vmatpush1.xpose.msra.mxu0 0.0
        %6502 = vmatprep.subr.mxu0 0.0
        %6503 = vmatpush1.xpose.msra.mxu0 0.0
        %6504 = vmatprep.subr.mxu0 0.0
        %6505 = vmatpush1.xpose.msra.mxu0 0.0
        %6506 = vmatprep.subr.mxu0 0.0
        %6507 = vmatpush1.xpose.msra.mxu0 0.0
        %6508 = vmatprep.subr.mxu0 0.0
        %6509 = vmatpush1.xpose.msra.mxu0 0.0
        %6510 = vmatprep.subr.mxu0 0.0
        %6511 = vmatpush1.xpose.msra.mxu0 0.0
        %6512 = vmatprep.subr.mxu0 0.0
        %6513 = vmatpush1.xpose.msra.mxu0 0.0
        %6514 = vmatprep.subr.mxu0 0.0
        %6515 = vmatpush1.xpose.msra.mxu0 0.0
        %6516 = vmatprep.subr.mxu0 0.0
        %6517 = vmatpush1.xpose.msra.mxu0 0.0
        %6518 = vmatprep.subr.mxu0 0.0
        %6519 = vmatpush1.xpose.msra.mxu0 %v6486
        %6520 = vmatprep.subr.mxu0 0.0
        %6521 = vmatpush2.xpose.msra.mxu0 0.0
        %6522 = vmatprep.subr.mxu0 0.0
        %6523 = vmatpush2.xpose.msra.mxu0 0.0
        %6524 = vmatprep.subr.mxu0 0.0
        %6525 = vmatpush2.xpose.msra.mxu0 0.0
        %6526 = vmatprep.subr.mxu0 0.0
        %6527 = vmatpush2.xpose.msra.mxu0 0.0
        %6528 = vmatprep.subr.mxu0 0.0
        %6529 = vmatpush2.xpose.msra.mxu0 0.0
        %6530 = vmatprep.subr.mxu0 0.0
        %6531 = vmatpush2.xpose.msra.mxu0 0.0
        %6532 = vmatprep.subr.mxu0 0.0
        %6533 = vmatpush2.xpose.msra.mxu0 0.0
        %6534 = vmatprep.subr.mxu0 0.0
        %6535 = vmatpush2.xpose.msra.mxu0 0.0
        %6536 = vmatprep.subr.mxu0 0.0
        %6537 = vmatpush2.xpose.msra.mxu0 0.0
        %6538 = vmatprep.subr.mxu0 0.0
        %6539 = vmatpush2.xpose.msra.mxu0 0.0
        %6540 = vmatprep.subr.mxu0 0.0
        %6541 = vmatpush2.xpose.msra.mxu0 0.0
        %6542 = vmatprep.subr.mxu0 0.0
        %6543 = vmatpush2.xpose.msra.mxu0 0.0
        %6544 = vmatprep.subr.mxu0 0.0
        %6545 = vmatpush2.xpose.msra.mxu0 0.0
        %6546 = vmatprep.subr.mxu0 0.0
        %6547 = vmatpush2.xpose.msra.mxu0 0.0
        %6548 = vmatprep.subr.mxu0 0.0
        %6549 = vmatpush2.xpose.msra.mxu0 0.0
        %6550 = vmatprep.subr.mxu0 0.0
        %6551 = vmatpush2.xpose.msra.mxu0 0.0
        %6552 = vmatprep.mubr.f32.mxu0 0.0
        %6553 = vmatmul.mubr.f32.gmra.mxu0 %v6484
        %v6554 = vpop.f32.mrf.mxu0
        %v6555 = vadd.f32 0.0, %v6554
        %v6556 = vpop.f32.mrf.mxu0
        %6557 = vdwg.mxu0
        %v6558 = vmul.f32 %v6555, 0.35355338
        %v6559 = vadd.f32 %v6558, %v1075
        %v6560 = vsel %vm1166, %v6559, -inf
        %6561 = vmax.xlane.f32.xlu0 %v6560
        %v6562 = vpop.xlane.xlu0 %6561
        %v6563 = vsub.f32 %v6559, %v6562
        %v6564 = vmul.f32 %v6563, 1.442695
        %v6565 = vpow.pop %v6564
        %v6566 = vsel %vm1166, %v6565, 0.0
        %6567 = vadd.xlane.f32.xlu0 %v6566
        %v6568 = vpop.xlane.xlu0 %6567
        %v6569 = vrcp.pop %v6568
        %v6570 = vmul.f32 %v6565, %v6569
        %6571 = vrot.lane.b32.xlu0 %v6312, 88
        %v6572 = vpop.permute.xlu0 %6571
        %v6575 = vsel %vm1166, %v6570, 0
        %6577 = vmatprep.subr.mxu0 0.0
        %6578 = vmatpush1.msra.mxu0 0.0
        %6579 = vmatprep.subr.mxu0 0.0
        %6580 = vmatpush1.msra.mxu0 0.0
        %6581 = vmatprep.subr.mxu0 0.0
        %6582 = vmatpush1.msra.mxu0 0.0
        %6583 = vmatprep.subr.mxu0 0.0
        %6584 = vmatpush1.msra.mxu0 0.0
        %6585 = vmatprep.subr.mxu0 0.0
        %6586 = vmatpush1.msra.mxu0 0.0
        %6587 = vmatprep.subr.mxu0 0.0
        %6588 = vmatpush1.msra.mxu0 0.0
        %6589 = vmatprep.subr.mxu0 0.0
        %6590 = vmatpush1.msra.mxu0 0.0
        %6591 = vmatprep.subr.mxu0 0.0
        %6592 = vmatpush1.msra.mxu0 0.0
        %6593 = vmatprep.subr.mxu0 0.0
        %6594 = vmatpush1.msra.mxu0 0.0
        %6595 = vmatprep.subr.mxu0 0.0
        %6596 = vmatpush1.msra.mxu0 0.0
        %6597 = vmatprep.subr.mxu0 0.0
        %6598 = vmatpush1.msra.mxu0 0.0
        %6599 = vmatprep.subr.mxu0 0.0
        %6600 = vmatpush1.msra.mxu0 0.0
        %6601 = vmatprep.subr.mxu0 0.0
        %6602 = vmatpush1.msra.mxu0 0.0
        %6603 = vmatprep.subr.mxu0 0.0
        %6604 = vmatpush1.msra.mxu0 0.0
        %6605 = vmatprep.subr.mxu0 0.0
        %6606 = vmatpush1.msra.mxu0 0.0
        %6607 = vmatprep.subr.mxu0 0.0
        %6608 = vmatpush1.msra.mxu0 %v6572
        %6609 = vmatprep.subr.mxu0 0.0
        %6610 = vmatpush2.msra.mxu0 0.0
        %6611 = vmatprep.subr.mxu0 0.0
        %6612 = vmatpush2.msra.mxu0 0.0
        %6613 = vmatprep.subr.mxu0 0.0
        %6614 = vmatpush2.msra.mxu0 0.0
        %6615 = vmatprep.subr.mxu0 0.0
        %6616 = vmatpush2.msra.mxu0 0.0
        %6617 = vmatprep.subr.mxu0 0.0
        %6618 = vmatpush2.msra.mxu0 0.0
        %6619 = vmatprep.subr.mxu0 0.0
        %6620 = vmatpush2.msra.mxu0 0.0
        %6621 = vmatprep.subr.mxu0 0.0
        %6622 = vmatpush2.msra.mxu0 0.0
        %6623 = vmatprep.subr.mxu0 0.0
        %6624 = vmatpush2.msra.mxu0 0.0
        %6625 = vmatprep.subr.mxu0 0.0
        %6626 = vmatpush2.msra.mxu0 0.0
        %6627 = vmatprep.subr.mxu0 0.0
        %6628 = vmatpush2.msra.mxu0 0.0
        %6629 = vmatprep.subr.mxu0 0.0
        %6630 = vmatpush2.msra.mxu0 0.0
        %6631 = vmatprep.subr.mxu0 0.0
        %6632 = vmatpush2.msra.mxu0 0.0
        %6633 = vmatprep.subr.mxu0 0.0
        %6634 = vmatpush2.msra.mxu0 0.0
        %6635 = vmatprep.subr.mxu0 0.0
        %6636 = vmatpush2.msra.mxu0 0.0
        %6637 = vmatprep.subr.mxu0 0.0
        %6638 = vmatpush2.msra.mxu0 0.0
        %6639 = vmatprep.subr.mxu0 0.0
        %6640 = vmatpush2.msra.mxu0 0.0
        %6641 = vmatprep.mubr.f32.mxu0 0.0
        %6642 = vmatmul.mubr.f32.gmra.mxu0 %v6575
        %v6643 = vpop.f32.mrf.mxu0
        %v6644 = vadd.f32 0.0, %v6643
        %v6645 = vpop.f32.mrf.mxu0
        %6646 = vdwg.mxu0
        %6647 = vrot.lane.b32.xlu0 %v6229, 112
        %v6648 = vpop.permute.xlu0 %6647
        %6649 = vrot.lane.b32.xlu0 %v6312, 112
        %v6650 = vpop.permute.xlu0 %6649
        %v6651 = vsel %vm1166, %v6648, 0
        %v6653 = vsel %vm1166, %v6650, 0
        %6655 = vmatprep.subr.mxu0 0.0
        %6656 = vmatpush1.xpose.msra.mxu0 0.0
        %6657 = vmatprep.subr.mxu0 0.0
        %6658 = vmatpush1.xpose.msra.mxu0 0.0
        %6659 = vmatprep.subr.mxu0 0.0
        %6660 = vmatpush1.xpose.msra.mxu0 0.0
        %6661 = vmatprep.subr.mxu0 0.0
        %6662 = vmatpush1.xpose.msra.mxu0 0.0
        %6663 = vmatprep.subr.mxu0 0.0
        %6664 = vmatpush1.xpose.msra.mxu0 0.0
        %6665 = vmatprep.subr.mxu0 0.0
        %6666 = vmatpush1.xpose.msra.mxu0 0.0
        %6667 = vmatprep.subr.mxu0 0.0
        %6668 = vmatpush1.xpose.msra.mxu0 0.0
        %6669 = vmatprep.subr.mxu0 0.0
        %6670 = vmatpush1.xpose.msra.mxu0 0.0
        %6671 = vmatprep.subr.mxu0 0.0
        %6672 = vmatpush1.xpose.msra.mxu0 0.0
        %6673 = vmatprep.subr.mxu0 0.0
        %6674 = vmatpush1.xpose.msra.mxu0 0.0
        %6675 = vmatprep.subr.mxu0 0.0
        %6676 = vmatpush1.xpose.msra.mxu0 0.0
        %6677 = vmatprep.subr.mxu0 0.0
        %6678 = vmatpush1.xpose.msra.mxu0 0.0
        %6679 = vmatprep.subr.mxu0 0.0
        %6680 = vmatpush1.xpose.msra.mxu0 0.0
        %6681 = vmatprep.subr.mxu0 0.0
        %6682 = vmatpush1.xpose.msra.mxu0 0.0
        %6683 = vmatprep.subr.mxu0 0.0
        %6684 = vmatpush1.xpose.msra.mxu0 0.0
        %6685 = vmatprep.subr.mxu0 0.0
        %6686 = vmatpush1.xpose.msra.mxu0 %v6653
        %6687 = vmatprep.subr.mxu0 0.0
        %6688 = vmatpush2.xpose.msra.mxu0 0.0
        %6689 = vmatprep.subr.mxu0 0.0
        %6690 = vmatpush2.xpose.msra.mxu0 0.0
        %6691 = vmatprep.subr.mxu0 0.0
        %6692 = vmatpush2.xpose.msra.mxu0 0.0
        %6693 = vmatprep.subr.mxu0 0.0
        %6694 = vmatpush2.xpose.msra.mxu0 0.0
        %6695 = vmatprep.subr.mxu0 0.0
        %6696 = vmatpush2.xpose.msra.mxu0 0.0
        %6697 = vmatprep.subr.mxu0 0.0
        %6698 = vmatpush2.xpose.msra.mxu0 0.0
        %6699 = vmatprep.subr.mxu0 0.0
        %6700 = vmatpush2.xpose.msra.mxu0 0.0
        %6701 = vmatprep.subr.mxu0 0.0
        %6702 = vmatpush2.xpose.msra.mxu0 0.0
        %6703 = vmatprep.subr.mxu0 0.0
        %6704 = vmatpush2.xpose.msra.mxu0 0.0
        %6705 = vmatprep.subr.mxu0 0.0
        %6706 = vmatpush2.xpose.msra.mxu0 0.0
        %6707 = vmatprep.subr.mxu0 0.0
        %6708 = vmatpush2.xpose.msra.mxu0 0.0
        %6709 = vmatprep.subr.mxu0 0.0
        %6710 = vmatpush2.xpose.msra.mxu0 0.0
        %6711 = vmatprep.subr.mxu0 0.0
        %6712 = vmatpush2.xpose.msra.mxu0 0.0
        %6713 = vmatprep.subr.mxu0 0.0
        %6714 = vmatpush2.xpose.msra.mxu0 0.0
        %6715 = vmatprep.subr.mxu0 0.0
        %6716 = vmatpush2.xpose.msra.mxu0 0.0
        %6717 = vmatprep.subr.mxu0 0.0
        %6718 = vmatpush2.xpose.msra.mxu0 0.0
        %6719 = vmatprep.mubr.f32.mxu0 0.0
        %6720 = vmatmul.mubr.f32.gmra.mxu0 %v6651
        %v6721 = vpop.f32.mrf.mxu0
        %v6722 = vadd.f32 0.0, %v6721
        %v6723 = vpop.f32.mrf.mxu0
        %6724 = vdwg.mxu0
        %v6725 = vmul.f32 %v6722, 0.35355338
        %v6726 = vadd.f32 %v6725, %v1075
        %v6727 = vsel %vm1166, %v6726, -inf
        %6728 = vmax.xlane.f32.xlu0 %v6727
        %v6729 = vpop.xlane.xlu0 %6728
        %v6730 = vsub.f32 %v6726, %v6729
        %v6731 = vmul.f32 %v6730, 1.442695
        %v6732 = vpow.pop %v6731
        %v6733 = vsel %vm1166, %v6732, 0.0
        %6734 = vadd.xlane.f32.xlu0 %v6733
        %v6735 = vpop.xlane.xlu0 %6734
        %v6736 = vrcp.pop %v6735
        %v6737 = vmul.f32 %v6732, %v6736
        %6738 = vrot.lane.b32.xlu0 %v6312, 80
        %v6739 = vpop.permute.xlu0 %6738
        %v6742 = vsel %vm1166, %v6737, 0
        %6744 = vmatprep.subr.mxu0 0.0
        %6745 = vmatpush1.msra.mxu0 0.0
        %6746 = vmatprep.subr.mxu0 0.0
        %6747 = vmatpush1.msra.mxu0 0.0
        %6748 = vmatprep.subr.mxu0 0.0
        %6749 = vmatpush1.msra.mxu0 0.0
        %6750 = vmatprep.subr.mxu0 0.0
        %6751 = vmatpush1.msra.mxu0 0.0
        %6752 = vmatprep.subr.mxu0 0.0
        %6753 = vmatpush1.msra.mxu0 0.0
        %6754 = vmatprep.subr.mxu0 0.0
        %6755 = vmatpush1.msra.mxu0 0.0
        %6756 = vmatprep.subr.mxu0 0.0
        %6757 = vmatpush1.msra.mxu0 0.0
        %6758 = vmatprep.subr.mxu0 0.0
        %6759 = vmatpush1.msra.mxu0 0.0
        %6760 = vmatprep.subr.mxu0 0.0
        %6761 = vmatpush1.msra.mxu0 0.0
        %6762 = vmatprep.subr.mxu0 0.0
        %6763 = vmatpush1.msra.mxu0 0.0
        %6764 = vmatprep.subr.mxu0 0.0
        %6765 = vmatpush1.msra.mxu0 0.0
        %6766 = vmatprep.subr.mxu0 0.0
        %6767 = vmatpush1.msra.mxu0 0.0
        %6768 = vmatprep.subr.mxu0 0.0
        %6769 = vmatpush1.msra.mxu0 0.0
        %6770 = vmatprep.subr.mxu0 0.0
        %6771 = vmatpush1.msra.mxu0 0.0
        %6772 = vmatprep.subr.mxu0 0.0
        %6773 = vmatpush1.msra.mxu0 0.0
        %6774 = vmatprep.subr.mxu0 0.0
        %6775 = vmatpush1.msra.mxu0 %v6739
        %6776 = vmatprep.subr.mxu0 0.0
        %6777 = vmatpush2.msra.mxu0 0.0
        %6778 = vmatprep.subr.mxu0 0.0
        %6779 = vmatpush2.msra.mxu0 0.0
        %6780 = vmatprep.subr.mxu0 0.0
        %6781 = vmatpush2.msra.mxu0 0.0
        %6782 = vmatprep.subr.mxu0 0.0
        %6783 = vmatpush2.msra.mxu0 0.0
        %6784 = vmatprep.subr.mxu0 0.0
        %6785 = vmatpush2.msra.mxu0 0.0
        %6786 = vmatprep.subr.mxu0 0.0
        %6787 = vmatpush2.msra.mxu0 0.0
        %6788 = vmatprep.subr.mxu0 0.0
        %6789 = vmatpush2.msra.mxu0 0.0
        %6790 = vmatprep.subr.mxu0 0.0
        %6791 = vmatpush2.msra.mxu0 0.0
        %6792 = vmatprep.subr.mxu0 0.0
        %6793 = vmatpush2.msra.mxu0 0.0
        %6794 = vmatprep.subr.mxu0 0.0
        %6795 = vmatpush2.msra.mxu0 0.0
        %6796 = vmatprep.subr.mxu0 0.0
        %6797 = vmatpush2.msra.mxu0 0.0
        %6798 = vmatprep.subr.mxu0 0.0
        %6799 = vmatpush2.msra.mxu0 0.0
        %6800 = vmatprep.subr.mxu0 0.0
        %6801 = vmatpush2.msra.mxu0 0.0
        %6802 = vmatprep.subr.mxu0 0.0
        %6803 = vmatpush2.msra.mxu0 0.0
        %6804 = vmatprep.subr.mxu0 0.0
        %6805 = vmatpush2.msra.mxu0 0.0
        %6806 = vmatprep.subr.mxu0 0.0
        %6807 = vmatpush2.msra.mxu0 0.0
        %6808 = vmatprep.mubr.f32.mxu0 0.0
        %6809 = vmatmul.mubr.f32.gmra.mxu0 %v6742
        %v6810 = vpop.f32.mrf.mxu0
        %v6811 = vadd.f32 0.0, %v6810
        %v6812 = vpop.f32.mrf.mxu0
        %6813 = vdwg.mxu0
        %6814 = vrot.lane.b32.xlu0 %v6229, 104
        %v6815 = vpop.permute.xlu0 %6814
        %6816 = vrot.lane.b32.xlu0 %v6312, 104
        %v6817 = vpop.permute.xlu0 %6816
        %v6818 = vsel %vm1166, %v6815, 0
        %v6820 = vsel %vm1166, %v6817, 0
        %6822 = vmatprep.subr.mxu0 0.0
        %6823 = vmatpush1.xpose.msra.mxu0 0.0
        %6824 = vmatprep.subr.mxu0 0.0
        %6825 = vmatpush1.xpose.msra.mxu0 0.0
        %6826 = vmatprep.subr.mxu0 0.0
        %6827 = vmatpush1.xpose.msra.mxu0 0.0
        %6828 = vmatprep.subr.mxu0 0.0
        %6829 = vmatpush1.xpose.msra.mxu0 0.0
        %6830 = vmatprep.subr.mxu0 0.0
        %6831 = vmatpush1.xpose.msra.mxu0 0.0
        %6832 = vmatprep.subr.mxu0 0.0
        %6833 = vmatpush1.xpose.msra.mxu0 0.0
        %6834 = vmatprep.subr.mxu0 0.0
        %6835 = vmatpush1.xpose.msra.mxu0 0.0
        %6836 = vmatprep.subr.mxu0 0.0
        %6837 = vmatpush1.xpose.msra.mxu0 0.0
        %6838 = vmatprep.subr.mxu0 0.0
        %6839 = vmatpush1.xpose.msra.mxu0 0.0
        %6840 = vmatprep.subr.mxu0 0.0
        %6841 = vmatpush1.xpose.msra.mxu0 0.0
        %6842 = vmatprep.subr.mxu0 0.0
        %6843 = vmatpush1.xpose.msra.mxu0 0.0
        %6844 = vmatprep.subr.mxu0 0.0
        %6845 = vmatpush1.xpose.msra.mxu0 0.0
        %6846 = vmatprep.subr.mxu0 0.0
        %6847 = vmatpush1.xpose.msra.mxu0 0.0
        %6848 = vmatprep.subr.mxu0 0.0
        %6849 = vmatpush1.xpose.msra.mxu0 0.0
        %6850 = vmatprep.subr.mxu0 0.0
        %6851 = vmatpush1.xpose.msra.mxu0 0.0
        %6852 = vmatprep.subr.mxu0 0.0
        %6853 = vmatpush1.xpose.msra.mxu0 %v6820
        %6854 = vmatprep.subr.mxu0 0.0
        %6855 = vmatpush2.xpose.msra.mxu0 0.0
        %6856 = vmatprep.subr.mxu0 0.0
        %6857 = vmatpush2.xpose.msra.mxu0 0.0
        %6858 = vmatprep.subr.mxu0 0.0
        %6859 = vmatpush2.xpose.msra.mxu0 0.0
        %6860 = vmatprep.subr.mxu0 0.0
        %6861 = vmatpush2.xpose.msra.mxu0 0.0
        %6862 = vmatprep.subr.mxu0 0.0
        %6863 = vmatpush2.xpose.msra.mxu0 0.0
        %6864 = vmatprep.subr.mxu0 0.0
        %6865 = vmatpush2.xpose.msra.mxu0 0.0
        %6866 = vmatprep.subr.mxu0 0.0
        %6867 = vmatpush2.xpose.msra.mxu0 0.0
        %6868 = vmatprep.subr.mxu0 0.0
        %6869 = vmatpush2.xpose.msra.mxu0 0.0
        %6870 = vmatprep.subr.mxu0 0.0
        %6871 = vmatpush2.xpose.msra.mxu0 0.0
        %6872 = vmatprep.subr.mxu0 0.0
        %6873 = vmatpush2.xpose.msra.mxu0 0.0
        %6874 = vmatprep.subr.mxu0 0.0
        %6875 = vmatpush2.xpose.msra.mxu0 0.0
        %6876 = vmatprep.subr.mxu0 0.0
        %6877 = vmatpush2.xpose.msra.mxu0 0.0
        %6878 = vmatprep.subr.mxu0 0.0
        %6879 = vmatpush2.xpose.msra.mxu0 0.0
        %6880 = vmatprep.subr.mxu0 0.0
        %6881 = vmatpush2.xpose.msra.mxu0 0.0
        %6882 = vmatprep.subr.mxu0 0.0
        %6883 = vmatpush2.xpose.msra.mxu0 0.0
        %6884 = vmatprep.subr.mxu0 0.0
        %6885 = vmatpush2.xpose.msra.mxu0 0.0
        %6886 = vmatprep.mubr.f32.mxu0 0.0
        %6887 = vmatmul.mubr.f32.gmra.mxu0 %v6818
        %v6888 = vpop.f32.mrf.mxu0
        %v6889 = vadd.f32 0.0, %v6888
        %v6890 = vpop.f32.mrf.mxu0
        %6891 = vdwg.mxu0
        %v6892 = vmul.f32 %v6889, 0.35355338
        %v6893 = vadd.f32 %v6892, %v1075
        %v6894 = vsel %vm1166, %v6893, -inf
        %6895 = vmax.xlane.f32.xlu0 %v6894
        %v6896 = vpop.xlane.xlu0 %6895
        %v6897 = vsub.f32 %v6893, %v6896
        %v6898 = vmul.f32 %v6897, 1.442695
        %v6899 = vpow.pop %v6898
        %v6900 = vsel %vm1166, %v6899, 0.0
        %6901 = vadd.xlane.f32.xlu0 %v6900
        %v6902 = vpop.xlane.xlu0 %6901
        %v6903 = vrcp.pop %v6902
        %v6904 = vmul.f32 %v6899, %v6903
        %6905 = vrot.lane.b32.xlu0 %v6312, 72
        %v6906 = vpop.permute.xlu0 %6905
        %v6909 = vsel %vm1166, %v6904, 0
        %6911 = vmatprep.subr.mxu0 0.0
        %6912 = vmatpush1.msra.mxu0 0.0
        %6913 = vmatprep.subr.mxu0 0.0
        %6914 = vmatpush1.msra.mxu0 0.0
        %6915 = vmatprep.subr.mxu0 0.0
        %6916 = vmatpush1.msra.mxu0 0.0
        %6917 = vmatprep.subr.mxu0 0.0
        %6918 = vmatpush1.msra.mxu0 0.0
        %6919 = vmatprep.subr.mxu0 0.0
        %6920 = vmatpush1.msra.mxu0 0.0
        %6921 = vmatprep.subr.mxu0 0.0
        %6922 = vmatpush1.msra.mxu0 0.0
        %6923 = vmatprep.subr.mxu0 0.0
        %6924 = vmatpush1.msra.mxu0 0.0
        %6925 = vmatprep.subr.mxu0 0.0
        %6926 = vmatpush1.msra.mxu0 0.0
        %6927 = vmatprep.subr.mxu0 0.0
        %6928 = vmatpush1.msra.mxu0 0.0
        %6929 = vmatprep.subr.mxu0 0.0
        %6930 = vmatpush1.msra.mxu0 0.0
        %6931 = vmatprep.subr.mxu0 0.0
        %6932 = vmatpush1.msra.mxu0 0.0
        %6933 = vmatprep.subr.mxu0 0.0
        %6934 = vmatpush1.msra.mxu0 0.0
        %6935 = vmatprep.subr.mxu0 0.0
        %6936 = vmatpush1.msra.mxu0 0.0
        %6937 = vmatprep.subr.mxu0 0.0
        %6938 = vmatpush1.msra.mxu0 0.0
        %6939 = vmatprep.subr.mxu0 0.0
        %6940 = vmatpush1.msra.mxu0 0.0
        %6941 = vmatprep.subr.mxu0 0.0
        %6942 = vmatpush1.msra.mxu0 %v6906
        %6943 = vmatprep.subr.mxu0 0.0
        %6944 = vmatpush2.msra.mxu0 0.0
        %6945 = vmatprep.subr.mxu0 0.0
        %6946 = vmatpush2.msra.mxu0 0.0
        %6947 = vmatprep.subr.mxu0 0.0
        %6948 = vmatpush2.msra.mxu0 0.0
        %6949 = vmatprep.subr.mxu0 0.0
        %6950 = vmatpush2.msra.mxu0 0.0
        %6951 = vmatprep.subr.mxu0 0.0
        %6952 = vmatpush2.msra.mxu0 0.0
        %6953 = vmatprep.subr.mxu0 0.0
        %6954 = vmatpush2.msra.mxu0 0.0
        %6955 = vmatprep.subr.mxu0 0.0
        %6956 = vmatpush2.msra.mxu0 0.0
        %6957 = vmatprep.subr.mxu0 0.0
        %6958 = vmatpush2.msra.mxu0 0.0
        %6959 = vmatprep.subr.mxu0 0.0
        %6960 = vmatpush2.msra.mxu0 0.0
        %6961 = vmatprep.subr.mxu0 0.0
        %6962 = vmatpush2.msra.mxu0 0.0
        %6963 = vmatprep.subr.mxu0 0.0
        %6964 = vmatpush2.msra.mxu0 0.0
        %6965 = vmatprep.subr.mxu0 0.0
        %6966 = vmatpush2.msra.mxu0 0.0
        %6967 = vmatprep.subr.mxu0 0.0
        %6968 = vmatpush2.msra.mxu0 0.0
        %6969 = vmatprep.subr.mxu0 0.0
        %6970 = vmatpush2.msra.mxu0 0.0
        %6971 = vmatprep.subr.mxu0 0.0
        %6972 = vmatpush2.msra.mxu0 0.0
        %6973 = vmatprep.subr.mxu0 0.0
        %6974 = vmatpush2.msra.mxu0 0.0
        %6975 = vmatprep.mubr.f32.mxu0 0.0
        %6976 = vmatmul.mubr.f32.gmra.mxu0 %v6909
        %v6977 = vpop.f32.mrf.mxu0
        %v6978 = vadd.f32 0.0, %v6977
        %v6979 = vpop.f32.mrf.mxu0
        %6980 = vdwg.mxu0
        %6982 = vrot.lane.b32.xlu0 %v6644, 8
        %v6983 = vpop.permute.xlu0 %6982
        %6986 = vrot.lane.b32.xlu0 %v6811, 16
        %v6987 = vpop.permute.xlu0 %6986
        %6990 = vrot.lane.b32.xlu0 %v6978, 24
        %v6991 = vpop.permute.xlu0 %6990
        %v6993 = vsel %vm1166, %v6477, %v6983
        %v6994 = vsel %vm1844, %v6993, %v6987
        %v6995 = vsel %vm1846, %v6994, %v6991
        %s6996 = scalar_lea.vmem [#allocation22], 32
        %v6997 = vld [vmem:[%s6996] sm:$0xff]
        %v6998 = vld [vmem:[%s6996 + $0x8] sm:$0xff]
        %v6999 = vld [vmem:[%s6996 + $0x10] sm:$0xff]
        %v7000 = vld [vmem:[%s6996 + $0x18] sm:$0xff]
        %s7001 = scalar_lea.vmem [#allocation23], 1
        %v7002 = vld [vmem:[%s7001] sm:$0x1]
        %v7004 = vlaneseq
        %v7005 = vshrl.u32 %v7004, 7
        %v7006 = vsub.s32 0, %v7005
        %v7007 = vrot.slane %v7002, %v7006
        %v7010 = vsel %vm1089, %v6995, 0
        %7012 = vmatprep.subr.mxu0 0.0
        %7013 = vmatpush1.msra.mxu0 0.0
        %7014 = vmatprep.subr.mxu0 0.0
        %7015 = vmatpush1.msra.mxu0 0.0
        %7016 = vmatprep.subr.mxu0 0.0
        %7017 = vmatpush1.msra.mxu0 0.0
        %7018 = vmatprep.subr.mxu0 0.0
        %7019 = vmatpush1.msra.mxu0 0.0
        %7020 = vmatprep.subr.mxu0 0.0
        %7021 = vmatpush1.msra.mxu0 0.0
        %7022 = vmatprep.subr.mxu0 0.0
        %7023 = vmatpush1.msra.mxu0 0.0
        %7024 = vmatprep.subr.mxu0 0.0
        %7025 = vmatpush1.msra.mxu0 0.0
        %7026 = vmatprep.subr.mxu0 0.0
        %7027 = vmatpush1.msra.mxu0 0.0
        %7028 = vmatprep.subr.mxu0 0.0
        %7029 = vmatpush1.msra.mxu0 0.0
        %7030 = vmatprep.subr.mxu0 0.0
        %7031 = vmatpush1.msra.mxu0 0.0
        %7032 = vmatprep.subr.mxu0 0.0
        %7033 = vmatpush1.msra.mxu0 0.0
        %7034 = vmatprep.subr.mxu0 0.0
        %7035 = vmatpush1.msra.mxu0 0.0
        %7036 = vmatprep.subr.mxu0 0.0
        %7037 = vmatpush1.msra.mxu0 %v7000
        %7038 = vmatprep.subr.mxu0 0.0
        %7039 = vmatpush1.msra.mxu0 %v6999
        %7040 = vmatprep.subr.mxu0 0.0
        %7041 = vmatpush1.msra.mxu0 %v6998
        %7042 = vmatprep.subr.mxu0 0.0
        %7043 = vmatpush1.msra.mxu0 %v6997
        %7044 = vmatprep.subr.mxu0 0.0
        %7045 = vmatpush2.msra.mxu0 0.0
        %7046 = vmatprep.subr.mxu0 0.0
        %7047 = vmatpush2.msra.mxu0 0.0
        %7048 = vmatprep.subr.mxu0 0.0
        %7049 = vmatpush2.msra.mxu0 0.0
        %7050 = vmatprep.subr.mxu0 0.0
        %7051 = vmatpush2.msra.mxu0 0.0
        %7052 = vmatprep.subr.mxu0 0.0
        %7053 = vmatpush2.msra.mxu0 0.0
        %7054 = vmatprep.subr.mxu0 0.0
        %7055 = vmatpush2.msra.mxu0 0.0
        %7056 = vmatprep.subr.mxu0 0.0
        %7057 = vmatpush2.msra.mxu0 0.0
        %7058 = vmatprep.subr.mxu0 0.0
        %7059 = vmatpush2.msra.mxu0 0.0
        %7060 = vmatprep.subr.mxu0 0.0
        %7061 = vmatpush2.msra.mxu0 0.0
        %7062 = vmatprep.subr.mxu0 0.0
        %7063 = vmatpush2.msra.mxu0 0.0
        %7064 = vmatprep.subr.mxu0 0.0
        %7065 = vmatpush2.msra.mxu0 0.0
        %7066 = vmatprep.subr.mxu0 0.0
        %7067 = vmatpush2.msra.mxu0 0.0
        %7068 = vmatprep.subr.mxu0 0.0
        %7069 = vmatpush2.msra.mxu0 0.0
        %7070 = vmatprep.subr.mxu0 0.0
        %7071 = vmatpush2.msra.mxu0 0.0
        %7072 = vmatprep.subr.mxu0 0.0
        %7073 = vmatpush2.msra.mxu0 0.0
        %7074 = vmatprep.subr.mxu0 0.0
        %7075 = vmatpush2.msra.mxu0 0.0
        %7076 = vmatprep.mubr.f32.mxu0 0.0
        %7077 = vmatmul.mubr.f32.gmra.mxu0 %v7010
        %v7078 = vpop.f32.mrf.mxu0
        %v7079 = vadd.f32 %v7007, %v7078
        %v7080 = vpop.f32.mrf.mxu0
        %7081 = vdwg.mxu0
        %v7082 = vadd.f32 %v6145, %v7079
        %v7083 = vsel %vm1089, %v7082, 0.0
        %7084 = vadd.xlane.f32.xlu0 %v7083
        %v7085 = vpop.xlane.xlu0 %7084
        %v7086 = vmul.f32 %v7085, %v1936
        %v7087 = vsub.f32 %v7082, %v7086
        %v7088 = vmul.f32 %v7087, %v7087
        %v7089 = vsel %vm1089, %v7088, 0.0
        %7090 = vadd.xlane.f32.xlu0 %v7089
        %v7091 = vpop.xlane.xlu0 %7090
        %v7092 = vmul.f32 %v7091, %v1936
        %v7093 = vadd.f32 %v7092, 1e-05
        %v7094 = vrsqrt.pop %v7093
        %v7095 = vmul.f32 %v7087, %v7094
        %v7096 = vlaneseq
        %v7097 = vshrl.u32 %v7096, 7
        %v7098 = vsub.s32 2, %v7097
        %v7099 = vrot.slane %v5267, %v7098
        %v7100 = vmul.f32 %v7095, %v7099
        %v7101 = vlaneseq
        %v7102 = vshrl.u32 %v7101, 7
        %v7103 = vsub.s32 3, %v7102
        %v7104 = vrot.slane %v5267, %v7103
        %v7105 = vadd.f32 %v7100, %v7104
        %s7106 = scalar_lea.vmem %s21, 32
        %v7107 = vld [vmem:[%s7106] sm:$0xff]
        %v7108 = vld [vmem:[%s7106 + $0x8] sm:$0xff]
        %v7109 = vld [vmem:[%s7106 + $0x10] sm:$0xff]
        %v7110 = vld [vmem:[%s7106 + $0x18] sm:$0xff]
        %s7111 = scalar_lea.vmem [#allocation25], 1
        %v7112 = vld [vmem:[%s7111] sm:$0x1]
        %v7114 = vlaneseq
        %v7115 = vshrl.u32 %v7114, 7
        %v7116 = vsub.s32 0, %v7115
        %v7117 = vrot.slane %v7112, %v7116
        %v7120 = vsel %vm1089, %v7105, 0
        %7122 = vmatprep.subr.mxu0 0.0
        %7123 = vmatpush1.msra.mxu0 0.0
        %7124 = vmatprep.subr.mxu0 0.0
        %7125 = vmatpush1.msra.mxu0 0.0
        %7126 = vmatprep.subr.mxu0 0.0
        %7127 = vmatpush1.msra.mxu0 0.0
        %7128 = vmatprep.subr.mxu0 0.0
        %7129 = vmatpush1.msra.mxu0 0.0
        %7130 = vmatprep.subr.mxu0 0.0
        %7131 = vmatpush1.msra.mxu0 0.0
        %7132 = vmatprep.subr.mxu0 0.0
        %7133 = vmatpush1.msra.mxu0 0.0
        %7134 = vmatprep.subr.mxu0 0.0
        %7135 = vmatpush1.msra.mxu0 0.0
        %7136 = vmatprep.subr.mxu0 0.0
        %7137 = vmatpush1.msra.mxu0 0.0
        %7138 = vmatprep.subr.mxu0 0.0
        %7139 = vmatpush1.msra.mxu0 0.0
        %7140 = vmatprep.subr.mxu0 0.0
        %7141 = vmatpush1.msra.mxu0 0.0
        %7142 = vmatprep.subr.mxu0 0.0
        %7143 = vmatpush1.msra.mxu0 0.0
        %7144 = vmatprep.subr.mxu0 0.0
        %7145 = vmatpush1.msra.mxu0 0.0
        %7146 = vmatprep.subr.mxu0 0.0
        %7147 = vmatpush1.msra.mxu0 %v7110
        %7148 = vmatprep.subr.mxu0 0.0
        %7149 = vmatpush1.msra.mxu0 %v7109
        %7150 = vmatprep.subr.mxu0 0.0
        %7151 = vmatpush1.msra.mxu0 %v7108
        %7152 = vmatprep.subr.mxu0 0.0
        %7153 = vmatpush1.msra.mxu0 %v7107
        %7154 = vmatprep.subr.mxu0 0.0
        %7155 = vmatpush2.msra.mxu0 0.0
        %7156 = vmatprep.subr.mxu0 0.0
        %7157 = vmatpush2.msra.mxu0 0.0
        %7158 = vmatprep.subr.mxu0 0.0
        %7159 = vmatpush2.msra.mxu0 0.0
        %7160 = vmatprep.subr.mxu0 0.0
        %7161 = vmatpush2.msra.mxu0 0.0
        %7162 = vmatprep.subr.mxu0 0.0
        %7163 = vmatpush2.msra.mxu0 0.0
        %7164 = vmatprep.subr.mxu0 0.0
        %7165 = vmatpush2.msra.mxu0 0.0
        %7166 = vmatprep.subr.mxu0 0.0
        %7167 = vmatpush2.msra.mxu0 0.0
        %7168 = vmatprep.subr.mxu0 0.0
        %7169 = vmatpush2.msra.mxu0 0.0
        %7170 = vmatprep.subr.mxu0 0.0
        %7171 = vmatpush2.msra.mxu0 0.0
        %7172 = vmatprep.subr.mxu0 0.0
        %7173 = vmatpush2.msra.mxu0 0.0
        %7174 = vmatprep.subr.mxu0 0.0
        %7175 = vmatpush2.msra.mxu0 0.0
        %7176 = vmatprep.subr.mxu0 0.0
        %7177 = vmatpush2.msra.mxu0 0.0
        %7178 = vmatprep.subr.mxu0 0.0
        %7179 = vmatpush2.msra.mxu0 0.0
        %7180 = vmatprep.subr.mxu0 0.0
        %7181 = vmatpush2.msra.mxu0 0.0
        %7182 = vmatprep.subr.mxu0 0.0
        %7183 = vmatpush2.msra.mxu0 0.0
        %7184 = vmatprep.subr.mxu0 0.0
        %7185 = vmatpush2.msra.mxu0 0.0
        %7186 = vmatprep.mubr.f32.mxu0 0.0
        %7187 = vmatmul.mubr.f32.gmra.mxu0 %v7120
        %v7188 = vpop.f32.mrf.mxu0
        %v7189 = vadd.f32 %v7117, %v7188
        %v7190 = vpop.f32.mrf.mxu0
        %7191 = vdwg.mxu0
        %v7192 = vmax.f32 %v7189, 0.0
        %s7193 = scalar_lea.vmem %s23, 64
        %v7194 = vld [vmem:[%s7193] sm:$0xff]
        %v7195 = vld [vmem:[%s7193 + $0x8] sm:$0xff]
        %v7196 = vld [vmem:[%s7193 + $0x10] sm:$0xff]
        %v7197 = vld [vmem:[%s7193 + $0x18] sm:$0xff]
        %v7198 = vld [vmem:[%s7193 + $0x20] sm:$0xff]
        %v7199 = vld [vmem:[%s7193 + $0x28] sm:$0xff]
        %v7200 = vld [vmem:[%s7193 + $0x30] sm:$0xff]
        %v7201 = vld [vmem:[%s7193 + $0x38] sm:$0xff]
        %s7202 = scalar_lea.vmem %s24, 1
        %v7203 = vld [vmem:[%s7202] sm:$0x1]
        %v7205 = vlaneseq
        %v7206 = vshrl.u32 %v7205, 7
        %v7207 = vsub.s32 0, %v7206
        %v7208 = vrot.slane %v7203, %v7207
        %v7211 = vsel %vm2057, %v7192, 0
        %7213 = vmatprep.subr.mxu0 0.0
        %7214 = vmatpush1.msra.mxu0 0.0
        %7215 = vmatprep.subr.mxu0 0.0
        %7216 = vmatpush1.msra.mxu0 0.0
        %7217 = vmatprep.subr.mxu0 0.0
        %7218 = vmatpush1.msra.mxu0 0.0
        %7219 = vmatprep.subr.mxu0 0.0
        %7220 = vmatpush1.msra.mxu0 0.0
        %7221 = vmatprep.subr.mxu0 0.0
        %7222 = vmatpush1.msra.mxu0 0.0
        %7223 = vmatprep.subr.mxu0 0.0
        %7224 = vmatpush1.msra.mxu0 0.0
        %7225 = vmatprep.subr.mxu0 0.0
        %7226 = vmatpush1.msra.mxu0 0.0
        %7227 = vmatprep.subr.mxu0 0.0
        %7228 = vmatpush1.msra.mxu0 0.0
        %7229 = vmatprep.subr.mxu0 0.0
        %7230 = vmatpush1.msra.mxu0 %v7201
        %7231 = vmatprep.subr.mxu0 0.0
        %7232 = vmatpush1.msra.mxu0 %v7200
        %7233 = vmatprep.subr.mxu0 0.0
        %7234 = vmatpush1.msra.mxu0 %v7199
        %7235 = vmatprep.subr.mxu0 0.0
        %7236 = vmatpush1.msra.mxu0 %v7198
        %7237 = vmatprep.subr.mxu0 0.0
        %7238 = vmatpush1.msra.mxu0 %v7197
        %7239 = vmatprep.subr.mxu0 0.0
        %7240 = vmatpush1.msra.mxu0 %v7196
        %7241 = vmatprep.subr.mxu0 0.0
        %7242 = vmatpush1.msra.mxu0 %v7195
        %7243 = vmatprep.subr.mxu0 0.0
        %7244 = vmatpush1.msra.mxu0 %v7194
        %7245 = vmatprep.subr.mxu0 0.0
        %7246 = vmatpush2.msra.mxu0 0.0
        %7247 = vmatprep.subr.mxu0 0.0
        %7248 = vmatpush2.msra.mxu0 0.0
        %7249 = vmatprep.subr.mxu0 0.0
        %7250 = vmatpush2.msra.mxu0 0.0
        %7251 = vmatprep.subr.mxu0 0.0
        %7252 = vmatpush2.msra.mxu0 0.0
        %7253 = vmatprep.subr.mxu0 0.0
        %7254 = vmatpush2.msra.mxu0 0.0
        %7255 = vmatprep.subr.mxu0 0.0
        %7256 = vmatpush2.msra.mxu0 0.0
        %7257 = vmatprep.subr.mxu0 0.0
        %7258 = vmatpush2.msra.mxu0 0.0
        %7259 = vmatprep.subr.mxu0 0.0
        %7260 = vmatpush2.msra.mxu0 0.0
        %7261 = vmatprep.subr.mxu0 0.0
        %7262 = vmatpush2.msra.mxu0 0.0
        %7263 = vmatprep.subr.mxu0 0.0
        %7264 = vmatpush2.msra.mxu0 0.0
        %7265 = vmatprep.subr.mxu0 0.0
        %7266 = vmatpush2.msra.mxu0 0.0
        %7267 = vmatprep.subr.mxu0 0.0
        %7268 = vmatpush2.msra.mxu0 0.0
        %7269 = vmatprep.subr.mxu0 0.0
        %7270 = vmatpush2.msra.mxu0 0.0
        %7271 = vmatprep.subr.mxu0 0.0
        %7272 = vmatpush2.msra.mxu0 0.0
        %7273 = vmatprep.subr.mxu0 0.0
        %7274 = vmatpush2.msra.mxu0 0.0
        %7275 = vmatprep.subr.mxu0 0.0
        %7276 = vmatpush2.msra.mxu0 0.0
        %7277 = vmatprep.mubr.f32.mxu0 0.0
        %7278 = vmatmul.mubr.f32.gmra.mxu0 %v7211
        %v7279 = vpop.f32.mrf.mxu0
        %v7280 = vadd.f32 %v7208, %v7279
        %v7281 = vpop.f32.mrf.mxu0
        %7282 = vdwg.mxu0
        %v7283 = vadd.f32 %v7105, %v7280
        %v7284 = vsel %vm1089, %v7283, 0.0
        %7285 = vadd.xlane.f32.xlu0 %v7284
        %v7286 = vpop.xlane.xlu0 %7285
        %v7287 = vmul.f32 %v7286, %v1936
        %v7288 = vsub.f32 %v7283, %v7287
        %v7289 = vmul.f32 %v7288, %v7288
        %v7290 = vsel %vm1089, %v7289, 0.0
        %7291 = vadd.xlane.f32.xlu0 %v7290
        %v7292 = vpop.xlane.xlu0 %7291
        %v7293 = vmul.f32 %v7292, %v1936
        %v7294 = vadd.f32 %v7293, 1e-05
        %v7295 = vrsqrt.pop %v7294
        %v7296 = vmul.f32 %v7288, %v7295
        %v7297 = vlaneseq
        %v7298 = vshrl.u32 %v7297, 7
        %v7299 = vsub.s32 4, %v7298
        %v7300 = vrot.slane %v5267, %v7299
        %v7301 = vmul.f32 %v7296, %v7300
        %v7302 = vlaneseq
        %v7303 = vshrl.u32 %v7302, 7
        %v7304 = vsub.s32 5, %v7303
        %v7305 = vrot.slane %v5267, %v7304
        %v7306 = vadd.f32 %v7301, %v7305
        %7307 = vst.msk [vmem:[%s1062] sm:$0xff] %vm1089, %v3235
        %7308 = vst.msk [vmem:[%s1069] sm:$0xff] %vm1089, %v7306
        %s7309 = sand.u32 %s621, 1
        %s7310 = scalar_lea.sflag [#allocation4], %s7309
        %s7311 = sand.u32 %s621, 1
        %s7312 = smul.addr %s7311, 8
        %s7313 = scalar_lea.vmem [#allocation26], %s7312
        %s7314 = sand.u32 %s647, 1
        %s7315 = scalar_lea.sflag [#allocation28], %s7314
        %s7316 = sand.u32 %s647, 1
        %s7317 = smul.addr %s7316, 8
        %s7318 = scalar_lea.vmem [#allocation27], %s7317
        // Predicated region
        $region185: #{tpu_custom_call.1} parent=123 // pred_check
          %p7319 = pneg %p631
        $region186: #{tpu_custom_call.1} parent=123 // pred_check_branch
          %7321 = sbr.rel (%p7319) target = $region188
        $region187: #{tpu_custom_call.1} parent=123 // pred_region
          %s7323 = ssub.s32 128, 128
          %7324 = vsyncadd %s7310, %s7323
          %s7325 = smul.addr %s57, 128
          %s7326 = scalar_lea.hbm %s26, %s7325
          %s7328 = sshll.u32 %s7313, 4
          %s7329 = int_to_ptr.vmem [resolvable:$true] %s7328
          %7331 = dma.vmem_to_hbm [thread:$0]  %s7329, 128, %s7326, %s7310
        $region188: #{tpu_custom_call.1} parent=123 // pred_fallthru
          _
        // Predicated region
        $region189: #{tpu_custom_call.1} parent=123 // pred_check
          %p7332 = pneg %p657
        $region190: #{tpu_custom_call.1} parent=123 // pred_check_branch
          %7334 = sbr.rel (%p7332) target = $region192
        $region191: #{tpu_custom_call.1} parent=123 // pred_region
          %s7336 = ssub.s32 128, 128
          %7337 = vsyncadd %s7315, %s7336
          %s7338 = smul.addr %s57, 128
          %s7339 = scalar_lea.hbm %s27, %s7338
          %s7341 = sshll.u32 %s7318, 4
          %s7342 = int_to_ptr.vmem [resolvable:$true] %s7341
          %7344 = dma.vmem_to_hbm [thread:$0]  %s7342, 128, %s7339, %s7315
        $region192: #{tpu_custom_call.1} parent=123 // pred_fallthru
          _
      $region124: #{tpu_custom_call.1} parent=5 // pred_fallthru
        _
      %p7345 = scmp.le.s32.totalorder 2, %s52
      // Predicated region
      $region193: #{tpu_custom_call.1} parent=5 // pred_check
        %p7346 = pneg %p7345
      $region194: #{tpu_custom_call.1} parent=5 // pred_check_branch
        %7348 = sbr.rel (%p7346) target = $region196
      $region195: #{tpu_custom_call.1} parent=5 // pred_region
        %s7349 = ssub.s32 %s52, 2
        // Predicated region
        $region197: #{tpu_custom_call.1} parent=195 // pred_check
          %p7350 = pneg %p637
        $region198: #{tpu_custom_call.1} parent=195 // pred_check_branch
          %7352 = sbr.rel (%p7350) target = $region200
        $region199: #{tpu_custom_call.1} parent=195 // pred_region
          %s7353 = sand.u32 %s622, 1
          %s7354 = scalar_lea.sflag [#allocation4], %s7353
          %s7355 = sand.u32 %s622, 1
          %s7356 = smul.addr %s7355, 8
          %s7357 = scalar_lea.vmem [#allocation26], %s7356
          %7358 = dma.done %s7354, 128
        $region200: #{tpu_custom_call.1} parent=195 // pred_fallthru
          _
        // Predicated region
        $region201: #{tpu_custom_call.1} parent=195 // pred_check
          %p7359 = pneg %p663
        $region202: #{tpu_custom_call.1} parent=195 // pred_check_branch
          %7361 = sbr.rel (%p7359) target = $region204
        $region203: #{tpu_custom_call.1} parent=195 // pred_region
          %s7362 = sand.u32 %s648, 1
          %s7363 = scalar_lea.sflag [#allocation28], %s7362
          %s7364 = sand.u32 %s648, 1
          %s7365 = smul.addr %s7364, 8
          %s7366 = scalar_lea.vmem [#allocation27], %s7365
          %7367 = dma.done %s7363, 128
        $region204: #{tpu_custom_call.1} parent=195 // pred_fallthru
          _
      $region196: #{tpu_custom_call.1} parent=5 // pred_fallthru
        _
    $region6: #{tpu_custom_call.1} parent=1 // loop_footer
      %s56 = sadd.s32 1, %s52
    $region7: #{tpu_custom_call.1} parent=1 // loop_footer_branch
      %51 = sbr.rel target = $region3
    $region8: #{tpu_custom_call.1} parent=1 // loop_exit
      _
    %7368 = vsyncpa [#allocation3], 1
    %s7369 = scalar_lea.sflag [#allocation3], 1
    %7370 = vsyncpa %s7369, 1
    %7371 = vsyncpa [#allocation6], 1
    %s7372 = scalar_lea.sflag [#allocation6], 1
    %7373 = vsyncpa %s7372, 1
    %7374 = vsyncpa [#allocation9], 1
    %7375 = vsyncpa [#allocation12], 1
    %7376 = vsyncpa [#allocation15], 1
    %7377 = vsyncpa [#allocation18], 1
    %7378 = vsyncpa [#allocation21], 1
    %7379 = vsyncpa [#allocation24], 1
    %7380 = vsyncpa [#allocation4], 1
    %s7381 = scalar_lea.sflag [#allocation4], 1
    %7382 = vsyncpa %s7381, 1
    %7383 = vsyncpa [#allocation28], 1
    %s7384 = scalar_lea.sflag [#allocation28], 1
    %7385 = vsyncpa %s7384, 1

</llo_original>
